<compile_context>
chip_gen: v5e
topology: v5e:2x2
jax: 0.10.0
libtpu: 0.0.40
codegen_flags: <defaults>
</compile_context>

<pallas_src>
import functools

import jax
import jax.numpy as jnp
from jax.experimental import pallas as pl
from jax.experimental.pallas import tpu as pltpu


# --------------------------------------------------------------------------
# Fused conv3x3(same) + bias + ReLU + 2x2 max-pool reduction (one image/step)
# --------------------------------------------------------------------------

def _conv3x3_relu_pool_kernel(x_ref, w_ref, b_ref, o_ref, *, H, W, use_mxu):
    """x_ref: (1, Hp*Wp, Cin) zero-padded image, rows flattened (Wp = W + 2).
    w_ref: (9, Cin, Cout) tap-major weights (tap t = kh*3 + kw).
    b_ref: (1, Cout).
    o_ref: (1, Mv-1, Cout) 2x2-max values in the flat Wp-strided layout; the
           pooled value for conv pixel (h, w) lives at flat row h*Wp + w."""
    Wp = W + 2
    m_acc = (H - 1) * Wp + W          # conv output rows needed (flat index)
    m_v = m_acc - Wp                  # rows after the vertical pair-max
    cout = w_ref.shape[-1]

    x = x_ref[0]                      # (Hp*Wp, Cin)
    acc = jnp.zeros((m_acc, cout), jnp.float32)
    for dy in range(3):
        for dx in range(3):
            off = dy * Wp + dx
            tap = x[off:off + m_acc, :]          # static contiguous slice
            wt = w_ref[dy * 3 + dx]              # (Cin, Cout)
            if use_mxu:
                acc = acc + jnp.dot(tap.astype(jnp.bfloat16), wt,
                                    preferred_element_type=jnp.float32)
            else:
                # Cin == 1: outer-product tap on the VPU (never feed K=1 to MXU).
                acc = acc + tap.astype(jnp.float32) * wt.astype(jnp.float32)

    acc = jnp.maximum(acc + b_ref[...], 0.0)     # bias + ReLU
    # 2x2 max-pool reduction, still in the flat layout (shifted maxes):
    v = jnp.maximum(acc[:m_v, :], acc[Wp:Wp + m_v, :])     # vertical pairs
    hm = jnp.maximum(v[:m_v - 1, :], v[1:m_v, :])          # horizontal pairs
    o_ref[0] = hm.astype(o_ref.dtype)


def conv3x3_relu_pool(x_nhwc, w9, b, *, use_mxu):
    """Conv2d(k=3, s=1, p=1) + ReLU + MaxPool2d(2, 2).  x: (B, H, W, Cin)."""
    B, H, W, Cin = x_nhwc.shape
    Cout = w9.shape[-1]
    Hp, Wp = H + 2, W + 2
    m_acc = (H - 1) * Wp + W
    m_v = m_acc - Wp

    xp = jnp.pad(x_nhwc, ((0, 0), (1, 1), (1, 1), (0, 0)))
    xp = xp.reshape(B, Hp * Wp, Cin)

    out_flat = pl.pallas_call(
        functools.partial(_conv3x3_relu_pool_kernel, H=H, W=W, use_mxu=use_mxu),
        out_shape=jax.ShapeDtypeStruct((B, m_v - 1, Cout), jnp.float32),
        grid=(B,),
        in_specs=[
            pl.BlockSpec((1, Hp * Wp, Cin), lambda i: (i, 0, 0)),
            pl.BlockSpec((9, Cin, Cout), lambda i: (0, 0, 0)),
            pl.BlockSpec((1, Cout), lambda i: (0, 0)),
        ],
        out_specs=pl.BlockSpec((1, m_v - 1, Cout), lambda i: (i, 0, 0)),
        compiler_params=pltpu.CompilerParams(
            dimension_semantics=("parallel",)),
    )(xp, w9, b.reshape(1, Cout))

    # TODO(synk): fold this stride-2 downsample into the kernel epilogue once a
    # sublane-strided store is worth the relayout; for now it is one strided
    # slice that XLA fuses with the next layer's pad/reshape.
    pad_rows = (H - 1) * Wp - (m_v - 1)                      # == 3
    y = jnp.pad(out_flat, ((0, 0), (0, pad_rows), (0, 0)))
    y = y.reshape(B, H - 1, Wp, Cout)
    return y[:, 0::2, 0:W:2, :]                              # (B, H//2, W//2, Cout)


# --------------------------------------------------------------------------
# Fused fc1 (+ReLU) + fc2 head, tiled over the batch
# --------------------------------------------------------------------------

def _mlp_head_kernel(x_ref, w1_ref, b1_ref, w2_ref, b2_ref, o_ref):
    h = jnp.dot(x_ref[...].astype(jnp.bfloat16), w1_ref[...],
                preferred_element_type=jnp.float32)
    h = jnp.maximum(h + b1_ref[...], 0.0)                    # fc1 + ReLU (stays in VMEM)
    y = jnp.dot(h.astype(jnp.bfloat16), w2_ref[...],
                preferred_element_type=jnp.float32)
    o_ref[...] = (y + b2_ref[...]).astype(o_ref.dtype)


def _pick_batch_tile(batch):
    for tm in (256, 128, 64, 32, 16, 8):
        if batch % tm == 0:
            return tm
    return batch


def mlp_head(x, w1, b1, w2, b2):
    B, K1 = x.shape
    N1 = w1.shape[1]
    N2 = w2.shape[1]
    TM = _pick_batch_tile(B)
    return pl.pallas_call(
        _mlp_head_kernel,
        out_shape=jax.ShapeDtypeStruct((B, N2), jnp.float32),
        grid=(B // TM,),
        in_specs=[
            pl.BlockSpec((TM, K1), lambda i: (i, 0)),
            pl.BlockSpec((K1, N1), lambda i: (0, 0)),
            pl.BlockSpec((1, N1), lambda i: (0, 0)),
            pl.BlockSpec((N1, N2), lambda i: (0, 0)),
            pl.BlockSpec((1, N2), lambda i: (0, 0)),
        ],
        out_specs=pl.BlockSpec((TM, N2), lambda i: (i, 0)),
        compiler_params=pltpu.CompilerParams(
            dimension_semantics=("parallel",)),
    )(x, w1, b1, w2, b2)


# --------------------------------------------------------------------------
# Params (torch layout) + one-time kernel-layout prep
# --------------------------------------------------------------------------

def init_params(key):
    """Deterministic PyTorch-style (uniform, fan-in scaled) init, torch layouts."""
    ks = jax.random.split(key, 8)

    def u(k, shape, fan_in):
        bound = 1.0 / (fan_in ** 0.5)
        return jax.random.uniform(k, shape, jnp.float32, -bound, bound)

    return {
        "w1": u(ks[0], (32, 1, 3, 3), 1 * 9),
        "b1": u(ks[1], (32,), 1 * 9),
        "w2": u(ks[2], (64, 32, 3, 3), 32 * 9),
        "b2": u(ks[3], (64,), 32 * 9),
        "fc1_w": u(ks[4], (128, 64 * 7 * 7), 64 * 7 * 7),
        "fc1_b": u(ks[5], (128,), 64 * 7 * 7),
        "fc2_w": u(ks[6], (10, 128), 128),
        "fc2_b": u(ks[7], (10,), 128),
    }


def prepare_params(p):
    """One-time layout/dtype prep (hoisted out of the jitted forward)."""
    # conv taps: (Cout, Cin, 3, 3) -> (9, Cin, Cout), tap-major.
    w1 = jnp.transpose(p["w1"], (2, 3, 1, 0)).reshape(9, 1, 32)          # f32 (VPU path)
    w2 = jnp.transpose(p["w2"], (2, 3, 1, 0)).reshape(9, 32, 64)
    w2 = w2.astype(jnp.bfloat16)                                         # MXU operand
    # fc1: permute K from torch's (C,H,W) flatten to our NHWC (H,W,C) flatten,
    # and pre-transpose to (K, N) so no per-call transpose is needed.
    fc1 = p["fc1_w"].reshape(128, 64, 7, 7)
    fc1 = jnp.transpose(fc1, (2, 3, 1, 0)).reshape(7 * 7 * 64, 128)
    fc1 = fc1.astype(jnp.bfloat16)
    # fc2: (10, 128) -> (128, 10), zero-pad N to 128 lanes (sliced off outside).
    fc2 = jnp.zeros((128, 128), jnp.float32).at[:, :10].set(p["fc2_w"].T)
    fc2 = fc2.astype(jnp.bfloat16)
    fc2_b = jnp.zeros((1, 128), jnp.float32).at[0, :10].set(p["fc2_b"])
    return {
        "w1": w1, "b1": p["b1"].astype(jnp.float32),
        "w2": w2, "b2": p["b2"].astype(jnp.float32),
        "fc1_w": fc1, "fc1_b": p["fc1_b"].reshape(1, 128).astype(jnp.float32),
        "fc2_w": fc2, "fc2_b": fc2_b,
    }


# --------------------------------------------------------------------------
# SimpleCNN forward
# --------------------------------------------------------------------------

@jax.jit
def simple_cnn_forward(x_nchw, kp):
    """x_nchw: (B, 1, 28, 28) float32  ->  logits (B, 10)."""
    x = jnp.transpose(x_nchw, (0, 2, 3, 1))                        # NCHW -> NHWC (C=1: free)
    x = conv3x3_relu_pool(x, kp["w1"], kp["b1"], use_mxu=False)    # (B, 14, 14, 32)
    x = conv3x3_relu_pool(x, kp["w2"], kp["b2"], use_mxu=True)     # (B,  7,  7, 64)
    B = x.shape[0]
    x = x.reshape(B, 7 * 7 * 64)      # NHWC flatten; fc1_w's K axis was permuted to match
    logits = mlp_head(x, kp["fc1_w"], kp["fc1_b"], kp["fc2_w"], kp["fc2_b"])
    return logits[:, :10]             # drop the lane-padding of fc2's N


if __name__ == "__main__":
    key = jax.random.PRNGKey(0)
    k_in, k_param = jax.random.split(key)
    # MNIST-shaped input (fc1 pins spatial size to 28x28, 1 channel).
    x = jax.random.normal(k_in, (2, 1, 28, 28), dtype=jnp.float32)
    params = init_params(k_param)
    kparams = prepare_params(params)   # one-time weight layout/dtype prep

    logits = simple_cnn_forward(x, kparams)
    jax.block_until_ready(logits)
    assert logits.shape == (2, 10), logits.shape
    print("KERNEL_OK")
</pallas_src>

<mosaic_0001>
module attributes {stable_mosaic.version = 11 : i64} {
  func.func @_conv3x3_relu_pool_kernel(%arg0: i32, %arg1: memref<1x900x1xf32, #tpu.memory_space<vmem>>, %arg2: memref<9x1x32xf32, #tpu.memory_space<vmem>>, %arg3: memref<1x32xf32, #tpu.memory_space<vmem>>, %arg4: memref<1x807x32xf32, #tpu.memory_space<vmem>>) attributes {dimension_semantics = [#tpu.dimension_semantics<parallel>], iteration_bounds = array<i64: 2>, scalar_prefetch = 0 : i64, scratch_operands = 0 : i64, tpu.core_type = #tpu.core_type<tc>, window_params = [{transform_indices = @transform_0, window_bounds = array<i64: 1, 900, 1>}, {pipeline_mode = #tpu.pipeline_mode<synchronous>, transform_indices = @transform_1, window_bounds = array<i64: 9, 1, 32>}, {pipeline_mode = #tpu.pipeline_mode<synchronous>, transform_indices = @transform_2, window_bounds = array<i64: 1, 32>}, {transform_indices = @transform_3, window_bounds = array<i64: 1, 807, 32>}]} {
    %c0 = arith.constant 0 : index
    %c0_0 = arith.constant 0 : index
    %c0_1 = arith.constant 0 : index
    %0 = vector.load %arg1[%c0, %c0_0, %c0_1] : memref<1x900x1xf32, #tpu.memory_space<vmem>>, vector<1x900x1xf32>
    %1 = vector.shape_cast %0 : vector<1x900x1xf32> to vector<900x1xf32>
    %cst = arith.constant 0.000000e+00 : f32
    %2 = vector.broadcast %cst : f32 to vector<838x32xf32>
    %3 = vector.extract_strided_slice %1 {offsets = [0, 0], sizes = [838, 1], strides = [1, 1]} : vector<900x1xf32> to vector<838x1xf32>
    %c0_2 = arith.constant 0 : index
    %c0_3 = arith.constant 0 : index
    %c0_4 = arith.constant 0 : index
    %4 = vector.load %arg2[%c0_2, %c0_3, %c0_4] : memref<9x1x32xf32, #tpu.memory_space<vmem>>, vector<1x1x32xf32>
    %5 = vector.shape_cast %4 : vector<1x1x32xf32> to vector<1x32xf32>
    %6 = vector.broadcast %3 : vector<838x1xf32> to vector<838x32xf32>
    %7 = vector.broadcast %5 : vector<1x32xf32> to vector<838x32xf32>
    %8 = arith.mulf %6, %7 : vector<838x32xf32>
    %9 = arith.addf %2, %8 : vector<838x32xf32>
    %10 = vector.extract_strided_slice %1 {offsets = [1, 0], sizes = [838, 1], strides = [1, 1]} : vector<900x1xf32> to vector<838x1xf32>
    %c1 = arith.constant 1 : index
    %c0_5 = arith.constant 0 : index
    %c0_6 = arith.constant 0 : index
    %11 = vector.load %arg2[%c1, %c0_5, %c0_6] : memref<9x1x32xf32, #tpu.memory_space<vmem>>, vector<1x1x32xf32>
    %12 = vector.shape_cast %11 : vector<1x1x32xf32> to vector<1x32xf32>
    %13 = vector.broadcast %10 : vector<838x1xf32> to vector<838x32xf32>
    %14 = vector.broadcast %12 : vector<1x32xf32> to vector<838x32xf32>
    %15 = arith.mulf %13, %14 : vector<838x32xf32>
    %16 = arith.addf %9, %15 : vector<838x32xf32>
    %17 = vector.extract_strided_slice %1 {offsets = [2, 0], sizes = [838, 1], strides = [1, 1]} : vector<900x1xf32> to vector<838x1xf32>
    %c2 = arith.constant 2 : index
    %c0_7 = arith.constant 0 : index
    %c0_8 = arith.constant 0 : index
    %18 = vector.load %arg2[%c2, %c0_7, %c0_8] : memref<9x1x32xf32, #tpu.memory_space<vmem>>, vector<1x1x32xf32>
    %19 = vector.shape_cast %18 : vector<1x1x32xf32> to vector<1x32xf32>
    %20 = vector.broadcast %17 : vector<838x1xf32> to vector<838x32xf32>
    %21 = vector.broadcast %19 : vector<1x32xf32> to vector<838x32xf32>
    %22 = arith.mulf %20, %21 : vector<838x32xf32>
    %23 = arith.addf %16, %22 : vector<838x32xf32>
    %24 = vector.extract_strided_slice %1 {offsets = [30, 0], sizes = [838, 1], strides = [1, 1]} : vector<900x1xf32> to vector<838x1xf32>
    %c3 = arith.constant 3 : index
    %c0_9 = arith.constant 0 : index
    %c0_10 = arith.constant 0 : index
    %25 = vector.load %arg2[%c3, %c0_9, %c0_10] : memref<9x1x32xf32, #tpu.memory_space<vmem>>, vector<1x1x32xf32>
    %26 = vector.shape_cast %25 : vector<1x1x32xf32> to vector<1x32xf32>
    %27 = vector.broadcast %24 : vector<838x1xf32> to vector<838x32xf32>
    %28 = vector.broadcast %26 : vector<1x32xf32> to vector<838x32xf32>
    %29 = arith.mulf %27, %28 : vector<838x32xf32>
    %30 = arith.addf %23, %29 : vector<838x32xf32>
    %31 = vector.extract_strided_slice %1 {offsets = [31, 0], sizes = [838, 1], strides = [1, 1]} : vector<900x1xf32> to vector<838x1xf32>
    %c4 = arith.constant 4 : index
    %c0_11 = arith.constant 0 : index
    %c0_12 = arith.constant 0 : index
    %32 = vector.load %arg2[%c4, %c0_11, %c0_12] : memref<9x1x32xf32, #tpu.memory_space<vmem>>, vector<1x1x32xf32>
    %33 = vector.shape_cast %32 : vector<1x1x32xf32> to vector<1x32xf32>
    %34 = vector.broadcast %31 : vector<838x1xf32> to vector<838x32xf32>
    %35 = vector.broadcast %33 : vector<1x32xf32> to vector<838x32xf32>
    %36 = arith.mulf %34, %35 : vector<838x32xf32>
    %37 = arith.addf %30, %36 : vector<838x32xf32>
    %38 = vector.extract_strided_slice %1 {offsets = [32, 0], sizes = [838, 1], strides = [1, 1]} : vector<900x1xf32> to vector<838x1xf32>
    %c5 = arith.constant 5 : index
    %c0_13 = arith.constant 0 : index
    %c0_14 = arith.constant 0 : index
    %39 = vector.load %arg2[%c5, %c0_13, %c0_14] : memref<9x1x32xf32, #tpu.memory_space<vmem>>, vector<1x1x32xf32>
    %40 = vector.shape_cast %39 : vector<1x1x32xf32> to vector<1x32xf32>
    %41 = vector.broadcast %38 : vector<838x1xf32> to vector<838x32xf32>
    %42 = vector.broadcast %40 : vector<1x32xf32> to vector<838x32xf32>
    %43 = arith.mulf %41, %42 : vector<838x32xf32>
    %44 = arith.addf %37, %43 : vector<838x32xf32>
    %45 = vector.extract_strided_slice %1 {offsets = [60, 0], sizes = [838, 1], strides = [1, 1]} : vector<900x1xf32> to vector<838x1xf32>
    %c6 = arith.constant 6 : index
    %c0_15 = arith.constant 0 : index
    %c0_16 = arith.constant 0 : index
    %46 = vector.load %arg2[%c6, %c0_15, %c0_16] : memref<9x1x32xf32, #tpu.memory_space<vmem>>, vector<1x1x32xf32>
    %47 = vector.shape_cast %46 : vector<1x1x32xf32> to vector<1x32xf32>
    %48 = vector.broadcast %45 : vector<838x1xf32> to vector<838x32xf32>
    %49 = vector.broadcast %47 : vector<1x32xf32> to vector<838x32xf32>
    %50 = arith.mulf %48, %49 : vector<838x32xf32>
    %51 = arith.addf %44, %50 : vector<838x32xf32>
    %52 = vector.extract_strided_slice %1 {offsets = [61, 0], sizes = [838, 1], strides = [1, 1]} : vector<900x1xf32> to vector<838x1xf32>
    %c7 = arith.constant 7 : index
    %c0_17 = arith.constant 0 : index
    %c0_18 = arith.constant 0 : index
    %53 = vector.load %arg2[%c7, %c0_17, %c0_18] : memref<9x1x32xf32, #tpu.memory_space<vmem>>, vector<1x1x32xf32>
    %54 = vector.shape_cast %53 : vector<1x1x32xf32> to vector<1x32xf32>
    %55 = vector.broadcast %52 : vector<838x1xf32> to vector<838x32xf32>
    %56 = vector.broadcast %54 : vector<1x32xf32> to vector<838x32xf32>
    %57 = arith.mulf %55, %56 : vector<838x32xf32>
    %58 = arith.addf %51, %57 : vector<838x32xf32>
    %59 = vector.extract_strided_slice %1 {offsets = [62, 0], sizes = [838, 1], strides = [1, 1]} : vector<900x1xf32> to vector<838x1xf32>
    %c8 = arith.constant 8 : index
    %c0_19 = arith.constant 0 : index
    %c0_20 = arith.constant 0 : index
    %60 = vector.load %arg2[%c8, %c0_19, %c0_20] : memref<9x1x32xf32, #tpu.memory_space<vmem>>, vector<1x1x32xf32>
    %61 = vector.shape_cast %60 : vector<1x1x32xf32> to vector<1x32xf32>
    %62 = vector.broadcast %59 : vector<838x1xf32> to vector<838x32xf32>
    %63 = vector.broadcast %61 : vector<1x32xf32> to vector<838x32xf32>
    %64 = arith.mulf %62, %63 : vector<838x32xf32>
    %65 = arith.addf %58, %64 : vector<838x32xf32>
    %c0_21 = arith.constant 0 : index
    %c0_22 = arith.constant 0 : index
    %66 = vector.load %arg3[%c0_21, %c0_22] : memref<1x32xf32, #tpu.memory_space<vmem>>, vector<1x32xf32>
    %67 = vector.broadcast %66 : vector<1x32xf32> to vector<838x32xf32>
    %68 = arith.addf %65, %67 : vector<838x32xf32>
    %cst_23 = arith.constant 0.000000e+00 : f32
    %69 = vector.broadcast %cst_23 : f32 to vector<838x32xf32>
    %70 = arith.maximumf %68, %69 : vector<838x32xf32>
    %71 = vector.extract_strided_slice %70 {offsets = [0, 0], sizes = [808, 32], strides = [1, 1]} : vector<838x32xf32> to vector<808x32xf32>
    %72 = vector.extract_strided_slice %70 {offsets = [30, 0], sizes = [808, 32], strides = [1, 1]} : vector<838x32xf32> to vector<808x32xf32>
    %73 = arith.maximumf %71, %72 : vector<808x32xf32>
    %74 = vector.extract_strided_slice %73 {offsets = [0, 0], sizes = [807, 32], strides = [1, 1]} : vector<808x32xf32> to vector<807x32xf32>
    %75 = vector.extract_strided_slice %73 {offsets = [1, 0], sizes = [807, 32], strides = [1, 1]} : vector<808x32xf32> to vector<807x32xf32>
    %76 = arith.maximumf %74, %75 : vector<807x32xf32>
    %c0_24 = arith.constant 0 : index
    %c0_25 = arith.constant 0 : index
    %c0_26 = arith.constant 0 : index
    %77 = vector.load %arg4[%c0_24, %c0_25, %c0_26] : memref<1x807x32xf32, #tpu.memory_space<vmem>>, vector<1x807x32xf32>
    %78 = vector.shape_cast %77 : vector<1x807x32xf32> to vector<807x32xf32>
    %79 = vector.shape_cast %76 : vector<807x32xf32> to vector<1x807x32xf32>
    tpu.vector_store %arg4[%c0_24, %c0_25, %c0_26], %79 {strides = array<i32>} : memref<1x807x32xf32, #tpu.memory_space<vmem>>, vector<1x807x32xf32>,
    return
  }
  func.func @transform_0(%arg0: i32) -> (i32, i32, i32) {
    %c0_i32 = arith.constant 0 : i32
    %c0_i32_0 = arith.constant 0 : i32
    %c0_i32_1 = arith.constant 0 : i32
    return %arg0, %c0_i32, %c0_i32_0 : i32, i32, i32
  }
  func.func @transform_1(%arg0: i32) -> (i32, i32, i32) {
    %c0_i32 = arith.constant 0 : i32
    %c0_i32_0 = arith.constant 0 : i32
    %c0_i32_1 = arith.constant 0 : i32
    %c0_i32_2 = arith.constant 0 : i32
    return %c0_i32, %c0_i32_0, %c0_i32_1 : i32, i32, i32
  }
  func.func @transform_2(%arg0: i32) -> (i32, i32) {
    %c0_i32 = arith.constant 0 : i32
    %c0_i32_0 = arith.constant 0 : i32
    %c0_i32_1 = arith.constant 0 : i32
    return %c0_i32, %c0_i32_0 : i32, i32
  }
  func.func @transform_3(%arg0: i32) -> (i32, i32, i32) {
    %c0_i32 = arith.constant 0 : i32
    %c0_i32_0 = arith.constant 0 : i32
    %c0_i32_1 = arith.constant 0 : i32
    return %arg0, %c0_i32, %c0_i32_0 : i32, i32, i32
  }
}

module attributes {stable_mosaic.version = 11 : i64} {
  func.func @_conv3x3_relu_pool_kernel(%arg0: i32, %arg1: memref<1x256x32xf32, #tpu.memory_space<vmem>>, %arg2: memref<9x32x64xbf16, #tpu.memory_space<vmem>>, %arg3: memref<1x64xf32, #tpu.memory_space<vmem>>, %arg4: memref<1x205x64xf32, #tpu.memory_space<vmem>>) attributes {dimension_semantics = [#tpu.dimension_semantics<parallel>], iteration_bounds = array<i64: 2>, scalar_prefetch = 0 : i64, scratch_operands = 0 : i64, tpu.core_type = #tpu.core_type<tc>, window_params = [{transform_indices = @transform_0, window_bounds = array<i64: 1, 256, 32>}, {pipeline_mode = #tpu.pipeline_mode<synchronous>, transform_indices = @transform_1, window_bounds = array<i64: 9, 32, 64>}, {pipeline_mode = #tpu.pipeline_mode<synchronous>, transform_indices = @transform_2, window_bounds = array<i64: 1, 64>}, {transform_indices = @transform_3, window_bounds = array<i64: 1, 205, 64>}]} {
    %c0 = arith.constant 0 : index
    %c0_0 = arith.constant 0 : index
    %c0_1 = arith.constant 0 : index
    %0 = vector.load %arg1[%c0, %c0_0, %c0_1] : memref<1x256x32xf32, #tpu.memory_space<vmem>>, vector<1x256x32xf32>
    %1 = vector.shape_cast %0 : vector<1x256x32xf32> to vector<256x32xf32>
    %cst = arith.constant 0.000000e+00 : f32
    %2 = vector.broadcast %cst : f32 to vector<222x64xf32>
    %3 = vector.extract_strided_slice %1 {offsets = [0, 0], sizes = [222, 32], strides = [1, 1]} : vector<256x32xf32> to vector<222x32xf32>
    %c0_2 = arith.constant 0 : index
    %c0_3 = arith.constant 0 : index
    %c0_4 = arith.constant 0 : index
    %4 = vector.load %arg2[%c0_2, %c0_3, %c0_4] : memref<9x32x64xbf16, #tpu.memory_space<vmem>>, vector<1x32x64xbf16>
    %5 = vector.shape_cast %4 : vector<1x32x64xbf16> to vector<32x64xbf16>
    %6 = arith.truncf %3 : vector<222x32xf32> to vector<222x32xbf16>
    %cst_5 = arith.constant dense<0.000000e+00> : vector<222x64xf32>
    %7 = tpu.matmul %6, %5, %cst_5 {dimension_numbers = #tpu.dot_dimension_numbers<[1], [0], [0], [1], [0, 0, 1, 1], [], []>} : vector<222x32xbf16>, vector<32x64xbf16>, vector<222x64xf32> -> vector<222x64xf32>
    %8 = arith.addf %2, %7 : vector<222x64xf32>
    %9 = vector.extract_strided_slice %1 {offsets = [1, 0], sizes = [222, 32], strides = [1, 1]} : vector<256x32xf32> to vector<222x32xf32>
    %c1 = arith.constant 1 : index
    %c0_6 = arith.constant 0 : index
    %c0_7 = arith.constant 0 : index
    %10 = vector.load %arg2[%c1, %c0_6, %c0_7] : memref<9x32x64xbf16, #tpu.memory_space<vmem>>, vector<1x32x64xbf16>
    %11 = vector.shape_cast %10 : vector<1x32x64xbf16> to vector<32x64xbf16>
    %12 = arith.truncf %9 : vector<222x32xf32> to vector<222x32xbf16>
    %cst_8 = arith.constant dense<0.000000e+00> : vector<222x64xf32>
    %13 = tpu.matmul %12, %11, %cst_8 {dimension_numbers = #tpu.dot_dimension_numbers<[1], [0], [0], [1], [0, 0, 1, 1], [], []>} : vector<222x32xbf16>, vector<32x64xbf16>, vector<222x64xf32> -> vector<222x64xf32>
    %14 = arith.addf %8, %13 : vector<222x64xf32>
    %15 = vector.extract_strided_slice %1 {offsets = [2, 0], sizes = [222, 32], strides = [1, 1]} : vector<256x32xf32> to vector<222x32xf32>
    %c2 = arith.constant 2 : index
    %c0_9 = arith.constant 0 : index
    %c0_10 = arith.constant 0 : index
    %16 = vector.load %arg2[%c2, %c0_9, %c0_10] : memref<9x32x64xbf16, #tpu.memory_space<vmem>>, vector<1x32x64xbf16>
    %17 = vector.shape_cast %16 : vector<1x32x64xbf16> to vector<32x64xbf16>
    %18 = arith.truncf %15 : vector<222x32xf32> to vector<222x32xbf16>
    %cst_11 = arith.constant dense<0.000000e+00> : vector<222x64xf32>
    %19 = tpu.matmul %18, %17, %cst_11 {dimension_numbers = #tpu.dot_dimension_numbers<[1], [0], [0], [1], [0, 0, 1, 1], [], []>} : vector<222x32xbf16>, vector<32x64xbf16>, vector<222x64xf32> -> vector<222x64xf32>
    %20 = arith.addf %14, %19 : vector<222x64xf32>
    %21 = vector.extract_strided_slice %1 {offsets = [16, 0], sizes = [222, 32], strides = [1, 1]} : vector<256x32xf32> to vector<222x32xf32>
    %c3 = arith.constant 3 : index
    %c0_12 = arith.constant 0 : index
    %c0_13 = arith.constant 0 : index
    %22 = vector.load %arg2[%c3, %c0_12, %c0_13] : memref<9x32x64xbf16, #tpu.memory_space<vmem>>, vector<1x32x64xbf16>
    %23 = vector.shape_cast %22 : vector<1x32x64xbf16> to vector<32x64xbf16>
    %24 = arith.truncf %21 : vector<222x32xf32> to vector<222x32xbf16>
    %cst_14 = arith.constant dense<0.000000e+00> : vector<222x64xf32>
    %25 = tpu.matmul %24, %23, %cst_14 {dimension_numbers = #tpu.dot_dimension_numbers<[1], [0], [0], [1], [0, 0, 1, 1], [], []>} : vector<222x32xbf16>, vector<32x64xbf16>, vector<222x64xf32> -> vector<222x64xf32>
    %26 = arith.addf %20, %25 : vector<222x64xf32>
    %27 = vector.extract_strided_slice %1 {offsets = [17, 0], sizes = [222, 32], strides = [1, 1]} : vector<256x32xf32> to vector<222x32xf32>
    %c4 = arith.constant 4 : index
    %c0_15 = arith.constant 0 : index
    %c0_16 = arith.constant 0 : index
    %28 = vector.load %arg2[%c4, %c0_15, %c0_16] : memref<9x32x64xbf16, #tpu.memory_space<vmem>>, vector<1x32x64xbf16>
    %29 = vector.shape_cast %28 : vector<1x32x64xbf16> to vector<32x64xbf16>
    %30 = arith.truncf %27 : vector<222x32xf32> to vector<222x32xbf16>
    %cst_17 = arith.constant dense<0.000000e+00> : vector<222x64xf32>
    %31 = tpu.matmul %30, %29, %cst_17 {dimension_numbers = #tpu.dot_dimension_numbers<[1], [0], [0], [1], [0, 0, 1, 1], [], []>} : vector<222x32xbf16>, vector<32x64xbf16>, vector<222x64xf32> -> vector<222x64xf32>
    %32 = arith.addf %26, %31 : vector<222x64xf32>
    %33 = vector.extract_strided_slice %1 {offsets = [18, 0], sizes = [222, 32], strides = [1, 1]} : vector<256x32xf32> to vector<222x32xf32>
    %c5 = arith.constant 5 : index
    %c0_18 = arith.constant 0 : index
    %c0_19 = arith.constant 0 : index
    %34 = vector.load %arg2[%c5, %c0_18, %c0_19] : memref<9x32x64xbf16, #tpu.memory_space<vmem>>, vector<1x32x64xbf16>
    %35 = vector.shape_cast %34 : vector<1x32x64xbf16> to vector<32x64xbf16>
    %36 = arith.truncf %33 : vector<222x32xf32> to vector<222x32xbf16>
    %cst_20 = arith.constant dense<0.000000e+00> : vector<222x64xf32>
    %37 = tpu.matmul %36, %35, %cst_20 {dimension_numbers = #tpu.dot_dimension_numbers<[1], [0], [0], [1], [0, 0, 1, 1], [], []>} : vector<222x32xbf16>, vector<32x64xbf16>, vector<222x64xf32> -> vector<222x64xf32>
    %38 = arith.addf %32, %37 : vector<222x64xf32>
    %39 = vector.extract_strided_slice %1 {offsets = [32, 0], sizes = [222, 32], strides = [1, 1]} : vector<256x32xf32> to vector<222x32xf32>
    %c6 = arith.constant 6 : index
    %c0_21 = arith.constant 0 : index
    %c0_22 = arith.constant 0 : index
    %40 = vector.load %arg2[%c6, %c0_21, %c0_22] : memref<9x32x64xbf16, #tpu.memory_space<vmem>>, vector<1x32x64xbf16>
    %41 = vector.shape_cast %40 : vector<1x32x64xbf16> to vector<32x64xbf16>
    %42 = arith.truncf %39 : vector<222x32xf32> to vector<222x32xbf16>
    %cst_23 = arith.constant dense<0.000000e+00> : vector<222x64xf32>
    %43 = tpu.matmul %42, %41, %cst_23 {dimension_numbers = #tpu.dot_dimension_numbers<[1], [0], [0], [1], [0, 0, 1, 1], [], []>} : vector<222x32xbf16>, vector<32x64xbf16>, vector<222x64xf32> -> vector<222x64xf32>
    %44 = arith.addf %38, %43 : vector<222x64xf32>
    %45 = vector.extract_strided_slice %1 {offsets = [33, 0], sizes = [222, 32], strides = [1, 1]} : vector<256x32xf32> to vector<222x32xf32>
    %c7 = arith.constant 7 : index
    %c0_24 = arith.constant 0 : index
    %c0_25 = arith.constant 0 : index
    %46 = vector.load %arg2[%c7, %c0_24, %c0_25] : memref<9x32x64xbf16, #tpu.memory_space<vmem>>, vector<1x32x64xbf16>
    %47 = vector.shape_cast %46 : vector<1x32x64xbf16> to vector<32x64xbf16>
    %48 = arith.truncf %45 : vector<222x32xf32> to vector<222x32xbf16>
    %cst_26 = arith.constant dense<0.000000e+00> : vector<222x64xf32>
    %49 = tpu.matmul %48, %47, %cst_26 {dimension_numbers = #tpu.dot_dimension_numbers<[1], [0], [0], [1], [0, 0, 1, 1], [], []>} : vector<222x32xbf16>, vector<32x64xbf16>, vector<222x64xf32> -> vector<222x64xf32>
    %50 = arith.addf %44, %49 : vector<222x64xf32>
    %51 = vector.extract_strided_slice %1 {offsets = [34, 0], sizes = [222, 32], strides = [1, 1]} : vector<256x32xf32> to vector<222x32xf32>
    %c8 = arith.constant 8 : index
    %c0_27 = arith.constant 0 : index
    %c0_28 = arith.constant 0 : index
    %52 = vector.load %arg2[%c8, %c0_27, %c0_28] : memref<9x32x64xbf16, #tpu.memory_space<vmem>>, vector<1x32x64xbf16>
    %53 = vector.shape_cast %52 : vector<1x32x64xbf16> to vector<32x64xbf16>
    %54 = arith.truncf %51 : vector<222x32xf32> to vector<222x32xbf16>
    %cst_29 = arith.constant dense<0.000000e+00> : vector<222x64xf32>
    %55 = tpu.matmul %54, %53, %cst_29 {dimension_numbers = #tpu.dot_dimension_numbers<[1], [0], [0], [1], [0, 0, 1, 1], [], []>} : vector<222x32xbf16>, vector<32x64xbf16>, vector<222x64xf32> -> vector<222x64xf32>
    %56 = arith.addf %50, %55 : vector<222x64xf32>
    %c0_30 = arith.constant 0 : index
    %c0_31 = arith.constant 0 : index
    %57 = vector.load %arg3[%c0_30, %c0_31] : memref<1x64xf32, #tpu.memory_space<vmem>>, vector<1x64xf32>
    %58 = vector.broadcast %57 : vector<1x64xf32> to vector<222x64xf32>
    %59 = arith.addf %56, %58 : vector<222x64xf32>
    %cst_32 = arith.constant 0.000000e+00 : f32
    %60 = vector.broadcast %cst_32 : f32 to vector<222x64xf32>
    %61 = arith.maximumf %59, %60 : vector<222x64xf32>
    %62 = vector.extract_strided_slice %61 {offsets = [0, 0], sizes = [206, 64], strides = [1, 1]} : vector<222x64xf32> to vector<206x64xf32>
    %63 = vector.extract_strided_slice %61 {offsets = [16, 0], sizes = [206, 64], strides = [1, 1]} : vector<222x64xf32> to vector<206x64xf32>
    %64 = arith.maximumf %62, %63 : vector<206x64xf32>
    %65 = vector.extract_strided_slice %64 {offsets = [0, 0], sizes = [205, 64], strides = [1, 1]} : vector<206x64xf32> to vector<205x64xf32>
    %66 = vector.extract_strided_slice %64 {offsets = [1, 0], sizes = [205, 64], strides = [1, 1]} : vector<206x64xf32> to vector<205x64xf32>
    %67 = arith.maximumf %65, %66 : vector<205x64xf32>
    %c0_33 = arith.constant 0 : index
    %c0_34 = arith.constant 0 : index
    %c0_35 = arith.constant 0 : index
    %68 = vector.load %arg4[%c0_33, %c0_34, %c0_35] : memref<1x205x64xf32, #tpu.memory_space<vmem>>, vector<1x205x64xf32>
    %69 = vector.shape_cast %68 : vector<1x205x64xf32> to vector<205x64xf32>
    %70 = vector.shape_cast %67 : vector<205x64xf32> to vector<1x205x64xf32>
    tpu.vector_store %arg4[%c0_33, %c0_34, %c0_35], %70 {strides = array<i32>} : memref<1x205x64xf32, #tpu.memory_space<vmem>>, vector<1x205x64xf32>,
    return
  }
  func.func @transform_0(%arg0: i32) -> (i32, i32, i32) {
    %c0_i32 = arith.constant 0 : i32
    %c0_i32_0 = arith.constant 0 : i32
    %c0_i32_1 = arith.constant 0 : i32
    return %arg0, %c0_i32, %c0_i32_0 : i32, i32, i32
  }
  func.func @transform_1(%arg0: i32) -> (i32, i32, i32) {
    %c0_i32 = arith.constant 0 : i32
    %c0_i32_0 = arith.constant 0 : i32
    %c0_i32_1 = arith.constant 0 : i32
    %c0_i32_2 = arith.constant 0 : i32
    return %c0_i32, %c0_i32_0, %c0_i32_1 : i32, i32, i32
  }
  func.func @transform_2(%arg0: i32) -> (i32, i32) {
    %c0_i32 = arith.constant 0 : i32
    %c0_i32_0 = arith.constant 0 : i32
    %c0_i32_1 = arith.constant 0 : i32
    return %c0_i32, %c0_i32_0 : i32, i32
  }
  func.func @transform_3(%arg0: i32) -> (i32, i32, i32) {
    %c0_i32 = arith.constant 0 : i32
    %c0_i32_0 = arith.constant 0 : i32
    %c0_i32_1 = arith.constant 0 : i32
    return %arg0, %c0_i32, %c0_i32_0 : i32, i32, i32
  }
}

module attributes {stable_mosaic.version = 11 : i64} {
  func.func @_mlp_head_kernel(%arg0: i32, %arg1: memref<2x3136xf32, #tpu.memory_space<vmem>>, %arg2: memref<3136x128xbf16, #tpu.memory_space<vmem>>, %arg3: memref<1x128xf32, #tpu.memory_space<vmem>>, %arg4: memref<128x128xbf16, #tpu.memory_space<vmem>>, %arg5: memref<1x128xf32, #tpu.memory_space<vmem>>, %arg6: memref<2x128xf32, #tpu.memory_space<vmem>>) attributes {dimension_semantics = [#tpu.dimension_semantics<parallel>], iteration_bounds = array<i64: 1>, scalar_prefetch = 0 : i64, scratch_operands = 0 : i64, tpu.core_type = #tpu.core_type<tc>, window_params = [{transform_indices = @transform_0, window_bounds = array<i64: 2, 3136>}, {pipeline_mode = #tpu.pipeline_mode<synchronous>, transform_indices = @transform_1, window_bounds = array<i64: 3136, 128>}, {pipeline_mode = #tpu.pipeline_mode<synchronous>, transform_indices = @transform_2, window_bounds = array<i64: 1, 128>}, {pipeline_mode = #tpu.pipeline_mode<synchronous>, transform_indices = @transform_3, window_bounds = array<i64: 128, 128>}, {pipeline_mode = #tpu.pipeline_mode<synchronous>, transform_indices = @transform_4, window_bounds = array<i64: 1, 128>}, {transform_indices = @transform_5, window_bounds = array<i64: 2, 128>}]} {
    %c0 = arith.constant 0 : index
    %c0_0 = arith.constant 0 : index
    %0 = vector.load %arg1[%c0, %c0_0] : memref<2x3136xf32, #tpu.memory_space<vmem>>, vector<2x3136xf32>
    %1 = arith.truncf %0 : vector<2x3136xf32> to vector<2x3136xbf16>
    %c0_1 = arith.constant 0 : index
    %c0_2 = arith.constant 0 : index
    %2 = vector.load %arg2[%c0_1, %c0_2] : memref<3136x128xbf16, #tpu.memory_space<vmem>>, vector<3136x128xbf16>
    %cst = arith.constant dense<0.000000e+00> : vector<2x128xf32>
    %3 = tpu.matmul %1, %2, %cst {dimension_numbers = #tpu.dot_dimension_numbers<[1], [0], [0], [1], [0, 0, 1, 1], [], []>} : vector<2x3136xbf16>, vector<3136x128xbf16>, vector<2x128xf32> -> vector<2x128xf32>
    %c0_3 = arith.constant 0 : index
    %c0_4 = arith.constant 0 : index
    %4 = vector.load %arg3[%c0_3, %c0_4] : memref<1x128xf32, #tpu.memory_space<vmem>>, vector<1x128xf32>
    %5 = vector.broadcast %4 : vector<1x128xf32> to vector<2x128xf32>
    %6 = arith.addf %3, %5 : vector<2x128xf32>
    %cst_5 = arith.constant 0.000000e+00 : f32
    %7 = vector.broadcast %cst_5 : f32 to vector<2x128xf32>
    %8 = arith.maximumf %6, %7 : vector<2x128xf32>
    %9 = arith.truncf %8 : vector<2x128xf32> to vector<2x128xbf16>
    %c0_6 = arith.constant 0 : index
    %c0_7 = arith.constant 0 : index
    %10 = vector.load %arg4[%c0_6, %c0_7] : memref<128x128xbf16, #tpu.memory_space<vmem>>, vector<128x128xbf16>
    %cst_8 = arith.constant dense<0.000000e+00> : vector<2x128xf32>
    %11 = tpu.matmul %9, %10, %cst_8 {dimension_numbers = #tpu.dot_dimension_numbers<[1], [0], [0], [1], [0, 0, 1, 1], [], []>} : vector<2x128xbf16>, vector<128x128xbf16>, vector<2x128xf32> -> vector<2x128xf32>
    %c0_9 = arith.constant 0 : index
    %c0_10 = arith.constant 0 : index
    %12 = vector.load %arg5[%c0_9, %c0_10] : memref<1x128xf32, #tpu.memory_space<vmem>>, vector<1x128xf32>
    %13 = vector.broadcast %12 : vector<1x128xf32> to vector<2x128xf32>
    %14 = arith.addf %11, %13 : vector<2x128xf32>
    %c0_11 = arith.constant 0 : index
    %c0_12 = arith.constant 0 : index
    %15 = vector.load %arg6[%c0_11, %c0_12] : memref<2x128xf32, #tpu.memory_space<vmem>>, vector<2x128xf32>
    tpu.vector_store %arg6[%c0_11, %c0_12], %14 {strides = array<i32>} : memref<2x128xf32, #tpu.memory_space<vmem>>, vector<2x128xf32>,
    return
  }
  func.func @transform_0(%arg0: i32) -> (i32, i32) {
    %c0_i32 = arith.constant 0 : i32
    %c0_i32_0 = arith.constant 0 : i32
    return %arg0, %c0_i32 : i32, i32
  }
  func.func @transform_1(%arg0: i32) -> (i32, i32) {
    %c0_i32 = arith.constant 0 : i32
    %c0_i32_0 = arith.constant 0 : i32
    %c0_i32_1 = arith.constant 0 : i32
    return %c0_i32, %c0_i32_0 : i32, i32
  }
  func.func @transform_2(%arg0: i32) -> (i32, i32) {
    %c0_i32 = arith.constant 0 : i32
    %c0_i32_0 = arith.constant 0 : i32
    %c0_i32_1 = arith.constant 0 : i32
    return %c0_i32, %c0_i32_0 : i32, i32
  }
  func.func @transform_3(%arg0: i32) -> (i32, i32) {
    %c0_i32 = arith.constant 0 : i32
    %c0_i32_0 = arith.constant 0 : i32
    %c0_i32_1 = arith.constant 0 : i32
    return %c0_i32, %c0_i32_0 : i32, i32
  }
  func.func @transform_4(%arg0: i32) -> (i32, i32) {
    %c0_i32 = arith.constant 0 : i32
    %c0_i32_0 = arith.constant 0 : i32
    %c0_i32_1 = arith.constant 0 : i32
    return %c0_i32, %c0_i32_0 : i32, i32
  }
  func.func @transform_5(%arg0: i32) -> (i32, i32) {
    %c0_i32 = arith.constant 0 : i32
    %c0_i32_0 = arith.constant 0 : i32
    return %arg0, %c0_i32 : i32, i32
  }
}

</mosaic_0001>

<llo_original>
// kernel: simple_cnn_forward.4
$region0: #{simple_cnn_forward.4}
  #allocation0 [shape = 'u32[]', space=smem, size = 0x4, offset = 0x4, fixed_abs, tag = 'smem constant byte address 0x4 - core index']
  #allocation1 [shape = 'u32[72,128]{1,0:T(1,128)}', space=vmem, size = 0x9000, scoped, tag = 'internal scratch']
  %s0 = inlined_call_operand.vmem [shape: f32[2,256,32], index: 0, kind: input, shape index: {}]
  %s1 = inlined_call_operand.vmem [shape: bf16[9,32,64], index: 1, kind: input, shape index: {}]
  %s2 = inlined_call_operand.vmem [shape: f32[1,64], index: 2, kind: input, shape index: {}]
  %s3 = inlined_call_operand.vmem [shape: f32[2,205,64], index: 3, kind: output, shape index: {}]
  %s4 = sld [smem:[#allocation0]]
  $region45: #{simple_cnn_forward.4} parent=0
    _
  %s6 = ssub.s32 1, %s4
  %s7 = scalar_select 0, %s6, %s4
  loop: start=0, step=1, limit=4
  $region2: #{simple_cnn_forward.4} parent=0 // loop_pre_header
    _
  $region3: #{simple_cnn_forward.4} parent=0 // loop_header
    %s9 = sphi 0, %s13
    %p10 = scmp.ge.s32.totalorder %s9, 4
    %s19 = sphi 0, %s21
    %s22 = sphi 0, %s19
    %s23 = sphi 0, %s22
    %s39 = sphi 0, %s23
    %s43 = sphi 0, %s43
    %s45 = sphi 0, %s43
    %s46 = sphi 0, %s45
    %s60 = sphi 0, %s46
    %s64 = sphi 0, %s64
    %s66 = sphi 0, %s64
    %s67 = sphi 0, %s66
    %s81 = sphi 0, %s67
    %s87 = sphi 0, %s89
    %s90 = sphi 0, %s87
    %s91 = sphi 0, %s90
    %s107 = sphi 0, %s91
  $region4: #{simple_cnn_forward.4} parent=0 // loop_header_branch
    %12 = sbr.rel (%p10) target = $region8
  $region5: #{simple_cnn_forward.4} parent=0 // loop_body
    %s14 = ssub.s32 %s9, 1
    %s15 = ssub.s32 %s9, 2
    %s16 = sadd.s32 %s9, 1
    %s17 = ssub.s32 %s9, %s16
    %p18 = scmp.eq.s32.totalorder %s17, 0
    %s20 = sadd.s32 %s19, 1
    %s21 = scalar_select %p18, %s19, %s20
    %p24 = pneg %p18
    %p25 = scmp.eq.s32.totalorder %s9, 1
    %p26 = por %p24, %p25
    %p27 = scmp.ne.s32.totalorder %s19, %s22
    %p28 = scmp.eq.s32.totalorder %s9, 0
    %p29 = por %p27, %p28
    %p30 = scmp.ne.s32.totalorder %s19, %s22
    %p31 = scmp.eq.s32.totalorder %s14, 1
    %p32 = por %p30, %p31
    %p33 = scmp.ne.s32.totalorder %s22, %s23
    %p34 = scmp.eq.s32.totalorder %s14, 0
    %p35 = por %p33, %p34
    %p36 = scmp.ne.s32.totalorder %s22, %s23
    %p37 = scmp.eq.s32.totalorder %s15, 1
    %p38 = por %p36, %p37
    %p40 = scmp.ne.s32.totalorder %s23, %s39
    %p41 = scmp.eq.s32.totalorder %s15, 0
    %p42 = por %p40, %p41
    %s44 = sadd.s32 %s43, 1
    %p47 = scmp.eq.s32.totalorder %s9, 1
    %p48 = scmp.ne.s32.totalorder %s43, %s45
    %p49 = scmp.eq.s32.totalorder %s9, 0
    %p50 = por %p48, %p49
    %p51 = scmp.ne.s32.totalorder %s43, %s45
    %p52 = scmp.eq.s32.totalorder %s14, 1
    %p53 = por %p51, %p52
    %p54 = scmp.ne.s32.totalorder %s45, %s46
    %p55 = scmp.eq.s32.totalorder %s14, 0
    %p56 = por %p54, %p55
    %p57 = scmp.ne.s32.totalorder %s45, %s46
    %p58 = scmp.eq.s32.totalorder %s15, 1
    %p59 = por %p57, %p58
    %p61 = scmp.ne.s32.totalorder %s46, %s60
    %p62 = scmp.eq.s32.totalorder %s15, 0
    %p63 = por %p61, %p62
    %s65 = sadd.s32 %s64, 1
    %p68 = scmp.eq.s32.totalorder %s9, 1
    %p69 = scmp.ne.s32.totalorder %s64, %s66
    %p70 = scmp.eq.s32.totalorder %s9, 0
    %p71 = por %p69, %p70
    %p72 = scmp.ne.s32.totalorder %s64, %s66
    %p73 = scmp.eq.s32.totalorder %s14, 1
    %p74 = por %p72, %p73
    %p75 = scmp.ne.s32.totalorder %s66, %s67
    %p76 = scmp.eq.s32.totalorder %s14, 0
    %p77 = por %p75, %p76
    %p78 = scmp.ne.s32.totalorder %s66, %s67
    %p79 = scmp.eq.s32.totalorder %s15, 1
    %p80 = por %p78, %p79
    %p82 = scmp.ne.s32.totalorder %s67, %s81
    %p83 = scmp.eq.s32.totalorder %s15, 0
    %p84 = por %p82, %p83
    %s85 = ssub.s32 %s9, %s16
    %p86 = scmp.eq.s32.totalorder %s85, 0
    %s88 = sadd.s32 %s87, 1
    %s89 = scalar_select %p86, %s87, %s88
    %p92 = pneg %p86
    %p93 = scmp.eq.s32.totalorder %s9, 1
    %p94 = por %p92, %p93
    %p95 = scmp.ne.s32.totalorder %s87, %s90
    %p96 = scmp.eq.s32.totalorder %s9, 0
    %p97 = por %p95, %p96
    %p98 = scmp.ne.s32.totalorder %s87, %s90
    %p99 = scmp.eq.s32.totalorder %s14, 1
    %p100 = por %p98, %p99
    %p101 = scmp.ne.s32.totalorder %s90, %s91
    %p102 = scmp.eq.s32.totalorder %s14, 0
    %p103 = por %p101, %p102
    %p104 = scmp.ne.s32.totalorder %s90, %s91
    %p105 = scmp.eq.s32.totalorder %s15, 1
    %p106 = por %p104, %p105
    %p108 = scmp.ne.s32.totalorder %s91, %s107
    %p109 = scmp.eq.s32.totalorder %s15, 0
    %p110 = por %p108, %p109
    %p111 = scmp.le.s32.totalorder 1, %s9
    %p112 = scmp.lt.s32.totalorder %s9, 3
    %p113 = pnand %p111, %p112
    %p114 = pneg %p113
    // Predicated region
    $region9: #{simple_cnn_forward.4} parent=5 // pred_check
      _
    $region10: #{simple_cnn_forward.4} parent=5 // pred_check_branch
      %116 = sbr.rel (%p113) target = $region12
    $region11: #{simple_cnn_forward.4} parent=5 // pred_region
      %s117 = ssub.s32 %s9, 1
      // Predicated region
      $region13: #{simple_cnn_forward.4} parent=11 // pred_check
        %p118 = pneg %p56
      $region14: #{simple_cnn_forward.4} parent=11 // pred_check_branch
        %120 = sbr.rel (%p118) target = $region16
      $region15: #{simple_cnn_forward.4} parent=11 // pred_region
        _
      $region16: #{simple_cnn_forward.4} parent=11 // pred_fallthru
        _
      // Predicated region
      $region17: #{simple_cnn_forward.4} parent=11 // pred_check
        %p121 = pneg %p77
      $region18: #{simple_cnn_forward.4} parent=11 // pred_check_branch
        %123 = sbr.rel (%p121) target = $region20
      $region19: #{simple_cnn_forward.4} parent=11 // pred_region
        _
      $region20: #{simple_cnn_forward.4} parent=11 // pred_fallthru
        _
    $region12: #{simple_cnn_forward.4} parent=5 // pred_fallthru
      _
    %p124 = scmp.lt.s32.totalorder %s9, 2
    // Predicated region
    $region21: #{simple_cnn_forward.4} parent=5 // pred_check
      %p125 = pneg %p124
    $region22: #{simple_cnn_forward.4} parent=5 // pred_check_branch
      %127 = sbr.rel (%p125) target = $region24
    $region23: #{simple_cnn_forward.4} parent=5 // pred_region
      // Predicated region
      $region25: #{simple_cnn_forward.4} parent=23 // pred_check
        %p128 = pneg %p29
      $region26: #{simple_cnn_forward.4} parent=23 // pred_check_branch
        %130 = sbr.rel (%p128) target = $region28
      $region27: #{simple_cnn_forward.4} parent=23 // pred_region
        %p131 = scmp.lt.s32.totalorder %s9, 1
        %s132 = scalar_select %p131, %s9, 1
        %s133 = smul.addr %s132, 32
        %s134 = smul.addr %s133, 8
        %s135 = scalar_lea.vmem %s0, %s134
      $region28: #{simple_cnn_forward.4} parent=23 // pred_fallthru
        _
    $region24: #{simple_cnn_forward.4} parent=5 // pred_fallthru
      _
    %p136 = scmp.le.s32.totalorder 1, %s9
    %p137 = scmp.lt.s32.totalorder %s9, 3
    %p138 = pnand %p136, %p137
    %p139 = pneg %p138
    // Predicated region
    $region29: #{simple_cnn_forward.4} parent=5 // pred_check
      _
    $region30: #{simple_cnn_forward.4} parent=5 // pred_check_branch
      %141 = sbr.rel (%p138) target = $region32
    $region31: #{simple_cnn_forward.4} parent=5 // pred_region
      %s142 = ssub.s32 %s9, 1
      %p143 = scmp.lt.s32.totalorder %s14, 1
      %s144 = scalar_select %p143, %s14, 1
      %s145 = smul.addr %s144, 32
      %s146 = smul.addr %s145, 8
      %s147 = scalar_lea.vmem %s0, %s146
      %p148 = pneg %p35
      %p149 = pneg %p32
      %p150 = pneg %p56
      %p151 = pneg %p53
      %p152 = pneg %p77
      %p153 = pneg %p74
      %p154 = pneg %p103
      %p155 = pneg %p100
      %p156 = scmp.lt.s32.totalorder %s14, 1
      %s157 = scalar_select %p156, %s14, 1
      %s158 = smul.addr %s157, 26
      %s159 = smul.addr %s158, 8
      %s160 = scalar_lea.vmem %s3, %s159
      %p161 = scmp.lt.s32.totalorder %s14, 1
      %s162 = scalar_select %p161, %s14, 1
      %s163 = smul.addr %s162, 32
      %s164 = smul.addr %s163, 8
      %s165 = scalar_lea.vmem %s0, %s164
      %p166 = scmp.lt.s32.totalorder %s14, 1
      %s167 = scalar_select %p166, %s14, 1
      %s168 = smul.addr %s167, 26
      %s169 = smul.addr %s168, 8
      %s170 = scalar_lea.vmem %s3, %s169
      %v172 = vld [vmem:[%s165] sm:$0xff]
      %v173 = vld [vmem:[%s165 + $0x8] sm:$0xff]
      %v174 = vld [vmem:[%s165 + $0x10] sm:$0xff]
      %v175 = vld [vmem:[%s165 + $0x18] sm:$0xff]
      %v176 = vld [vmem:[%s165 + $0x20] sm:$0xff]
      %v177 = vld [vmem:[%s165 + $0x28] sm:$0xff]
      %v178 = vld [vmem:[%s165 + $0x30] sm:$0xff]
      %v179 = vld [vmem:[%s165 + $0x38] sm:$0xff]
      %v180 = vld [vmem:[%s165 + $0x40] sm:$0xff]
      %v181 = vld [vmem:[%s165 + $0x48] sm:$0xff]
      %v182 = vld [vmem:[%s165 + $0x50] sm:$0xff]
      %v183 = vld [vmem:[%s165 + $0x58] sm:$0xff]
      %v184 = vld [vmem:[%s165 + $0x60] sm:$0xff]
      %v185 = vld [vmem:[%s165 + $0x68] sm:$0xff]
      %v186 = vld [vmem:[%s165 + $0x70] sm:$0xff]
      %v187 = vld [vmem:[%s165 + $0x78] sm:$0xff]
      %v188 = vld [vmem:[%s165 + $0x80] sm:$0xff]
      %v189 = vld [vmem:[%s165 + $0x88] sm:$0xff]
      %v190 = vld [vmem:[%s165 + $0x90] sm:$0xff]
      %v191 = vld [vmem:[%s165 + $0x98] sm:$0xff]
      %v192 = vld [vmem:[%s165 + $0xa0] sm:$0xff]
      %v193 = vld [vmem:[%s165 + $0xa8] sm:$0xff]
      %v194 = vld [vmem:[%s165 + $0xb0] sm:$0xff]
      %v195 = vld [vmem:[%s165 + $0xb8] sm:$0xff]
      %v196 = vld [vmem:[%s165 + $0xc0] sm:$0xff]
      %v197 = vld [vmem:[%s165 + $0xc8] sm:$0xff]
      %v198 = vld [vmem:[%s165 + $0xd0] sm:$0xff]
      %v199 = vld [vmem:[%s165 + $0xd8] sm:$0xff]
      %v200 = vld [vmem:[%s165 + $0xe0] sm:$0xff]
      %v201 = vld [vmem:[%s165 + $0xe8] sm:$0xff]
      %v202 = vld [vmem:[%s165 + $0xf0] sm:$0xff]
      %v203 = vld [vmem:[%s165 + $0xf8] sm:$0xff]
      %v204 = vld [vmem:[%s1] sm:$0xf]
      %v205 = vld [vmem:[%s1 + $0x4] sm:$0xf]
      %v206 = vld [vmem:[%s1 + $0x8] sm:$0xf]
      %v207 = vld [vmem:[%s1 + $0xc] sm:$0xf]
      %v208 = vpack.c.bf16 %v173, %v172
      %v209 = vpack.c.bf16 %v175, %v174
      %v210 = vpack.c.bf16 %v177, %v176
      %v211 = vpack.c.bf16 %v179, %v178
      %v212 = vpack.c.bf16 %v181, %v180
      %v213 = vpack.c.bf16 %v183, %v182
      %v214 = vpack.c.bf16 %v185, %v184
      %v215 = vpack.c.bf16 %v187, %v186
      %v216 = vpack.c.bf16 %v189, %v188
      %v217 = vpack.c.bf16 %v191, %v190
      %v218 = vpack.c.bf16 %v193, %v192
      %v219 = vpack.c.bf16 %v195, %v194
      %v220 = vpack.c.bf16 %v197, %v196
      %v221 = vpack.c.bf16 %v199, %v198
      %s222 = scalar_lea.vmem %s1, 16
      %v223 = vld [vmem:[%s222] sm:$0xf]
      %v224 = vld [vmem:[%s222 + $0x4] sm:$0xf]
      %v225 = vld [vmem:[%s222 + $0x8] sm:$0xf]
      %v226 = vld [vmem:[%s222 + $0xc] sm:$0xf]
      %vm227 = vsmask.f32 7424
      %v229 = vshrl.u32 %v208, 16
      %v231 = vshll.u32 %v208, 16
      %v233 = vrot.slane %v231, 1
      %v234 = vor.u32 %v229, %v233
      %v236 = vshll.u32 %v209, 16
      %v238 = vrot.slane %v236, 1
      %v239 = vsel %vm227, %v234, %v238
      %v240 = vshrl.u32 %v209, 16
      %v242 = vor.u32 %v240, %v238
      %v244 = vshll.u32 %v210, 16
      %v246 = vrot.slane %v244, 1
      %v247 = vsel %vm227, %v242, %v246
      %v248 = vshrl.u32 %v210, 16
      %v250 = vor.u32 %v248, %v246
      %v252 = vshll.u32 %v211, 16
      %v254 = vrot.slane %v252, 1
      %v255 = vsel %vm227, %v250, %v254
      %v256 = vshrl.u32 %v211, 16
      %v258 = vor.u32 %v256, %v254
      %v260 = vshll.u32 %v212, 16
      %v262 = vrot.slane %v260, 1
      %v263 = vsel %vm227, %v258, %v262
      %v264 = vshrl.u32 %v212, 16
      %v266 = vor.u32 %v264, %v262
      %v268 = vshll.u32 %v213, 16
      %v270 = vrot.slane %v268, 1
      %v271 = vsel %vm227, %v266, %v270
      %v272 = vshrl.u32 %v213, 16
      %v274 = vor.u32 %v272, %v270
      %v276 = vshll.u32 %v214, 16
      %v278 = vrot.slane %v276, 1
      %v279 = vsel %vm227, %v274, %v278
      %v280 = vshrl.u32 %v214, 16
      %v282 = vor.u32 %v280, %v278
      %v284 = vshll.u32 %v215, 16
      %v286 = vrot.slane %v284, 1
      %v287 = vsel %vm227, %v282, %v286
      %v288 = vshrl.u32 %v215, 16
      %v290 = vor.u32 %v288, %v286
      %v292 = vshll.u32 %v216, 16
      %v294 = vrot.slane %v292, 1
      %v295 = vsel %vm227, %v290, %v294
      %v296 = vshrl.u32 %v216, 16
      %v298 = vor.u32 %v296, %v294
      %v300 = vshll.u32 %v217, 16
      %v302 = vrot.slane %v300, 1
      %v303 = vsel %vm227, %v298, %v302
      %v304 = vshrl.u32 %v217, 16
      %v306 = vor.u32 %v304, %v302
      %v308 = vshll.u32 %v218, 16
      %v310 = vrot.slane %v308, 1
      %v311 = vsel %vm227, %v306, %v310
      %v312 = vshrl.u32 %v218, 16
      %v314 = vor.u32 %v312, %v310
      %v316 = vshll.u32 %v219, 16
      %v318 = vrot.slane %v316, 1
      %v319 = vsel %vm227, %v314, %v318
      %v320 = vshrl.u32 %v219, 16
      %v322 = vor.u32 %v320, %v318
      %v324 = vshll.u32 %v220, 16
      %v326 = vrot.slane %v324, 1
      %v327 = vsel %vm227, %v322, %v326
      %v328 = vshrl.u32 %v220, 16
      %v330 = vor.u32 %v328, %v326
      %v332 = vshll.u32 %v221, 16
      %v334 = vrot.slane %v332, 1
      %v335 = vsel %vm227, %v330, %v334
      %v336 = vshrl.u32 %v221, 16
      %v338 = vor.u32 %v336, %v334
      %v343 = vunpack.c.l.b16 %v223
      %v344 = vunpack.c.l.b16 %v224
      %v345 = vunpack.c.l.b16 %v225
      %v346 = vunpack.c.l.b16 %v226
      %v347 = vpack.c.b16 %v344, %v343
      %v348 = vpack.c.b16 %v346, %v345
      %vm351 = vcmask 261120
      %v353 = vsel %vm351, %v239, 0
      %v356 = vsel %vm351, %v247, 0
      %v359 = vsel %vm351, %v255, 0
      %v362 = vsel %vm351, %v263, 0
      %v365 = vsel %vm351, %v271, 0
      %v368 = vsel %vm351, %v279, 0
      %v371 = vsel %vm351, %v287, 0
      %v374 = vsel %vm351, %v295, 0
      %v377 = vsel %vm351, %v303, 0
      %v380 = vsel %vm351, %v311, 0
      %v383 = vsel %vm351, %v319, 0
      %v386 = vsel %vm351, %v327, 0
      %v389 = vsel %vm351, %v335, 0
      %v392 = vsel %vm351, %v338, 0
      %394 = vmatpush.bf16.msra.mxu0 0
      %395 = vmatpush.bf16.msra.mxu0 0
      %396 = vmatpush.bf16.msra.mxu0 0
      %397 = vmatpush.bf16.msra.mxu0 0
      %398 = vmatpush.bf16.msra.mxu0 0
      %399 = vmatpush.bf16.msra.mxu0 0
      %400 = vmatpush.bf16.msra.mxu0 %v348
      %401 = vmatpush.bf16.msra.mxu0 %v347
      %402 = vmatmul.bf16.gmra.mxu0 %v353
      %v403 = vpop.f32.mrf.mxu0
      %v404 = vadd.f32 0.0, %v403
      %v405 = vpop.f32.mrf.mxu0
      %v406 = vadd.f32 0.0, %v405
      %407 = vmatmul.bf16.gmra.mxu0 %v356
      %v408 = vpop.f32.mrf.mxu0
      %v409 = vadd.f32 0.0, %v408
      %v410 = vpop.f32.mrf.mxu0
      %v411 = vadd.f32 0.0, %v410
      %412 = vmatmul.bf16.gmra.mxu0 %v359
      %v413 = vpop.f32.mrf.mxu0
      %v414 = vadd.f32 0.0, %v413
      %v415 = vpop.f32.mrf.mxu0
      %v416 = vadd.f32 0.0, %v415
      %417 = vmatmul.bf16.gmra.mxu0 %v362
      %v418 = vpop.f32.mrf.mxu0
      %v419 = vadd.f32 0.0, %v418
      %v420 = vpop.f32.mrf.mxu0
      %v421 = vadd.f32 0.0, %v420
      %422 = vmatmul.bf16.gmra.mxu0 %v365
      %v423 = vpop.f32.mrf.mxu0
      %v424 = vadd.f32 0.0, %v423
      %v425 = vpop.f32.mrf.mxu0
      %v426 = vadd.f32 0.0, %v425
      %427 = vmatmul.bf16.gmra.mxu0 %v368
      %v428 = vpop.f32.mrf.mxu0
      %v429 = vadd.f32 0.0, %v428
      %v430 = vpop.f32.mrf.mxu0
      %v431 = vadd.f32 0.0, %v430
      %432 = vmatmul.bf16.gmra.mxu0 %v371
      %v433 = vpop.f32.mrf.mxu0
      %v434 = vadd.f32 0.0, %v433
      %v435 = vpop.f32.mrf.mxu0
      %v436 = vadd.f32 0.0, %v435
      %437 = vmatmul.bf16.gmra.mxu0 %v374
      %v438 = vpop.f32.mrf.mxu0
      %v439 = vadd.f32 0.0, %v438
      %v440 = vpop.f32.mrf.mxu0
      %v441 = vadd.f32 0.0, %v440
      %442 = vmatmul.bf16.gmra.mxu0 %v377
      %v443 = vpop.f32.mrf.mxu0
      %v444 = vadd.f32 0.0, %v443
      %v445 = vpop.f32.mrf.mxu0
      %v446 = vadd.f32 0.0, %v445
      %447 = vmatmul.bf16.gmra.mxu0 %v380
      %v448 = vpop.f32.mrf.mxu0
      %v449 = vadd.f32 0.0, %v448
      %v450 = vpop.f32.mrf.mxu0
      %v451 = vadd.f32 0.0, %v450
      %452 = vmatmul.bf16.gmra.mxu0 %v383
      %v453 = vpop.f32.mrf.mxu0
      %v454 = vadd.f32 0.0, %v453
      %v455 = vpop.f32.mrf.mxu0
      %v456 = vadd.f32 0.0, %v455
      %457 = vmatmul.bf16.gmra.mxu0 %v386
      %v458 = vpop.f32.mrf.mxu0
      %v459 = vadd.f32 0.0, %v458
      %v460 = vpop.f32.mrf.mxu0
      %v461 = vadd.f32 0.0, %v460
      %462 = vmatmul.bf16.gmra.mxu0 %v389
      %v463 = vpop.f32.mrf.mxu0
      %v464 = vadd.f32 0.0, %v463
      %v465 = vpop.f32.mrf.mxu0
      %v466 = vadd.f32 0.0, %v465
      %467 = vmatmul.bf16.gmra.mxu0 %v392
      %v468 = vpop.f32.mrf.mxu0
      %v469 = vadd.f32 0.0, %v468
      %v470 = vpop.f32.mrf.mxu0
      %v471 = vadd.f32 0.0, %v470
      %472 = vdwg.mxu0
      %v477 = vunpack.c.l.b16 %v204
      %v478 = vunpack.c.l.b16 %v205
      %v479 = vunpack.c.l.b16 %v206
      %v480 = vunpack.c.l.b16 %v207
      %v481 = vpack.c.b16 %v478, %v477
      %v482 = vpack.c.b16 %v480, %v479
      %v485 = vsel %vm351, %v208, 0
      %v487 = vsel %vm351, %v209, 0
      %v489 = vsel %vm351, %v210, 0
      %v491 = vsel %vm351, %v211, 0
      %v493 = vsel %vm351, %v212, 0
      %v495 = vsel %vm351, %v213, 0
      %v497 = vsel %vm351, %v214, 0
      %v499 = vsel %vm351, %v215, 0
      %v501 = vsel %vm351, %v216, 0
      %v503 = vsel %vm351, %v217, 0
      %v505 = vsel %vm351, %v218, 0
      %v507 = vsel %vm351, %v219, 0
      %v509 = vsel %vm351, %v220, 0
      %v511 = vsel %vm351, %v221, 0
      %513 = vmatpush.bf16.msra.mxu0 0
      %514 = vmatpush.bf16.msra.mxu0 0
      %515 = vmatpush.bf16.msra.mxu0 0
      %516 = vmatpush.bf16.msra.mxu0 0
      %517 = vmatpush.bf16.msra.mxu0 0
      %518 = vmatpush.bf16.msra.mxu0 0
      %519 = vmatpush.bf16.msra.mxu0 %v482
      %520 = vmatpush.bf16.msra.mxu0 %v481
      %521 = vmatmul.bf16.gmra.mxu0 %v485
      %v522 = vpop.f32.mrf.mxu0
      %v523 = vadd.f32 %v404, %v522
      %v524 = vpop.f32.mrf.mxu0
      %v525 = vadd.f32 %v406, %v524
      %526 = vmatmul.bf16.gmra.mxu0 %v487
      %v527 = vpop.f32.mrf.mxu0
      %v528 = vadd.f32 %v409, %v527
      %v529 = vpop.f32.mrf.mxu0
      %v530 = vadd.f32 %v411, %v529
      %531 = vmatmul.bf16.gmra.mxu0 %v489
      %v532 = vpop.f32.mrf.mxu0
      %v533 = vadd.f32 %v414, %v532
      %v534 = vpop.f32.mrf.mxu0
      %v535 = vadd.f32 %v416, %v534
      %536 = vmatmul.bf16.gmra.mxu0 %v491
      %v537 = vpop.f32.mrf.mxu0
      %v538 = vadd.f32 %v419, %v537
      %v539 = vpop.f32.mrf.mxu0
      %v540 = vadd.f32 %v421, %v539
      %541 = vmatmul.bf16.gmra.mxu0 %v493
      %v542 = vpop.f32.mrf.mxu0
      %v543 = vadd.f32 %v424, %v542
      %v544 = vpop.f32.mrf.mxu0
      %v545 = vadd.f32 %v426, %v544
      %546 = vmatmul.bf16.gmra.mxu0 %v495
      %v547 = vpop.f32.mrf.mxu0
      %v548 = vadd.f32 %v429, %v547
      %v549 = vpop.f32.mrf.mxu0
      %v550 = vadd.f32 %v431, %v549
      %551 = vmatmul.bf16.gmra.mxu0 %v497
      %v552 = vpop.f32.mrf.mxu0
      %v553 = vadd.f32 %v434, %v552
      %v554 = vpop.f32.mrf.mxu0
      %v555 = vadd.f32 %v436, %v554
      %556 = vmatmul.bf16.gmra.mxu0 %v499
      %v557 = vpop.f32.mrf.mxu0
      %v558 = vadd.f32 %v439, %v557
      %v559 = vpop.f32.mrf.mxu0
      %v560 = vadd.f32 %v441, %v559
      %561 = vmatmul.bf16.gmra.mxu0 %v501
      %v562 = vpop.f32.mrf.mxu0
      %v563 = vadd.f32 %v444, %v562
      %v564 = vpop.f32.mrf.mxu0
      %v565 = vadd.f32 %v446, %v564
      %566 = vmatmul.bf16.gmra.mxu0 %v503
      %v567 = vpop.f32.mrf.mxu0
      %v568 = vadd.f32 %v449, %v567
      %v569 = vpop.f32.mrf.mxu0
      %v570 = vadd.f32 %v451, %v569
      %571 = vmatmul.bf16.gmra.mxu0 %v505
      %v572 = vpop.f32.mrf.mxu0
      %v573 = vadd.f32 %v454, %v572
      %v574 = vpop.f32.mrf.mxu0
      %v575 = vadd.f32 %v456, %v574
      %576 = vmatmul.bf16.gmra.mxu0 %v507
      %v577 = vpop.f32.mrf.mxu0
      %v578 = vadd.f32 %v459, %v577
      %v579 = vpop.f32.mrf.mxu0
      %v580 = vadd.f32 %v461, %v579
      %581 = vmatmul.bf16.gmra.mxu0 %v509
      %v582 = vpop.f32.mrf.mxu0
      %v583 = vadd.f32 %v464, %v582
      %v584 = vpop.f32.mrf.mxu0
      %v585 = vadd.f32 %v466, %v584
      %586 = vmatmul.bf16.gmra.mxu0 %v511
      %v587 = vpop.f32.mrf.mxu0
      %v588 = vadd.f32 %v469, %v587
      %v589 = vpop.f32.mrf.mxu0
      %v590 = vadd.f32 %v471, %v589
      %591 = vdwg.mxu0
      %s592 = scalar_lea.vmem %s1, 32
      %v593 = vld [vmem:[%s592] sm:$0xf]
      %v594 = vld [vmem:[%s592 + $0x4] sm:$0xf]
      %v595 = vld [vmem:[%s592 + $0x8] sm:$0xf]
      %v596 = vld [vmem:[%s592 + $0xc] sm:$0xf]
      %vm611 = vcmask 1046528
      %v612 = vrot.slane %v208, 1
      %v613 = vrot.slane %v209, 1
      %v614 = vsel %vm611, %v612, %v613
      %v615 = vrot.slane %v210, 1
      %v616 = vsel %vm611, %v613, %v615
      %v617 = vrot.slane %v211, 1
      %v618 = vsel %vm611, %v615, %v617
      %v619 = vrot.slane %v212, 1
      %v620 = vsel %vm611, %v617, %v619
      %v621 = vrot.slane %v213, 1
      %v622 = vsel %vm611, %v619, %v621
      %v623 = vrot.slane %v214, 1
      %v624 = vsel %vm611, %v621, %v623
      %v625 = vrot.slane %v215, 1
      %v626 = vsel %vm611, %v623, %v625
      %v627 = vrot.slane %v216, 1
      %v628 = vsel %vm611, %v625, %v627
      %v629 = vrot.slane %v217, 1
      %v630 = vsel %vm611, %v627, %v629
      %v631 = vrot.slane %v218, 1
      %v632 = vsel %vm611, %v629, %v631
      %v633 = vrot.slane %v219, 1
      %v634 = vsel %vm611, %v631, %v633
      %v635 = vrot.slane %v220, 1
      %v636 = vsel %vm611, %v633, %v635
      %v637 = vrot.slane %v221, 1
      %v638 = vsel %vm611, %v635, %v637
      %v643 = vunpack.c.l.b16 %v593
      %v644 = vunpack.c.l.b16 %v594
      %v645 = vunpack.c.l.b16 %v595
      %v646 = vunpack.c.l.b16 %v596
      %v647 = vpack.c.b16 %v644, %v643
      %v648 = vpack.c.b16 %v646, %v645
      %v652 = vsel %vm351, %v614, 0
      %v655 = vsel %vm351, %v616, 0
      %v658 = vsel %vm351, %v618, 0
      %v661 = vsel %vm351, %v620, 0
      %v664 = vsel %vm351, %v622, 0
      %v667 = vsel %vm351, %v624, 0
      %v670 = vsel %vm351, %v626, 0
      %v673 = vsel %vm351, %v628, 0
      %v676 = vsel %vm351, %v630, 0
      %v679 = vsel %vm351, %v632, 0
      %v682 = vsel %vm351, %v634, 0
      %v685 = vsel %vm351, %v636, 0
      %v688 = vsel %vm351, %v638, 0
      %v691 = vsel %vm351, %v637, 0
      %693 = vmatpush.bf16.msra.mxu0 0
      %694 = vmatpush.bf16.msra.mxu0 0
      %695 = vmatpush.bf16.msra.mxu0 0
      %696 = vmatpush.bf16.msra.mxu0 0
      %697 = vmatpush.bf16.msra.mxu0 0
      %698 = vmatpush.bf16.msra.mxu0 0
      %699 = vmatpush.bf16.msra.mxu0 %v648
      %700 = vmatpush.bf16.msra.mxu0 %v647
      %701 = vmatmul.bf16.gmra.mxu0 %v652
      %v702 = vpop.f32.mrf.mxu0
      %v703 = vadd.f32 0.0, %v702
      %v704 = vpop.f32.mrf.mxu0
      %v705 = vadd.f32 0.0, %v704
      %706 = vmatmul.bf16.gmra.mxu0 %v655
      %v707 = vpop.f32.mrf.mxu0
      %v708 = vadd.f32 0.0, %v707
      %v709 = vpop.f32.mrf.mxu0
      %v710 = vadd.f32 0.0, %v709
      %711 = vmatmul.bf16.gmra.mxu0 %v658
      %v712 = vpop.f32.mrf.mxu0
      %v713 = vadd.f32 0.0, %v712
      %v714 = vpop.f32.mrf.mxu0
      %v715 = vadd.f32 0.0, %v714
      %716 = vmatmul.bf16.gmra.mxu0 %v661
      %v717 = vpop.f32.mrf.mxu0
      %v718 = vadd.f32 0.0, %v717
      %v719 = vpop.f32.mrf.mxu0
      %v720 = vadd.f32 0.0, %v719
      %721 = vmatmul.bf16.gmra.mxu0 %v664
      %v722 = vpop.f32.mrf.mxu0
      %v723 = vadd.f32 0.0, %v722
      %v724 = vpop.f32.mrf.mxu0
      %v725 = vadd.f32 0.0, %v724
      %726 = vmatmul.bf16.gmra.mxu0 %v667
      %v727 = vpop.f32.mrf.mxu0
      %v728 = vadd.f32 0.0, %v727
      %v729 = vpop.f32.mrf.mxu0
      %v730 = vadd.f32 0.0, %v729
      %731 = vmatmul.bf16.gmra.mxu0 %v670
      %v732 = vpop.f32.mrf.mxu0
      %v733 = vadd.f32 0.0, %v732
      %v734 = vpop.f32.mrf.mxu0
      %v735 = vadd.f32 0.0, %v734
      %736 = vmatmul.bf16.gmra.mxu0 %v673
      %v737 = vpop.f32.mrf.mxu0
      %v738 = vadd.f32 0.0, %v737
      %v739 = vpop.f32.mrf.mxu0
      %v740 = vadd.f32 0.0, %v739
      %741 = vmatmul.bf16.gmra.mxu0 %v676
      %v742 = vpop.f32.mrf.mxu0
      %v743 = vadd.f32 0.0, %v742
      %v744 = vpop.f32.mrf.mxu0
      %v745 = vadd.f32 0.0, %v744
      %746 = vmatmul.bf16.gmra.mxu0 %v679
      %v747 = vpop.f32.mrf.mxu0
      %v748 = vadd.f32 0.0, %v747
      %v749 = vpop.f32.mrf.mxu0
      %v750 = vadd.f32 0.0, %v749
      %751 = vmatmul.bf16.gmra.mxu0 %v682
      %v752 = vpop.f32.mrf.mxu0
      %v753 = vadd.f32 0.0, %v752
      %v754 = vpop.f32.mrf.mxu0
      %v755 = vadd.f32 0.0, %v754
      %756 = vmatmul.bf16.gmra.mxu0 %v685
      %v757 = vpop.f32.mrf.mxu0
      %v758 = vadd.f32 0.0, %v757
      %v759 = vpop.f32.mrf.mxu0
      %v760 = vadd.f32 0.0, %v759
      %761 = vmatmul.bf16.gmra.mxu0 %v688
      %v762 = vpop.f32.mrf.mxu0
      %v763 = vadd.f32 0.0, %v762
      %v764 = vpop.f32.mrf.mxu0
      %v765 = vadd.f32 0.0, %v764
      %766 = vmatmul.bf16.gmra.mxu0 %v691
      %v767 = vpop.f32.mrf.mxu0
      %v768 = vadd.f32 0.0, %v767
      %v769 = vpop.f32.mrf.mxu0
      %v770 = vadd.f32 0.0, %v769
      %771 = vdwg.mxu0
      %v772 = vadd.f32 %v523, %v703
      %v773 = vadd.f32 %v525, %v705
      %v774 = vadd.f32 %v528, %v708
      %v775 = vadd.f32 %v530, %v710
      %v776 = vadd.f32 %v533, %v713
      %v777 = vadd.f32 %v535, %v715
      %v778 = vadd.f32 %v538, %v718
      %v779 = vadd.f32 %v540, %v720
      %v780 = vadd.f32 %v543, %v723
      %v781 = vadd.f32 %v545, %v725
      %v782 = vadd.f32 %v548, %v728
      %v783 = vadd.f32 %v550, %v730
      %v784 = vadd.f32 %v553, %v733
      %v785 = vadd.f32 %v555, %v735
      %v786 = vadd.f32 %v558, %v738
      %v787 = vadd.f32 %v560, %v740
      %v788 = vadd.f32 %v563, %v743
      %v789 = vadd.f32 %v565, %v745
      %v790 = vadd.f32 %v568, %v748
      %v791 = vadd.f32 %v570, %v750
      %v792 = vadd.f32 %v573, %v753
      %v793 = vadd.f32 %v575, %v755
      %v794 = vadd.f32 %v578, %v758
      %v795 = vadd.f32 %v580, %v760
      %v796 = vadd.f32 %v583, %v763
      %v797 = vadd.f32 %v585, %v765
      %v798 = vadd.f32 %v588, %v768
      %v799 = vadd.f32 %v590, %v770
      %s800 = scalar_lea.vmem %s1, 48
      %v801 = vld [vmem:[%s800] sm:$0xf]
      %v802 = vld [vmem:[%s800 + $0x4] sm:$0xf]
      %v803 = vld [vmem:[%s800 + $0x8] sm:$0xf]
      %v804 = vld [vmem:[%s800 + $0xc] sm:$0xf]
      %v805 = vpack.c.bf16 %v201, %v200
      %v810 = vunpack.c.l.b16 %v801
      %v811 = vunpack.c.l.b16 %v802
      %v812 = vunpack.c.l.b16 %v803
      %v813 = vunpack.c.l.b16 %v804
      %v814 = vpack.c.b16 %v811, %v810
      %v815 = vpack.c.b16 %v813, %v812
      %v819 = vsel %vm351, %v805, 0
      %821 = vmatpush.bf16.msra.mxu0 0
      %822 = vmatpush.bf16.msra.mxu0 0
      %823 = vmatpush.bf16.msra.mxu0 0
      %824 = vmatpush.bf16.msra.mxu0 0
      %825 = vmatpush.bf16.msra.mxu0 0
      %826 = vmatpush.bf16.msra.mxu0 0
      %827 = vmatpush.bf16.msra.mxu0 %v815
      %828 = vmatpush.bf16.msra.mxu0 %v814
      %829 = vmatmul.bf16.gmra.mxu0 %v487
      %v830 = vpop.f32.mrf.mxu0
      %v831 = vadd.f32 0.0, %v830
      %v832 = vpop.f32.mrf.mxu0
      %v833 = vadd.f32 0.0, %v832
      %834 = vmatmul.bf16.gmra.mxu0 %v489
      %v835 = vpop.f32.mrf.mxu0
      %v836 = vadd.f32 0.0, %v835
      %v837 = vpop.f32.mrf.mxu0
      %v838 = vadd.f32 0.0, %v837
      %839 = vmatmul.bf16.gmra.mxu0 %v491
      %v840 = vpop.f32.mrf.mxu0
      %v841 = vadd.f32 0.0, %v840
      %v842 = vpop.f32.mrf.mxu0
      %v843 = vadd.f32 0.0, %v842
      %844 = vmatmul.bf16.gmra.mxu0 %v493
      %v845 = vpop.f32.mrf.mxu0
      %v846 = vadd.f32 0.0, %v845
      %v847 = vpop.f32.mrf.mxu0
      %v848 = vadd.f32 0.0, %v847
      %849 = vmatmul.bf16.gmra.mxu0 %v495
      %v850 = vpop.f32.mrf.mxu0
      %v851 = vadd.f32 0.0, %v850
      %v852 = vpop.f32.mrf.mxu0
      %v853 = vadd.f32 0.0, %v852
      %854 = vmatmul.bf16.gmra.mxu0 %v497
      %v855 = vpop.f32.mrf.mxu0
      %v856 = vadd.f32 0.0, %v855
      %v857 = vpop.f32.mrf.mxu0
      %v858 = vadd.f32 0.0, %v857
      %859 = vmatmul.bf16.gmra.mxu0 %v499
      %v860 = vpop.f32.mrf.mxu0
      %v861 = vadd.f32 0.0, %v860
      %v862 = vpop.f32.mrf.mxu0
      %v863 = vadd.f32 0.0, %v862
      %864 = vmatmul.bf16.gmra.mxu0 %v501
      %v865 = vpop.f32.mrf.mxu0
      %v866 = vadd.f32 0.0, %v865
      %v867 = vpop.f32.mrf.mxu0
      %v868 = vadd.f32 0.0, %v867
      %869 = vmatmul.bf16.gmra.mxu0 %v503
      %v870 = vpop.f32.mrf.mxu0
      %v871 = vadd.f32 0.0, %v870
      %v872 = vpop.f32.mrf.mxu0
      %v873 = vadd.f32 0.0, %v872
      %874 = vmatmul.bf16.gmra.mxu0 %v505
      %v875 = vpop.f32.mrf.mxu0
      %v876 = vadd.f32 0.0, %v875
      %v877 = vpop.f32.mrf.mxu0
      %v878 = vadd.f32 0.0, %v877
      %879 = vmatmul.bf16.gmra.mxu0 %v507
      %v880 = vpop.f32.mrf.mxu0
      %v881 = vadd.f32 0.0, %v880
      %v882 = vpop.f32.mrf.mxu0
      %v883 = vadd.f32 0.0, %v882
      %884 = vmatmul.bf16.gmra.mxu0 %v509
      %v885 = vpop.f32.mrf.mxu0
      %v886 = vadd.f32 0.0, %v885
      %v887 = vpop.f32.mrf.mxu0
      %v888 = vadd.f32 0.0, %v887
      %889 = vmatmul.bf16.gmra.mxu0 %v511
      %v890 = vpop.f32.mrf.mxu0
      %v891 = vadd.f32 0.0, %v890
      %v892 = vpop.f32.mrf.mxu0
      %v893 = vadd.f32 0.0, %v892
      %894 = vmatmul.bf16.gmra.mxu0 %v819
      %v895 = vpop.f32.mrf.mxu0
      %v896 = vadd.f32 0.0, %v895
      %v897 = vpop.f32.mrf.mxu0
      %v898 = vadd.f32 0.0, %v897
      %899 = vdwg.mxu0
      %v900 = vadd.f32 %v772, %v831
      %v901 = vadd.f32 %v773, %v833
      %v902 = vadd.f32 %v774, %v836
      %v903 = vadd.f32 %v775, %v838
      %v904 = vadd.f32 %v776, %v841
      %v905 = vadd.f32 %v777, %v843
      %v906 = vadd.f32 %v778, %v846
      %v907 = vadd.f32 %v779, %v848
      %v908 = vadd.f32 %v780, %v851
      %v909 = vadd.f32 %v781, %v853
      %v910 = vadd.f32 %v782, %v856
      %v911 = vadd.f32 %v783, %v858
      %v912 = vadd.f32 %v784, %v861
      %v913 = vadd.f32 %v785, %v863
      %v914 = vadd.f32 %v786, %v866
      %v915 = vadd.f32 %v787, %v868
      %v916 = vadd.f32 %v788, %v871
      %v917 = vadd.f32 %v789, %v873
      %v918 = vadd.f32 %v790, %v876
      %v919 = vadd.f32 %v791, %v878
      %v920 = vadd.f32 %v792, %v881
      %v921 = vadd.f32 %v793, %v883
      %v922 = vadd.f32 %v794, %v886
      %v923 = vadd.f32 %v795, %v888
      %v924 = vadd.f32 %v796, %v891
      %v925 = vadd.f32 %v797, %v893
      %v926 = vadd.f32 %v798, %v896
      %v927 = vadd.f32 %v799, %v898
      %s928 = scalar_lea.vmem %s1, 64
      %v929 = vld [vmem:[%s928] sm:$0xf]
      %v930 = vld [vmem:[%s928 + $0x4] sm:$0xf]
      %v931 = vld [vmem:[%s928 + $0x8] sm:$0xf]
      %v932 = vld [vmem:[%s928 + $0xc] sm:$0xf]
      %v933 = vshll.u32 %v805, 16
      %v935 = vrot.slane %v933, 1
      %v936 = vsel %vm227, %v338, %v935
      %v937 = vshrl.u32 %v805, 16
      %v939 = vor.u32 %v937, %v935
      %v944 = vunpack.c.l.b16 %v929
      %v945 = vunpack.c.l.b16 %v930
      %v946 = vunpack.c.l.b16 %v931
      %v947 = vunpack.c.l.b16 %v932
      %v948 = vpack.c.b16 %v945, %v944
      %v949 = vpack.c.b16 %v947, %v946
      %v953 = vsel %vm351, %v936, 0
      %v956 = vsel %vm351, %v939, 0
      %958 = vmatpush.bf16.msra.mxu0 0
      %959 = vmatpush.bf16.msra.mxu0 0
      %960 = vmatpush.bf16.msra.mxu0 0
      %961 = vmatpush.bf16.msra.mxu0 0
      %962 = vmatpush.bf16.msra.mxu0 0
      %963 = vmatpush.bf16.msra.mxu0 0
      %964 = vmatpush.bf16.msra.mxu0 %v949
      %965 = vmatpush.bf16.msra.mxu0 %v948
      %966 = vmatmul.bf16.gmra.mxu0 %v356
      %v967 = vpop.f32.mrf.mxu0
      %v968 = vadd.f32 0.0, %v967
      %v969 = vpop.f32.mrf.mxu0
      %v970 = vadd.f32 0.0, %v969
      %971 = vmatmul.bf16.gmra.mxu0 %v359
      %v972 = vpop.f32.mrf.mxu0
      %v973 = vadd.f32 0.0, %v972
      %v974 = vpop.f32.mrf.mxu0
      %v975 = vadd.f32 0.0, %v974
      %976 = vmatmul.bf16.gmra.mxu0 %v362
      %v977 = vpop.f32.mrf.mxu0
      %v978 = vadd.f32 0.0, %v977
      %v979 = vpop.f32.mrf.mxu0
      %v980 = vadd.f32 0.0, %v979
      %981 = vmatmul.bf16.gmra.mxu0 %v365
      %v982 = vpop.f32.mrf.mxu0
      %v983 = vadd.f32 0.0, %v982
      %v984 = vpop.f32.mrf.mxu0
      %v985 = vadd.f32 0.0, %v984
      %986 = vmatmul.bf16.gmra.mxu0 %v368
      %v987 = vpop.f32.mrf.mxu0
      %v988 = vadd.f32 0.0, %v987
      %v989 = vpop.f32.mrf.mxu0
      %v990 = vadd.f32 0.0, %v989
      %991 = vmatmul.bf16.gmra.mxu0 %v371
      %v992 = vpop.f32.mrf.mxu0
      %v993 = vadd.f32 0.0, %v992
      %v994 = vpop.f32.mrf.mxu0
      %v995 = vadd.f32 0.0, %v994
      %996 = vmatmul.bf16.gmra.mxu0 %v374
      %v997 = vpop.f32.mrf.mxu0
      %v998 = vadd.f32 0.0, %v997
      %v999 = vpop.f32.mrf.mxu0
      %v1000 = vadd.f32 0.0, %v999
      %1001 = vmatmul.bf16.gmra.mxu0 %v377
      %v1002 = vpop.f32.mrf.mxu0
      %v1003 = vadd.f32 0.0, %v1002
      %v1004 = vpop.f32.mrf.mxu0
      %v1005 = vadd.f32 0.0, %v1004
      %1006 = vmatmul.bf16.gmra.mxu0 %v380
      %v1007 = vpop.f32.mrf.mxu0
      %v1008 = vadd.f32 0.0, %v1007
      %v1009 = vpop.f32.mrf.mxu0
      %v1010 = vadd.f32 0.0, %v1009
      %1011 = vmatmul.bf16.gmra.mxu0 %v383
      %v1012 = vpop.f32.mrf.mxu0
      %v1013 = vadd.f32 0.0, %v1012
      %v1014 = vpop.f32.mrf.mxu0
      %v1015 = vadd.f32 0.0, %v1014
      %1016 = vmatmul.bf16.gmra.mxu0 %v386
      %v1017 = vpop.f32.mrf.mxu0
      %v1018 = vadd.f32 0.0, %v1017
      %v1019 = vpop.f32.mrf.mxu0
      %v1020 = vadd.f32 0.0, %v1019
      %1021 = vmatmul.bf16.gmra.mxu0 %v389
      %v1022 = vpop.f32.mrf.mxu0
      %v1023 = vadd.f32 0.0, %v1022
      %v1024 = vpop.f32.mrf.mxu0
      %v1025 = vadd.f32 0.0, %v1024
      %1026 = vmatmul.bf16.gmra.mxu0 %v953
      %v1027 = vpop.f32.mrf.mxu0
      %v1028 = vadd.f32 0.0, %v1027
      %v1029 = vpop.f32.mrf.mxu0
      %v1030 = vadd.f32 0.0, %v1029
      %1031 = vmatmul.bf16.gmra.mxu0 %v956
      %v1032 = vpop.f32.mrf.mxu0
      %v1033 = vadd.f32 0.0, %v1032
      %v1034 = vpop.f32.mrf.mxu0
      %v1035 = vadd.f32 0.0, %v1034
      %1036 = vdwg.mxu0
      %v1037 = vadd.f32 %v900, %v968
      %v1038 = vadd.f32 %v901, %v970
      %v1039 = vadd.f32 %v902, %v973
      %v1040 = vadd.f32 %v903, %v975
      %v1041 = vadd.f32 %v904, %v978
      %v1042 = vadd.f32 %v905, %v980
      %v1043 = vadd.f32 %v906, %v983
      %v1044 = vadd.f32 %v907, %v985
      %v1045 = vadd.f32 %v908, %v988
      %v1046 = vadd.f32 %v909, %v990
      %v1047 = vadd.f32 %v910, %v993
      %v1048 = vadd.f32 %v911, %v995
      %v1049 = vadd.f32 %v912, %v998
      %v1050 = vadd.f32 %v913, %v1000
      %v1051 = vadd.f32 %v914, %v1003
      %v1052 = vadd.f32 %v915, %v1005
      %v1053 = vadd.f32 %v916, %v1008
      %v1054 = vadd.f32 %v917, %v1010
      %v1055 = vadd.f32 %v918, %v1013
      %v1056 = vadd.f32 %v919, %v1015
      %v1057 = vadd.f32 %v920, %v1018
      %v1058 = vadd.f32 %v921, %v1020
      %v1059 = vadd.f32 %v922, %v1023
      %v1060 = vadd.f32 %v923, %v1025
      %v1061 = vadd.f32 %v924, %v1028
      %v1062 = vadd.f32 %v925, %v1030
      %v1063 = vadd.f32 %v926, %v1033
      %v1064 = vadd.f32 %v927, %v1035
      %s1065 = scalar_lea.vmem %s1, 80
      %v1066 = vld [vmem:[%s1065] sm:$0xf]
      %v1067 = vld [vmem:[%s1065 + $0x4] sm:$0xf]
      %v1068 = vld [vmem:[%s1065 + $0x8] sm:$0xf]
      %v1069 = vld [vmem:[%s1065 + $0xc] sm:$0xf]
      %v1071 = vrot.slane %v805, 1
      %v1072 = vsel %vm611, %v637, %v1071
      %v1077 = vunpack.c.l.b16 %v1066
      %v1078 = vunpack.c.l.b16 %v1067
      %v1079 = vunpack.c.l.b16 %v1068
      %v1080 = vunpack.c.l.b16 %v1069
      %v1081 = vpack.c.b16 %v1078, %v1077
      %v1082 = vpack.c.b16 %v1080, %v1079
      %v1086 = vsel %vm351, %v1072, 0
      %v1089 = vsel %vm351, %v1071, 0
      %1091 = vmatpush.bf16.msra.mxu0 0
      %1092 = vmatpush.bf16.msra.mxu0 0
      %1093 = vmatpush.bf16.msra.mxu0 0
      %1094 = vmatpush.bf16.msra.mxu0 0
      %1095 = vmatpush.bf16.msra.mxu0 0
      %1096 = vmatpush.bf16.msra.mxu0 0
      %1097 = vmatpush.bf16.msra.mxu0 %v1082
      %1098 = vmatpush.bf16.msra.mxu0 %v1081
      %1099 = vmatmul.bf16.gmra.mxu0 %v655
      %v1100 = vpop.f32.mrf.mxu0
      %v1101 = vadd.f32 0.0, %v1100
      %v1102 = vpop.f32.mrf.mxu0
      %v1103 = vadd.f32 0.0, %v1102
      %1104 = vmatmul.bf16.gmra.mxu0 %v658
      %v1105 = vpop.f32.mrf.mxu0
      %v1106 = vadd.f32 0.0, %v1105
      %v1107 = vpop.f32.mrf.mxu0
      %v1108 = vadd.f32 0.0, %v1107
      %1109 = vmatmul.bf16.gmra.mxu0 %v661
      %v1110 = vpop.f32.mrf.mxu0
      %v1111 = vadd.f32 0.0, %v1110
      %v1112 = vpop.f32.mrf.mxu0
      %v1113 = vadd.f32 0.0, %v1112
      %1114 = vmatmul.bf16.gmra.mxu0 %v664
      %v1115 = vpop.f32.mrf.mxu0
      %v1116 = vadd.f32 0.0, %v1115
      %v1117 = vpop.f32.mrf.mxu0
      %v1118 = vadd.f32 0.0, %v1117
      %1119 = vmatmul.bf16.gmra.mxu0 %v667
      %v1120 = vpop.f32.mrf.mxu0
      %v1121 = vadd.f32 0.0, %v1120
      %v1122 = vpop.f32.mrf.mxu0
      %v1123 = vadd.f32 0.0, %v1122
      %1124 = vmatmul.bf16.gmra.mxu0 %v670
      %v1125 = vpop.f32.mrf.mxu0
      %v1126 = vadd.f32 0.0, %v1125
      %v1127 = vpop.f32.mrf.mxu0
      %v1128 = vadd.f32 0.0, %v1127
      %1129 = vmatmul.bf16.gmra.mxu0 %v673
      %v1130 = vpop.f32.mrf.mxu0
      %v1131 = vadd.f32 0.0, %v1130
      %v1132 = vpop.f32.mrf.mxu0
      %v1133 = vadd.f32 0.0, %v1132
      %1134 = vmatmul.bf16.gmra.mxu0 %v676
      %v1135 = vpop.f32.mrf.mxu0
      %v1136 = vadd.f32 0.0, %v1135
      %v1137 = vpop.f32.mrf.mxu0
      %v1138 = vadd.f32 0.0, %v1137
      %1139 = vmatmul.bf16.gmra.mxu0 %v679
      %v1140 = vpop.f32.mrf.mxu0
      %v1141 = vadd.f32 0.0, %v1140
      %v1142 = vpop.f32.mrf.mxu0
      %v1143 = vadd.f32 0.0, %v1142
      %1144 = vmatmul.bf16.gmra.mxu0 %v682
      %v1145 = vpop.f32.mrf.mxu0
      %v1146 = vadd.f32 0.0, %v1145
      %v1147 = vpop.f32.mrf.mxu0
      %v1148 = vadd.f32 0.0, %v1147
      %1149 = vmatmul.bf16.gmra.mxu0 %v685
      %v1150 = vpop.f32.mrf.mxu0
      %v1151 = vadd.f32 0.0, %v1150
      %v1152 = vpop.f32.mrf.mxu0
      %v1153 = vadd.f32 0.0, %v1152
      %1154 = vmatmul.bf16.gmra.mxu0 %v688
      %v1155 = vpop.f32.mrf.mxu0
      %v1156 = vadd.f32 0.0, %v1155
      %v1157 = vpop.f32.mrf.mxu0
      %v1158 = vadd.f32 0.0, %v1157
      %1159 = vmatmul.bf16.gmra.mxu0 %v1086
      %v1160 = vpop.f32.mrf.mxu0
      %v1161 = vadd.f32 0.0, %v1160
      %v1162 = vpop.f32.mrf.mxu0
      %v1163 = vadd.f32 0.0, %v1162
      %1164 = vmatmul.bf16.gmra.mxu0 %v1089
      %v1165 = vpop.f32.mrf.mxu0
      %v1166 = vadd.f32 0.0, %v1165
      %v1167 = vpop.f32.mrf.mxu0
      %v1168 = vadd.f32 0.0, %v1167
      %1169 = vdwg.mxu0
      %v1170 = vadd.f32 %v1037, %v1101
      %v1171 = vadd.f32 %v1038, %v1103
      %v1172 = vadd.f32 %v1039, %v1106
      %v1173 = vadd.f32 %v1040, %v1108
      %v1174 = vadd.f32 %v1041, %v1111
      %v1175 = vadd.f32 %v1042, %v1113
      %v1176 = vadd.f32 %v1043, %v1116
      %v1177 = vadd.f32 %v1044, %v1118
      %v1178 = vadd.f32 %v1045, %v1121
      %v1179 = vadd.f32 %v1046, %v1123
      %v1180 = vadd.f32 %v1047, %v1126
      %v1181 = vadd.f32 %v1048, %v1128
      %v1182 = vadd.f32 %v1049, %v1131
      %v1183 = vadd.f32 %v1050, %v1133
      %v1184 = vadd.f32 %v1051, %v1136
      %v1185 = vadd.f32 %v1052, %v1138
      %v1186 = vadd.f32 %v1053, %v1141
      %v1187 = vadd.f32 %v1054, %v1143
      %v1188 = vadd.f32 %v1055, %v1146
      %v1189 = vadd.f32 %v1056, %v1148
      %v1190 = vadd.f32 %v1057, %v1151
      %v1191 = vadd.f32 %v1058, %v1153
      %v1192 = vadd.f32 %v1059, %v1156
      %v1193 = vadd.f32 %v1060, %v1158
      %v1194 = vadd.f32 %v1061, %v1161
      %v1195 = vadd.f32 %v1062, %v1163
      %v1196 = vadd.f32 %v1063, %v1166
      %v1197 = vadd.f32 %v1064, %v1168
      %s1198 = scalar_lea.vmem %s1, 96
      %v1199 = vld [vmem:[%s1198] sm:$0xf]
      %v1200 = vld [vmem:[%s1198 + $0x4] sm:$0xf]
      %v1201 = vld [vmem:[%s1198 + $0x8] sm:$0xf]
      %v1202 = vld [vmem:[%s1198 + $0xc] sm:$0xf]
      %v1203 = vpack.c.bf16 %v203, %v202
      %v1208 = vunpack.c.l.b16 %v1199
      %v1209 = vunpack.c.l.b16 %v1200
      %v1210 = vunpack.c.l.b16 %v1201
      %v1211 = vunpack.c.l.b16 %v1202
      %v1212 = vpack.c.b16 %v1209, %v1208
      %v1213 = vpack.c.b16 %v1211, %v1210
      %v1217 = vsel %vm351, %v1203, 0
      %1219 = vmatpush.bf16.msra.mxu0 0
      %1220 = vmatpush.bf16.msra.mxu0 0
      %1221 = vmatpush.bf16.msra.mxu0 0
      %1222 = vmatpush.bf16.msra.mxu0 0
      %1223 = vmatpush.bf16.msra.mxu0 0
      %1224 = vmatpush.bf16.msra.mxu0 0
      %1225 = vmatpush.bf16.msra.mxu0 %v1213
      %1226 = vmatpush.bf16.msra.mxu0 %v1212
      %1227 = vmatmul.bf16.gmra.mxu0 %v489
      %v1228 = vpop.f32.mrf.mxu0
      %v1229 = vadd.f32 0.0, %v1228
      %v1230 = vpop.f32.mrf.mxu0
      %v1231 = vadd.f32 0.0, %v1230
      %1232 = vmatmul.bf16.gmra.mxu0 %v491
      %v1233 = vpop.f32.mrf.mxu0
      %v1234 = vadd.f32 0.0, %v1233
      %v1235 = vpop.f32.mrf.mxu0
      %v1236 = vadd.f32 0.0, %v1235
      %1237 = vmatmul.bf16.gmra.mxu0 %v493
      %v1238 = vpop.f32.mrf.mxu0
      %v1239 = vadd.f32 0.0, %v1238
      %v1240 = vpop.f32.mrf.mxu0
      %v1241 = vadd.f32 0.0, %v1240
      %1242 = vmatmul.bf16.gmra.mxu0 %v495
      %v1243 = vpop.f32.mrf.mxu0
      %v1244 = vadd.f32 0.0, %v1243
      %v1245 = vpop.f32.mrf.mxu0
      %v1246 = vadd.f32 0.0, %v1245
      %1247 = vmatmul.bf16.gmra.mxu0 %v497
      %v1248 = vpop.f32.mrf.mxu0
      %v1249 = vadd.f32 0.0, %v1248
      %v1250 = vpop.f32.mrf.mxu0
      %v1251 = vadd.f32 0.0, %v1250
      %1252 = vmatmul.bf16.gmra.mxu0 %v499
      %v1253 = vpop.f32.mrf.mxu0
      %v1254 = vadd.f32 0.0, %v1253
      %v1255 = vpop.f32.mrf.mxu0
      %v1256 = vadd.f32 0.0, %v1255
      %1257 = vmatmul.bf16.gmra.mxu0 %v501
      %v1258 = vpop.f32.mrf.mxu0
      %v1259 = vadd.f32 0.0, %v1258
      %v1260 = vpop.f32.mrf.mxu0
      %v1261 = vadd.f32 0.0, %v1260
      %1262 = vmatmul.bf16.gmra.mxu0 %v503
      %v1263 = vpop.f32.mrf.mxu0
      %v1264 = vadd.f32 0.0, %v1263
      %v1265 = vpop.f32.mrf.mxu0
      %v1266 = vadd.f32 0.0, %v1265
      %1267 = vmatmul.bf16.gmra.mxu0 %v505
      %v1268 = vpop.f32.mrf.mxu0
      %v1269 = vadd.f32 0.0, %v1268
      %v1270 = vpop.f32.mrf.mxu0
      %v1271 = vadd.f32 0.0, %v1270
      %1272 = vmatmul.bf16.gmra.mxu0 %v507
      %v1273 = vpop.f32.mrf.mxu0
      %v1274 = vadd.f32 0.0, %v1273
      %v1275 = vpop.f32.mrf.mxu0
      %v1276 = vadd.f32 0.0, %v1275
      %1277 = vmatmul.bf16.gmra.mxu0 %v509
      %v1278 = vpop.f32.mrf.mxu0
      %v1279 = vadd.f32 0.0, %v1278
      %v1280 = vpop.f32.mrf.mxu0
      %v1281 = vadd.f32 0.0, %v1280
      %1282 = vmatmul.bf16.gmra.mxu0 %v511
      %v1283 = vpop.f32.mrf.mxu0
      %v1284 = vadd.f32 0.0, %v1283
      %v1285 = vpop.f32.mrf.mxu0
      %v1286 = vadd.f32 0.0, %v1285
      %1287 = vmatmul.bf16.gmra.mxu0 %v819
      %v1288 = vpop.f32.mrf.mxu0
      %v1289 = vadd.f32 0.0, %v1288
      %v1290 = vpop.f32.mrf.mxu0
      %v1291 = vadd.f32 0.0, %v1290
      %1292 = vmatmul.bf16.gmra.mxu0 %v1217
      %v1293 = vpop.f32.mrf.mxu0
      %v1294 = vadd.f32 0.0, %v1293
      %v1295 = vpop.f32.mrf.mxu0
      %v1296 = vadd.f32 0.0, %v1295
      %1297 = vdwg.mxu0
      %v1298 = vadd.f32 %v1170, %v1229
      %v1299 = vadd.f32 %v1171, %v1231
      %v1300 = vadd.f32 %v1172, %v1234
      %v1301 = vadd.f32 %v1173, %v1236
      %v1302 = vadd.f32 %v1174, %v1239
      %v1303 = vadd.f32 %v1175, %v1241
      %v1304 = vadd.f32 %v1176, %v1244
      %v1305 = vadd.f32 %v1177, %v1246
      %v1306 = vadd.f32 %v1178, %v1249
      %v1307 = vadd.f32 %v1179, %v1251
      %v1308 = vadd.f32 %v1180, %v1254
      %v1309 = vadd.f32 %v1181, %v1256
      %v1310 = vadd.f32 %v1182, %v1259
      %v1311 = vadd.f32 %v1183, %v1261
      %v1312 = vadd.f32 %v1184, %v1264
      %v1313 = vadd.f32 %v1185, %v1266
      %v1314 = vadd.f32 %v1186, %v1269
      %v1315 = vadd.f32 %v1187, %v1271
      %v1316 = vadd.f32 %v1188, %v1274
      %v1317 = vadd.f32 %v1189, %v1276
      %v1318 = vadd.f32 %v1190, %v1279
      %v1319 = vadd.f32 %v1191, %v1281
      %v1320 = vadd.f32 %v1192, %v1284
      %v1321 = vadd.f32 %v1193, %v1286
      %v1322 = vadd.f32 %v1194, %v1289
      %v1323 = vadd.f32 %v1195, %v1291
      %v1324 = vadd.f32 %v1196, %v1294
      %v1325 = vadd.f32 %v1197, %v1296
      %s1326 = scalar_lea.vmem %s1, 112
      %v1327 = vld [vmem:[%s1326] sm:$0xf]
      %v1328 = vld [vmem:[%s1326 + $0x4] sm:$0xf]
      %v1329 = vld [vmem:[%s1326 + $0x8] sm:$0xf]
      %v1330 = vld [vmem:[%s1326 + $0xc] sm:$0xf]
      %v1331 = vshll.u32 %v1203, 16
      %v1333 = vrot.slane %v1331, 1
      %v1334 = vsel %vm227, %v939, %v1333
      %v1335 = vshrl.u32 %v1203, 16
      %v1337 = vor.u32 %v1335, %v1333
      %v1342 = vunpack.c.l.b16 %v1327
      %v1343 = vunpack.c.l.b16 %v1328
      %v1344 = vunpack.c.l.b16 %v1329
      %v1345 = vunpack.c.l.b16 %v1330
      %v1346 = vpack.c.b16 %v1343, %v1342
      %v1347 = vpack.c.b16 %v1345, %v1344
      %v1351 = vsel %vm351, %v1334, 0
      %v1354 = vsel %vm351, %v1337, 0
      %1356 = vmatpush.bf16.msra.mxu0 0
      %1357 = vmatpush.bf16.msra.mxu0 0
      %1358 = vmatpush.bf16.msra.mxu0 0
      %1359 = vmatpush.bf16.msra.mxu0 0
      %1360 = vmatpush.bf16.msra.mxu0 0
      %1361 = vmatpush.bf16.msra.mxu0 0
      %1362 = vmatpush.bf16.msra.mxu0 %v1347
      %1363 = vmatpush.bf16.msra.mxu0 %v1346
      %1364 = vmatmul.bf16.gmra.mxu0 %v359
      %v1365 = vpop.f32.mrf.mxu0
      %v1366 = vadd.f32 0.0, %v1365
      %v1367 = vpop.f32.mrf.mxu0
      %v1368 = vadd.f32 0.0, %v1367
      %1369 = vmatmul.bf16.gmra.mxu0 %v362
      %v1370 = vpop.f32.mrf.mxu0
      %v1371 = vadd.f32 0.0, %v1370
      %v1372 = vpop.f32.mrf.mxu0
      %v1373 = vadd.f32 0.0, %v1372
      %1374 = vmatmul.bf16.gmra.mxu0 %v365
      %v1375 = vpop.f32.mrf.mxu0
      %v1376 = vadd.f32 0.0, %v1375
      %v1377 = vpop.f32.mrf.mxu0
      %v1378 = vadd.f32 0.0, %v1377
      %1379 = vmatmul.bf16.gmra.mxu0 %v368
      %v1380 = vpop.f32.mrf.mxu0
      %v1381 = vadd.f32 0.0, %v1380
      %v1382 = vpop.f32.mrf.mxu0
      %v1383 = vadd.f32 0.0, %v1382
      %1384 = vmatmul.bf16.gmra.mxu0 %v371
      %v1385 = vpop.f32.mrf.mxu0
      %v1386 = vadd.f32 0.0, %v1385
      %v1387 = vpop.f32.mrf.mxu0
      %v1388 = vadd.f32 0.0, %v1387
      %1389 = vmatmul.bf16.gmra.mxu0 %v374
      %v1390 = vpop.f32.mrf.mxu0
      %v1391 = vadd.f32 0.0, %v1390
      %v1392 = vpop.f32.mrf.mxu0
      %v1393 = vadd.f32 0.0, %v1392
      %1394 = vmatmul.bf16.gmra.mxu0 %v377
      %v1395 = vpop.f32.mrf.mxu0
      %v1396 = vadd.f32 0.0, %v1395
      %v1397 = vpop.f32.mrf.mxu0
      %v1398 = vadd.f32 0.0, %v1397
      %1399 = vmatmul.bf16.gmra.mxu0 %v380
      %v1400 = vpop.f32.mrf.mxu0
      %v1401 = vadd.f32 0.0, %v1400
      %v1402 = vpop.f32.mrf.mxu0
      %v1403 = vadd.f32 0.0, %v1402
      %1404 = vmatmul.bf16.gmra.mxu0 %v383
      %v1405 = vpop.f32.mrf.mxu0
      %v1406 = vadd.f32 0.0, %v1405
      %v1407 = vpop.f32.mrf.mxu0
      %v1408 = vadd.f32 0.0, %v1407
      %1409 = vmatmul.bf16.gmra.mxu0 %v386
      %v1410 = vpop.f32.mrf.mxu0
      %v1411 = vadd.f32 0.0, %v1410
      %v1412 = vpop.f32.mrf.mxu0
      %v1413 = vadd.f32 0.0, %v1412
      %1414 = vmatmul.bf16.gmra.mxu0 %v389
      %v1415 = vpop.f32.mrf.mxu0
      %v1416 = vadd.f32 0.0, %v1415
      %v1417 = vpop.f32.mrf.mxu0
      %v1418 = vadd.f32 0.0, %v1417
      %1419 = vmatmul.bf16.gmra.mxu0 %v953
      %v1420 = vpop.f32.mrf.mxu0
      %v1421 = vadd.f32 0.0, %v1420
      %v1422 = vpop.f32.mrf.mxu0
      %v1423 = vadd.f32 0.0, %v1422
      %1424 = vmatmul.bf16.gmra.mxu0 %v1351
      %v1425 = vpop.f32.mrf.mxu0
      %v1426 = vadd.f32 0.0, %v1425
      %v1427 = vpop.f32.mrf.mxu0
      %v1428 = vadd.f32 0.0, %v1427
      %1429 = vmatmul.bf16.gmra.mxu0 %v1354
      %v1430 = vpop.f32.mrf.mxu0
      %v1431 = vadd.f32 0.0, %v1430
      %v1432 = vpop.f32.mrf.mxu0
      %v1433 = vadd.f32 0.0, %v1432
      %1434 = vdwg.mxu0
      %v1435 = vadd.f32 %v1298, %v1366
      %v1436 = vadd.f32 %v1299, %v1368
      %v1437 = vadd.f32 %v1300, %v1371
      %v1438 = vadd.f32 %v1301, %v1373
      %v1439 = vadd.f32 %v1302, %v1376
      %v1440 = vadd.f32 %v1303, %v1378
      %v1441 = vadd.f32 %v1304, %v1381
      %v1442 = vadd.f32 %v1305, %v1383
      %v1443 = vadd.f32 %v1306, %v1386
      %v1444 = vadd.f32 %v1307, %v1388
      %v1445 = vadd.f32 %v1308, %v1391
      %v1446 = vadd.f32 %v1309, %v1393
      %v1447 = vadd.f32 %v1310, %v1396
      %v1448 = vadd.f32 %v1311, %v1398
      %v1449 = vadd.f32 %v1312, %v1401
      %v1450 = vadd.f32 %v1313, %v1403
      %v1451 = vadd.f32 %v1314, %v1406
      %v1452 = vadd.f32 %v1315, %v1408
      %v1453 = vadd.f32 %v1316, %v1411
      %v1454 = vadd.f32 %v1317, %v1413
      %v1455 = vadd.f32 %v1318, %v1416
      %v1456 = vadd.f32 %v1319, %v1418
      %v1457 = vadd.f32 %v1320, %v1421
      %v1458 = vadd.f32 %v1321, %v1423
      %v1459 = vadd.f32 %v1322, %v1426
      %v1460 = vadd.f32 %v1323, %v1428
      %v1461 = vadd.f32 %v1324, %v1431
      %v1462 = vadd.f32 %v1325, %v1433
      %s1463 = scalar_lea.vmem %s1, 128
      %v1464 = vld [vmem:[%s1463] sm:$0xf]
      %v1465 = vld [vmem:[%s1463 + $0x4] sm:$0xf]
      %v1466 = vld [vmem:[%s1463 + $0x8] sm:$0xf]
      %v1467 = vld [vmem:[%s1463 + $0xc] sm:$0xf]
      %v1469 = vrot.slane %v1203, 1
      %v1470 = vsel %vm611, %v1071, %v1469
      %v1475 = vunpack.c.l.b16 %v1464
      %v1476 = vunpack.c.l.b16 %v1465
      %v1477 = vunpack.c.l.b16 %v1466
      %v1478 = vunpack.c.l.b16 %v1467
      %v1479 = vpack.c.b16 %v1476, %v1475
      %v1480 = vpack.c.b16 %v1478, %v1477
      %v1484 = vsel %vm351, %v1470, 0
      %v1487 = vsel %vm351, %v1469, 0
      %1489 = vmatpush.bf16.msra.mxu0 0
      %1490 = vmatpush.bf16.msra.mxu0 0
      %1491 = vmatpush.bf16.msra.mxu0 0
      %1492 = vmatpush.bf16.msra.mxu0 0
      %1493 = vmatpush.bf16.msra.mxu0 0
      %1494 = vmatpush.bf16.msra.mxu0 0
      %1495 = vmatpush.bf16.msra.mxu0 %v1480
      %1496 = vmatpush.bf16.msra.mxu0 %v1479
      %1497 = vmatmul.bf16.gmra.mxu0 %v658
      %v1498 = vpop.f32.mrf.mxu0
      %v1499 = vadd.f32 0.0, %v1498
      %v1500 = vpop.f32.mrf.mxu0
      %v1501 = vadd.f32 0.0, %v1500
      %1502 = vmatmul.bf16.gmra.mxu0 %v661
      %v1503 = vpop.f32.mrf.mxu0
      %v1504 = vadd.f32 0.0, %v1503
      %v1505 = vpop.f32.mrf.mxu0
      %v1506 = vadd.f32 0.0, %v1505
      %1507 = vmatmul.bf16.gmra.mxu0 %v664
      %v1508 = vpop.f32.mrf.mxu0
      %v1509 = vadd.f32 0.0, %v1508
      %v1510 = vpop.f32.mrf.mxu0
      %v1511 = vadd.f32 0.0, %v1510
      %1512 = vmatmul.bf16.gmra.mxu0 %v667
      %v1513 = vpop.f32.mrf.mxu0
      %v1514 = vadd.f32 0.0, %v1513
      %v1515 = vpop.f32.mrf.mxu0
      %v1516 = vadd.f32 0.0, %v1515
      %1517 = vmatmul.bf16.gmra.mxu0 %v670
      %v1518 = vpop.f32.mrf.mxu0
      %v1519 = vadd.f32 0.0, %v1518
      %v1520 = vpop.f32.mrf.mxu0
      %v1521 = vadd.f32 0.0, %v1520
      %1522 = vmatmul.bf16.gmra.mxu0 %v673
      %v1523 = vpop.f32.mrf.mxu0
      %v1524 = vadd.f32 0.0, %v1523
      %v1525 = vpop.f32.mrf.mxu0
      %v1526 = vadd.f32 0.0, %v1525
      %1527 = vmatmul.bf16.gmra.mxu0 %v676
      %v1528 = vpop.f32.mrf.mxu0
      %v1529 = vadd.f32 0.0, %v1528
      %v1530 = vpop.f32.mrf.mxu0
      %v1531 = vadd.f32 0.0, %v1530
      %1532 = vmatmul.bf16.gmra.mxu0 %v679
      %v1533 = vpop.f32.mrf.mxu0
      %v1534 = vadd.f32 0.0, %v1533
      %v1535 = vpop.f32.mrf.mxu0
      %v1536 = vadd.f32 0.0, %v1535
      %1537 = vmatmul.bf16.gmra.mxu0 %v682
      %v1538 = vpop.f32.mrf.mxu0
      %v1539 = vadd.f32 0.0, %v1538
      %v1540 = vpop.f32.mrf.mxu0
      %v1541 = vadd.f32 0.0, %v1540
      %1542 = vmatmul.bf16.gmra.mxu0 %v685
      %v1543 = vpop.f32.mrf.mxu0
      %v1544 = vadd.f32 0.0, %v1543
      %v1545 = vpop.f32.mrf.mxu0
      %v1546 = vadd.f32 0.0, %v1545
      %1547 = vmatmul.bf16.gmra.mxu0 %v688
      %v1548 = vpop.f32.mrf.mxu0
      %v1549 = vadd.f32 0.0, %v1548
      %v1550 = vpop.f32.mrf.mxu0
      %v1551 = vadd.f32 0.0, %v1550
      %1552 = vmatmul.bf16.gmra.mxu0 %v1086
      %v1553 = vpop.f32.mrf.mxu0
      %v1554 = vadd.f32 0.0, %v1553
      %v1555 = vpop.f32.mrf.mxu0
      %v1556 = vadd.f32 0.0, %v1555
      %1557 = vmatmul.bf16.gmra.mxu0 %v1484
      %v1558 = vpop.f32.mrf.mxu0
      %v1559 = vadd.f32 0.0, %v1558
      %v1560 = vpop.f32.mrf.mxu0
      %v1561 = vadd.f32 0.0, %v1560
      %1562 = vmatmul.bf16.gmra.mxu0 %v1487
      %v1563 = vpop.f32.mrf.mxu0
      %v1564 = vadd.f32 0.0, %v1563
      %v1565 = vpop.f32.mrf.mxu0
      %v1566 = vadd.f32 0.0, %v1565
      %1567 = vdwg.mxu0
      %v1568 = vadd.f32 %v1435, %v1499
      %v1569 = vadd.f32 %v1436, %v1501
      %v1570 = vadd.f32 %v1437, %v1504
      %v1571 = vadd.f32 %v1438, %v1506
      %v1572 = vadd.f32 %v1439, %v1509
      %v1573 = vadd.f32 %v1440, %v1511
      %v1574 = vadd.f32 %v1441, %v1514
      %v1575 = vadd.f32 %v1442, %v1516
      %v1576 = vadd.f32 %v1443, %v1519
      %v1577 = vadd.f32 %v1444, %v1521
      %v1578 = vadd.f32 %v1445, %v1524
      %v1579 = vadd.f32 %v1446, %v1526
      %v1580 = vadd.f32 %v1447, %v1529
      %v1581 = vadd.f32 %v1448, %v1531
      %v1582 = vadd.f32 %v1449, %v1534
      %v1583 = vadd.f32 %v1450, %v1536
      %v1584 = vadd.f32 %v1451, %v1539
      %v1585 = vadd.f32 %v1452, %v1541
      %v1586 = vadd.f32 %v1453, %v1544
      %v1587 = vadd.f32 %v1454, %v1546
      %v1588 = vadd.f32 %v1455, %v1549
      %v1589 = vadd.f32 %v1456, %v1551
      %v1590 = vadd.f32 %v1457, %v1554
      %v1591 = vadd.f32 %v1458, %v1556
      %v1592 = vadd.f32 %v1459, %v1559
      %v1593 = vadd.f32 %v1460, %v1561
      %v1594 = vadd.f32 %v1461, %v1564
      %v1595 = vadd.f32 %v1462, %v1566
      %v1596 = vld [vmem:[%s2] sm:$0x1]
      %v1598 = vperm.slane %v1596, 0
      %v1600 = vadd.f32 %v1568, %v1598
      %v1601 = vadd.f32 %v1569, %v1598
      %v1602 = vadd.f32 %v1570, %v1598
      %v1603 = vadd.f32 %v1571, %v1598
      %v1604 = vadd.f32 %v1572, %v1598
      %v1605 = vadd.f32 %v1573, %v1598
      %v1606 = vadd.f32 %v1574, %v1598
      %v1607 = vadd.f32 %v1575, %v1598
      %v1608 = vadd.f32 %v1576, %v1598
      %v1609 = vadd.f32 %v1577, %v1598
      %v1610 = vadd.f32 %v1578, %v1598
      %v1611 = vadd.f32 %v1579, %v1598
      %v1612 = vadd.f32 %v1580, %v1598
      %v1613 = vadd.f32 %v1581, %v1598
      %v1614 = vadd.f32 %v1582, %v1598
      %v1615 = vadd.f32 %v1583, %v1598
      %v1616 = vadd.f32 %v1584, %v1598
      %v1617 = vadd.f32 %v1585, %v1598
      %v1618 = vadd.f32 %v1586, %v1598
      %v1619 = vadd.f32 %v1587, %v1598
      %v1620 = vadd.f32 %v1588, %v1598
      %v1621 = vadd.f32 %v1589, %v1598
      %v1622 = vadd.f32 %v1590, %v1598
      %v1623 = vadd.f32 %v1591, %v1598
      %v1624 = vadd.f32 %v1592, %v1598
      %v1625 = vadd.f32 %v1593, %v1598
      %v1626 = vadd.f32 %v1594, %v1598
      %v1627 = vadd.f32 %v1595, %v1598
      %v1628 = vmax.f32 %v1600, 0.0
      %v1629 = vmax.f32 %v1601, 0.0
      %v1630 = vmax.f32 %v1602, 0.0
      %v1631 = vmax.f32 %v1603, 0.0
      %v1632 = vmax.f32 %v1604, 0.0
      %v1633 = vmax.f32 %v1605, 0.0
      %v1634 = vmax.f32 %v1606, 0.0
      %v1635 = vmax.f32 %v1607, 0.0
      %v1636 = vmax.f32 %v1608, 0.0
      %v1637 = vmax.f32 %v1609, 0.0
      %v1638 = vmax.f32 %v1610, 0.0
      %v1639 = vmax.f32 %v1611, 0.0
      %v1640 = vmax.f32 %v1612, 0.0
      %v1641 = vmax.f32 %v1613, 0.0
      %v1642 = vmax.f32 %v1614, 0.0
      %v1643 = vmax.f32 %v1615, 0.0
      %v1644 = vmax.f32 %v1616, 0.0
      %v1645 = vmax.f32 %v1617, 0.0
      %v1646 = vmax.f32 %v1618, 0.0
      %v1647 = vmax.f32 %v1619, 0.0
      %v1648 = vmax.f32 %v1620, 0.0
      %v1649 = vmax.f32 %v1621, 0.0
      %v1650 = vmax.f32 %v1622, 0.0
      %v1651 = vmax.f32 %v1623, 0.0
      %v1652 = vmax.f32 %v1624, 0.0
      %v1653 = vmax.f32 %v1625, 0.0
      %v1654 = vmax.f32 %v1626, 0.0
      %v1655 = vmax.f32 %v1627, 0.0
      %v1656 = vmax.f32 %v1628, %v1630
      %v1657 = vmax.f32 %v1629, %v1631
      %v1658 = vmax.f32 %v1630, %v1632
      %v1659 = vmax.f32 %v1631, %v1633
      %v1660 = vmax.f32 %v1632, %v1634
      %v1661 = vmax.f32 %v1633, %v1635
      %v1662 = vmax.f32 %v1634, %v1636
      %v1663 = vmax.f32 %v1635, %v1637
      %v1664 = vmax.f32 %v1636, %v1638
      %v1665 = vmax.f32 %v1637, %v1639
      %v1666 = vmax.f32 %v1638, %v1640
      %v1667 = vmax.f32 %v1639, %v1641
      %v1668 = vmax.f32 %v1640, %v1642
      %v1669 = vmax.f32 %v1641, %v1643
      %v1670 = vmax.f32 %v1642, %v1644
      %v1671 = vmax.f32 %v1643, %v1645
      %v1672 = vmax.f32 %v1644, %v1646
      %v1673 = vmax.f32 %v1645, %v1647
      %v1674 = vmax.f32 %v1646, %v1648
      %v1675 = vmax.f32 %v1647, %v1649
      %v1676 = vmax.f32 %v1648, %v1650
      %v1677 = vmax.f32 %v1649, %v1651
      %v1678 = vmax.f32 %v1650, %v1652
      %v1679 = vmax.f32 %v1651, %v1653
      %v1680 = vmax.f32 %v1652, %v1654
      %v1681 = vmax.f32 %v1653, %v1655
      %vm1708 = vcmask 1046528
      %v1709 = vrot.slane %v1656, 1
      %v1710 = vrot.slane %v1657, 1
      %v1711 = vsel %vm1708, %v1709, %v1710
      %v1712 = vrot.slane %v1658, 1
      %v1713 = vsel %vm1708, %v1710, %v1712
      %v1714 = vrot.slane %v1659, 1
      %v1715 = vsel %vm1708, %v1712, %v1714
      %v1716 = vrot.slane %v1660, 1
      %v1717 = vsel %vm1708, %v1714, %v1716
      %v1718 = vrot.slane %v1661, 1
      %v1719 = vsel %vm1708, %v1716, %v1718
      %v1720 = vrot.slane %v1662, 1
      %v1721 = vsel %vm1708, %v1718, %v1720
      %v1722 = vrot.slane %v1663, 1
      %v1723 = vsel %vm1708, %v1720, %v1722
      %v1724 = vrot.slane %v1664, 1
      %v1725 = vsel %vm1708, %v1722, %v1724
      %v1726 = vrot.slane %v1665, 1
      %v1727 = vsel %vm1708, %v1724, %v1726
      %v1728 = vrot.slane %v1666, 1
      %v1729 = vsel %vm1708, %v1726, %v1728
      %v1730 = vrot.slane %v1667, 1
      %v1731 = vsel %vm1708, %v1728, %v1730
      %v1732 = vrot.slane %v1668, 1
      %v1733 = vsel %vm1708, %v1730, %v1732
      %v1734 = vrot.slane %v1669, 1
      %v1735 = vsel %vm1708, %v1732, %v1734
      %v1736 = vrot.slane %v1670, 1
      %v1737 = vsel %vm1708, %v1734, %v1736
      %v1738 = vrot.slane %v1671, 1
      %v1739 = vsel %vm1708, %v1736, %v1738
      %v1740 = vrot.slane %v1672, 1
      %v1741 = vsel %vm1708, %v1738, %v1740
      %v1742 = vrot.slane %v1673, 1
      %v1743 = vsel %vm1708, %v1740, %v1742
      %v1744 = vrot.slane %v1674, 1
      %v1745 = vsel %vm1708, %v1742, %v1744
      %v1746 = vrot.slane %v1675, 1
      %v1747 = vsel %vm1708, %v1744, %v1746
      %v1748 = vrot.slane %v1676, 1
      %v1749 = vsel %vm1708, %v1746, %v1748
      %v1750 = vrot.slane %v1677, 1
      %v1751 = vsel %vm1708, %v1748, %v1750
      %v1752 = vrot.slane %v1678, 1
      %v1753 = vsel %vm1708, %v1750, %v1752
      %v1754 = vrot.slane %v1679, 1
      %v1755 = vsel %vm1708, %v1752, %v1754
      %v1756 = vrot.slane %v1680, 1
      %v1757 = vsel %vm1708, %v1754, %v1756
      %v1758 = vrot.slane %v1681, 1
      %v1759 = vsel %vm1708, %v1756, %v1758
      %v1786 = vmax.f32 %v1656, %v1711
      %v1787 = vmax.f32 %v1657, %v1713
      %v1788 = vmax.f32 %v1658, %v1715
      %v1789 = vmax.f32 %v1659, %v1717
      %v1790 = vmax.f32 %v1660, %v1719
      %v1791 = vmax.f32 %v1661, %v1721
      %v1792 = vmax.f32 %v1662, %v1723
      %v1793 = vmax.f32 %v1663, %v1725
      %v1794 = vmax.f32 %v1664, %v1727
      %v1795 = vmax.f32 %v1665, %v1729
      %v1796 = vmax.f32 %v1666, %v1731
      %v1797 = vmax.f32 %v1667, %v1733
      %v1798 = vmax.f32 %v1668, %v1735
      %v1799 = vmax.f32 %v1669, %v1737
      %v1800 = vmax.f32 %v1670, %v1739
      %v1801 = vmax.f32 %v1671, %v1741
      %v1802 = vmax.f32 %v1672, %v1743
      %v1803 = vmax.f32 %v1673, %v1745
      %v1804 = vmax.f32 %v1674, %v1747
      %v1805 = vmax.f32 %v1675, %v1749
      %v1806 = vmax.f32 %v1676, %v1751
      %v1807 = vmax.f32 %v1677, %v1753
      %v1808 = vmax.f32 %v1678, %v1755
      %v1809 = vmax.f32 %v1679, %v1757
      %v1810 = vmax.f32 %v1680, %v1759
      %v1811 = vmax.f32 %v1681, %v1758
      %vm1812 = vcmask 523264
      %1813 = vst.msk [vmem:[%s170] sm:$0xff] %vm1812, %v1786
      %1814 = vst.msk [vmem:[%s170 + $0x8] sm:$0xff] %vm1812, %v1787
      %1815 = vst.msk [vmem:[%s170 + $0x10] sm:$0xff] %vm1812, %v1788
      %1816 = vst.msk [vmem:[%s170 + $0x18] sm:$0xff] %vm1812, %v1789
      %1817 = vst.msk [vmem:[%s170 + $0x20] sm:$0xff] %vm1812, %v1790
      %1818 = vst.msk [vmem:[%s170 + $0x28] sm:$0xff] %vm1812, %v1791
      %1819 = vst.msk [vmem:[%s170 + $0x30] sm:$0xff] %vm1812, %v1792
      %1820 = vst.msk [vmem:[%s170 + $0x38] sm:$0xff] %vm1812, %v1793
      %1821 = vst.msk [vmem:[%s170 + $0x40] sm:$0xff] %vm1812, %v1794
      %1822 = vst.msk [vmem:[%s170 + $0x48] sm:$0xff] %vm1812, %v1795
      %1823 = vst.msk [vmem:[%s170 + $0x50] sm:$0xff] %vm1812, %v1796
      %1824 = vst.msk [vmem:[%s170 + $0x58] sm:$0xff] %vm1812, %v1797
      %1825 = vst.msk [vmem:[%s170 + $0x60] sm:$0xff] %vm1812, %v1798
      %1826 = vst.msk [vmem:[%s170 + $0x68] sm:$0xff] %vm1812, %v1799
      %1827 = vst.msk [vmem:[%s170 + $0x70] sm:$0xff] %vm1812, %v1800
      %1828 = vst.msk [vmem:[%s170 + $0x78] sm:$0xff] %vm1812, %v1801
      %1829 = vst.msk [vmem:[%s170 + $0x80] sm:$0xff] %vm1812, %v1802
      %1830 = vst.msk [vmem:[%s170 + $0x88] sm:$0xff] %vm1812, %v1803
      %1831 = vst.msk [vmem:[%s170 + $0x90] sm:$0xff] %vm1812, %v1804
      %1832 = vst.msk [vmem:[%s170 + $0x98] sm:$0xff] %vm1812, %v1805
      %1833 = vst.msk [vmem:[%s170 + $0xa0] sm:$0xff] %vm1812, %v1806
      %1834 = vst.msk [vmem:[%s170 + $0xa8] sm:$0xff] %vm1812, %v1807
      %1835 = vst.msk [vmem:[%s170 + $0xb0] sm:$0xff] %vm1812, %v1808
      %1836 = vst.msk [vmem:[%s170 + $0xb8] sm:$0xff] %vm1812, %v1809
      %1837 = vst.msk [vmem:[%s170 + $0xc0] sm:$0xff] %vm1812, %v1810
      %vm1838 = vcmask 520192
      %1839 = vst.msk [vmem:[%s170 + $0xc8] sm:$0x1f] %vm1838, %v1811
      %p1840 = scmp.lt.s32.totalorder %s14, 1
      %s1841 = scalar_select %p1840, %s14, 1
      %s1842 = smul.addr %s1841, 26
      %s1843 = smul.addr %s1842, 8
      %s1844 = scalar_lea.vmem %s3, %s1843
      // Predicated region
      $region33: #{simple_cnn_forward.4} parent=31 // pred_check
        %p1845 = pneg %p100
      $region34: #{simple_cnn_forward.4} parent=31 // pred_check_branch
        %1847 = sbr.rel (%p1845) target = $region36
      $region35: #{simple_cnn_forward.4} parent=31 // pred_region
        _
      $region36: #{simple_cnn_forward.4} parent=31 // pred_fallthru
        _
    $region32: #{simple_cnn_forward.4} parent=5 // pred_fallthru
      _
    %p1848 = scmp.le.s32.totalorder 2, %s9
    // Predicated region
    $region37: #{simple_cnn_forward.4} parent=5 // pred_check
      %p1849 = pneg %p1848
    $region38: #{simple_cnn_forward.4} parent=5 // pred_check_branch
      %1851 = sbr.rel (%p1849) target = $region40
    $region39: #{simple_cnn_forward.4} parent=5 // pred_region
      %s1852 = ssub.s32 %s9, 2
      // Predicated region
      $region41: #{simple_cnn_forward.4} parent=39 // pred_check
        %p1853 = pneg %p106
      $region42: #{simple_cnn_forward.4} parent=39 // pred_check_branch
        %1855 = sbr.rel (%p1853) target = $region44
      $region43: #{simple_cnn_forward.4} parent=39 // pred_region
        %p1856 = scmp.lt.s32.totalorder %s15, 1
        %s1857 = scalar_select %p1856, %s15, 1
        %s1858 = smul.addr %s1857, 26
        %s1859 = smul.addr %s1858, 8
        %s1860 = scalar_lea.vmem %s3, %s1859
      $region44: #{simple_cnn_forward.4} parent=39 // pred_fallthru
        _
    $region40: #{simple_cnn_forward.4} parent=5 // pred_fallthru
      _
  $region6: #{simple_cnn_forward.4} parent=0 // loop_footer
    %s13 = sadd.s32 1, %s9
  $region7: #{simple_cnn_forward.4} parent=0 // loop_footer_branch
    %8 = sbr.rel target = $region3
  $region8: #{simple_cnn_forward.4} parent=0 // loop_exit
    _

// kernel: simple_cnn_forward.3
$region0: #{simple_cnn_forward.3}
  #allocation0 [shape = 'u32[]', space=smem, size = 0x4, offset = 0x4, fixed_abs, tag = 'smem constant byte address 0x4 - core index']
  #allocation1 [shape = 'u32[72,128]{1,0:T(1,128)}', space=vmem, size = 0x9000, scoped, tag = 'internal scratch']
  %s0 = inlined_call_operand.vmem [shape: f32[2,900,1], index: 0, kind: input, shape index: {}]
  %s1 = inlined_call_operand.vmem [shape: f32[9,1,32], index: 1, kind: input, shape index: {}]
  %s2 = inlined_call_operand.vmem [shape: f32[1,32], index: 2, kind: input, shape index: {}]
  %s3 = inlined_call_operand.vmem [shape: f32[2,807,32], index: 3, kind: output, shape index: {}]
  %s4 = sld [smem:[#allocation0]]
  $region45: #{simple_cnn_forward.3} parent=0
    _
  %s6 = ssub.s32 1, %s4
  %s7 = scalar_select 0, %s6, %s4
  loop: start=0, step=1, limit=4
  $region2: #{simple_cnn_forward.3} parent=0 // loop_pre_header
    _
  $region3: #{simple_cnn_forward.3} parent=0 // loop_header
    %s9 = sphi 0, %s13
    %p10 = scmp.ge.s32.totalorder %s9, 4
    %s19 = sphi 0, %s21
    %s22 = sphi 0, %s19
    %s23 = sphi 0, %s22
    %s39 = sphi 0, %s23
    %s43 = sphi 0, %s43
    %s45 = sphi 0, %s43
    %s46 = sphi 0, %s45
    %s60 = sphi 0, %s46
    %s64 = sphi 0, %s64
    %s66 = sphi 0, %s64
    %s67 = sphi 0, %s66
    %s81 = sphi 0, %s67
    %s87 = sphi 0, %s89
    %s90 = sphi 0, %s87
    %s91 = sphi 0, %s90
    %s107 = sphi 0, %s91
  $region4: #{simple_cnn_forward.3} parent=0 // loop_header_branch
    %12 = sbr.rel (%p10) target = $region8
  $region5: #{simple_cnn_forward.3} parent=0 // loop_body
    %s14 = ssub.s32 %s9, 1
    %s15 = ssub.s32 %s9, 2
    %s16 = sadd.s32 %s9, 1
    %s17 = ssub.s32 %s9, %s16
    %p18 = scmp.eq.s32.totalorder %s17, 0
    %s20 = sadd.s32 %s19, 1
    %s21 = scalar_select %p18, %s19, %s20
    %p24 = pneg %p18
    %p25 = scmp.eq.s32.totalorder %s9, 1
    %p26 = por %p24, %p25
    %p27 = scmp.ne.s32.totalorder %s19, %s22
    %p28 = scmp.eq.s32.totalorder %s9, 0
    %p29 = por %p27, %p28
    %p30 = scmp.ne.s32.totalorder %s19, %s22
    %p31 = scmp.eq.s32.totalorder %s14, 1
    %p32 = por %p30, %p31
    %p33 = scmp.ne.s32.totalorder %s22, %s23
    %p34 = scmp.eq.s32.totalorder %s14, 0
    %p35 = por %p33, %p34
    %p36 = scmp.ne.s32.totalorder %s22, %s23
    %p37 = scmp.eq.s32.totalorder %s15, 1
    %p38 = por %p36, %p37
    %p40 = scmp.ne.s32.totalorder %s23, %s39
    %p41 = scmp.eq.s32.totalorder %s15, 0
    %p42 = por %p40, %p41
    %s44 = sadd.s32 %s43, 1
    %p47 = scmp.eq.s32.totalorder %s9, 1
    %p48 = scmp.ne.s32.totalorder %s43, %s45
    %p49 = scmp.eq.s32.totalorder %s9, 0
    %p50 = por %p48, %p49
    %p51 = scmp.ne.s32.totalorder %s43, %s45
    %p52 = scmp.eq.s32.totalorder %s14, 1
    %p53 = por %p51, %p52
    %p54 = scmp.ne.s32.totalorder %s45, %s46
    %p55 = scmp.eq.s32.totalorder %s14, 0
    %p56 = por %p54, %p55
    %p57 = scmp.ne.s32.totalorder %s45, %s46
    %p58 = scmp.eq.s32.totalorder %s15, 1
    %p59 = por %p57, %p58
    %p61 = scmp.ne.s32.totalorder %s46, %s60
    %p62 = scmp.eq.s32.totalorder %s15, 0
    %p63 = por %p61, %p62
    %s65 = sadd.s32 %s64, 1
    %p68 = scmp.eq.s32.totalorder %s9, 1
    %p69 = scmp.ne.s32.totalorder %s64, %s66
    %p70 = scmp.eq.s32.totalorder %s9, 0
    %p71 = por %p69, %p70
    %p72 = scmp.ne.s32.totalorder %s64, %s66
    %p73 = scmp.eq.s32.totalorder %s14, 1
    %p74 = por %p72, %p73
    %p75 = scmp.ne.s32.totalorder %s66, %s67
    %p76 = scmp.eq.s32.totalorder %s14, 0
    %p77 = por %p75, %p76
    %p78 = scmp.ne.s32.totalorder %s66, %s67
    %p79 = scmp.eq.s32.totalorder %s15, 1
    %p80 = por %p78, %p79
    %p82 = scmp.ne.s32.totalorder %s67, %s81
    %p83 = scmp.eq.s32.totalorder %s15, 0
    %p84 = por %p82, %p83
    %s85 = ssub.s32 %s9, %s16
    %p86 = scmp.eq.s32.totalorder %s85, 0
    %s88 = sadd.s32 %s87, 1
    %s89 = scalar_select %p86, %s87, %s88
    %p92 = pneg %p86
    %p93 = scmp.eq.s32.totalorder %s9, 1
    %p94 = por %p92, %p93
    %p95 = scmp.ne.s32.totalorder %s87, %s90
    %p96 = scmp.eq.s32.totalorder %s9, 0
    %p97 = por %p95, %p96
    %p98 = scmp.ne.s32.totalorder %s87, %s90
    %p99 = scmp.eq.s32.totalorder %s14, 1
    %p100 = por %p98, %p99
    %p101 = scmp.ne.s32.totalorder %s90, %s91
    %p102 = scmp.eq.s32.totalorder %s14, 0
    %p103 = por %p101, %p102
    %p104 = scmp.ne.s32.totalorder %s90, %s91
    %p105 = scmp.eq.s32.totalorder %s15, 1
    %p106 = por %p104, %p105
    %p108 = scmp.ne.s32.totalorder %s91, %s107
    %p109 = scmp.eq.s32.totalorder %s15, 0
    %p110 = por %p108, %p109
    %p111 = scmp.le.s32.totalorder 1, %s9
    %p112 = scmp.lt.s32.totalorder %s9, 3
    %p113 = pnand %p111, %p112
    %p114 = pneg %p113
    // Predicated region
    $region9: #{simple_cnn_forward.3} parent=5 // pred_check
      _
    $region10: #{simple_cnn_forward.3} parent=5 // pred_check_branch
      %116 = sbr.rel (%p113) target = $region12
    $region11: #{simple_cnn_forward.3} parent=5 // pred_region
      %s117 = ssub.s32 %s9, 1
      // Predicated region
      $region13: #{simple_cnn_forward.3} parent=11 // pred_check
        %p118 = pneg %p56
      $region14: #{simple_cnn_forward.3} parent=11 // pred_check_branch
        %120 = sbr.rel (%p118) target = $region16
      $region15: #{simple_cnn_forward.3} parent=11 // pred_region
        _
      $region16: #{simple_cnn_forward.3} parent=11 // pred_fallthru
        _
      // Predicated region
      $region17: #{simple_cnn_forward.3} parent=11 // pred_check
        %p121 = pneg %p77
      $region18: #{simple_cnn_forward.3} parent=11 // pred_check_branch
        %123 = sbr.rel (%p121) target = $region20
      $region19: #{simple_cnn_forward.3} parent=11 // pred_region
        _
      $region20: #{simple_cnn_forward.3} parent=11 // pred_fallthru
        _
    $region12: #{simple_cnn_forward.3} parent=5 // pred_fallthru
      _
    %p124 = scmp.lt.s32.totalorder %s9, 2
    // Predicated region
    $region21: #{simple_cnn_forward.3} parent=5 // pred_check
      %p125 = pneg %p124
    $region22: #{simple_cnn_forward.3} parent=5 // pred_check_branch
      %127 = sbr.rel (%p125) target = $region24
    $region23: #{simple_cnn_forward.3} parent=5 // pred_region
      // Predicated region
      $region25: #{simple_cnn_forward.3} parent=23 // pred_check
        %p128 = pneg %p29
      $region26: #{simple_cnn_forward.3} parent=23 // pred_check_branch
        %130 = sbr.rel (%p128) target = $region28
      $region27: #{simple_cnn_forward.3} parent=23 // pred_region
        %p131 = scmp.lt.s32.totalorder %s9, 1
        %s132 = scalar_select %p131, %s9, 1
        %s133 = smul.addr %s132, 113
        %s134 = smul.addr %s133, 8
        %s135 = scalar_lea.vmem %s0, %s134
      $region28: #{simple_cnn_forward.3} parent=23 // pred_fallthru
        _
    $region24: #{simple_cnn_forward.3} parent=5 // pred_fallthru
      _
    %p136 = scmp.le.s32.totalorder 1, %s9
    %p137 = scmp.lt.s32.totalorder %s9, 3
    %p138 = pnand %p136, %p137
    %p139 = pneg %p138
    // Predicated region
    $region29: #{simple_cnn_forward.3} parent=5 // pred_check
      _
    $region30: #{simple_cnn_forward.3} parent=5 // pred_check_branch
      %141 = sbr.rel (%p138) target = $region32
    $region31: #{simple_cnn_forward.3} parent=5 // pred_region
      %s142 = ssub.s32 %s9, 1
      %p143 = scmp.lt.s32.totalorder %s14, 1
      %s144 = scalar_select %p143, %s14, 1
      %s145 = smul.addr %s144, 113
      %s146 = smul.addr %s145, 8
      %s147 = scalar_lea.vmem %s0, %s146
      %p148 = pneg %p35
      %p149 = pneg %p32
      %p150 = pneg %p56
      %p151 = pneg %p53
      %p152 = pneg %p77
      %p153 = pneg %p74
      %p154 = pneg %p103
      %p155 = pneg %p100
      %p156 = scmp.lt.s32.totalorder %s14, 1
      %s157 = scalar_select %p156, %s14, 1
      %s158 = smul.addr %s157, 101
      %s159 = smul.addr %s158, 8
      %s160 = scalar_lea.vmem %s3, %s159
      %p161 = scmp.lt.s32.totalorder %s14, 1
      %s162 = scalar_select %p161, %s14, 1
      %s163 = smul.addr %s162, 113
      %s164 = smul.addr %s163, 8
      %s165 = scalar_lea.vmem %s0, %s164
      %p166 = scmp.lt.s32.totalorder %s14, 1
      %s167 = scalar_select %p166, %s14, 1
      %s168 = smul.addr %s167, 101
      %s169 = smul.addr %s168, 8
      %s170 = scalar_lea.vmem %s3, %s169
      %v171 = vld [vmem:[%s165] sm:$0xff]
      %v172 = vld [vmem:[%s165 + $0x8] sm:$0xff]
      %v173 = vld [vmem:[%s165 + $0x10] sm:$0xff]
      %v174 = vld [vmem:[%s165 + $0x18] sm:$0xff]
      %v175 = vld [vmem:[%s165 + $0x20] sm:$0xff]
      %v176 = vld [vmem:[%s165 + $0x28] sm:$0xff]
      %v177 = vld [vmem:[%s165 + $0x30] sm:$0xff]
      %v178 = vld [vmem:[%s165 + $0x38] sm:$0xff]
      %v179 = vld [vmem:[%s165 + $0x40] sm:$0xff]
      %v180 = vld [vmem:[%s165 + $0x48] sm:$0xff]
      %v181 = vld [vmem:[%s165 + $0x50] sm:$0xff]
      %v182 = vld [vmem:[%s165 + $0x58] sm:$0xff]
      %v183 = vld [vmem:[%s165 + $0x60] sm:$0xff]
      %v184 = vld [vmem:[%s165 + $0x68] sm:$0xff]
      %v185 = vld [vmem:[%s165 + $0x70] sm:$0xff]
      %v186 = vld [vmem:[%s165 + $0x78] sm:$0xff]
      %v187 = vld [vmem:[%s165 + $0x80] sm:$0xff]
      %v188 = vld [vmem:[%s165 + $0x88] sm:$0xff]
      %v189 = vld [vmem:[%s165 + $0x90] sm:$0xff]
      %v190 = vld [vmem:[%s165 + $0x98] sm:$0xff]
      %v191 = vld [vmem:[%s165 + $0xa0] sm:$0xff]
      %v192 = vld [vmem:[%s165 + $0xa8] sm:$0xff]
      %v193 = vld [vmem:[%s165 + $0xb0] sm:$0xff]
      %v194 = vld [vmem:[%s165 + $0xb8] sm:$0xff]
      %v195 = vld [vmem:[%s165 + $0xc0] sm:$0xff]
      %v196 = vld [vmem:[%s165 + $0xc8] sm:$0xff]
      %v197 = vld [vmem:[%s165 + $0xd0] sm:$0xff]
      %v198 = vld [vmem:[%s165 + $0xd8] sm:$0xff]
      %v199 = vld [vmem:[%s165 + $0xe0] sm:$0xff]
      %v200 = vld [vmem:[%s165 + $0xe8] sm:$0xff]
      %v201 = vld [vmem:[%s165 + $0xf0] sm:$0xff]
      %v202 = vld [vmem:[%s165 + $0xf8] sm:$0xff]
      %v203 = vld [vmem:[%s165 + $0x100] sm:$0xff]
      %v204 = vld [vmem:[%s165 + $0x108] sm:$0xff]
      %v205 = vld [vmem:[%s165 + $0x110] sm:$0xff]
      %v206 = vld [vmem:[%s165 + $0x118] sm:$0xff]
      %v207 = vld [vmem:[%s165 + $0x120] sm:$0xff]
      %v208 = vld [vmem:[%s165 + $0x128] sm:$0xff]
      %v209 = vld [vmem:[%s165 + $0x130] sm:$0xff]
      %v210 = vld [vmem:[%s165 + $0x138] sm:$0xff]
      %v211 = vld [vmem:[%s165 + $0x140] sm:$0xff]
      %v212 = vld [vmem:[%s165 + $0x148] sm:$0xff]
      %v213 = vld [vmem:[%s165 + $0x150] sm:$0xff]
      %v214 = vld [vmem:[%s165 + $0x158] sm:$0xff]
      %v215 = vld [vmem:[%s165 + $0x160] sm:$0xff]
      %v216 = vld [vmem:[%s165 + $0x168] sm:$0xff]
      %v217 = vld [vmem:[%s165 + $0x170] sm:$0xff]
      %v218 = vld [vmem:[%s165 + $0x178] sm:$0xff]
      %v219 = vld [vmem:[%s165 + $0x180] sm:$0xff]
      %v220 = vld [vmem:[%s165 + $0x188] sm:$0xff]
      %v221 = vld [vmem:[%s165 + $0x190] sm:$0xff]
      %v222 = vld [vmem:[%s165 + $0x198] sm:$0xff]
      %v223 = vld [vmem:[%s165 + $0x1a0] sm:$0xff]
      %v224 = vld [vmem:[%s165 + $0x1a8] sm:$0xff]
      %v225 = vld [vmem:[%s165 + $0x1b0] sm:$0xff]
      %v226 = vld [vmem:[%s165 + $0x1b8] sm:$0xff]
      %v227 = vld [vmem:[%s165 + $0x1c0] sm:$0xff]
      %v228 = vld [vmem:[%s165 + $0x1c8] sm:$0xff]
      %v229 = vld [vmem:[%s165 + $0x1d0] sm:$0xff]
      %v230 = vld [vmem:[%s165 + $0x1d8] sm:$0xff]
      %v231 = vld [vmem:[%s165 + $0x1e0] sm:$0xff]
      %v232 = vld [vmem:[%s165 + $0x1e8] sm:$0xff]
      %v233 = vld [vmem:[%s165 + $0x1f0] sm:$0xff]
      %v234 = vld [vmem:[%s165 + $0x1f8] sm:$0xff]
      %v235 = vld [vmem:[%s165 + $0x200] sm:$0xff]
      %v236 = vld [vmem:[%s165 + $0x208] sm:$0xff]
      %v237 = vld [vmem:[%s165 + $0x210] sm:$0xff]
      %v238 = vld [vmem:[%s165 + $0x218] sm:$0xff]
      %v239 = vld [vmem:[%s165 + $0x220] sm:$0xff]
      %v240 = vld [vmem:[%s165 + $0x228] sm:$0xff]
      %v241 = vld [vmem:[%s165 + $0x230] sm:$0xff]
      %v242 = vld [vmem:[%s165 + $0x238] sm:$0xff]
      %v243 = vld [vmem:[%s165 + $0x240] sm:$0xff]
      %v244 = vld [vmem:[%s165 + $0x248] sm:$0xff]
      %v245 = vld [vmem:[%s165 + $0x250] sm:$0xff]
      %v246 = vld [vmem:[%s165 + $0x258] sm:$0xff]
      %v247 = vld [vmem:[%s165 + $0x260] sm:$0xff]
      %v248 = vld [vmem:[%s165 + $0x268] sm:$0xff]
      %v249 = vld [vmem:[%s165 + $0x270] sm:$0xff]
      %v250 = vld [vmem:[%s165 + $0x278] sm:$0xff]
      %v251 = vld [vmem:[%s165 + $0x280] sm:$0xff]
      %v252 = vld [vmem:[%s165 + $0x288] sm:$0xff]
      %v253 = vld [vmem:[%s165 + $0x290] sm:$0xff]
      %v254 = vld [vmem:[%s165 + $0x298] sm:$0xff]
      %v255 = vld [vmem:[%s165 + $0x2a0] sm:$0xff]
      %v256 = vld [vmem:[%s165 + $0x2a8] sm:$0xff]
      %v257 = vld [vmem:[%s165 + $0x2b0] sm:$0xff]
      %v258 = vld [vmem:[%s165 + $0x2b8] sm:$0xff]
      %v259 = vld [vmem:[%s165 + $0x2c0] sm:$0xff]
      %v260 = vld [vmem:[%s165 + $0x2c8] sm:$0xff]
      %v261 = vld [vmem:[%s165 + $0x2d0] sm:$0xff]
      %v262 = vld [vmem:[%s165 + $0x2d8] sm:$0xff]
      %v263 = vld [vmem:[%s165 + $0x2e0] sm:$0xff]
      %v264 = vld [vmem:[%s165 + $0x2e8] sm:$0xff]
      %v265 = vld [vmem:[%s165 + $0x2f0] sm:$0xff]
      %v266 = vld [vmem:[%s165 + $0x2f8] sm:$0xff]
      %v267 = vld [vmem:[%s165 + $0x300] sm:$0xff]
      %v268 = vld [vmem:[%s165 + $0x308] sm:$0xff]
      %v269 = vld [vmem:[%s165 + $0x310] sm:$0xff]
      %v270 = vld [vmem:[%s165 + $0x318] sm:$0xff]
      %v271 = vld [vmem:[%s165 + $0x320] sm:$0xff]
      %v272 = vld [vmem:[%s165 + $0x328] sm:$0xff]
      %v273 = vld [vmem:[%s165 + $0x330] sm:$0xff]
      %v274 = vld [vmem:[%s165 + $0x338] sm:$0xff]
      %v275 = vld [vmem:[%s165 + $0x340] sm:$0xff]
      %v276 = vld [vmem:[%s165 + $0x348] sm:$0xff]
      %v277 = vld [vmem:[%s165 + $0x350] sm:$0xff]
      %v278 = vld [vmem:[%s165 + $0x358] sm:$0xff]
      %v279 = vld [vmem:[%s165 + $0x360] sm:$0xff]
      %v280 = vld [vmem:[%s165 + $0x368] sm:$0xff]
      %v281 = vld [vmem:[%s165 + $0x370] sm:$0xff]
      %v282 = vld [vmem:[%s165 + $0x378] sm:$0xff]
      %v283 = vld [vmem:[%s165 + $0x380] sm:$0xf]
      %v284 = vld [vmem:[%s1] sm:$0x1]
      %286 = vset.pattern.permute.xlu0 0
      %287 = vperm.xlu0 %286, %v171
      %v288 = vpop.permute.xlu0 %287
      %291 = vset.pattern.permute.xlu0 0
      %292 = vperm.xlu0 %291, %v172
      %v293 = vpop.permute.xlu0 %292
      %296 = vset.pattern.permute.xlu0 0
      %297 = vperm.xlu0 %296, %v173
      %v298 = vpop.permute.xlu0 %297
      %301 = vset.pattern.permute.xlu0 0
      %302 = vperm.xlu0 %301, %v174
      %v303 = vpop.permute.xlu0 %302
      %306 = vset.pattern.permute.xlu0 0
      %307 = vperm.xlu0 %306, %v175
      %v308 = vpop.permute.xlu0 %307
      %311 = vset.pattern.permute.xlu0 0
      %312 = vperm.xlu0 %311, %v176
      %v313 = vpop.permute.xlu0 %312
      %316 = vset.pattern.permute.xlu0 0
      %317 = vperm.xlu0 %316, %v177
      %v318 = vpop.permute.xlu0 %317
      %321 = vset.pattern.permute.xlu0 0
      %322 = vperm.xlu0 %321, %v178
      %v323 = vpop.permute.xlu0 %322
      %326 = vset.pattern.permute.xlu0 0
      %327 = vperm.xlu0 %326, %v179
      %v328 = vpop.permute.xlu0 %327
      %331 = vset.pattern.permute.xlu0 0
      %332 = vperm.xlu0 %331, %v180
      %v333 = vpop.permute.xlu0 %332
      %336 = vset.pattern.permute.xlu0 0
      %337 = vperm.xlu0 %336, %v181
      %v338 = vpop.permute.xlu0 %337
      %341 = vset.pattern.permute.xlu0 0
      %342 = vperm.xlu0 %341, %v182
      %v343 = vpop.permute.xlu0 %342
      %346 = vset.pattern.permute.xlu0 0
      %347 = vperm.xlu0 %346, %v183
      %v348 = vpop.permute.xlu0 %347
      %351 = vset.pattern.permute.xlu0 0
      %352 = vperm.xlu0 %351, %v184
      %v353 = vpop.permute.xlu0 %352
      %356 = vset.pattern.permute.xlu0 0
      %357 = vperm.xlu0 %356, %v185
      %v358 = vpop.permute.xlu0 %357
      %361 = vset.pattern.permute.xlu0 0
      %362 = vperm.xlu0 %361, %v186
      %v363 = vpop.permute.xlu0 %362
      %366 = vset.pattern.permute.xlu0 0
      %367 = vperm.xlu0 %366, %v187
      %v368 = vpop.permute.xlu0 %367
      %371 = vset.pattern.permute.xlu0 0
      %372 = vperm.xlu0 %371, %v188
      %v373 = vpop.permute.xlu0 %372
      %376 = vset.pattern.permute.xlu0 0
      %377 = vperm.xlu0 %376, %v189
      %v378 = vpop.permute.xlu0 %377
      %381 = vset.pattern.permute.xlu0 0
      %382 = vperm.xlu0 %381, %v190
      %v383 = vpop.permute.xlu0 %382
      %386 = vset.pattern.permute.xlu0 0
      %387 = vperm.xlu0 %386, %v191
      %v388 = vpop.permute.xlu0 %387
      %391 = vset.pattern.permute.xlu0 0
      %392 = vperm.xlu0 %391, %v192
      %v393 = vpop.permute.xlu0 %392
      %396 = vset.pattern.permute.xlu0 0
      %397 = vperm.xlu0 %396, %v193
      %v398 = vpop.permute.xlu0 %397
      %401 = vset.pattern.permute.xlu0 0
      %402 = vperm.xlu0 %401, %v194
      %v403 = vpop.permute.xlu0 %402
      %406 = vset.pattern.permute.xlu0 0
      %407 = vperm.xlu0 %406, %v195
      %v408 = vpop.permute.xlu0 %407
      %411 = vset.pattern.permute.xlu0 0
      %412 = vperm.xlu0 %411, %v196
      %v413 = vpop.permute.xlu0 %412
      %416 = vset.pattern.permute.xlu0 0
      %417 = vperm.xlu0 %416, %v197
      %v418 = vpop.permute.xlu0 %417
      %421 = vset.pattern.permute.xlu0 0
      %422 = vperm.xlu0 %421, %v198
      %v423 = vpop.permute.xlu0 %422
      %426 = vset.pattern.permute.xlu0 0
      %427 = vperm.xlu0 %426, %v199
      %v428 = vpop.permute.xlu0 %427
      %431 = vset.pattern.permute.xlu0 0
      %432 = vperm.xlu0 %431, %v200
      %v433 = vpop.permute.xlu0 %432
      %436 = vset.pattern.permute.xlu0 0
      %437 = vperm.xlu0 %436, %v201
      %v438 = vpop.permute.xlu0 %437
      %441 = vset.pattern.permute.xlu0 0
      %442 = vperm.xlu0 %441, %v202
      %v443 = vpop.permute.xlu0 %442
      %446 = vset.pattern.permute.xlu0 0
      %447 = vperm.xlu0 %446, %v203
      %v448 = vpop.permute.xlu0 %447
      %451 = vset.pattern.permute.xlu0 0
      %452 = vperm.xlu0 %451, %v204
      %v453 = vpop.permute.xlu0 %452
      %456 = vset.pattern.permute.xlu0 0
      %457 = vperm.xlu0 %456, %v205
      %v458 = vpop.permute.xlu0 %457
      %461 = vset.pattern.permute.xlu0 0
      %462 = vperm.xlu0 %461, %v206
      %v463 = vpop.permute.xlu0 %462
      %466 = vset.pattern.permute.xlu0 0
      %467 = vperm.xlu0 %466, %v207
      %v468 = vpop.permute.xlu0 %467
      %471 = vset.pattern.permute.xlu0 0
      %472 = vperm.xlu0 %471, %v208
      %v473 = vpop.permute.xlu0 %472
      %476 = vset.pattern.permute.xlu0 0
      %477 = vperm.xlu0 %476, %v209
      %v478 = vpop.permute.xlu0 %477
      %481 = vset.pattern.permute.xlu0 0
      %482 = vperm.xlu0 %481, %v210
      %v483 = vpop.permute.xlu0 %482
      %486 = vset.pattern.permute.xlu0 0
      %487 = vperm.xlu0 %486, %v211
      %v488 = vpop.permute.xlu0 %487
      %491 = vset.pattern.permute.xlu0 0
      %492 = vperm.xlu0 %491, %v212
      %v493 = vpop.permute.xlu0 %492
      %496 = vset.pattern.permute.xlu0 0
      %497 = vperm.xlu0 %496, %v213
      %v498 = vpop.permute.xlu0 %497
      %501 = vset.pattern.permute.xlu0 0
      %502 = vperm.xlu0 %501, %v214
      %v503 = vpop.permute.xlu0 %502
      %506 = vset.pattern.permute.xlu0 0
      %507 = vperm.xlu0 %506, %v215
      %v508 = vpop.permute.xlu0 %507
      %511 = vset.pattern.permute.xlu0 0
      %512 = vperm.xlu0 %511, %v216
      %v513 = vpop.permute.xlu0 %512
      %516 = vset.pattern.permute.xlu0 0
      %517 = vperm.xlu0 %516, %v217
      %v518 = vpop.permute.xlu0 %517
      %521 = vset.pattern.permute.xlu0 0
      %522 = vperm.xlu0 %521, %v218
      %v523 = vpop.permute.xlu0 %522
      %526 = vset.pattern.permute.xlu0 0
      %527 = vperm.xlu0 %526, %v219
      %v528 = vpop.permute.xlu0 %527
      %531 = vset.pattern.permute.xlu0 0
      %532 = vperm.xlu0 %531, %v220
      %v533 = vpop.permute.xlu0 %532
      %536 = vset.pattern.permute.xlu0 0
      %537 = vperm.xlu0 %536, %v221
      %v538 = vpop.permute.xlu0 %537
      %541 = vset.pattern.permute.xlu0 0
      %542 = vperm.xlu0 %541, %v222
      %v543 = vpop.permute.xlu0 %542
      %546 = vset.pattern.permute.xlu0 0
      %547 = vperm.xlu0 %546, %v223
      %v548 = vpop.permute.xlu0 %547
      %551 = vset.pattern.permute.xlu0 0
      %552 = vperm.xlu0 %551, %v224
      %v553 = vpop.permute.xlu0 %552
      %556 = vset.pattern.permute.xlu0 0
      %557 = vperm.xlu0 %556, %v225
      %v558 = vpop.permute.xlu0 %557
      %561 = vset.pattern.permute.xlu0 0
      %562 = vperm.xlu0 %561, %v226
      %v563 = vpop.permute.xlu0 %562
      %566 = vset.pattern.permute.xlu0 0
      %567 = vperm.xlu0 %566, %v227
      %v568 = vpop.permute.xlu0 %567
      %571 = vset.pattern.permute.xlu0 0
      %572 = vperm.xlu0 %571, %v228
      %v573 = vpop.permute.xlu0 %572
      %576 = vset.pattern.permute.xlu0 0
      %577 = vperm.xlu0 %576, %v229
      %v578 = vpop.permute.xlu0 %577
      %581 = vset.pattern.permute.xlu0 0
      %582 = vperm.xlu0 %581, %v230
      %v583 = vpop.permute.xlu0 %582
      %586 = vset.pattern.permute.xlu0 0
      %587 = vperm.xlu0 %586, %v231
      %v588 = vpop.permute.xlu0 %587
      %591 = vset.pattern.permute.xlu0 0
      %592 = vperm.xlu0 %591, %v232
      %v593 = vpop.permute.xlu0 %592
      %596 = vset.pattern.permute.xlu0 0
      %597 = vperm.xlu0 %596, %v233
      %v598 = vpop.permute.xlu0 %597
      %601 = vset.pattern.permute.xlu0 0
      %602 = vperm.xlu0 %601, %v234
      %v603 = vpop.permute.xlu0 %602
      %606 = vset.pattern.permute.xlu0 0
      %607 = vperm.xlu0 %606, %v235
      %v608 = vpop.permute.xlu0 %607
      %611 = vset.pattern.permute.xlu0 0
      %612 = vperm.xlu0 %611, %v236
      %v613 = vpop.permute.xlu0 %612
      %616 = vset.pattern.permute.xlu0 0
      %617 = vperm.xlu0 %616, %v237
      %v618 = vpop.permute.xlu0 %617
      %621 = vset.pattern.permute.xlu0 0
      %622 = vperm.xlu0 %621, %v238
      %v623 = vpop.permute.xlu0 %622
      %626 = vset.pattern.permute.xlu0 0
      %627 = vperm.xlu0 %626, %v239
      %v628 = vpop.permute.xlu0 %627
      %631 = vset.pattern.permute.xlu0 0
      %632 = vperm.xlu0 %631, %v240
      %v633 = vpop.permute.xlu0 %632
      %636 = vset.pattern.permute.xlu0 0
      %637 = vperm.xlu0 %636, %v241
      %v638 = vpop.permute.xlu0 %637
      %641 = vset.pattern.permute.xlu0 0
      %642 = vperm.xlu0 %641, %v242
      %v643 = vpop.permute.xlu0 %642
      %646 = vset.pattern.permute.xlu0 0
      %647 = vperm.xlu0 %646, %v243
      %v648 = vpop.permute.xlu0 %647
      %651 = vset.pattern.permute.xlu0 0
      %652 = vperm.xlu0 %651, %v244
      %v653 = vpop.permute.xlu0 %652
      %656 = vset.pattern.permute.xlu0 0
      %657 = vperm.xlu0 %656, %v245
      %v658 = vpop.permute.xlu0 %657
      %661 = vset.pattern.permute.xlu0 0
      %662 = vperm.xlu0 %661, %v246
      %v663 = vpop.permute.xlu0 %662
      %666 = vset.pattern.permute.xlu0 0
      %667 = vperm.xlu0 %666, %v247
      %v668 = vpop.permute.xlu0 %667
      %671 = vset.pattern.permute.xlu0 0
      %672 = vperm.xlu0 %671, %v248
      %v673 = vpop.permute.xlu0 %672
      %676 = vset.pattern.permute.xlu0 0
      %677 = vperm.xlu0 %676, %v249
      %v678 = vpop.permute.xlu0 %677
      %681 = vset.pattern.permute.xlu0 0
      %682 = vperm.xlu0 %681, %v250
      %v683 = vpop.permute.xlu0 %682
      %686 = vset.pattern.permute.xlu0 0
      %687 = vperm.xlu0 %686, %v251
      %v688 = vpop.permute.xlu0 %687
      %691 = vset.pattern.permute.xlu0 0
      %692 = vperm.xlu0 %691, %v252
      %v693 = vpop.permute.xlu0 %692
      %696 = vset.pattern.permute.xlu0 0
      %697 = vperm.xlu0 %696, %v253
      %v698 = vpop.permute.xlu0 %697
      %701 = vset.pattern.permute.xlu0 0
      %702 = vperm.xlu0 %701, %v254
      %v703 = vpop.permute.xlu0 %702
      %706 = vset.pattern.permute.xlu0 0
      %707 = vperm.xlu0 %706, %v255
      %v708 = vpop.permute.xlu0 %707
      %711 = vset.pattern.permute.xlu0 0
      %712 = vperm.xlu0 %711, %v256
      %v713 = vpop.permute.xlu0 %712
      %716 = vset.pattern.permute.xlu0 0
      %717 = vperm.xlu0 %716, %v257
      %v718 = vpop.permute.xlu0 %717
      %721 = vset.pattern.permute.xlu0 0
      %722 = vperm.xlu0 %721, %v258
      %v723 = vpop.permute.xlu0 %722
      %726 = vset.pattern.permute.xlu0 0
      %727 = vperm.xlu0 %726, %v259
      %v728 = vpop.permute.xlu0 %727
      %731 = vset.pattern.permute.xlu0 0
      %732 = vperm.xlu0 %731, %v260
      %v733 = vpop.permute.xlu0 %732
      %736 = vset.pattern.permute.xlu0 0
      %737 = vperm.xlu0 %736, %v261
      %v738 = vpop.permute.xlu0 %737
      %741 = vset.pattern.permute.xlu0 0
      %742 = vperm.xlu0 %741, %v262
      %v743 = vpop.permute.xlu0 %742
      %746 = vset.pattern.permute.xlu0 0
      %747 = vperm.xlu0 %746, %v263
      %v748 = vpop.permute.xlu0 %747
      %751 = vset.pattern.permute.xlu0 0
      %752 = vperm.xlu0 %751, %v264
      %v753 = vpop.permute.xlu0 %752
      %756 = vset.pattern.permute.xlu0 0
      %757 = vperm.xlu0 %756, %v265
      %v758 = vpop.permute.xlu0 %757
      %761 = vset.pattern.permute.xlu0 0
      %762 = vperm.xlu0 %761, %v266
      %v763 = vpop.permute.xlu0 %762
      %766 = vset.pattern.permute.xlu0 0
      %767 = vperm.xlu0 %766, %v267
      %v768 = vpop.permute.xlu0 %767
      %771 = vset.pattern.permute.xlu0 0
      %772 = vperm.xlu0 %771, %v268
      %v773 = vpop.permute.xlu0 %772
      %776 = vset.pattern.permute.xlu0 0
      %777 = vperm.xlu0 %776, %v269
      %v778 = vpop.permute.xlu0 %777
      %781 = vset.pattern.permute.xlu0 0
      %782 = vperm.xlu0 %781, %v270
      %v783 = vpop.permute.xlu0 %782
      %786 = vset.pattern.permute.xlu0 0
      %787 = vperm.xlu0 %786, %v271
      %v788 = vpop.permute.xlu0 %787
      %791 = vset.pattern.permute.xlu0 0
      %792 = vperm.xlu0 %791, %v272
      %v793 = vpop.permute.xlu0 %792
      %796 = vset.pattern.permute.xlu0 0
      %797 = vperm.xlu0 %796, %v273
      %v798 = vpop.permute.xlu0 %797
      %801 = vset.pattern.permute.xlu0 0
      %802 = vperm.xlu0 %801, %v274
      %v803 = vpop.permute.xlu0 %802
      %806 = vset.pattern.permute.xlu0 0
      %807 = vperm.xlu0 %806, %v275
      %v808 = vpop.permute.xlu0 %807
      %v811 = vperm.slane %v284, 0
      %v813 = vmul.f32 %v288, %v811
      %v814 = vmul.f32 %v293, %v811
      %v815 = vmul.f32 %v298, %v811
      %v816 = vmul.f32 %v303, %v811
      %v817 = vmul.f32 %v308, %v811
      %v818 = vmul.f32 %v313, %v811
      %v819 = vmul.f32 %v318, %v811
      %v820 = vmul.f32 %v323, %v811
      %v821 = vmul.f32 %v328, %v811
      %v822 = vmul.f32 %v333, %v811
      %v823 = vmul.f32 %v338, %v811
      %v824 = vmul.f32 %v343, %v811
      %v825 = vmul.f32 %v348, %v811
      %v826 = vmul.f32 %v353, %v811
      %v827 = vmul.f32 %v358, %v811
      %v828 = vmul.f32 %v363, %v811
      %v829 = vmul.f32 %v368, %v811
      %v830 = vmul.f32 %v373, %v811
      %v831 = vmul.f32 %v378, %v811
      %v832 = vmul.f32 %v383, %v811
      %v833 = vmul.f32 %v388, %v811
      %v834 = vmul.f32 %v393, %v811
      %v835 = vmul.f32 %v398, %v811
      %v836 = vmul.f32 %v403, %v811
      %v837 = vmul.f32 %v408, %v811
      %v838 = vmul.f32 %v413, %v811
      %v839 = vmul.f32 %v418, %v811
      %v840 = vmul.f32 %v423, %v811
      %v841 = vmul.f32 %v428, %v811
      %v842 = vmul.f32 %v433, %v811
      %v843 = vmul.f32 %v438, %v811
      %v844 = vmul.f32 %v443, %v811
      %v845 = vmul.f32 %v448, %v811
      %v846 = vmul.f32 %v453, %v811
      %v847 = vmul.f32 %v458, %v811
      %v848 = vmul.f32 %v463, %v811
      %v849 = vmul.f32 %v468, %v811
      %v850 = vmul.f32 %v473, %v811
      %v851 = vmul.f32 %v478, %v811
      %v852 = vmul.f32 %v483, %v811
      %v853 = vmul.f32 %v488, %v811
      %v854 = vmul.f32 %v493, %v811
      %v855 = vmul.f32 %v498, %v811
      %v856 = vmul.f32 %v503, %v811
      %v857 = vmul.f32 %v508, %v811
      %v858 = vmul.f32 %v513, %v811
      %v859 = vmul.f32 %v518, %v811
      %v860 = vmul.f32 %v523, %v811
      %v861 = vmul.f32 %v528, %v811
      %v862 = vmul.f32 %v533, %v811
      %v863 = vmul.f32 %v538, %v811
      %v864 = vmul.f32 %v543, %v811
      %v865 = vmul.f32 %v548, %v811
      %v866 = vmul.f32 %v553, %v811
      %v867 = vmul.f32 %v558, %v811
      %v868 = vmul.f32 %v563, %v811
      %v869 = vmul.f32 %v568, %v811
      %v870 = vmul.f32 %v573, %v811
      %v871 = vmul.f32 %v578, %v811
      %v872 = vmul.f32 %v583, %v811
      %v873 = vmul.f32 %v588, %v811
      %v874 = vmul.f32 %v593, %v811
      %v875 = vmul.f32 %v598, %v811
      %v876 = vmul.f32 %v603, %v811
      %v877 = vmul.f32 %v608, %v811
      %v878 = vmul.f32 %v613, %v811
      %v879 = vmul.f32 %v618, %v811
      %v880 = vmul.f32 %v623, %v811
      %v881 = vmul.f32 %v628, %v811
      %v882 = vmul.f32 %v633, %v811
      %v883 = vmul.f32 %v638, %v811
      %v884 = vmul.f32 %v643, %v811
      %v885 = vmul.f32 %v648, %v811
      %v886 = vmul.f32 %v653, %v811
      %v887 = vmul.f32 %v658, %v811
      %v888 = vmul.f32 %v663, %v811
      %v889 = vmul.f32 %v668, %v811
      %v890 = vmul.f32 %v673, %v811
      %v891 = vmul.f32 %v678, %v811
      %v892 = vmul.f32 %v683, %v811
      %v893 = vmul.f32 %v688, %v811
      %v894 = vmul.f32 %v693, %v811
      %v895 = vmul.f32 %v698, %v811
      %v896 = vmul.f32 %v703, %v811
      %v897 = vmul.f32 %v708, %v811
      %v898 = vmul.f32 %v713, %v811
      %v899 = vmul.f32 %v718, %v811
      %v900 = vmul.f32 %v723, %v811
      %v901 = vmul.f32 %v728, %v811
      %v902 = vmul.f32 %v733, %v811
      %v903 = vmul.f32 %v738, %v811
      %v904 = vmul.f32 %v743, %v811
      %v905 = vmul.f32 %v748, %v811
      %v906 = vmul.f32 %v753, %v811
      %v907 = vmul.f32 %v758, %v811
      %v908 = vmul.f32 %v763, %v811
      %v909 = vmul.f32 %v768, %v811
      %v910 = vmul.f32 %v773, %v811
      %v911 = vmul.f32 %v778, %v811
      %v912 = vmul.f32 %v783, %v811
      %v913 = vmul.f32 %v788, %v811
      %v914 = vmul.f32 %v793, %v811
      %v915 = vmul.f32 %v798, %v811
      %v916 = vmul.f32 %v803, %v811
      %v917 = vmul.f32 %v808, %v811
      %v918 = vadd.f32 %v813, 0.0
      %v919 = vadd.f32 %v814, 0.0
      %v920 = vadd.f32 %v815, 0.0
      %v921 = vadd.f32 %v816, 0.0
      %v922 = vadd.f32 %v817, 0.0
      %v923 = vadd.f32 %v818, 0.0
      %v924 = vadd.f32 %v819, 0.0
      %v925 = vadd.f32 %v820, 0.0
      %v926 = vadd.f32 %v821, 0.0
      %v927 = vadd.f32 %v822, 0.0
      %v928 = vadd.f32 %v823, 0.0
      %v929 = vadd.f32 %v824, 0.0
      %v930 = vadd.f32 %v825, 0.0
      %v931 = vadd.f32 %v826, 0.0
      %v932 = vadd.f32 %v827, 0.0
      %v933 = vadd.f32 %v828, 0.0
      %v934 = vadd.f32 %v829, 0.0
      %v935 = vadd.f32 %v830, 0.0
      %v936 = vadd.f32 %v831, 0.0
      %v937 = vadd.f32 %v832, 0.0
      %v938 = vadd.f32 %v833, 0.0
      %v939 = vadd.f32 %v834, 0.0
      %v940 = vadd.f32 %v835, 0.0
      %v941 = vadd.f32 %v836, 0.0
      %v942 = vadd.f32 %v837, 0.0
      %v943 = vadd.f32 %v838, 0.0
      %v944 = vadd.f32 %v839, 0.0
      %v945 = vadd.f32 %v840, 0.0
      %v946 = vadd.f32 %v841, 0.0
      %v947 = vadd.f32 %v842, 0.0
      %v948 = vadd.f32 %v843, 0.0
      %v949 = vadd.f32 %v844, 0.0
      %v950 = vadd.f32 %v845, 0.0
      %v951 = vadd.f32 %v846, 0.0
      %v952 = vadd.f32 %v847, 0.0
      %v953 = vadd.f32 %v848, 0.0
      %v954 = vadd.f32 %v849, 0.0
      %v955 = vadd.f32 %v850, 0.0
      %v956 = vadd.f32 %v851, 0.0
      %v957 = vadd.f32 %v852, 0.0
      %v958 = vadd.f32 %v853, 0.0
      %v959 = vadd.f32 %v854, 0.0
      %v960 = vadd.f32 %v855, 0.0
      %v961 = vadd.f32 %v856, 0.0
      %v962 = vadd.f32 %v857, 0.0
      %v963 = vadd.f32 %v858, 0.0
      %v964 = vadd.f32 %v859, 0.0
      %v965 = vadd.f32 %v860, 0.0
      %v966 = vadd.f32 %v861, 0.0
      %v967 = vadd.f32 %v862, 0.0
      %v968 = vadd.f32 %v863, 0.0
      %v969 = vadd.f32 %v864, 0.0
      %v970 = vadd.f32 %v865, 0.0
      %v971 = vadd.f32 %v866, 0.0
      %v972 = vadd.f32 %v867, 0.0
      %v973 = vadd.f32 %v868, 0.0
      %v974 = vadd.f32 %v869, 0.0
      %v975 = vadd.f32 %v870, 0.0
      %v976 = vadd.f32 %v871, 0.0
      %v977 = vadd.f32 %v872, 0.0
      %v978 = vadd.f32 %v873, 0.0
      %v979 = vadd.f32 %v874, 0.0
      %v980 = vadd.f32 %v875, 0.0
      %v981 = vadd.f32 %v876, 0.0
      %v982 = vadd.f32 %v877, 0.0
      %v983 = vadd.f32 %v878, 0.0
      %v984 = vadd.f32 %v879, 0.0
      %v985 = vadd.f32 %v880, 0.0
      %v986 = vadd.f32 %v881, 0.0
      %v987 = vadd.f32 %v882, 0.0
      %v988 = vadd.f32 %v883, 0.0
      %v989 = vadd.f32 %v884, 0.0
      %v990 = vadd.f32 %v885, 0.0
      %v991 = vadd.f32 %v886, 0.0
      %v992 = vadd.f32 %v887, 0.0
      %v993 = vadd.f32 %v888, 0.0
      %v994 = vadd.f32 %v889, 0.0
      %v995 = vadd.f32 %v890, 0.0
      %v996 = vadd.f32 %v891, 0.0
      %v997 = vadd.f32 %v892, 0.0
      %v998 = vadd.f32 %v893, 0.0
      %v999 = vadd.f32 %v894, 0.0
      %v1000 = vadd.f32 %v895, 0.0
      %v1001 = vadd.f32 %v896, 0.0
      %v1002 = vadd.f32 %v897, 0.0
      %v1003 = vadd.f32 %v898, 0.0
      %v1004 = vadd.f32 %v899, 0.0
      %v1005 = vadd.f32 %v900, 0.0
      %v1006 = vadd.f32 %v901, 0.0
      %v1007 = vadd.f32 %v902, 0.0
      %v1008 = vadd.f32 %v903, 0.0
      %v1009 = vadd.f32 %v904, 0.0
      %v1010 = vadd.f32 %v905, 0.0
      %v1011 = vadd.f32 %v906, 0.0
      %v1012 = vadd.f32 %v907, 0.0
      %v1013 = vadd.f32 %v908, 0.0
      %v1014 = vadd.f32 %v909, 0.0
      %v1015 = vadd.f32 %v910, 0.0
      %v1016 = vadd.f32 %v911, 0.0
      %v1017 = vadd.f32 %v912, 0.0
      %v1018 = vadd.f32 %v913, 0.0
      %v1019 = vadd.f32 %v914, 0.0
      %v1020 = vadd.f32 %v915, 0.0
      %v1021 = vadd.f32 %v916, 0.0
      %v1022 = vadd.f32 %v917, 0.0
      %s1023 = scalar_lea.vmem %s1, 1
      %v1024 = vld [vmem:[%s1023] sm:$0x1]
      %v1026 = vperm.slane %v1024, 0
      %v1028 = vmul.f32 %v288, %v1026
      %v1029 = vmul.f32 %v293, %v1026
      %v1030 = vmul.f32 %v298, %v1026
      %v1031 = vmul.f32 %v303, %v1026
      %v1032 = vmul.f32 %v308, %v1026
      %v1033 = vmul.f32 %v313, %v1026
      %v1034 = vmul.f32 %v318, %v1026
      %v1035 = vmul.f32 %v323, %v1026
      %v1036 = vmul.f32 %v328, %v1026
      %v1037 = vmul.f32 %v333, %v1026
      %v1038 = vmul.f32 %v338, %v1026
      %v1039 = vmul.f32 %v343, %v1026
      %v1040 = vmul.f32 %v348, %v1026
      %v1041 = vmul.f32 %v353, %v1026
      %v1042 = vmul.f32 %v358, %v1026
      %v1043 = vmul.f32 %v363, %v1026
      %v1044 = vmul.f32 %v368, %v1026
      %v1045 = vmul.f32 %v373, %v1026
      %v1046 = vmul.f32 %v378, %v1026
      %v1047 = vmul.f32 %v383, %v1026
      %v1048 = vmul.f32 %v388, %v1026
      %v1049 = vmul.f32 %v393, %v1026
      %v1050 = vmul.f32 %v398, %v1026
      %v1051 = vmul.f32 %v403, %v1026
      %v1052 = vmul.f32 %v408, %v1026
      %v1053 = vmul.f32 %v413, %v1026
      %v1054 = vmul.f32 %v418, %v1026
      %v1055 = vmul.f32 %v423, %v1026
      %v1056 = vmul.f32 %v428, %v1026
      %v1057 = vmul.f32 %v433, %v1026
      %v1058 = vmul.f32 %v438, %v1026
      %v1059 = vmul.f32 %v443, %v1026
      %v1060 = vmul.f32 %v448, %v1026
      %v1061 = vmul.f32 %v453, %v1026
      %v1062 = vmul.f32 %v458, %v1026
      %v1063 = vmul.f32 %v463, %v1026
      %v1064 = vmul.f32 %v468, %v1026
      %v1065 = vmul.f32 %v473, %v1026
      %v1066 = vmul.f32 %v478, %v1026
      %v1067 = vmul.f32 %v483, %v1026
      %v1068 = vmul.f32 %v488, %v1026
      %v1069 = vmul.f32 %v493, %v1026
      %v1070 = vmul.f32 %v498, %v1026
      %v1071 = vmul.f32 %v503, %v1026
      %v1072 = vmul.f32 %v508, %v1026
      %v1073 = vmul.f32 %v513, %v1026
      %v1074 = vmul.f32 %v518, %v1026
      %v1075 = vmul.f32 %v523, %v1026
      %v1076 = vmul.f32 %v528, %v1026
      %v1077 = vmul.f32 %v533, %v1026
      %v1078 = vmul.f32 %v538, %v1026
      %v1079 = vmul.f32 %v543, %v1026
      %v1080 = vmul.f32 %v548, %v1026
      %v1081 = vmul.f32 %v553, %v1026
      %v1082 = vmul.f32 %v558, %v1026
      %v1083 = vmul.f32 %v563, %v1026
      %v1084 = vmul.f32 %v568, %v1026
      %v1085 = vmul.f32 %v573, %v1026
      %v1086 = vmul.f32 %v578, %v1026
      %v1087 = vmul.f32 %v583, %v1026
      %v1088 = vmul.f32 %v588, %v1026
      %v1089 = vmul.f32 %v593, %v1026
      %v1090 = vmul.f32 %v598, %v1026
      %v1091 = vmul.f32 %v603, %v1026
      %v1092 = vmul.f32 %v608, %v1026
      %v1093 = vmul.f32 %v613, %v1026
      %v1094 = vmul.f32 %v618, %v1026
      %v1095 = vmul.f32 %v623, %v1026
      %v1096 = vmul.f32 %v628, %v1026
      %v1097 = vmul.f32 %v633, %v1026
      %v1098 = vmul.f32 %v638, %v1026
      %v1099 = vmul.f32 %v643, %v1026
      %v1100 = vmul.f32 %v648, %v1026
      %v1101 = vmul.f32 %v653, %v1026
      %v1102 = vmul.f32 %v658, %v1026
      %v1103 = vmul.f32 %v663, %v1026
      %v1104 = vmul.f32 %v668, %v1026
      %v1105 = vmul.f32 %v673, %v1026
      %v1106 = vmul.f32 %v678, %v1026
      %v1107 = vmul.f32 %v683, %v1026
      %v1108 = vmul.f32 %v688, %v1026
      %v1109 = vmul.f32 %v693, %v1026
      %v1110 = vmul.f32 %v698, %v1026
      %v1111 = vmul.f32 %v703, %v1026
      %v1112 = vmul.f32 %v708, %v1026
      %v1113 = vmul.f32 %v713, %v1026
      %v1114 = vmul.f32 %v718, %v1026
      %v1115 = vmul.f32 %v723, %v1026
      %v1116 = vmul.f32 %v728, %v1026
      %v1117 = vmul.f32 %v733, %v1026
      %v1118 = vmul.f32 %v738, %v1026
      %v1119 = vmul.f32 %v743, %v1026
      %v1120 = vmul.f32 %v748, %v1026
      %v1121 = vmul.f32 %v753, %v1026
      %v1122 = vmul.f32 %v758, %v1026
      %v1123 = vmul.f32 %v763, %v1026
      %v1124 = vmul.f32 %v768, %v1026
      %v1125 = vmul.f32 %v773, %v1026
      %v1126 = vmul.f32 %v778, %v1026
      %v1127 = vmul.f32 %v783, %v1026
      %v1128 = vmul.f32 %v788, %v1026
      %v1129 = vmul.f32 %v793, %v1026
      %v1130 = vmul.f32 %v798, %v1026
      %v1131 = vmul.f32 %v803, %v1026
      %v1132 = vmul.f32 %v808, %v1026
      %vm1238 = vcmask 1046528
      %v1239 = vrot.slane %v1028, 1
      %v1240 = vrot.slane %v1029, 1
      %v1241 = vsel %vm1238, %v1239, %v1240
      %v1242 = vrot.slane %v1030, 1
      %v1243 = vsel %vm1238, %v1240, %v1242
      %v1244 = vrot.slane %v1031, 1
      %v1245 = vsel %vm1238, %v1242, %v1244
      %v1246 = vrot.slane %v1032, 1
      %v1247 = vsel %vm1238, %v1244, %v1246
      %v1248 = vrot.slane %v1033, 1
      %v1249 = vsel %vm1238, %v1246, %v1248
      %v1250 = vrot.slane %v1034, 1
      %v1251 = vsel %vm1238, %v1248, %v1250
      %v1252 = vrot.slane %v1035, 1
      %v1253 = vsel %vm1238, %v1250, %v1252
      %v1254 = vrot.slane %v1036, 1
      %v1255 = vsel %vm1238, %v1252, %v1254
      %v1256 = vrot.slane %v1037, 1
      %v1257 = vsel %vm1238, %v1254, %v1256
      %v1258 = vrot.slane %v1038, 1
      %v1259 = vsel %vm1238, %v1256, %v1258
      %v1260 = vrot.slane %v1039, 1
      %v1261 = vsel %vm1238, %v1258, %v1260
      %v1262 = vrot.slane %v1040, 1
      %v1263 = vsel %vm1238, %v1260, %v1262
      %v1264 = vrot.slane %v1041, 1
      %v1265 = vsel %vm1238, %v1262, %v1264
      %v1266 = vrot.slane %v1042, 1
      %v1267 = vsel %vm1238, %v1264, %v1266
      %v1268 = vrot.slane %v1043, 1
      %v1269 = vsel %vm1238, %v1266, %v1268
      %v1270 = vrot.slane %v1044, 1
      %v1271 = vsel %vm1238, %v1268, %v1270
      %v1272 = vrot.slane %v1045, 1
      %v1273 = vsel %vm1238, %v1270, %v1272
      %v1274 = vrot.slane %v1046, 1
      %v1275 = vsel %vm1238, %v1272, %v1274
      %v1276 = vrot.slane %v1047, 1
      %v1277 = vsel %vm1238, %v1274, %v1276
      %v1278 = vrot.slane %v1048, 1
      %v1279 = vsel %vm1238, %v1276, %v1278
      %v1280 = vrot.slane %v1049, 1
      %v1281 = vsel %vm1238, %v1278, %v1280
      %v1282 = vrot.slane %v1050, 1
      %v1283 = vsel %vm1238, %v1280, %v1282
      %v1284 = vrot.slane %v1051, 1
      %v1285 = vsel %vm1238, %v1282, %v1284
      %v1286 = vrot.slane %v1052, 1
      %v1287 = vsel %vm1238, %v1284, %v1286
      %v1288 = vrot.slane %v1053, 1
      %v1289 = vsel %vm1238, %v1286, %v1288
      %v1290 = vrot.slane %v1054, 1
      %v1291 = vsel %vm1238, %v1288, %v1290
      %v1292 = vrot.slane %v1055, 1
      %v1293 = vsel %vm1238, %v1290, %v1292
      %v1294 = vrot.slane %v1056, 1
      %v1295 = vsel %vm1238, %v1292, %v1294
      %v1296 = vrot.slane %v1057, 1
      %v1297 = vsel %vm1238, %v1294, %v1296
      %v1298 = vrot.slane %v1058, 1
      %v1299 = vsel %vm1238, %v1296, %v1298
      %v1300 = vrot.slane %v1059, 1
      %v1301 = vsel %vm1238, %v1298, %v1300
      %v1302 = vrot.slane %v1060, 1
      %v1303 = vsel %vm1238, %v1300, %v1302
      %v1304 = vrot.slane %v1061, 1
      %v1305 = vsel %vm1238, %v1302, %v1304
      %v1306 = vrot.slane %v1062, 1
      %v1307 = vsel %vm1238, %v1304, %v1306
      %v1308 = vrot.slane %v1063, 1
      %v1309 = vsel %vm1238, %v1306, %v1308
      %v1310 = vrot.slane %v1064, 1
      %v1311 = vsel %vm1238, %v1308, %v1310
      %v1312 = vrot.slane %v1065, 1
      %v1313 = vsel %vm1238, %v1310, %v1312
      %v1314 = vrot.slane %v1066, 1
      %v1315 = vsel %vm1238, %v1312, %v1314
      %v1316 = vrot.slane %v1067, 1
      %v1317 = vsel %vm1238, %v1314, %v1316
      %v1318 = vrot.slane %v1068, 1
      %v1319 = vsel %vm1238, %v1316, %v1318
      %v1320 = vrot.slane %v1069, 1
      %v1321 = vsel %vm1238, %v1318, %v1320
      %v1322 = vrot.slane %v1070, 1
      %v1323 = vsel %vm1238, %v1320, %v1322
      %v1324 = vrot.slane %v1071, 1
      %v1325 = vsel %vm1238, %v1322, %v1324
      %v1326 = vrot.slane %v1072, 1
      %v1327 = vsel %vm1238, %v1324, %v1326
      %v1328 = vrot.slane %v1073, 1
      %v1329 = vsel %vm1238, %v1326, %v1328
      %v1330 = vrot.slane %v1074, 1
      %v1331 = vsel %vm1238, %v1328, %v1330
      %v1332 = vrot.slane %v1075, 1
      %v1333 = vsel %vm1238, %v1330, %v1332
      %v1334 = vrot.slane %v1076, 1
      %v1335 = vsel %vm1238, %v1332, %v1334
      %v1336 = vrot.slane %v1077, 1
      %v1337 = vsel %vm1238, %v1334, %v1336
      %v1338 = vrot.slane %v1078, 1
      %v1339 = vsel %vm1238, %v1336, %v1338
      %v1340 = vrot.slane %v1079, 1
      %v1341 = vsel %vm1238, %v1338, %v1340
      %v1342 = vrot.slane %v1080, 1
      %v1343 = vsel %vm1238, %v1340, %v1342
      %v1344 = vrot.slane %v1081, 1
      %v1345 = vsel %vm1238, %v1342, %v1344
      %v1346 = vrot.slane %v1082, 1
      %v1347 = vsel %vm1238, %v1344, %v1346
      %v1348 = vrot.slane %v1083, 1
      %v1349 = vsel %vm1238, %v1346, %v1348
      %v1350 = vrot.slane %v1084, 1
      %v1351 = vsel %vm1238, %v1348, %v1350
      %v1352 = vrot.slane %v1085, 1
      %v1353 = vsel %vm1238, %v1350, %v1352
      %v1354 = vrot.slane %v1086, 1
      %v1355 = vsel %vm1238, %v1352, %v1354
      %v1356 = vrot.slane %v1087, 1
      %v1357 = vsel %vm1238, %v1354, %v1356
      %v1358 = vrot.slane %v1088, 1
      %v1359 = vsel %vm1238, %v1356, %v1358
      %v1360 = vrot.slane %v1089, 1
      %v1361 = vsel %vm1238, %v1358, %v1360
      %v1362 = vrot.slane %v1090, 1
      %v1363 = vsel %vm1238, %v1360, %v1362
      %v1364 = vrot.slane %v1091, 1
      %v1365 = vsel %vm1238, %v1362, %v1364
      %v1366 = vrot.slane %v1092, 1
      %v1367 = vsel %vm1238, %v1364, %v1366
      %v1368 = vrot.slane %v1093, 1
      %v1369 = vsel %vm1238, %v1366, %v1368
      %v1370 = vrot.slane %v1094, 1
      %v1371 = vsel %vm1238, %v1368, %v1370
      %v1372 = vrot.slane %v1095, 1
      %v1373 = vsel %vm1238, %v1370, %v1372
      %v1374 = vrot.slane %v1096, 1
      %v1375 = vsel %vm1238, %v1372, %v1374
      %v1376 = vrot.slane %v1097, 1
      %v1377 = vsel %vm1238, %v1374, %v1376
      %v1378 = vrot.slane %v1098, 1
      %v1379 = vsel %vm1238, %v1376, %v1378
      %v1380 = vrot.slane %v1099, 1
      %v1381 = vsel %vm1238, %v1378, %v1380
      %v1382 = vrot.slane %v1100, 1
      %v1383 = vsel %vm1238, %v1380, %v1382
      %v1384 = vrot.slane %v1101, 1
      %v1385 = vsel %vm1238, %v1382, %v1384
      %v1386 = vrot.slane %v1102, 1
      %v1387 = vsel %vm1238, %v1384, %v1386
      %v1388 = vrot.slane %v1103, 1
      %v1389 = vsel %vm1238, %v1386, %v1388
      %v1390 = vrot.slane %v1104, 1
      %v1391 = vsel %vm1238, %v1388, %v1390
      %v1392 = vrot.slane %v1105, 1
      %v1393 = vsel %vm1238, %v1390, %v1392
      %v1394 = vrot.slane %v1106, 1
      %v1395 = vsel %vm1238, %v1392, %v1394
      %v1396 = vrot.slane %v1107, 1
      %v1397 = vsel %vm1238, %v1394, %v1396
      %v1398 = vrot.slane %v1108, 1
      %v1399 = vsel %vm1238, %v1396, %v1398
      %v1400 = vrot.slane %v1109, 1
      %v1401 = vsel %vm1238, %v1398, %v1400
      %v1402 = vrot.slane %v1110, 1
      %v1403 = vsel %vm1238, %v1400, %v1402
      %v1404 = vrot.slane %v1111, 1
      %v1405 = vsel %vm1238, %v1402, %v1404
      %v1406 = vrot.slane %v1112, 1
      %v1407 = vsel %vm1238, %v1404, %v1406
      %v1408 = vrot.slane %v1113, 1
      %v1409 = vsel %vm1238, %v1406, %v1408
      %v1410 = vrot.slane %v1114, 1
      %v1411 = vsel %vm1238, %v1408, %v1410
      %v1412 = vrot.slane %v1115, 1
      %v1413 = vsel %vm1238, %v1410, %v1412
      %v1414 = vrot.slane %v1116, 1
      %v1415 = vsel %vm1238, %v1412, %v1414
      %v1416 = vrot.slane %v1117, 1
      %v1417 = vsel %vm1238, %v1414, %v1416
      %v1418 = vrot.slane %v1118, 1
      %v1419 = vsel %vm1238, %v1416, %v1418
      %v1420 = vrot.slane %v1119, 1
      %v1421 = vsel %vm1238, %v1418, %v1420
      %v1422 = vrot.slane %v1120, 1
      %v1423 = vsel %vm1238, %v1420, %v1422
      %v1424 = vrot.slane %v1121, 1
      %v1425 = vsel %vm1238, %v1422, %v1424
      %v1426 = vrot.slane %v1122, 1
      %v1427 = vsel %vm1238, %v1424, %v1426
      %v1428 = vrot.slane %v1123, 1
      %v1429 = vsel %vm1238, %v1426, %v1428
      %v1430 = vrot.slane %v1124, 1
      %v1431 = vsel %vm1238, %v1428, %v1430
      %v1432 = vrot.slane %v1125, 1
      %v1433 = vsel %vm1238, %v1430, %v1432
      %v1434 = vrot.slane %v1126, 1
      %v1435 = vsel %vm1238, %v1432, %v1434
      %v1436 = vrot.slane %v1127, 1
      %v1437 = vsel %vm1238, %v1434, %v1436
      %v1438 = vrot.slane %v1128, 1
      %v1439 = vsel %vm1238, %v1436, %v1438
      %v1440 = vrot.slane %v1129, 1
      %v1441 = vsel %vm1238, %v1438, %v1440
      %v1442 = vrot.slane %v1130, 1
      %v1443 = vsel %vm1238, %v1440, %v1442
      %v1444 = vrot.slane %v1131, 1
      %v1445 = vsel %vm1238, %v1442, %v1444
      %v1446 = vrot.slane %v1132, 1
      %v1447 = vsel %vm1238, %v1444, %v1446
      %v1553 = vadd.f32 %v918, %v1241
      %v1554 = vadd.f32 %v919, %v1243
      %v1555 = vadd.f32 %v920, %v1245
      %v1556 = vadd.f32 %v921, %v1247
      %v1557 = vadd.f32 %v922, %v1249
      %v1558 = vadd.f32 %v923, %v1251
      %v1559 = vadd.f32 %v924, %v1253
      %v1560 = vadd.f32 %v925, %v1255
      %v1561 = vadd.f32 %v926, %v1257
      %v1562 = vadd.f32 %v927, %v1259
      %v1563 = vadd.f32 %v928, %v1261
      %v1564 = vadd.f32 %v929, %v1263
      %v1565 = vadd.f32 %v930, %v1265
      %v1566 = vadd.f32 %v931, %v1267
      %v1567 = vadd.f32 %v932, %v1269
      %v1568 = vadd.f32 %v933, %v1271
      %v1569 = vadd.f32 %v934, %v1273
      %v1570 = vadd.f32 %v935, %v1275
      %v1571 = vadd.f32 %v936, %v1277
      %v1572 = vadd.f32 %v937, %v1279
      %v1573 = vadd.f32 %v938, %v1281
      %v1574 = vadd.f32 %v939, %v1283
      %v1575 = vadd.f32 %v940, %v1285
      %v1576 = vadd.f32 %v941, %v1287
      %v1577 = vadd.f32 %v942, %v1289
      %v1578 = vadd.f32 %v943, %v1291
      %v1579 = vadd.f32 %v944, %v1293
      %v1580 = vadd.f32 %v945, %v1295
      %v1581 = vadd.f32 %v946, %v1297
      %v1582 = vadd.f32 %v947, %v1299
      %v1583 = vadd.f32 %v948, %v1301
      %v1584 = vadd.f32 %v949, %v1303
      %v1585 = vadd.f32 %v950, %v1305
      %v1586 = vadd.f32 %v951, %v1307
      %v1587 = vadd.f32 %v952, %v1309
      %v1588 = vadd.f32 %v953, %v1311
      %v1589 = vadd.f32 %v954, %v1313
      %v1590 = vadd.f32 %v955, %v1315
      %v1591 = vadd.f32 %v956, %v1317
      %v1592 = vadd.f32 %v957, %v1319
      %v1593 = vadd.f32 %v958, %v1321
      %v1594 = vadd.f32 %v959, %v1323
      %v1595 = vadd.f32 %v960, %v1325
      %v1596 = vadd.f32 %v961, %v1327
      %v1597 = vadd.f32 %v962, %v1329
      %v1598 = vadd.f32 %v963, %v1331
      %v1599 = vadd.f32 %v964, %v1333
      %v1600 = vadd.f32 %v965, %v1335
      %v1601 = vadd.f32 %v966, %v1337
      %v1602 = vadd.f32 %v967, %v1339
      %v1603 = vadd.f32 %v968, %v1341
      %v1604 = vadd.f32 %v969, %v1343
      %v1605 = vadd.f32 %v970, %v1345
      %v1606 = vadd.f32 %v971, %v1347
      %v1607 = vadd.f32 %v972, %v1349
      %v1608 = vadd.f32 %v973, %v1351
      %v1609 = vadd.f32 %v974, %v1353
      %v1610 = vadd.f32 %v975, %v1355
      %v1611 = vadd.f32 %v976, %v1357
      %v1612 = vadd.f32 %v977, %v1359
      %v1613 = vadd.f32 %v978, %v1361
      %v1614 = vadd.f32 %v979, %v1363
      %v1615 = vadd.f32 %v980, %v1365
      %v1616 = vadd.f32 %v981, %v1367
      %v1617 = vadd.f32 %v982, %v1369
      %v1618 = vadd.f32 %v983, %v1371
      %v1619 = vadd.f32 %v984, %v1373
      %v1620 = vadd.f32 %v985, %v1375
      %v1621 = vadd.f32 %v986, %v1377
      %v1622 = vadd.f32 %v987, %v1379
      %v1623 = vadd.f32 %v988, %v1381
      %v1624 = vadd.f32 %v989, %v1383
      %v1625 = vadd.f32 %v990, %v1385
      %v1626 = vadd.f32 %v991, %v1387
      %v1627 = vadd.f32 %v992, %v1389
      %v1628 = vadd.f32 %v993, %v1391
      %v1629 = vadd.f32 %v994, %v1393
      %v1630 = vadd.f32 %v995, %v1395
      %v1631 = vadd.f32 %v996, %v1397
      %v1632 = vadd.f32 %v997, %v1399
      %v1633 = vadd.f32 %v998, %v1401
      %v1634 = vadd.f32 %v999, %v1403
      %v1635 = vadd.f32 %v1000, %v1405
      %v1636 = vadd.f32 %v1001, %v1407
      %v1637 = vadd.f32 %v1002, %v1409
      %v1638 = vadd.f32 %v1003, %v1411
      %v1639 = vadd.f32 %v1004, %v1413
      %v1640 = vadd.f32 %v1005, %v1415
      %v1641 = vadd.f32 %v1006, %v1417
      %v1642 = vadd.f32 %v1007, %v1419
      %v1643 = vadd.f32 %v1008, %v1421
      %v1644 = vadd.f32 %v1009, %v1423
      %v1645 = vadd.f32 %v1010, %v1425
      %v1646 = vadd.f32 %v1011, %v1427
      %v1647 = vadd.f32 %v1012, %v1429
      %v1648 = vadd.f32 %v1013, %v1431
      %v1649 = vadd.f32 %v1014, %v1433
      %v1650 = vadd.f32 %v1015, %v1435
      %v1651 = vadd.f32 %v1016, %v1437
      %v1652 = vadd.f32 %v1017, %v1439
      %v1653 = vadd.f32 %v1018, %v1441
      %v1654 = vadd.f32 %v1019, %v1443
      %v1655 = vadd.f32 %v1020, %v1445
      %v1656 = vadd.f32 %v1021, %v1447
      %v1657 = vadd.f32 %v1022, %v1446
      %s1658 = scalar_lea.vmem %s1, 2
      %v1659 = vld [vmem:[%s1658] sm:$0x1]
      %v1661 = vperm.slane %v1659, 0
      %v1663 = vmul.f32 %v288, %v1661
      %v1664 = vmul.f32 %v293, %v1661
      %v1665 = vmul.f32 %v298, %v1661
      %v1666 = vmul.f32 %v303, %v1661
      %v1667 = vmul.f32 %v308, %v1661
      %v1668 = vmul.f32 %v313, %v1661
      %v1669 = vmul.f32 %v318, %v1661
      %v1670 = vmul.f32 %v323, %v1661
      %v1671 = vmul.f32 %v328, %v1661
      %v1672 = vmul.f32 %v333, %v1661
      %v1673 = vmul.f32 %v338, %v1661
      %v1674 = vmul.f32 %v343, %v1661
      %v1675 = vmul.f32 %v348, %v1661
      %v1676 = vmul.f32 %v353, %v1661
      %v1677 = vmul.f32 %v358, %v1661
      %v1678 = vmul.f32 %v363, %v1661
      %v1679 = vmul.f32 %v368, %v1661
      %v1680 = vmul.f32 %v373, %v1661
      %v1681 = vmul.f32 %v378, %v1661
      %v1682 = vmul.f32 %v383, %v1661
      %v1683 = vmul.f32 %v388, %v1661
      %v1684 = vmul.f32 %v393, %v1661
      %v1685 = vmul.f32 %v398, %v1661
      %v1686 = vmul.f32 %v403, %v1661
      %v1687 = vmul.f32 %v408, %v1661
      %v1688 = vmul.f32 %v413, %v1661
      %v1689 = vmul.f32 %v418, %v1661
      %v1690 = vmul.f32 %v423, %v1661
      %v1691 = vmul.f32 %v428, %v1661
      %v1692 = vmul.f32 %v433, %v1661
      %v1693 = vmul.f32 %v438, %v1661
      %v1694 = vmul.f32 %v443, %v1661
      %v1695 = vmul.f32 %v448, %v1661
      %v1696 = vmul.f32 %v453, %v1661
      %v1697 = vmul.f32 %v458, %v1661
      %v1698 = vmul.f32 %v463, %v1661
      %v1699 = vmul.f32 %v468, %v1661
      %v1700 = vmul.f32 %v473, %v1661
      %v1701 = vmul.f32 %v478, %v1661
      %v1702 = vmul.f32 %v483, %v1661
      %v1703 = vmul.f32 %v488, %v1661
      %v1704 = vmul.f32 %v493, %v1661
      %v1705 = vmul.f32 %v498, %v1661
      %v1706 = vmul.f32 %v503, %v1661
      %v1707 = vmul.f32 %v508, %v1661
      %v1708 = vmul.f32 %v513, %v1661
      %v1709 = vmul.f32 %v518, %v1661
      %v1710 = vmul.f32 %v523, %v1661
      %v1711 = vmul.f32 %v528, %v1661
      %v1712 = vmul.f32 %v533, %v1661
      %v1713 = vmul.f32 %v538, %v1661
      %v1714 = vmul.f32 %v543, %v1661
      %v1715 = vmul.f32 %v548, %v1661
      %v1716 = vmul.f32 %v553, %v1661
      %v1717 = vmul.f32 %v558, %v1661
      %v1718 = vmul.f32 %v563, %v1661
      %v1719 = vmul.f32 %v568, %v1661
      %v1720 = vmul.f32 %v573, %v1661
      %v1721 = vmul.f32 %v578, %v1661
      %v1722 = vmul.f32 %v583, %v1661
      %v1723 = vmul.f32 %v588, %v1661
      %v1724 = vmul.f32 %v593, %v1661
      %v1725 = vmul.f32 %v598, %v1661
      %v1726 = vmul.f32 %v603, %v1661
      %v1727 = vmul.f32 %v608, %v1661
      %v1728 = vmul.f32 %v613, %v1661
      %v1729 = vmul.f32 %v618, %v1661
      %v1730 = vmul.f32 %v623, %v1661
      %v1731 = vmul.f32 %v628, %v1661
      %v1732 = vmul.f32 %v633, %v1661
      %v1733 = vmul.f32 %v638, %v1661
      %v1734 = vmul.f32 %v643, %v1661
      %v1735 = vmul.f32 %v648, %v1661
      %v1736 = vmul.f32 %v653, %v1661
      %v1737 = vmul.f32 %v658, %v1661
      %v1738 = vmul.f32 %v663, %v1661
      %v1739 = vmul.f32 %v668, %v1661
      %v1740 = vmul.f32 %v673, %v1661
      %v1741 = vmul.f32 %v678, %v1661
      %v1742 = vmul.f32 %v683, %v1661
      %v1743 = vmul.f32 %v688, %v1661
      %v1744 = vmul.f32 %v693, %v1661
      %v1745 = vmul.f32 %v698, %v1661
      %v1746 = vmul.f32 %v703, %v1661
      %v1747 = vmul.f32 %v708, %v1661
      %v1748 = vmul.f32 %v713, %v1661
      %v1749 = vmul.f32 %v718, %v1661
      %v1750 = vmul.f32 %v723, %v1661
      %v1751 = vmul.f32 %v728, %v1661
      %v1752 = vmul.f32 %v733, %v1661
      %v1753 = vmul.f32 %v738, %v1661
      %v1754 = vmul.f32 %v743, %v1661
      %v1755 = vmul.f32 %v748, %v1661
      %v1756 = vmul.f32 %v753, %v1661
      %v1757 = vmul.f32 %v758, %v1661
      %v1758 = vmul.f32 %v763, %v1661
      %v1759 = vmul.f32 %v768, %v1661
      %v1760 = vmul.f32 %v773, %v1661
      %v1761 = vmul.f32 %v778, %v1661
      %v1762 = vmul.f32 %v783, %v1661
      %v1763 = vmul.f32 %v788, %v1661
      %v1764 = vmul.f32 %v793, %v1661
      %v1765 = vmul.f32 %v798, %v1661
      %v1766 = vmul.f32 %v803, %v1661
      %v1767 = vmul.f32 %v808, %v1661
      %vm1873 = vcmask 1045504
      %v1874 = vrot.slane %v1663, 2
      %v1875 = vrot.slane %v1664, 2
      %v1876 = vsel %vm1873, %v1874, %v1875
      %v1877 = vrot.slane %v1665, 2
      %v1878 = vsel %vm1873, %v1875, %v1877
      %v1879 = vrot.slane %v1666, 2
      %v1880 = vsel %vm1873, %v1877, %v1879
      %v1881 = vrot.slane %v1667, 2
      %v1882 = vsel %vm1873, %v1879, %v1881
      %v1883 = vrot.slane %v1668, 2
      %v1884 = vsel %vm1873, %v1881, %v1883
      %v1885 = vrot.slane %v1669, 2
      %v1886 = vsel %vm1873, %v1883, %v1885
      %v1887 = vrot.slane %v1670, 2
      %v1888 = vsel %vm1873, %v1885, %v1887
      %v1889 = vrot.slane %v1671, 2
      %v1890 = vsel %vm1873, %v1887, %v1889
      %v1891 = vrot.slane %v1672, 2
      %v1892 = vsel %vm1873, %v1889, %v1891
      %v1893 = vrot.slane %v1673, 2
      %v1894 = vsel %vm1873, %v1891, %v1893
      %v1895 = vrot.slane %v1674, 2
      %v1896 = vsel %vm1873, %v1893, %v1895
      %v1897 = vrot.slane %v1675, 2
      %v1898 = vsel %vm1873, %v1895, %v1897
      %v1899 = vrot.slane %v1676, 2
      %v1900 = vsel %vm1873, %v1897, %v1899
      %v1901 = vrot.slane %v1677, 2
      %v1902 = vsel %vm1873, %v1899, %v1901
      %v1903 = vrot.slane %v1678, 2
      %v1904 = vsel %vm1873, %v1901, %v1903
      %v1905 = vrot.slane %v1679, 2
      %v1906 = vsel %vm1873, %v1903, %v1905
      %v1907 = vrot.slane %v1680, 2
      %v1908 = vsel %vm1873, %v1905, %v1907
      %v1909 = vrot.slane %v1681, 2
      %v1910 = vsel %vm1873, %v1907, %v1909
      %v1911 = vrot.slane %v1682, 2
      %v1912 = vsel %vm1873, %v1909, %v1911
      %v1913 = vrot.slane %v1683, 2
      %v1914 = vsel %vm1873, %v1911, %v1913
      %v1915 = vrot.slane %v1684, 2
      %v1916 = vsel %vm1873, %v1913, %v1915
      %v1917 = vrot.slane %v1685, 2
      %v1918 = vsel %vm1873, %v1915, %v1917
      %v1919 = vrot.slane %v1686, 2
      %v1920 = vsel %vm1873, %v1917, %v1919
      %v1921 = vrot.slane %v1687, 2
      %v1922 = vsel %vm1873, %v1919, %v1921
      %v1923 = vrot.slane %v1688, 2
      %v1924 = vsel %vm1873, %v1921, %v1923
      %v1925 = vrot.slane %v1689, 2
      %v1926 = vsel %vm1873, %v1923, %v1925
      %v1927 = vrot.slane %v1690, 2
      %v1928 = vsel %vm1873, %v1925, %v1927
      %v1929 = vrot.slane %v1691, 2
      %v1930 = vsel %vm1873, %v1927, %v1929
      %v1931 = vrot.slane %v1692, 2
      %v1932 = vsel %vm1873, %v1929, %v1931
      %v1933 = vrot.slane %v1693, 2
      %v1934 = vsel %vm1873, %v1931, %v1933
      %v1935 = vrot.slane %v1694, 2
      %v1936 = vsel %vm1873, %v1933, %v1935
      %v1937 = vrot.slane %v1695, 2
      %v1938 = vsel %vm1873, %v1935, %v1937
      %v1939 = vrot.slane %v1696, 2
      %v1940 = vsel %vm1873, %v1937, %v1939
      %v1941 = vrot.slane %v1697, 2
      %v1942 = vsel %vm1873, %v1939, %v1941
      %v1943 = vrot.slane %v1698, 2
      %v1944 = vsel %vm1873, %v1941, %v1943
      %v1945 = vrot.slane %v1699, 2
      %v1946 = vsel %vm1873, %v1943, %v1945
      %v1947 = vrot.slane %v1700, 2
      %v1948 = vsel %vm1873, %v1945, %v1947
      %v1949 = vrot.slane %v1701, 2
      %v1950 = vsel %vm1873, %v1947, %v1949
      %v1951 = vrot.slane %v1702, 2
      %v1952 = vsel %vm1873, %v1949, %v1951
      %v1953 = vrot.slane %v1703, 2
      %v1954 = vsel %vm1873, %v1951, %v1953
      %v1955 = vrot.slane %v1704, 2
      %v1956 = vsel %vm1873, %v1953, %v1955
      %v1957 = vrot.slane %v1705, 2
      %v1958 = vsel %vm1873, %v1955, %v1957
      %v1959 = vrot.slane %v1706, 2
      %v1960 = vsel %vm1873, %v1957, %v1959
      %v1961 = vrot.slane %v1707, 2
      %v1962 = vsel %vm1873, %v1959, %v1961
      %v1963 = vrot.slane %v1708, 2
      %v1964 = vsel %vm1873, %v1961, %v1963
      %v1965 = vrot.slane %v1709, 2
      %v1966 = vsel %vm1873, %v1963, %v1965
      %v1967 = vrot.slane %v1710, 2
      %v1968 = vsel %vm1873, %v1965, %v1967
      %v1969 = vrot.slane %v1711, 2
      %v1970 = vsel %vm1873, %v1967, %v1969
      %v1971 = vrot.slane %v1712, 2
      %v1972 = vsel %vm1873, %v1969, %v1971
      %v1973 = vrot.slane %v1713, 2
      %v1974 = vsel %vm1873, %v1971, %v1973
      %v1975 = vrot.slane %v1714, 2
      %v1976 = vsel %vm1873, %v1973, %v1975
      %v1977 = vrot.slane %v1715, 2
      %v1978 = vsel %vm1873, %v1975, %v1977
      %v1979 = vrot.slane %v1716, 2
      %v1980 = vsel %vm1873, %v1977, %v1979
      %v1981 = vrot.slane %v1717, 2
      %v1982 = vsel %vm1873, %v1979, %v1981
      %v1983 = vrot.slane %v1718, 2
      %v1984 = vsel %vm1873, %v1981, %v1983
      %v1985 = vrot.slane %v1719, 2
      %v1986 = vsel %vm1873, %v1983, %v1985
      %v1987 = vrot.slane %v1720, 2
      %v1988 = vsel %vm1873, %v1985, %v1987
      %v1989 = vrot.slane %v1721, 2
      %v1990 = vsel %vm1873, %v1987, %v1989
      %v1991 = vrot.slane %v1722, 2
      %v1992 = vsel %vm1873, %v1989, %v1991
      %v1993 = vrot.slane %v1723, 2
      %v1994 = vsel %vm1873, %v1991, %v1993
      %v1995 = vrot.slane %v1724, 2
      %v1996 = vsel %vm1873, %v1993, %v1995
      %v1997 = vrot.slane %v1725, 2
      %v1998 = vsel %vm1873, %v1995, %v1997
      %v1999 = vrot.slane %v1726, 2
      %v2000 = vsel %vm1873, %v1997, %v1999
      %v2001 = vrot.slane %v1727, 2
      %v2002 = vsel %vm1873, %v1999, %v2001
      %v2003 = vrot.slane %v1728, 2
      %v2004 = vsel %vm1873, %v2001, %v2003
      %v2005 = vrot.slane %v1729, 2
      %v2006 = vsel %vm1873, %v2003, %v2005
      %v2007 = vrot.slane %v1730, 2
      %v2008 = vsel %vm1873, %v2005, %v2007
      %v2009 = vrot.slane %v1731, 2
      %v2010 = vsel %vm1873, %v2007, %v2009
      %v2011 = vrot.slane %v1732, 2
      %v2012 = vsel %vm1873, %v2009, %v2011
      %v2013 = vrot.slane %v1733, 2
      %v2014 = vsel %vm1873, %v2011, %v2013
      %v2015 = vrot.slane %v1734, 2
      %v2016 = vsel %vm1873, %v2013, %v2015
      %v2017 = vrot.slane %v1735, 2
      %v2018 = vsel %vm1873, %v2015, %v2017
      %v2019 = vrot.slane %v1736, 2
      %v2020 = vsel %vm1873, %v2017, %v2019
      %v2021 = vrot.slane %v1737, 2
      %v2022 = vsel %vm1873, %v2019, %v2021
      %v2023 = vrot.slane %v1738, 2
      %v2024 = vsel %vm1873, %v2021, %v2023
      %v2025 = vrot.slane %v1739, 2
      %v2026 = vsel %vm1873, %v2023, %v2025
      %v2027 = vrot.slane %v1740, 2
      %v2028 = vsel %vm1873, %v2025, %v2027
      %v2029 = vrot.slane %v1741, 2
      %v2030 = vsel %vm1873, %v2027, %v2029
      %v2031 = vrot.slane %v1742, 2
      %v2032 = vsel %vm1873, %v2029, %v2031
      %v2033 = vrot.slane %v1743, 2
      %v2034 = vsel %vm1873, %v2031, %v2033
      %v2035 = vrot.slane %v1744, 2
      %v2036 = vsel %vm1873, %v2033, %v2035
      %v2037 = vrot.slane %v1745, 2
      %v2038 = vsel %vm1873, %v2035, %v2037
      %v2039 = vrot.slane %v1746, 2
      %v2040 = vsel %vm1873, %v2037, %v2039
      %v2041 = vrot.slane %v1747, 2
      %v2042 = vsel %vm1873, %v2039, %v2041
      %v2043 = vrot.slane %v1748, 2
      %v2044 = vsel %vm1873, %v2041, %v2043
      %v2045 = vrot.slane %v1749, 2
      %v2046 = vsel %vm1873, %v2043, %v2045
      %v2047 = vrot.slane %v1750, 2
      %v2048 = vsel %vm1873, %v2045, %v2047
      %v2049 = vrot.slane %v1751, 2
      %v2050 = vsel %vm1873, %v2047, %v2049
      %v2051 = vrot.slane %v1752, 2
      %v2052 = vsel %vm1873, %v2049, %v2051
      %v2053 = vrot.slane %v1753, 2
      %v2054 = vsel %vm1873, %v2051, %v2053
      %v2055 = vrot.slane %v1754, 2
      %v2056 = vsel %vm1873, %v2053, %v2055
      %v2057 = vrot.slane %v1755, 2
      %v2058 = vsel %vm1873, %v2055, %v2057
      %v2059 = vrot.slane %v1756, 2
      %v2060 = vsel %vm1873, %v2057, %v2059
      %v2061 = vrot.slane %v1757, 2
      %v2062 = vsel %vm1873, %v2059, %v2061
      %v2063 = vrot.slane %v1758, 2
      %v2064 = vsel %vm1873, %v2061, %v2063
      %v2065 = vrot.slane %v1759, 2
      %v2066 = vsel %vm1873, %v2063, %v2065
      %v2067 = vrot.slane %v1760, 2
      %v2068 = vsel %vm1873, %v2065, %v2067
      %v2069 = vrot.slane %v1761, 2
      %v2070 = vsel %vm1873, %v2067, %v2069
      %v2071 = vrot.slane %v1762, 2
      %v2072 = vsel %vm1873, %v2069, %v2071
      %v2073 = vrot.slane %v1763, 2
      %v2074 = vsel %vm1873, %v2071, %v2073
      %v2075 = vrot.slane %v1764, 2
      %v2076 = vsel %vm1873, %v2073, %v2075
      %v2077 = vrot.slane %v1765, 2
      %v2078 = vsel %vm1873, %v2075, %v2077
      %v2079 = vrot.slane %v1766, 2
      %v2080 = vsel %vm1873, %v2077, %v2079
      %v2081 = vrot.slane %v1767, 2
      %v2082 = vsel %vm1873, %v2079, %v2081
      %v2188 = vadd.f32 %v1553, %v1876
      %v2189 = vadd.f32 %v1554, %v1878
      %v2190 = vadd.f32 %v1555, %v1880
      %v2191 = vadd.f32 %v1556, %v1882
      %v2192 = vadd.f32 %v1557, %v1884
      %v2193 = vadd.f32 %v1558, %v1886
      %v2194 = vadd.f32 %v1559, %v1888
      %v2195 = vadd.f32 %v1560, %v1890
      %v2196 = vadd.f32 %v1561, %v1892
      %v2197 = vadd.f32 %v1562, %v1894
      %v2198 = vadd.f32 %v1563, %v1896
      %v2199 = vadd.f32 %v1564, %v1898
      %v2200 = vadd.f32 %v1565, %v1900
      %v2201 = vadd.f32 %v1566, %v1902
      %v2202 = vadd.f32 %v1567, %v1904
      %v2203 = vadd.f32 %v1568, %v1906
      %v2204 = vadd.f32 %v1569, %v1908
      %v2205 = vadd.f32 %v1570, %v1910
      %v2206 = vadd.f32 %v1571, %v1912
      %v2207 = vadd.f32 %v1572, %v1914
      %v2208 = vadd.f32 %v1573, %v1916
      %v2209 = vadd.f32 %v1574, %v1918
      %v2210 = vadd.f32 %v1575, %v1920
      %v2211 = vadd.f32 %v1576, %v1922
      %v2212 = vadd.f32 %v1577, %v1924
      %v2213 = vadd.f32 %v1578, %v1926
      %v2214 = vadd.f32 %v1579, %v1928
      %v2215 = vadd.f32 %v1580, %v1930
      %v2216 = vadd.f32 %v1581, %v1932
      %v2217 = vadd.f32 %v1582, %v1934
      %v2218 = vadd.f32 %v1583, %v1936
      %v2219 = vadd.f32 %v1584, %v1938
      %v2220 = vadd.f32 %v1585, %v1940
      %v2221 = vadd.f32 %v1586, %v1942
      %v2222 = vadd.f32 %v1587, %v1944
      %v2223 = vadd.f32 %v1588, %v1946
      %v2224 = vadd.f32 %v1589, %v1948
      %v2225 = vadd.f32 %v1590, %v1950
      %v2226 = vadd.f32 %v1591, %v1952
      %v2227 = vadd.f32 %v1592, %v1954
      %v2228 = vadd.f32 %v1593, %v1956
      %v2229 = vadd.f32 %v1594, %v1958
      %v2230 = vadd.f32 %v1595, %v1960
      %v2231 = vadd.f32 %v1596, %v1962
      %v2232 = vadd.f32 %v1597, %v1964
      %v2233 = vadd.f32 %v1598, %v1966
      %v2234 = vadd.f32 %v1599, %v1968
      %v2235 = vadd.f32 %v1600, %v1970
      %v2236 = vadd.f32 %v1601, %v1972
      %v2237 = vadd.f32 %v1602, %v1974
      %v2238 = vadd.f32 %v1603, %v1976
      %v2239 = vadd.f32 %v1604, %v1978
      %v2240 = vadd.f32 %v1605, %v1980
      %v2241 = vadd.f32 %v1606, %v1982
      %v2242 = vadd.f32 %v1607, %v1984
      %v2243 = vadd.f32 %v1608, %v1986
      %v2244 = vadd.f32 %v1609, %v1988
      %v2245 = vadd.f32 %v1610, %v1990
      %v2246 = vadd.f32 %v1611, %v1992
      %v2247 = vadd.f32 %v1612, %v1994
      %v2248 = vadd.f32 %v1613, %v1996
      %v2249 = vadd.f32 %v1614, %v1998
      %v2250 = vadd.f32 %v1615, %v2000
      %v2251 = vadd.f32 %v1616, %v2002
      %v2252 = vadd.f32 %v1617, %v2004
      %v2253 = vadd.f32 %v1618, %v2006
      %v2254 = vadd.f32 %v1619, %v2008
      %v2255 = vadd.f32 %v1620, %v2010
      %v2256 = vadd.f32 %v1621, %v2012
      %v2257 = vadd.f32 %v1622, %v2014
      %v2258 = vadd.f32 %v1623, %v2016
      %v2259 = vadd.f32 %v1624, %v2018
      %v2260 = vadd.f32 %v1625, %v2020
      %v2261 = vadd.f32 %v1626, %v2022
      %v2262 = vadd.f32 %v1627, %v2024
      %v2263 = vadd.f32 %v1628, %v2026
      %v2264 = vadd.f32 %v1629, %v2028
      %v2265 = vadd.f32 %v1630, %v2030
      %v2266 = vadd.f32 %v1631, %v2032
      %v2267 = vadd.f32 %v1632, %v2034
      %v2268 = vadd.f32 %v1633, %v2036
      %v2269 = vadd.f32 %v1634, %v2038
      %v2270 = vadd.f32 %v1635, %v2040
      %v2271 = vadd.f32 %v1636, %v2042
      %v2272 = vadd.f32 %v1637, %v2044
      %v2273 = vadd.f32 %v1638, %v2046
      %v2274 = vadd.f32 %v1639, %v2048
      %v2275 = vadd.f32 %v1640, %v2050
      %v2276 = vadd.f32 %v1641, %v2052
      %v2277 = vadd.f32 %v1642, %v2054
      %v2278 = vadd.f32 %v1643, %v2056
      %v2279 = vadd.f32 %v1644, %v2058
      %v2280 = vadd.f32 %v1645, %v2060
      %v2281 = vadd.f32 %v1646, %v2062
      %v2282 = vadd.f32 %v1647, %v2064
      %v2283 = vadd.f32 %v1648, %v2066
      %v2284 = vadd.f32 %v1649, %v2068
      %v2285 = vadd.f32 %v1650, %v2070
      %v2286 = vadd.f32 %v1651, %v2072
      %v2287 = vadd.f32 %v1652, %v2074
      %v2288 = vadd.f32 %v1653, %v2076
      %v2289 = vadd.f32 %v1654, %v2078
      %v2290 = vadd.f32 %v1655, %v2080
      %v2291 = vadd.f32 %v1656, %v2082
      %v2292 = vadd.f32 %v1657, %v2081
      %s2293 = scalar_lea.vmem %s1, 3
      %v2294 = vld [vmem:[%s2293] sm:$0x1]
      %2296 = vset.pattern.permute.xlu0 0
      %2297 = vperm.xlu0 %2296, %v276
      %v2298 = vpop.permute.xlu0 %2297
      %2301 = vset.pattern.permute.xlu0 0
      %2302 = vperm.xlu0 %2301, %v277
      %v2303 = vpop.permute.xlu0 %2302
      %2306 = vset.pattern.permute.xlu0 0
      %2307 = vperm.xlu0 %2306, %v278
      %v2308 = vpop.permute.xlu0 %2307
      %2311 = vset.pattern.permute.xlu0 0
      %2312 = vperm.xlu0 %2311, %v279
      %v2313 = vpop.permute.xlu0 %2312
      %v2316 = vperm.slane %v2294, 0
      %v2318 = vmul.f32 %v303, %v2316
      %v2319 = vmul.f32 %v308, %v2316
      %v2320 = vmul.f32 %v313, %v2316
      %v2321 = vmul.f32 %v318, %v2316
      %v2322 = vmul.f32 %v323, %v2316
      %v2323 = vmul.f32 %v328, %v2316
      %v2324 = vmul.f32 %v333, %v2316
      %v2325 = vmul.f32 %v338, %v2316
      %v2326 = vmul.f32 %v343, %v2316
      %v2327 = vmul.f32 %v348, %v2316
      %v2328 = vmul.f32 %v353, %v2316
      %v2329 = vmul.f32 %v358, %v2316
      %v2330 = vmul.f32 %v363, %v2316
      %v2331 = vmul.f32 %v368, %v2316
      %v2332 = vmul.f32 %v373, %v2316
      %v2333 = vmul.f32 %v378, %v2316
      %v2334 = vmul.f32 %v383, %v2316
      %v2335 = vmul.f32 %v388, %v2316
      %v2336 = vmul.f32 %v393, %v2316
      %v2337 = vmul.f32 %v398, %v2316
      %v2338 = vmul.f32 %v403, %v2316
      %v2339 = vmul.f32 %v408, %v2316
      %v2340 = vmul.f32 %v413, %v2316
      %v2341 = vmul.f32 %v418, %v2316
      %v2342 = vmul.f32 %v423, %v2316
      %v2343 = vmul.f32 %v428, %v2316
      %v2344 = vmul.f32 %v433, %v2316
      %v2345 = vmul.f32 %v438, %v2316
      %v2346 = vmul.f32 %v443, %v2316
      %v2347 = vmul.f32 %v448, %v2316
      %v2348 = vmul.f32 %v453, %v2316
      %v2349 = vmul.f32 %v458, %v2316
      %v2350 = vmul.f32 %v463, %v2316
      %v2351 = vmul.f32 %v468, %v2316
      %v2352 = vmul.f32 %v473, %v2316
      %v2353 = vmul.f32 %v478, %v2316
      %v2354 = vmul.f32 %v483, %v2316
      %v2355 = vmul.f32 %v488, %v2316
      %v2356 = vmul.f32 %v493, %v2316
      %v2357 = vmul.f32 %v498, %v2316
      %v2358 = vmul.f32 %v503, %v2316
      %v2359 = vmul.f32 %v508, %v2316
      %v2360 = vmul.f32 %v513, %v2316
      %v2361 = vmul.f32 %v518, %v2316
      %v2362 = vmul.f32 %v523, %v2316
      %v2363 = vmul.f32 %v528, %v2316
      %v2364 = vmul.f32 %v533, %v2316
      %v2365 = vmul.f32 %v538, %v2316
      %v2366 = vmul.f32 %v543, %v2316
      %v2367 = vmul.f32 %v548, %v2316
      %v2368 = vmul.f32 %v553, %v2316
      %v2369 = vmul.f32 %v558, %v2316
      %v2370 = vmul.f32 %v563, %v2316
      %v2371 = vmul.f32 %v568, %v2316
      %v2372 = vmul.f32 %v573, %v2316
      %v2373 = vmul.f32 %v578, %v2316
      %v2374 = vmul.f32 %v583, %v2316
      %v2375 = vmul.f32 %v588, %v2316
      %v2376 = vmul.f32 %v593, %v2316
      %v2377 = vmul.f32 %v598, %v2316
      %v2378 = vmul.f32 %v603, %v2316
      %v2379 = vmul.f32 %v608, %v2316
      %v2380 = vmul.f32 %v613, %v2316
      %v2381 = vmul.f32 %v618, %v2316
      %v2382 = vmul.f32 %v623, %v2316
      %v2383 = vmul.f32 %v628, %v2316
      %v2384 = vmul.f32 %v633, %v2316
      %v2385 = vmul.f32 %v638, %v2316
      %v2386 = vmul.f32 %v643, %v2316
      %v2387 = vmul.f32 %v648, %v2316
      %v2388 = vmul.f32 %v653, %v2316
      %v2389 = vmul.f32 %v658, %v2316
      %v2390 = vmul.f32 %v663, %v2316
      %v2391 = vmul.f32 %v668, %v2316
      %v2392 = vmul.f32 %v673, %v2316
      %v2393 = vmul.f32 %v678, %v2316
      %v2394 = vmul.f32 %v683, %v2316
      %v2395 = vmul.f32 %v688, %v2316
      %v2396 = vmul.f32 %v693, %v2316
      %v2397 = vmul.f32 %v698, %v2316
      %v2398 = vmul.f32 %v703, %v2316
      %v2399 = vmul.f32 %v708, %v2316
      %v2400 = vmul.f32 %v713, %v2316
      %v2401 = vmul.f32 %v718, %v2316
      %v2402 = vmul.f32 %v723, %v2316
      %v2403 = vmul.f32 %v728, %v2316
      %v2404 = vmul.f32 %v733, %v2316
      %v2405 = vmul.f32 %v738, %v2316
      %v2406 = vmul.f32 %v743, %v2316
      %v2407 = vmul.f32 %v748, %v2316
      %v2408 = vmul.f32 %v753, %v2316
      %v2409 = vmul.f32 %v758, %v2316
      %v2410 = vmul.f32 %v763, %v2316
      %v2411 = vmul.f32 %v768, %v2316
      %v2412 = vmul.f32 %v773, %v2316
      %v2413 = vmul.f32 %v778, %v2316
      %v2414 = vmul.f32 %v783, %v2316
      %v2415 = vmul.f32 %v788, %v2316
      %v2416 = vmul.f32 %v793, %v2316
      %v2417 = vmul.f32 %v798, %v2316
      %v2418 = vmul.f32 %v803, %v2316
      %v2419 = vmul.f32 %v808, %v2316
      %v2420 = vmul.f32 %v2298, %v2316
      %v2421 = vmul.f32 %v2303, %v2316
      %v2422 = vmul.f32 %v2308, %v2316
      %v2423 = vmul.f32 %v2313, %v2316
      %vm2530 = vcmask 1041408
      %v2531 = vrot.slane %v2318, 6
      %v2532 = vrot.slane %v2319, 6
      %v2533 = vsel %vm2530, %v2531, %v2532
      %v2534 = vrot.slane %v2320, 6
      %v2535 = vsel %vm2530, %v2532, %v2534
      %v2536 = vrot.slane %v2321, 6
      %v2537 = vsel %vm2530, %v2534, %v2536
      %v2538 = vrot.slane %v2322, 6
      %v2539 = vsel %vm2530, %v2536, %v2538
      %v2540 = vrot.slane %v2323, 6
      %v2541 = vsel %vm2530, %v2538, %v2540
      %v2542 = vrot.slane %v2324, 6
      %v2543 = vsel %vm2530, %v2540, %v2542
      %v2544 = vrot.slane %v2325, 6
      %v2545 = vsel %vm2530, %v2542, %v2544
      %v2546 = vrot.slane %v2326, 6
      %v2547 = vsel %vm2530, %v2544, %v2546
      %v2548 = vrot.slane %v2327, 6
      %v2549 = vsel %vm2530, %v2546, %v2548
      %v2550 = vrot.slane %v2328, 6
      %v2551 = vsel %vm2530, %v2548, %v2550
      %v2552 = vrot.slane %v2329, 6
      %v2553 = vsel %vm2530, %v2550, %v2552
      %v2554 = vrot.slane %v2330, 6
      %v2555 = vsel %vm2530, %v2552, %v2554
      %v2556 = vrot.slane %v2331, 6
      %v2557 = vsel %vm2530, %v2554, %v2556
      %v2558 = vrot.slane %v2332, 6
      %v2559 = vsel %vm2530, %v2556, %v2558
      %v2560 = vrot.slane %v2333, 6
      %v2561 = vsel %vm2530, %v2558, %v2560
      %v2562 = vrot.slane %v2334, 6
      %v2563 = vsel %vm2530, %v2560, %v2562
      %v2564 = vrot.slane %v2335, 6
      %v2565 = vsel %vm2530, %v2562, %v2564
      %v2566 = vrot.slane %v2336, 6
      %v2567 = vsel %vm2530, %v2564, %v2566
      %v2568 = vrot.slane %v2337, 6
      %v2569 = vsel %vm2530, %v2566, %v2568
      %v2570 = vrot.slane %v2338, 6
      %v2571 = vsel %vm2530, %v2568, %v2570
      %v2572 = vrot.slane %v2339, 6
      %v2573 = vsel %vm2530, %v2570, %v2572
      %v2574 = vrot.slane %v2340, 6
      %v2575 = vsel %vm2530, %v2572, %v2574
      %v2576 = vrot.slane %v2341, 6
      %v2577 = vsel %vm2530, %v2574, %v2576
      %v2578 = vrot.slane %v2342, 6
      %v2579 = vsel %vm2530, %v2576, %v2578
      %v2580 = vrot.slane %v2343, 6
      %v2581 = vsel %vm2530, %v2578, %v2580
      %v2582 = vrot.slane %v2344, 6
      %v2583 = vsel %vm2530, %v2580, %v2582
      %v2584 = vrot.slane %v2345, 6
      %v2585 = vsel %vm2530, %v2582, %v2584
      %v2586 = vrot.slane %v2346, 6
      %v2587 = vsel %vm2530, %v2584, %v2586
      %v2588 = vrot.slane %v2347, 6
      %v2589 = vsel %vm2530, %v2586, %v2588
      %v2590 = vrot.slane %v2348, 6
      %v2591 = vsel %vm2530, %v2588, %v2590
      %v2592 = vrot.slane %v2349, 6
      %v2593 = vsel %vm2530, %v2590, %v2592
      %v2594 = vrot.slane %v2350, 6
      %v2595 = vsel %vm2530, %v2592, %v2594
      %v2596 = vrot.slane %v2351, 6
      %v2597 = vsel %vm2530, %v2594, %v2596
      %v2598 = vrot.slane %v2352, 6
      %v2599 = vsel %vm2530, %v2596, %v2598
      %v2600 = vrot.slane %v2353, 6
      %v2601 = vsel %vm2530, %v2598, %v2600
      %v2602 = vrot.slane %v2354, 6
      %v2603 = vsel %vm2530, %v2600, %v2602
      %v2604 = vrot.slane %v2355, 6
      %v2605 = vsel %vm2530, %v2602, %v2604
      %v2606 = vrot.slane %v2356, 6
      %v2607 = vsel %vm2530, %v2604, %v2606
      %v2608 = vrot.slane %v2357, 6
      %v2609 = vsel %vm2530, %v2606, %v2608
      %v2610 = vrot.slane %v2358, 6
      %v2611 = vsel %vm2530, %v2608, %v2610
      %v2612 = vrot.slane %v2359, 6
      %v2613 = vsel %vm2530, %v2610, %v2612
      %v2614 = vrot.slane %v2360, 6
      %v2615 = vsel %vm2530, %v2612, %v2614
      %v2616 = vrot.slane %v2361, 6
      %v2617 = vsel %vm2530, %v2614, %v2616
      %v2618 = vrot.slane %v2362, 6
      %v2619 = vsel %vm2530, %v2616, %v2618
      %v2620 = vrot.slane %v2363, 6
      %v2621 = vsel %vm2530, %v2618, %v2620
      %v2622 = vrot.slane %v2364, 6
      %v2623 = vsel %vm2530, %v2620, %v2622
      %v2624 = vrot.slane %v2365, 6
      %v2625 = vsel %vm2530, %v2622, %v2624
      %v2626 = vrot.slane %v2366, 6
      %v2627 = vsel %vm2530, %v2624, %v2626
      %v2628 = vrot.slane %v2367, 6
      %v2629 = vsel %vm2530, %v2626, %v2628
      %v2630 = vrot.slane %v2368, 6
      %v2631 = vsel %vm2530, %v2628, %v2630
      %v2632 = vrot.slane %v2369, 6
      %v2633 = vsel %vm2530, %v2630, %v2632
      %v2634 = vrot.slane %v2370, 6
      %v2635 = vsel %vm2530, %v2632, %v2634
      %v2636 = vrot.slane %v2371, 6
      %v2637 = vsel %vm2530, %v2634, %v2636
      %v2638 = vrot.slane %v2372, 6
      %v2639 = vsel %vm2530, %v2636, %v2638
      %v2640 = vrot.slane %v2373, 6
      %v2641 = vsel %vm2530, %v2638, %v2640
      %v2642 = vrot.slane %v2374, 6
      %v2643 = vsel %vm2530, %v2640, %v2642
      %v2644 = vrot.slane %v2375, 6
      %v2645 = vsel %vm2530, %v2642, %v2644
      %v2646 = vrot.slane %v2376, 6
      %v2647 = vsel %vm2530, %v2644, %v2646
      %v2648 = vrot.slane %v2377, 6
      %v2649 = vsel %vm2530, %v2646, %v2648
      %v2650 = vrot.slane %v2378, 6
      %v2651 = vsel %vm2530, %v2648, %v2650
      %v2652 = vrot.slane %v2379, 6
      %v2653 = vsel %vm2530, %v2650, %v2652
      %v2654 = vrot.slane %v2380, 6
      %v2655 = vsel %vm2530, %v2652, %v2654
      %v2656 = vrot.slane %v2381, 6
      %v2657 = vsel %vm2530, %v2654, %v2656
      %v2658 = vrot.slane %v2382, 6
      %v2659 = vsel %vm2530, %v2656, %v2658
      %v2660 = vrot.slane %v2383, 6
      %v2661 = vsel %vm2530, %v2658, %v2660
      %v2662 = vrot.slane %v2384, 6
      %v2663 = vsel %vm2530, %v2660, %v2662
      %v2664 = vrot.slane %v2385, 6
      %v2665 = vsel %vm2530, %v2662, %v2664
      %v2666 = vrot.slane %v2386, 6
      %v2667 = vsel %vm2530, %v2664, %v2666
      %v2668 = vrot.slane %v2387, 6
      %v2669 = vsel %vm2530, %v2666, %v2668
      %v2670 = vrot.slane %v2388, 6
      %v2671 = vsel %vm2530, %v2668, %v2670
      %v2672 = vrot.slane %v2389, 6
      %v2673 = vsel %vm2530, %v2670, %v2672
      %v2674 = vrot.slane %v2390, 6
      %v2675 = vsel %vm2530, %v2672, %v2674
      %v2676 = vrot.slane %v2391, 6
      %v2677 = vsel %vm2530, %v2674, %v2676
      %v2678 = vrot.slane %v2392, 6
      %v2679 = vsel %vm2530, %v2676, %v2678
      %v2680 = vrot.slane %v2393, 6
      %v2681 = vsel %vm2530, %v2678, %v2680
      %v2682 = vrot.slane %v2394, 6
      %v2683 = vsel %vm2530, %v2680, %v2682
      %v2684 = vrot.slane %v2395, 6
      %v2685 = vsel %vm2530, %v2682, %v2684
      %v2686 = vrot.slane %v2396, 6
      %v2687 = vsel %vm2530, %v2684, %v2686
      %v2688 = vrot.slane %v2397, 6
      %v2689 = vsel %vm2530, %v2686, %v2688
      %v2690 = vrot.slane %v2398, 6
      %v2691 = vsel %vm2530, %v2688, %v2690
      %v2692 = vrot.slane %v2399, 6
      %v2693 = vsel %vm2530, %v2690, %v2692
      %v2694 = vrot.slane %v2400, 6
      %v2695 = vsel %vm2530, %v2692, %v2694
      %v2696 = vrot.slane %v2401, 6
      %v2697 = vsel %vm2530, %v2694, %v2696
      %v2698 = vrot.slane %v2402, 6
      %v2699 = vsel %vm2530, %v2696, %v2698
      %v2700 = vrot.slane %v2403, 6
      %v2701 = vsel %vm2530, %v2698, %v2700
      %v2702 = vrot.slane %v2404, 6
      %v2703 = vsel %vm2530, %v2700, %v2702
      %v2704 = vrot.slane %v2405, 6
      %v2705 = vsel %vm2530, %v2702, %v2704
      %v2706 = vrot.slane %v2406, 6
      %v2707 = vsel %vm2530, %v2704, %v2706
      %v2708 = vrot.slane %v2407, 6
      %v2709 = vsel %vm2530, %v2706, %v2708
      %v2710 = vrot.slane %v2408, 6
      %v2711 = vsel %vm2530, %v2708, %v2710
      %v2712 = vrot.slane %v2409, 6
      %v2713 = vsel %vm2530, %v2710, %v2712
      %v2714 = vrot.slane %v2410, 6
      %v2715 = vsel %vm2530, %v2712, %v2714
      %v2716 = vrot.slane %v2411, 6
      %v2717 = vsel %vm2530, %v2714, %v2716
      %v2718 = vrot.slane %v2412, 6
      %v2719 = vsel %vm2530, %v2716, %v2718
      %v2720 = vrot.slane %v2413, 6
      %v2721 = vsel %vm2530, %v2718, %v2720
      %v2722 = vrot.slane %v2414, 6
      %v2723 = vsel %vm2530, %v2720, %v2722
      %v2724 = vrot.slane %v2415, 6
      %v2725 = vsel %vm2530, %v2722, %v2724
      %v2726 = vrot.slane %v2416, 6
      %v2727 = vsel %vm2530, %v2724, %v2726
      %v2728 = vrot.slane %v2417, 6
      %v2729 = vsel %vm2530, %v2726, %v2728
      %v2730 = vrot.slane %v2418, 6
      %v2731 = vsel %vm2530, %v2728, %v2730
      %v2732 = vrot.slane %v2419, 6
      %v2733 = vsel %vm2530, %v2730, %v2732
      %v2734 = vrot.slane %v2420, 6
      %v2735 = vsel %vm2530, %v2732, %v2734
      %v2736 = vrot.slane %v2421, 6
      %v2737 = vsel %vm2530, %v2734, %v2736
      %v2738 = vrot.slane %v2422, 6
      %v2739 = vsel %vm2530, %v2736, %v2738
      %v2740 = vrot.slane %v2423, 6
      %v2741 = vsel %vm2530, %v2738, %v2740
      %v2847 = vadd.f32 %v2188, %v2533
      %v2848 = vadd.f32 %v2189, %v2535
      %v2849 = vadd.f32 %v2190, %v2537
      %v2850 = vadd.f32 %v2191, %v2539
      %v2851 = vadd.f32 %v2192, %v2541
      %v2852 = vadd.f32 %v2193, %v2543
      %v2853 = vadd.f32 %v2194, %v2545
      %v2854 = vadd.f32 %v2195, %v2547
      %v2855 = vadd.f32 %v2196, %v2549
      %v2856 = vadd.f32 %v2197, %v2551
      %v2857 = vadd.f32 %v2198, %v2553
      %v2858 = vadd.f32 %v2199, %v2555
      %v2859 = vadd.f32 %v2200, %v2557
      %v2860 = vadd.f32 %v2201, %v2559
      %v2861 = vadd.f32 %v2202, %v2561
      %v2862 = vadd.f32 %v2203, %v2563
      %v2863 = vadd.f32 %v2204, %v2565
      %v2864 = vadd.f32 %v2205, %v2567
      %v2865 = vadd.f32 %v2206, %v2569
      %v2866 = vadd.f32 %v2207, %v2571
      %v2867 = vadd.f32 %v2208, %v2573
      %v2868 = vadd.f32 %v2209, %v2575
      %v2869 = vadd.f32 %v2210, %v2577
      %v2870 = vadd.f32 %v2211, %v2579
      %v2871 = vadd.f32 %v2212, %v2581
      %v2872 = vadd.f32 %v2213, %v2583
      %v2873 = vadd.f32 %v2214, %v2585
      %v2874 = vadd.f32 %v2215, %v2587
      %v2875 = vadd.f32 %v2216, %v2589
      %v2876 = vadd.f32 %v2217, %v2591
      %v2877 = vadd.f32 %v2218, %v2593
      %v2878 = vadd.f32 %v2219, %v2595
      %v2879 = vadd.f32 %v2220, %v2597
      %v2880 = vadd.f32 %v2221, %v2599
      %v2881 = vadd.f32 %v2222, %v2601
      %v2882 = vadd.f32 %v2223, %v2603
      %v2883 = vadd.f32 %v2224, %v2605
      %v2884 = vadd.f32 %v2225, %v2607
      %v2885 = vadd.f32 %v2226, %v2609
      %v2886 = vadd.f32 %v2227, %v2611
      %v2887 = vadd.f32 %v2228, %v2613
      %v2888 = vadd.f32 %v2229, %v2615
      %v2889 = vadd.f32 %v2230, %v2617
      %v2890 = vadd.f32 %v2231, %v2619
      %v2891 = vadd.f32 %v2232, %v2621
      %v2892 = vadd.f32 %v2233, %v2623
      %v2893 = vadd.f32 %v2234, %v2625
      %v2894 = vadd.f32 %v2235, %v2627
      %v2895 = vadd.f32 %v2236, %v2629
      %v2896 = vadd.f32 %v2237, %v2631
      %v2897 = vadd.f32 %v2238, %v2633
      %v2898 = vadd.f32 %v2239, %v2635
      %v2899 = vadd.f32 %v2240, %v2637
      %v2900 = vadd.f32 %v2241, %v2639
      %v2901 = vadd.f32 %v2242, %v2641
      %v2902 = vadd.f32 %v2243, %v2643
      %v2903 = vadd.f32 %v2244, %v2645
      %v2904 = vadd.f32 %v2245, %v2647
      %v2905 = vadd.f32 %v2246, %v2649
      %v2906 = vadd.f32 %v2247, %v2651
      %v2907 = vadd.f32 %v2248, %v2653
      %v2908 = vadd.f32 %v2249, %v2655
      %v2909 = vadd.f32 %v2250, %v2657
      %v2910 = vadd.f32 %v2251, %v2659
      %v2911 = vadd.f32 %v2252, %v2661
      %v2912 = vadd.f32 %v2253, %v2663
      %v2913 = vadd.f32 %v2254, %v2665
      %v2914 = vadd.f32 %v2255, %v2667
      %v2915 = vadd.f32 %v2256, %v2669
      %v2916 = vadd.f32 %v2257, %v2671
      %v2917 = vadd.f32 %v2258, %v2673
      %v2918 = vadd.f32 %v2259, %v2675
      %v2919 = vadd.f32 %v2260, %v2677
      %v2920 = vadd.f32 %v2261, %v2679
      %v2921 = vadd.f32 %v2262, %v2681
      %v2922 = vadd.f32 %v2263, %v2683
      %v2923 = vadd.f32 %v2264, %v2685
      %v2924 = vadd.f32 %v2265, %v2687
      %v2925 = vadd.f32 %v2266, %v2689
      %v2926 = vadd.f32 %v2267, %v2691
      %v2927 = vadd.f32 %v2268, %v2693
      %v2928 = vadd.f32 %v2269, %v2695
      %v2929 = vadd.f32 %v2270, %v2697
      %v2930 = vadd.f32 %v2271, %v2699
      %v2931 = vadd.f32 %v2272, %v2701
      %v2932 = vadd.f32 %v2273, %v2703
      %v2933 = vadd.f32 %v2274, %v2705
      %v2934 = vadd.f32 %v2275, %v2707
      %v2935 = vadd.f32 %v2276, %v2709
      %v2936 = vadd.f32 %v2277, %v2711
      %v2937 = vadd.f32 %v2278, %v2713
      %v2938 = vadd.f32 %v2279, %v2715
      %v2939 = vadd.f32 %v2280, %v2717
      %v2940 = vadd.f32 %v2281, %v2719
      %v2941 = vadd.f32 %v2282, %v2721
      %v2942 = vadd.f32 %v2283, %v2723
      %v2943 = vadd.f32 %v2284, %v2725
      %v2944 = vadd.f32 %v2285, %v2727
      %v2945 = vadd.f32 %v2286, %v2729
      %v2946 = vadd.f32 %v2287, %v2731
      %v2947 = vadd.f32 %v2288, %v2733
      %v2948 = vadd.f32 %v2289, %v2735
      %v2949 = vadd.f32 %v2290, %v2737
      %v2950 = vadd.f32 %v2291, %v2739
      %v2951 = vadd.f32 %v2292, %v2741
      %s2952 = scalar_lea.vmem %s1, 4
      %v2953 = vld [vmem:[%s2952] sm:$0x1]
      %v2955 = vperm.slane %v2953, 0
      %v2957 = vmul.f32 %v303, %v2955
      %v2958 = vmul.f32 %v308, %v2955
      %v2959 = vmul.f32 %v313, %v2955
      %v2960 = vmul.f32 %v318, %v2955
      %v2961 = vmul.f32 %v323, %v2955
      %v2962 = vmul.f32 %v328, %v2955
      %v2963 = vmul.f32 %v333, %v2955
      %v2964 = vmul.f32 %v338, %v2955
      %v2965 = vmul.f32 %v343, %v2955
      %v2966 = vmul.f32 %v348, %v2955
      %v2967 = vmul.f32 %v353, %v2955
      %v2968 = vmul.f32 %v358, %v2955
      %v2969 = vmul.f32 %v363, %v2955
      %v2970 = vmul.f32 %v368, %v2955
      %v2971 = vmul.f32 %v373, %v2955
      %v2972 = vmul.f32 %v378, %v2955
      %v2973 = vmul.f32 %v383, %v2955
      %v2974 = vmul.f32 %v388, %v2955
      %v2975 = vmul.f32 %v393, %v2955
      %v2976 = vmul.f32 %v398, %v2955
      %v2977 = vmul.f32 %v403, %v2955
      %v2978 = vmul.f32 %v408, %v2955
      %v2979 = vmul.f32 %v413, %v2955
      %v2980 = vmul.f32 %v418, %v2955
      %v2981 = vmul.f32 %v423, %v2955
      %v2982 = vmul.f32 %v428, %v2955
      %v2983 = vmul.f32 %v433, %v2955
      %v2984 = vmul.f32 %v438, %v2955
      %v2985 = vmul.f32 %v443, %v2955
      %v2986 = vmul.f32 %v448, %v2955
      %v2987 = vmul.f32 %v453, %v2955
      %v2988 = vmul.f32 %v458, %v2955
      %v2989 = vmul.f32 %v463, %v2955
      %v2990 = vmul.f32 %v468, %v2955
      %v2991 = vmul.f32 %v473, %v2955
      %v2992 = vmul.f32 %v478, %v2955
      %v2993 = vmul.f32 %v483, %v2955
      %v2994 = vmul.f32 %v488, %v2955
      %v2995 = vmul.f32 %v493, %v2955
      %v2996 = vmul.f32 %v498, %v2955
      %v2997 = vmul.f32 %v503, %v2955
      %v2998 = vmul.f32 %v508, %v2955
      %v2999 = vmul.f32 %v513, %v2955
      %v3000 = vmul.f32 %v518, %v2955
      %v3001 = vmul.f32 %v523, %v2955
      %v3002 = vmul.f32 %v528, %v2955
      %v3003 = vmul.f32 %v533, %v2955
      %v3004 = vmul.f32 %v538, %v2955
      %v3005 = vmul.f32 %v543, %v2955
      %v3006 = vmul.f32 %v548, %v2955
      %v3007 = vmul.f32 %v553, %v2955
      %v3008 = vmul.f32 %v558, %v2955
      %v3009 = vmul.f32 %v563, %v2955
      %v3010 = vmul.f32 %v568, %v2955
      %v3011 = vmul.f32 %v573, %v2955
      %v3012 = vmul.f32 %v578, %v2955
      %v3013 = vmul.f32 %v583, %v2955
      %v3014 = vmul.f32 %v588, %v2955
      %v3015 = vmul.f32 %v593, %v2955
      %v3016 = vmul.f32 %v598, %v2955
      %v3017 = vmul.f32 %v603, %v2955
      %v3018 = vmul.f32 %v608, %v2955
      %v3019 = vmul.f32 %v613, %v2955
      %v3020 = vmul.f32 %v618, %v2955
      %v3021 = vmul.f32 %v623, %v2955
      %v3022 = vmul.f32 %v628, %v2955
      %v3023 = vmul.f32 %v633, %v2955
      %v3024 = vmul.f32 %v638, %v2955
      %v3025 = vmul.f32 %v643, %v2955
      %v3026 = vmul.f32 %v648, %v2955
      %v3027 = vmul.f32 %v653, %v2955
      %v3028 = vmul.f32 %v658, %v2955
      %v3029 = vmul.f32 %v663, %v2955
      %v3030 = vmul.f32 %v668, %v2955
      %v3031 = vmul.f32 %v673, %v2955
      %v3032 = vmul.f32 %v678, %v2955
      %v3033 = vmul.f32 %v683, %v2955
      %v3034 = vmul.f32 %v688, %v2955
      %v3035 = vmul.f32 %v693, %v2955
      %v3036 = vmul.f32 %v698, %v2955
      %v3037 = vmul.f32 %v703, %v2955
      %v3038 = vmul.f32 %v708, %v2955
      %v3039 = vmul.f32 %v713, %v2955
      %v3040 = vmul.f32 %v718, %v2955
      %v3041 = vmul.f32 %v723, %v2955
      %v3042 = vmul.f32 %v728, %v2955
      %v3043 = vmul.f32 %v733, %v2955
      %v3044 = vmul.f32 %v738, %v2955
      %v3045 = vmul.f32 %v743, %v2955
      %v3046 = vmul.f32 %v748, %v2955
      %v3047 = vmul.f32 %v753, %v2955
      %v3048 = vmul.f32 %v758, %v2955
      %v3049 = vmul.f32 %v763, %v2955
      %v3050 = vmul.f32 %v768, %v2955
      %v3051 = vmul.f32 %v773, %v2955
      %v3052 = vmul.f32 %v778, %v2955
      %v3053 = vmul.f32 %v783, %v2955
      %v3054 = vmul.f32 %v788, %v2955
      %v3055 = vmul.f32 %v793, %v2955
      %v3056 = vmul.f32 %v798, %v2955
      %v3057 = vmul.f32 %v803, %v2955
      %v3058 = vmul.f32 %v808, %v2955
      %v3059 = vmul.f32 %v2298, %v2955
      %v3060 = vmul.f32 %v2303, %v2955
      %v3061 = vmul.f32 %v2308, %v2955
      %v3062 = vmul.f32 %v2313, %v2955
      %vm3169 = vcmask 1040384
      %v3170 = vrot.slane %v2957, 7
      %v3171 = vrot.slane %v2958, 7
      %v3172 = vsel %vm3169, %v3170, %v3171
      %v3173 = vrot.slane %v2959, 7
      %v3174 = vsel %vm3169, %v3171, %v3173
      %v3175 = vrot.slane %v2960, 7
      %v3176 = vsel %vm3169, %v3173, %v3175
      %v3177 = vrot.slane %v2961, 7
      %v3178 = vsel %vm3169, %v3175, %v3177
      %v3179 = vrot.slane %v2962, 7
      %v3180 = vsel %vm3169, %v3177, %v3179
      %v3181 = vrot.slane %v2963, 7
      %v3182 = vsel %vm3169, %v3179, %v3181
      %v3183 = vrot.slane %v2964, 7
      %v3184 = vsel %vm3169, %v3181, %v3183
      %v3185 = vrot.slane %v2965, 7
      %v3186 = vsel %vm3169, %v3183, %v3185
      %v3187 = vrot.slane %v2966, 7
      %v3188 = vsel %vm3169, %v3185, %v3187
      %v3189 = vrot.slane %v2967, 7
      %v3190 = vsel %vm3169, %v3187, %v3189
      %v3191 = vrot.slane %v2968, 7
      %v3192 = vsel %vm3169, %v3189, %v3191
      %v3193 = vrot.slane %v2969, 7
      %v3194 = vsel %vm3169, %v3191, %v3193
      %v3195 = vrot.slane %v2970, 7
      %v3196 = vsel %vm3169, %v3193, %v3195
      %v3197 = vrot.slane %v2971, 7
      %v3198 = vsel %vm3169, %v3195, %v3197
      %v3199 = vrot.slane %v2972, 7
      %v3200 = vsel %vm3169, %v3197, %v3199
      %v3201 = vrot.slane %v2973, 7
      %v3202 = vsel %vm3169, %v3199, %v3201
      %v3203 = vrot.slane %v2974, 7
      %v3204 = vsel %vm3169, %v3201, %v3203
      %v3205 = vrot.slane %v2975, 7
      %v3206 = vsel %vm3169, %v3203, %v3205
      %v3207 = vrot.slane %v2976, 7
      %v3208 = vsel %vm3169, %v3205, %v3207
      %v3209 = vrot.slane %v2977, 7
      %v3210 = vsel %vm3169, %v3207, %v3209
      %v3211 = vrot.slane %v2978, 7
      %v3212 = vsel %vm3169, %v3209, %v3211
      %v3213 = vrot.slane %v2979, 7
      %v3214 = vsel %vm3169, %v3211, %v3213
      %v3215 = vrot.slane %v2980, 7
      %v3216 = vsel %vm3169, %v3213, %v3215
      %v3217 = vrot.slane %v2981, 7
      %v3218 = vsel %vm3169, %v3215, %v3217
      %v3219 = vrot.slane %v2982, 7
      %v3220 = vsel %vm3169, %v3217, %v3219
      %v3221 = vrot.slane %v2983, 7
      %v3222 = vsel %vm3169, %v3219, %v3221
      %v3223 = vrot.slane %v2984, 7
      %v3224 = vsel %vm3169, %v3221, %v3223
      %v3225 = vrot.slane %v2985, 7
      %v3226 = vsel %vm3169, %v3223, %v3225
      %v3227 = vrot.slane %v2986, 7
      %v3228 = vsel %vm3169, %v3225, %v3227
      %v3229 = vrot.slane %v2987, 7
      %v3230 = vsel %vm3169, %v3227, %v3229
      %v3231 = vrot.slane %v2988, 7
      %v3232 = vsel %vm3169, %v3229, %v3231
      %v3233 = vrot.slane %v2989, 7
      %v3234 = vsel %vm3169, %v3231, %v3233
      %v3235 = vrot.slane %v2990, 7
      %v3236 = vsel %vm3169, %v3233, %v3235
      %v3237 = vrot.slane %v2991, 7
      %v3238 = vsel %vm3169, %v3235, %v3237
      %v3239 = vrot.slane %v2992, 7
      %v3240 = vsel %vm3169, %v3237, %v3239
      %v3241 = vrot.slane %v2993, 7
      %v3242 = vsel %vm3169, %v3239, %v3241
      %v3243 = vrot.slane %v2994, 7
      %v3244 = vsel %vm3169, %v3241, %v3243
      %v3245 = vrot.slane %v2995, 7
      %v3246 = vsel %vm3169, %v3243, %v3245
      %v3247 = vrot.slane %v2996, 7
      %v3248 = vsel %vm3169, %v3245, %v3247
      %v3249 = vrot.slane %v2997, 7
      %v3250 = vsel %vm3169, %v3247, %v3249
      %v3251 = vrot.slane %v2998, 7
      %v3252 = vsel %vm3169, %v3249, %v3251
      %v3253 = vrot.slane %v2999, 7
      %v3254 = vsel %vm3169, %v3251, %v3253
      %v3255 = vrot.slane %v3000, 7
      %v3256 = vsel %vm3169, %v3253, %v3255
      %v3257 = vrot.slane %v3001, 7
      %v3258 = vsel %vm3169, %v3255, %v3257
      %v3259 = vrot.slane %v3002, 7
      %v3260 = vsel %vm3169, %v3257, %v3259
      %v3261 = vrot.slane %v3003, 7
      %v3262 = vsel %vm3169, %v3259, %v3261
      %v3263 = vrot.slane %v3004, 7
      %v3264 = vsel %vm3169, %v3261, %v3263
      %v3265 = vrot.slane %v3005, 7
      %v3266 = vsel %vm3169, %v3263, %v3265
      %v3267 = vrot.slane %v3006, 7
      %v3268 = vsel %vm3169, %v3265, %v3267
      %v3269 = vrot.slane %v3007, 7
      %v3270 = vsel %vm3169, %v3267, %v3269
      %v3271 = vrot.slane %v3008, 7
      %v3272 = vsel %vm3169, %v3269, %v3271
      %v3273 = vrot.slane %v3009, 7
      %v3274 = vsel %vm3169, %v3271, %v3273
      %v3275 = vrot.slane %v3010, 7
      %v3276 = vsel %vm3169, %v3273, %v3275
      %v3277 = vrot.slane %v3011, 7
      %v3278 = vsel %vm3169, %v3275, %v3277
      %v3279 = vrot.slane %v3012, 7
      %v3280 = vsel %vm3169, %v3277, %v3279
      %v3281 = vrot.slane %v3013, 7
      %v3282 = vsel %vm3169, %v3279, %v3281
      %v3283 = vrot.slane %v3014, 7
      %v3284 = vsel %vm3169, %v3281, %v3283
      %v3285 = vrot.slane %v3015, 7
      %v3286 = vsel %vm3169, %v3283, %v3285
      %v3287 = vrot.slane %v3016, 7
      %v3288 = vsel %vm3169, %v3285, %v3287
      %v3289 = vrot.slane %v3017, 7
      %v3290 = vsel %vm3169, %v3287, %v3289
      %v3291 = vrot.slane %v3018, 7
      %v3292 = vsel %vm3169, %v3289, %v3291
      %v3293 = vrot.slane %v3019, 7
      %v3294 = vsel %vm3169, %v3291, %v3293
      %v3295 = vrot.slane %v3020, 7
      %v3296 = vsel %vm3169, %v3293, %v3295
      %v3297 = vrot.slane %v3021, 7
      %v3298 = vsel %vm3169, %v3295, %v3297
      %v3299 = vrot.slane %v3022, 7
      %v3300 = vsel %vm3169, %v3297, %v3299
      %v3301 = vrot.slane %v3023, 7
      %v3302 = vsel %vm3169, %v3299, %v3301
      %v3303 = vrot.slane %v3024, 7
      %v3304 = vsel %vm3169, %v3301, %v3303
      %v3305 = vrot.slane %v3025, 7
      %v3306 = vsel %vm3169, %v3303, %v3305
      %v3307 = vrot.slane %v3026, 7
      %v3308 = vsel %vm3169, %v3305, %v3307
      %v3309 = vrot.slane %v3027, 7
      %v3310 = vsel %vm3169, %v3307, %v3309
      %v3311 = vrot.slane %v3028, 7
      %v3312 = vsel %vm3169, %v3309, %v3311
      %v3313 = vrot.slane %v3029, 7
      %v3314 = vsel %vm3169, %v3311, %v3313
      %v3315 = vrot.slane %v3030, 7
      %v3316 = vsel %vm3169, %v3313, %v3315
      %v3317 = vrot.slane %v3031, 7
      %v3318 = vsel %vm3169, %v3315, %v3317
      %v3319 = vrot.slane %v3032, 7
      %v3320 = vsel %vm3169, %v3317, %v3319
      %v3321 = vrot.slane %v3033, 7
      %v3322 = vsel %vm3169, %v3319, %v3321
      %v3323 = vrot.slane %v3034, 7
      %v3324 = vsel %vm3169, %v3321, %v3323
      %v3325 = vrot.slane %v3035, 7
      %v3326 = vsel %vm3169, %v3323, %v3325
      %v3327 = vrot.slane %v3036, 7
      %v3328 = vsel %vm3169, %v3325, %v3327
      %v3329 = vrot.slane %v3037, 7
      %v3330 = vsel %vm3169, %v3327, %v3329
      %v3331 = vrot.slane %v3038, 7
      %v3332 = vsel %vm3169, %v3329, %v3331
      %v3333 = vrot.slane %v3039, 7
      %v3334 = vsel %vm3169, %v3331, %v3333
      %v3335 = vrot.slane %v3040, 7
      %v3336 = vsel %vm3169, %v3333, %v3335
      %v3337 = vrot.slane %v3041, 7
      %v3338 = vsel %vm3169, %v3335, %v3337
      %v3339 = vrot.slane %v3042, 7
      %v3340 = vsel %vm3169, %v3337, %v3339
      %v3341 = vrot.slane %v3043, 7
      %v3342 = vsel %vm3169, %v3339, %v3341
      %v3343 = vrot.slane %v3044, 7
      %v3344 = vsel %vm3169, %v3341, %v3343
      %v3345 = vrot.slane %v3045, 7
      %v3346 = vsel %vm3169, %v3343, %v3345
      %v3347 = vrot.slane %v3046, 7
      %v3348 = vsel %vm3169, %v3345, %v3347
      %v3349 = vrot.slane %v3047, 7
      %v3350 = vsel %vm3169, %v3347, %v3349
      %v3351 = vrot.slane %v3048, 7
      %v3352 = vsel %vm3169, %v3349, %v3351
      %v3353 = vrot.slane %v3049, 7
      %v3354 = vsel %vm3169, %v3351, %v3353
      %v3355 = vrot.slane %v3050, 7
      %v3356 = vsel %vm3169, %v3353, %v3355
      %v3357 = vrot.slane %v3051, 7
      %v3358 = vsel %vm3169, %v3355, %v3357
      %v3359 = vrot.slane %v3052, 7
      %v3360 = vsel %vm3169, %v3357, %v3359
      %v3361 = vrot.slane %v3053, 7
      %v3362 = vsel %vm3169, %v3359, %v3361
      %v3363 = vrot.slane %v3054, 7
      %v3364 = vsel %vm3169, %v3361, %v3363
      %v3365 = vrot.slane %v3055, 7
      %v3366 = vsel %vm3169, %v3363, %v3365
      %v3367 = vrot.slane %v3056, 7
      %v3368 = vsel %vm3169, %v3365, %v3367
      %v3369 = vrot.slane %v3057, 7
      %v3370 = vsel %vm3169, %v3367, %v3369
      %v3371 = vrot.slane %v3058, 7
      %v3372 = vsel %vm3169, %v3369, %v3371
      %v3373 = vrot.slane %v3059, 7
      %v3374 = vsel %vm3169, %v3371, %v3373
      %v3375 = vrot.slane %v3060, 7
      %v3376 = vsel %vm3169, %v3373, %v3375
      %v3377 = vrot.slane %v3061, 7
      %v3378 = vsel %vm3169, %v3375, %v3377
      %v3379 = vrot.slane %v3062, 7
      %v3380 = vsel %vm3169, %v3377, %v3379
      %v3486 = vadd.f32 %v2847, %v3172
      %v3487 = vadd.f32 %v2848, %v3174
      %v3488 = vadd.f32 %v2849, %v3176
      %v3489 = vadd.f32 %v2850, %v3178
      %v3490 = vadd.f32 %v2851, %v3180
      %v3491 = vadd.f32 %v2852, %v3182
      %v3492 = vadd.f32 %v2853, %v3184
      %v3493 = vadd.f32 %v2854, %v3186
      %v3494 = vadd.f32 %v2855, %v3188
      %v3495 = vadd.f32 %v2856, %v3190
      %v3496 = vadd.f32 %v2857, %v3192
      %v3497 = vadd.f32 %v2858, %v3194
      %v3498 = vadd.f32 %v2859, %v3196
      %v3499 = vadd.f32 %v2860, %v3198
      %v3500 = vadd.f32 %v2861, %v3200
      %v3501 = vadd.f32 %v2862, %v3202
      %v3502 = vadd.f32 %v2863, %v3204
      %v3503 = vadd.f32 %v2864, %v3206
      %v3504 = vadd.f32 %v2865, %v3208
      %v3505 = vadd.f32 %v2866, %v3210
      %v3506 = vadd.f32 %v2867, %v3212
      %v3507 = vadd.f32 %v2868, %v3214
      %v3508 = vadd.f32 %v2869, %v3216
      %v3509 = vadd.f32 %v2870, %v3218
      %v3510 = vadd.f32 %v2871, %v3220
      %v3511 = vadd.f32 %v2872, %v3222
      %v3512 = vadd.f32 %v2873, %v3224
      %v3513 = vadd.f32 %v2874, %v3226
      %v3514 = vadd.f32 %v2875, %v3228
      %v3515 = vadd.f32 %v2876, %v3230
      %v3516 = vadd.f32 %v2877, %v3232
      %v3517 = vadd.f32 %v2878, %v3234
      %v3518 = vadd.f32 %v2879, %v3236
      %v3519 = vadd.f32 %v2880, %v3238
      %v3520 = vadd.f32 %v2881, %v3240
      %v3521 = vadd.f32 %v2882, %v3242
      %v3522 = vadd.f32 %v2883, %v3244
      %v3523 = vadd.f32 %v2884, %v3246
      %v3524 = vadd.f32 %v2885, %v3248
      %v3525 = vadd.f32 %v2886, %v3250
      %v3526 = vadd.f32 %v2887, %v3252
      %v3527 = vadd.f32 %v2888, %v3254
      %v3528 = vadd.f32 %v2889, %v3256
      %v3529 = vadd.f32 %v2890, %v3258
      %v3530 = vadd.f32 %v2891, %v3260
      %v3531 = vadd.f32 %v2892, %v3262
      %v3532 = vadd.f32 %v2893, %v3264
      %v3533 = vadd.f32 %v2894, %v3266
      %v3534 = vadd.f32 %v2895, %v3268
      %v3535 = vadd.f32 %v2896, %v3270
      %v3536 = vadd.f32 %v2897, %v3272
      %v3537 = vadd.f32 %v2898, %v3274
      %v3538 = vadd.f32 %v2899, %v3276
      %v3539 = vadd.f32 %v2900, %v3278
      %v3540 = vadd.f32 %v2901, %v3280
      %v3541 = vadd.f32 %v2902, %v3282
      %v3542 = vadd.f32 %v2903, %v3284
      %v3543 = vadd.f32 %v2904, %v3286
      %v3544 = vadd.f32 %v2905, %v3288
      %v3545 = vadd.f32 %v2906, %v3290
      %v3546 = vadd.f32 %v2907, %v3292
      %v3547 = vadd.f32 %v2908, %v3294
      %v3548 = vadd.f32 %v2909, %v3296
      %v3549 = vadd.f32 %v2910, %v3298
      %v3550 = vadd.f32 %v2911, %v3300
      %v3551 = vadd.f32 %v2912, %v3302
      %v3552 = vadd.f32 %v2913, %v3304
      %v3553 = vadd.f32 %v2914, %v3306
      %v3554 = vadd.f32 %v2915, %v3308
      %v3555 = vadd.f32 %v2916, %v3310
      %v3556 = vadd.f32 %v2917, %v3312
      %v3557 = vadd.f32 %v2918, %v3314
      %v3558 = vadd.f32 %v2919, %v3316
      %v3559 = vadd.f32 %v2920, %v3318
      %v3560 = vadd.f32 %v2921, %v3320
      %v3561 = vadd.f32 %v2922, %v3322
      %v3562 = vadd.f32 %v2923, %v3324
      %v3563 = vadd.f32 %v2924, %v3326
      %v3564 = vadd.f32 %v2925, %v3328
      %v3565 = vadd.f32 %v2926, %v3330
      %v3566 = vadd.f32 %v2927, %v3332
      %v3567 = vadd.f32 %v2928, %v3334
      %v3568 = vadd.f32 %v2929, %v3336
      %v3569 = vadd.f32 %v2930, %v3338
      %v3570 = vadd.f32 %v2931, %v3340
      %v3571 = vadd.f32 %v2932, %v3342
      %v3572 = vadd.f32 %v2933, %v3344
      %v3573 = vadd.f32 %v2934, %v3346
      %v3574 = vadd.f32 %v2935, %v3348
      %v3575 = vadd.f32 %v2936, %v3350
      %v3576 = vadd.f32 %v2937, %v3352
      %v3577 = vadd.f32 %v2938, %v3354
      %v3578 = vadd.f32 %v2939, %v3356
      %v3579 = vadd.f32 %v2940, %v3358
      %v3580 = vadd.f32 %v2941, %v3360
      %v3581 = vadd.f32 %v2942, %v3362
      %v3582 = vadd.f32 %v2943, %v3364
      %v3583 = vadd.f32 %v2944, %v3366
      %v3584 = vadd.f32 %v2945, %v3368
      %v3585 = vadd.f32 %v2946, %v3370
      %v3586 = vadd.f32 %v2947, %v3372
      %v3587 = vadd.f32 %v2948, %v3374
      %v3588 = vadd.f32 %v2949, %v3376
      %v3589 = vadd.f32 %v2950, %v3378
      %v3590 = vadd.f32 %v2951, %v3380
      %s3591 = scalar_lea.vmem %s1, 5
      %v3592 = vld [vmem:[%s3591] sm:$0x1]
      %v3594 = vperm.slane %v3592, 0
      %v3596 = vmul.f32 %v308, %v3594
      %v3597 = vmul.f32 %v313, %v3594
      %v3598 = vmul.f32 %v318, %v3594
      %v3599 = vmul.f32 %v323, %v3594
      %v3600 = vmul.f32 %v328, %v3594
      %v3601 = vmul.f32 %v333, %v3594
      %v3602 = vmul.f32 %v338, %v3594
      %v3603 = vmul.f32 %v343, %v3594
      %v3604 = vmul.f32 %v348, %v3594
      %v3605 = vmul.f32 %v353, %v3594
      %v3606 = vmul.f32 %v358, %v3594
      %v3607 = vmul.f32 %v363, %v3594
      %v3608 = vmul.f32 %v368, %v3594
      %v3609 = vmul.f32 %v373, %v3594
      %v3610 = vmul.f32 %v378, %v3594
      %v3611 = vmul.f32 %v383, %v3594
      %v3612 = vmul.f32 %v388, %v3594
      %v3613 = vmul.f32 %v393, %v3594
      %v3614 = vmul.f32 %v398, %v3594
      %v3615 = vmul.f32 %v403, %v3594
      %v3616 = vmul.f32 %v408, %v3594
      %v3617 = vmul.f32 %v413, %v3594
      %v3618 = vmul.f32 %v418, %v3594
      %v3619 = vmul.f32 %v423, %v3594
      %v3620 = vmul.f32 %v428, %v3594
      %v3621 = vmul.f32 %v433, %v3594
      %v3622 = vmul.f32 %v438, %v3594
      %v3623 = vmul.f32 %v443, %v3594
      %v3624 = vmul.f32 %v448, %v3594
      %v3625 = vmul.f32 %v453, %v3594
      %v3626 = vmul.f32 %v458, %v3594
      %v3627 = vmul.f32 %v463, %v3594
      %v3628 = vmul.f32 %v468, %v3594
      %v3629 = vmul.f32 %v473, %v3594
      %v3630 = vmul.f32 %v478, %v3594
      %v3631 = vmul.f32 %v483, %v3594
      %v3632 = vmul.f32 %v488, %v3594
      %v3633 = vmul.f32 %v493, %v3594
      %v3634 = vmul.f32 %v498, %v3594
      %v3635 = vmul.f32 %v503, %v3594
      %v3636 = vmul.f32 %v508, %v3594
      %v3637 = vmul.f32 %v513, %v3594
      %v3638 = vmul.f32 %v518, %v3594
      %v3639 = vmul.f32 %v523, %v3594
      %v3640 = vmul.f32 %v528, %v3594
      %v3641 = vmul.f32 %v533, %v3594
      %v3642 = vmul.f32 %v538, %v3594
      %v3643 = vmul.f32 %v543, %v3594
      %v3644 = vmul.f32 %v548, %v3594
      %v3645 = vmul.f32 %v553, %v3594
      %v3646 = vmul.f32 %v558, %v3594
      %v3647 = vmul.f32 %v563, %v3594
      %v3648 = vmul.f32 %v568, %v3594
      %v3649 = vmul.f32 %v573, %v3594
      %v3650 = vmul.f32 %v578, %v3594
      %v3651 = vmul.f32 %v583, %v3594
      %v3652 = vmul.f32 %v588, %v3594
      %v3653 = vmul.f32 %v593, %v3594
      %v3654 = vmul.f32 %v598, %v3594
      %v3655 = vmul.f32 %v603, %v3594
      %v3656 = vmul.f32 %v608, %v3594
      %v3657 = vmul.f32 %v613, %v3594
      %v3658 = vmul.f32 %v618, %v3594
      %v3659 = vmul.f32 %v623, %v3594
      %v3660 = vmul.f32 %v628, %v3594
      %v3661 = vmul.f32 %v633, %v3594
      %v3662 = vmul.f32 %v638, %v3594
      %v3663 = vmul.f32 %v643, %v3594
      %v3664 = vmul.f32 %v648, %v3594
      %v3665 = vmul.f32 %v653, %v3594
      %v3666 = vmul.f32 %v658, %v3594
      %v3667 = vmul.f32 %v663, %v3594
      %v3668 = vmul.f32 %v668, %v3594
      %v3669 = vmul.f32 %v673, %v3594
      %v3670 = vmul.f32 %v678, %v3594
      %v3671 = vmul.f32 %v683, %v3594
      %v3672 = vmul.f32 %v688, %v3594
      %v3673 = vmul.f32 %v693, %v3594
      %v3674 = vmul.f32 %v698, %v3594
      %v3675 = vmul.f32 %v703, %v3594
      %v3676 = vmul.f32 %v708, %v3594
      %v3677 = vmul.f32 %v713, %v3594
      %v3678 = vmul.f32 %v718, %v3594
      %v3679 = vmul.f32 %v723, %v3594
      %v3680 = vmul.f32 %v728, %v3594
      %v3681 = vmul.f32 %v733, %v3594
      %v3682 = vmul.f32 %v738, %v3594
      %v3683 = vmul.f32 %v743, %v3594
      %v3684 = vmul.f32 %v748, %v3594
      %v3685 = vmul.f32 %v753, %v3594
      %v3686 = vmul.f32 %v758, %v3594
      %v3687 = vmul.f32 %v763, %v3594
      %v3688 = vmul.f32 %v768, %v3594
      %v3689 = vmul.f32 %v773, %v3594
      %v3690 = vmul.f32 %v778, %v3594
      %v3691 = vmul.f32 %v783, %v3594
      %v3692 = vmul.f32 %v788, %v3594
      %v3693 = vmul.f32 %v793, %v3594
      %v3694 = vmul.f32 %v798, %v3594
      %v3695 = vmul.f32 %v803, %v3594
      %v3696 = vmul.f32 %v808, %v3594
      %v3697 = vmul.f32 %v2298, %v3594
      %v3698 = vmul.f32 %v2303, %v3594
      %v3699 = vmul.f32 %v2308, %v3594
      %v3700 = vmul.f32 %v2313, %v3594
      %v3701 = vadd.f32 %v3486, %v3596
      %v3702 = vadd.f32 %v3487, %v3597
      %v3703 = vadd.f32 %v3488, %v3598
      %v3704 = vadd.f32 %v3489, %v3599
      %v3705 = vadd.f32 %v3490, %v3600
      %v3706 = vadd.f32 %v3491, %v3601
      %v3707 = vadd.f32 %v3492, %v3602
      %v3708 = vadd.f32 %v3493, %v3603
      %v3709 = vadd.f32 %v3494, %v3604
      %v3710 = vadd.f32 %v3495, %v3605
      %v3711 = vadd.f32 %v3496, %v3606
      %v3712 = vadd.f32 %v3497, %v3607
      %v3713 = vadd.f32 %v3498, %v3608
      %v3714 = vadd.f32 %v3499, %v3609
      %v3715 = vadd.f32 %v3500, %v3610
      %v3716 = vadd.f32 %v3501, %v3611
      %v3717 = vadd.f32 %v3502, %v3612
      %v3718 = vadd.f32 %v3503, %v3613
      %v3719 = vadd.f32 %v3504, %v3614
      %v3720 = vadd.f32 %v3505, %v3615
      %v3721 = vadd.f32 %v3506, %v3616
      %v3722 = vadd.f32 %v3507, %v3617
      %v3723 = vadd.f32 %v3508, %v3618
      %v3724 = vadd.f32 %v3509, %v3619
      %v3725 = vadd.f32 %v3510, %v3620
      %v3726 = vadd.f32 %v3511, %v3621
      %v3727 = vadd.f32 %v3512, %v3622
      %v3728 = vadd.f32 %v3513, %v3623
      %v3729 = vadd.f32 %v3514, %v3624
      %v3730 = vadd.f32 %v3515, %v3625
      %v3731 = vadd.f32 %v3516, %v3626
      %v3732 = vadd.f32 %v3517, %v3627
      %v3733 = vadd.f32 %v3518, %v3628
      %v3734 = vadd.f32 %v3519, %v3629
      %v3735 = vadd.f32 %v3520, %v3630
      %v3736 = vadd.f32 %v3521, %v3631
      %v3737 = vadd.f32 %v3522, %v3632
      %v3738 = vadd.f32 %v3523, %v3633
      %v3739 = vadd.f32 %v3524, %v3634
      %v3740 = vadd.f32 %v3525, %v3635
      %v3741 = vadd.f32 %v3526, %v3636
      %v3742 = vadd.f32 %v3527, %v3637
      %v3743 = vadd.f32 %v3528, %v3638
      %v3744 = vadd.f32 %v3529, %v3639
      %v3745 = vadd.f32 %v3530, %v3640
      %v3746 = vadd.f32 %v3531, %v3641
      %v3747 = vadd.f32 %v3532, %v3642
      %v3748 = vadd.f32 %v3533, %v3643
      %v3749 = vadd.f32 %v3534, %v3644
      %v3750 = vadd.f32 %v3535, %v3645
      %v3751 = vadd.f32 %v3536, %v3646
      %v3752 = vadd.f32 %v3537, %v3647
      %v3753 = vadd.f32 %v3538, %v3648
      %v3754 = vadd.f32 %v3539, %v3649
      %v3755 = vadd.f32 %v3540, %v3650
      %v3756 = vadd.f32 %v3541, %v3651
      %v3757 = vadd.f32 %v3542, %v3652
      %v3758 = vadd.f32 %v3543, %v3653
      %v3759 = vadd.f32 %v3544, %v3654
      %v3760 = vadd.f32 %v3545, %v3655
      %v3761 = vadd.f32 %v3546, %v3656
      %v3762 = vadd.f32 %v3547, %v3657
      %v3763 = vadd.f32 %v3548, %v3658
      %v3764 = vadd.f32 %v3549, %v3659
      %v3765 = vadd.f32 %v3550, %v3660
      %v3766 = vadd.f32 %v3551, %v3661
      %v3767 = vadd.f32 %v3552, %v3662
      %v3768 = vadd.f32 %v3553, %v3663
      %v3769 = vadd.f32 %v3554, %v3664
      %v3770 = vadd.f32 %v3555, %v3665
      %v3771 = vadd.f32 %v3556, %v3666
      %v3772 = vadd.f32 %v3557, %v3667
      %v3773 = vadd.f32 %v3558, %v3668
      %v3774 = vadd.f32 %v3559, %v3669
      %v3775 = vadd.f32 %v3560, %v3670
      %v3776 = vadd.f32 %v3561, %v3671
      %v3777 = vadd.f32 %v3562, %v3672
      %v3778 = vadd.f32 %v3563, %v3673
      %v3779 = vadd.f32 %v3564, %v3674
      %v3780 = vadd.f32 %v3565, %v3675
      %v3781 = vadd.f32 %v3566, %v3676
      %v3782 = vadd.f32 %v3567, %v3677
      %v3783 = vadd.f32 %v3568, %v3678
      %v3784 = vadd.f32 %v3569, %v3679
      %v3785 = vadd.f32 %v3570, %v3680
      %v3786 = vadd.f32 %v3571, %v3681
      %v3787 = vadd.f32 %v3572, %v3682
      %v3788 = vadd.f32 %v3573, %v3683
      %v3789 = vadd.f32 %v3574, %v3684
      %v3790 = vadd.f32 %v3575, %v3685
      %v3791 = vadd.f32 %v3576, %v3686
      %v3792 = vadd.f32 %v3577, %v3687
      %v3793 = vadd.f32 %v3578, %v3688
      %v3794 = vadd.f32 %v3579, %v3689
      %v3795 = vadd.f32 %v3580, %v3690
      %v3796 = vadd.f32 %v3581, %v3691
      %v3797 = vadd.f32 %v3582, %v3692
      %v3798 = vadd.f32 %v3583, %v3693
      %v3799 = vadd.f32 %v3584, %v3694
      %v3800 = vadd.f32 %v3585, %v3695
      %v3801 = vadd.f32 %v3586, %v3696
      %v3802 = vadd.f32 %v3587, %v3697
      %v3803 = vadd.f32 %v3588, %v3698
      %v3804 = vadd.f32 %v3589, %v3699
      %v3805 = vadd.f32 %v3590, %v3700
      %s3806 = scalar_lea.vmem %s1, 6
      %v3807 = vld [vmem:[%s3806] sm:$0x1]
      %3809 = vset.pattern.permute.xlu0 0
      %3810 = vperm.xlu0 %3809, %v280
      %v3811 = vpop.permute.xlu0 %3810
      %3814 = vset.pattern.permute.xlu0 0
      %3815 = vperm.xlu0 %3814, %v281
      %v3816 = vpop.permute.xlu0 %3815
      %3819 = vset.pattern.permute.xlu0 0
      %3820 = vperm.xlu0 %3819, %v282
      %v3821 = vpop.permute.xlu0 %3820
      %3824 = vset.pattern.permute.xlu0 0
      %3825 = vperm.xlu0 %3824, %v283
      %v3826 = vpop.permute.xlu0 %3825
      %v3829 = vperm.slane %v3807, 0
      %v3831 = vmul.f32 %v323, %v3829
      %v3832 = vmul.f32 %v328, %v3829
      %v3833 = vmul.f32 %v333, %v3829
      %v3834 = vmul.f32 %v338, %v3829
      %v3835 = vmul.f32 %v343, %v3829
      %v3836 = vmul.f32 %v348, %v3829
      %v3837 = vmul.f32 %v353, %v3829
      %v3838 = vmul.f32 %v358, %v3829
      %v3839 = vmul.f32 %v363, %v3829
      %v3840 = vmul.f32 %v368, %v3829
      %v3841 = vmul.f32 %v373, %v3829
      %v3842 = vmul.f32 %v378, %v3829
      %v3843 = vmul.f32 %v383, %v3829
      %v3844 = vmul.f32 %v388, %v3829
      %v3845 = vmul.f32 %v393, %v3829
      %v3846 = vmul.f32 %v398, %v3829
      %v3847 = vmul.f32 %v403, %v3829
      %v3848 = vmul.f32 %v408, %v3829
      %v3849 = vmul.f32 %v413, %v3829
      %v3850 = vmul.f32 %v418, %v3829
      %v3851 = vmul.f32 %v423, %v3829
      %v3852 = vmul.f32 %v428, %v3829
      %v3853 = vmul.f32 %v433, %v3829
      %v3854 = vmul.f32 %v438, %v3829
      %v3855 = vmul.f32 %v443, %v3829
      %v3856 = vmul.f32 %v448, %v3829
      %v3857 = vmul.f32 %v453, %v3829
      %v3858 = vmul.f32 %v458, %v3829
      %v3859 = vmul.f32 %v463, %v3829
      %v3860 = vmul.f32 %v468, %v3829
      %v3861 = vmul.f32 %v473, %v3829
      %v3862 = vmul.f32 %v478, %v3829
      %v3863 = vmul.f32 %v483, %v3829
      %v3864 = vmul.f32 %v488, %v3829
      %v3865 = vmul.f32 %v493, %v3829
      %v3866 = vmul.f32 %v498, %v3829
      %v3867 = vmul.f32 %v503, %v3829
      %v3868 = vmul.f32 %v508, %v3829
      %v3869 = vmul.f32 %v513, %v3829
      %v3870 = vmul.f32 %v518, %v3829
      %v3871 = vmul.f32 %v523, %v3829
      %v3872 = vmul.f32 %v528, %v3829
      %v3873 = vmul.f32 %v533, %v3829
      %v3874 = vmul.f32 %v538, %v3829
      %v3875 = vmul.f32 %v543, %v3829
      %v3876 = vmul.f32 %v548, %v3829
      %v3877 = vmul.f32 %v553, %v3829
      %v3878 = vmul.f32 %v558, %v3829
      %v3879 = vmul.f32 %v563, %v3829
      %v3880 = vmul.f32 %v568, %v3829
      %v3881 = vmul.f32 %v573, %v3829
      %v3882 = vmul.f32 %v578, %v3829
      %v3883 = vmul.f32 %v583, %v3829
      %v3884 = vmul.f32 %v588, %v3829
      %v3885 = vmul.f32 %v593, %v3829
      %v3886 = vmul.f32 %v598, %v3829
      %v3887 = vmul.f32 %v603, %v3829
      %v3888 = vmul.f32 %v608, %v3829
      %v3889 = vmul.f32 %v613, %v3829
      %v3890 = vmul.f32 %v618, %v3829
      %v3891 = vmul.f32 %v623, %v3829
      %v3892 = vmul.f32 %v628, %v3829
      %v3893 = vmul.f32 %v633, %v3829
      %v3894 = vmul.f32 %v638, %v3829
      %v3895 = vmul.f32 %v643, %v3829
      %v3896 = vmul.f32 %v648, %v3829
      %v3897 = vmul.f32 %v653, %v3829
      %v3898 = vmul.f32 %v658, %v3829
      %v3899 = vmul.f32 %v663, %v3829
      %v3900 = vmul.f32 %v668, %v3829
      %v3901 = vmul.f32 %v673, %v3829
      %v3902 = vmul.f32 %v678, %v3829
      %v3903 = vmul.f32 %v683, %v3829
      %v3904 = vmul.f32 %v688, %v3829
      %v3905 = vmul.f32 %v693, %v3829
      %v3906 = vmul.f32 %v698, %v3829
      %v3907 = vmul.f32 %v703, %v3829
      %v3908 = vmul.f32 %v708, %v3829
      %v3909 = vmul.f32 %v713, %v3829
      %v3910 = vmul.f32 %v718, %v3829
      %v3911 = vmul.f32 %v723, %v3829
      %v3912 = vmul.f32 %v728, %v3829
      %v3913 = vmul.f32 %v733, %v3829
      %v3914 = vmul.f32 %v738, %v3829
      %v3915 = vmul.f32 %v743, %v3829
      %v3916 = vmul.f32 %v748, %v3829
      %v3917 = vmul.f32 %v753, %v3829
      %v3918 = vmul.f32 %v758, %v3829
      %v3919 = vmul.f32 %v763, %v3829
      %v3920 = vmul.f32 %v768, %v3829
      %v3921 = vmul.f32 %v773, %v3829
      %v3922 = vmul.f32 %v778, %v3829
      %v3923 = vmul.f32 %v783, %v3829
      %v3924 = vmul.f32 %v788, %v3829
      %v3925 = vmul.f32 %v793, %v3829
      %v3926 = vmul.f32 %v798, %v3829
      %v3927 = vmul.f32 %v803, %v3829
      %v3928 = vmul.f32 %v808, %v3829
      %v3929 = vmul.f32 %v2298, %v3829
      %v3930 = vmul.f32 %v2303, %v3829
      %v3931 = vmul.f32 %v2308, %v3829
      %v3932 = vmul.f32 %v2313, %v3829
      %v3933 = vmul.f32 %v3811, %v3829
      %v3934 = vmul.f32 %v3816, %v3829
      %v3935 = vmul.f32 %v3821, %v3829
      %v3936 = vmul.f32 %v3826, %v3829
      %vm4043 = vcmask 1043456
      %v4044 = vrot.slane %v3831, 4
      %v4045 = vrot.slane %v3832, 4
      %v4046 = vsel %vm4043, %v4044, %v4045
      %v4047 = vrot.slane %v3833, 4
      %v4048 = vsel %vm4043, %v4045, %v4047
      %v4049 = vrot.slane %v3834, 4
      %v4050 = vsel %vm4043, %v4047, %v4049
      %v4051 = vrot.slane %v3835, 4
      %v4052 = vsel %vm4043, %v4049, %v4051
      %v4053 = vrot.slane %v3836, 4
      %v4054 = vsel %vm4043, %v4051, %v4053
      %v4055 = vrot.slane %v3837, 4
      %v4056 = vsel %vm4043, %v4053, %v4055
      %v4057 = vrot.slane %v3838, 4
      %v4058 = vsel %vm4043, %v4055, %v4057
      %v4059 = vrot.slane %v3839, 4
      %v4060 = vsel %vm4043, %v4057, %v4059
      %v4061 = vrot.slane %v3840, 4
      %v4062 = vsel %vm4043, %v4059, %v4061
      %v4063 = vrot.slane %v3841, 4
      %v4064 = vsel %vm4043, %v4061, %v4063
      %v4065 = vrot.slane %v3842, 4
      %v4066 = vsel %vm4043, %v4063, %v4065
      %v4067 = vrot.slane %v3843, 4
      %v4068 = vsel %vm4043, %v4065, %v4067
      %v4069 = vrot.slane %v3844, 4
      %v4070 = vsel %vm4043, %v4067, %v4069
      %v4071 = vrot.slane %v3845, 4
      %v4072 = vsel %vm4043, %v4069, %v4071
      %v4073 = vrot.slane %v3846, 4
      %v4074 = vsel %vm4043, %v4071, %v4073
      %v4075 = vrot.slane %v3847, 4
      %v4076 = vsel %vm4043, %v4073, %v4075
      %v4077 = vrot.slane %v3848, 4
      %v4078 = vsel %vm4043, %v4075, %v4077
      %v4079 = vrot.slane %v3849, 4
      %v4080 = vsel %vm4043, %v4077, %v4079
      %v4081 = vrot.slane %v3850, 4
      %v4082 = vsel %vm4043, %v4079, %v4081
      %v4083 = vrot.slane %v3851, 4
      %v4084 = vsel %vm4043, %v4081, %v4083
      %v4085 = vrot.slane %v3852, 4
      %v4086 = vsel %vm4043, %v4083, %v4085
      %v4087 = vrot.slane %v3853, 4
      %v4088 = vsel %vm4043, %v4085, %v4087
      %v4089 = vrot.slane %v3854, 4
      %v4090 = vsel %vm4043, %v4087, %v4089
      %v4091 = vrot.slane %v3855, 4
      %v4092 = vsel %vm4043, %v4089, %v4091
      %v4093 = vrot.slane %v3856, 4
      %v4094 = vsel %vm4043, %v4091, %v4093
      %v4095 = vrot.slane %v3857, 4
      %v4096 = vsel %vm4043, %v4093, %v4095
      %v4097 = vrot.slane %v3858, 4
      %v4098 = vsel %vm4043, %v4095, %v4097
      %v4099 = vrot.slane %v3859, 4
      %v4100 = vsel %vm4043, %v4097, %v4099
      %v4101 = vrot.slane %v3860, 4
      %v4102 = vsel %vm4043, %v4099, %v4101
      %v4103 = vrot.slane %v3861, 4
      %v4104 = vsel %vm4043, %v4101, %v4103
      %v4105 = vrot.slane %v3862, 4
      %v4106 = vsel %vm4043, %v4103, %v4105
      %v4107 = vrot.slane %v3863, 4
      %v4108 = vsel %vm4043, %v4105, %v4107
      %v4109 = vrot.slane %v3864, 4
      %v4110 = vsel %vm4043, %v4107, %v4109
      %v4111 = vrot.slane %v3865, 4
      %v4112 = vsel %vm4043, %v4109, %v4111
      %v4113 = vrot.slane %v3866, 4
      %v4114 = vsel %vm4043, %v4111, %v4113
      %v4115 = vrot.slane %v3867, 4
      %v4116 = vsel %vm4043, %v4113, %v4115
      %v4117 = vrot.slane %v3868, 4
      %v4118 = vsel %vm4043, %v4115, %v4117
      %v4119 = vrot.slane %v3869, 4
      %v4120 = vsel %vm4043, %v4117, %v4119
      %v4121 = vrot.slane %v3870, 4
      %v4122 = vsel %vm4043, %v4119, %v4121
      %v4123 = vrot.slane %v3871, 4
      %v4124 = vsel %vm4043, %v4121, %v4123
      %v4125 = vrot.slane %v3872, 4
      %v4126 = vsel %vm4043, %v4123, %v4125
      %v4127 = vrot.slane %v3873, 4
      %v4128 = vsel %vm4043, %v4125, %v4127
      %v4129 = vrot.slane %v3874, 4
      %v4130 = vsel %vm4043, %v4127, %v4129
      %v4131 = vrot.slane %v3875, 4
      %v4132 = vsel %vm4043, %v4129, %v4131
      %v4133 = vrot.slane %v3876, 4
      %v4134 = vsel %vm4043, %v4131, %v4133
      %v4135 = vrot.slane %v3877, 4
      %v4136 = vsel %vm4043, %v4133, %v4135
      %v4137 = vrot.slane %v3878, 4
      %v4138 = vsel %vm4043, %v4135, %v4137
      %v4139 = vrot.slane %v3879, 4
      %v4140 = vsel %vm4043, %v4137, %v4139
      %v4141 = vrot.slane %v3880, 4
      %v4142 = vsel %vm4043, %v4139, %v4141
      %v4143 = vrot.slane %v3881, 4
      %v4144 = vsel %vm4043, %v4141, %v4143
      %v4145 = vrot.slane %v3882, 4
      %v4146 = vsel %vm4043, %v4143, %v4145
      %v4147 = vrot.slane %v3883, 4
      %v4148 = vsel %vm4043, %v4145, %v4147
      %v4149 = vrot.slane %v3884, 4
      %v4150 = vsel %vm4043, %v4147, %v4149
      %v4151 = vrot.slane %v3885, 4
      %v4152 = vsel %vm4043, %v4149, %v4151
      %v4153 = vrot.slane %v3886, 4
      %v4154 = vsel %vm4043, %v4151, %v4153
      %v4155 = vrot.slane %v3887, 4
      %v4156 = vsel %vm4043, %v4153, %v4155
      %v4157 = vrot.slane %v3888, 4
      %v4158 = vsel %vm4043, %v4155, %v4157
      %v4159 = vrot.slane %v3889, 4
      %v4160 = vsel %vm4043, %v4157, %v4159
      %v4161 = vrot.slane %v3890, 4
      %v4162 = vsel %vm4043, %v4159, %v4161
      %v4163 = vrot.slane %v3891, 4
      %v4164 = vsel %vm4043, %v4161, %v4163
      %v4165 = vrot.slane %v3892, 4
      %v4166 = vsel %vm4043, %v4163, %v4165
      %v4167 = vrot.slane %v3893, 4
      %v4168 = vsel %vm4043, %v4165, %v4167
      %v4169 = vrot.slane %v3894, 4
      %v4170 = vsel %vm4043, %v4167, %v4169
      %v4171 = vrot.slane %v3895, 4
      %v4172 = vsel %vm4043, %v4169, %v4171
      %v4173 = vrot.slane %v3896, 4
      %v4174 = vsel %vm4043, %v4171, %v4173
      %v4175 = vrot.slane %v3897, 4
      %v4176 = vsel %vm4043, %v4173, %v4175
      %v4177 = vrot.slane %v3898, 4
      %v4178 = vsel %vm4043, %v4175, %v4177
      %v4179 = vrot.slane %v3899, 4
      %v4180 = vsel %vm4043, %v4177, %v4179
      %v4181 = vrot.slane %v3900, 4
      %v4182 = vsel %vm4043, %v4179, %v4181
      %v4183 = vrot.slane %v3901, 4
      %v4184 = vsel %vm4043, %v4181, %v4183
      %v4185 = vrot.slane %v3902, 4
      %v4186 = vsel %vm4043, %v4183, %v4185
      %v4187 = vrot.slane %v3903, 4
      %v4188 = vsel %vm4043, %v4185, %v4187
      %v4189 = vrot.slane %v3904, 4
      %v4190 = vsel %vm4043, %v4187, %v4189
      %v4191 = vrot.slane %v3905, 4
      %v4192 = vsel %vm4043, %v4189, %v4191
      %v4193 = vrot.slane %v3906, 4
      %v4194 = vsel %vm4043, %v4191, %v4193
      %v4195 = vrot.slane %v3907, 4
      %v4196 = vsel %vm4043, %v4193, %v4195
      %v4197 = vrot.slane %v3908, 4
      %v4198 = vsel %vm4043, %v4195, %v4197
      %v4199 = vrot.slane %v3909, 4
      %v4200 = vsel %vm4043, %v4197, %v4199
      %v4201 = vrot.slane %v3910, 4
      %v4202 = vsel %vm4043, %v4199, %v4201
      %v4203 = vrot.slane %v3911, 4
      %v4204 = vsel %vm4043, %v4201, %v4203
      %v4205 = vrot.slane %v3912, 4
      %v4206 = vsel %vm4043, %v4203, %v4205
      %v4207 = vrot.slane %v3913, 4
      %v4208 = vsel %vm4043, %v4205, %v4207
      %v4209 = vrot.slane %v3914, 4
      %v4210 = vsel %vm4043, %v4207, %v4209
      %v4211 = vrot.slane %v3915, 4
      %v4212 = vsel %vm4043, %v4209, %v4211
      %v4213 = vrot.slane %v3916, 4
      %v4214 = vsel %vm4043, %v4211, %v4213
      %v4215 = vrot.slane %v3917, 4
      %v4216 = vsel %vm4043, %v4213, %v4215
      %v4217 = vrot.slane %v3918, 4
      %v4218 = vsel %vm4043, %v4215, %v4217
      %v4219 = vrot.slane %v3919, 4
      %v4220 = vsel %vm4043, %v4217, %v4219
      %v4221 = vrot.slane %v3920, 4
      %v4222 = vsel %vm4043, %v4219, %v4221
      %v4223 = vrot.slane %v3921, 4
      %v4224 = vsel %vm4043, %v4221, %v4223
      %v4225 = vrot.slane %v3922, 4
      %v4226 = vsel %vm4043, %v4223, %v4225
      %v4227 = vrot.slane %v3923, 4
      %v4228 = vsel %vm4043, %v4225, %v4227
      %v4229 = vrot.slane %v3924, 4
      %v4230 = vsel %vm4043, %v4227, %v4229
      %v4231 = vrot.slane %v3925, 4
      %v4232 = vsel %vm4043, %v4229, %v4231
      %v4233 = vrot.slane %v3926, 4
      %v4234 = vsel %vm4043, %v4231, %v4233
      %v4235 = vrot.slane %v3927, 4
      %v4236 = vsel %vm4043, %v4233, %v4235
      %v4237 = vrot.slane %v3928, 4
      %v4238 = vsel %vm4043, %v4235, %v4237
      %v4239 = vrot.slane %v3929, 4
      %v4240 = vsel %vm4043, %v4237, %v4239
      %v4241 = vrot.slane %v3930, 4
      %v4242 = vsel %vm4043, %v4239, %v4241
      %v4243 = vrot.slane %v3931, 4
      %v4244 = vsel %vm4043, %v4241, %v4243
      %v4245 = vrot.slane %v3932, 4
      %v4246 = vsel %vm4043, %v4243, %v4245
      %v4247 = vrot.slane %v3933, 4
      %v4248 = vsel %vm4043, %v4245, %v4247
      %v4249 = vrot.slane %v3934, 4
      %v4250 = vsel %vm4043, %v4247, %v4249
      %v4251 = vrot.slane %v3935, 4
      %v4252 = vsel %vm4043, %v4249, %v4251
      %v4253 = vrot.slane %v3936, 4
      %v4254 = vsel %vm4043, %v4251, %v4253
      %v4360 = vadd.f32 %v3701, %v4046
      %v4361 = vadd.f32 %v3702, %v4048
      %v4362 = vadd.f32 %v3703, %v4050
      %v4363 = vadd.f32 %v3704, %v4052
      %v4364 = vadd.f32 %v3705, %v4054
      %v4365 = vadd.f32 %v3706, %v4056
      %v4366 = vadd.f32 %v3707, %v4058
      %v4367 = vadd.f32 %v3708, %v4060
      %v4368 = vadd.f32 %v3709, %v4062
      %v4369 = vadd.f32 %v3710, %v4064
      %v4370 = vadd.f32 %v3711, %v4066
      %v4371 = vadd.f32 %v3712, %v4068
      %v4372 = vadd.f32 %v3713, %v4070
      %v4373 = vadd.f32 %v3714, %v4072
      %v4374 = vadd.f32 %v3715, %v4074
      %v4375 = vadd.f32 %v3716, %v4076
      %v4376 = vadd.f32 %v3717, %v4078
      %v4377 = vadd.f32 %v3718, %v4080
      %v4378 = vadd.f32 %v3719, %v4082
      %v4379 = vadd.f32 %v3720, %v4084
      %v4380 = vadd.f32 %v3721, %v4086
      %v4381 = vadd.f32 %v3722, %v4088
      %v4382 = vadd.f32 %v3723, %v4090
      %v4383 = vadd.f32 %v3724, %v4092
      %v4384 = vadd.f32 %v3725, %v4094
      %v4385 = vadd.f32 %v3726, %v4096
      %v4386 = vadd.f32 %v3727, %v4098
      %v4387 = vadd.f32 %v3728, %v4100
      %v4388 = vadd.f32 %v3729, %v4102
      %v4389 = vadd.f32 %v3730, %v4104
      %v4390 = vadd.f32 %v3731, %v4106
      %v4391 = vadd.f32 %v3732, %v4108
      %v4392 = vadd.f32 %v3733, %v4110
      %v4393 = vadd.f32 %v3734, %v4112
      %v4394 = vadd.f32 %v3735, %v4114
      %v4395 = vadd.f32 %v3736, %v4116
      %v4396 = vadd.f32 %v3737, %v4118
      %v4397 = vadd.f32 %v3738, %v4120
      %v4398 = vadd.f32 %v3739, %v4122
      %v4399 = vadd.f32 %v3740, %v4124
      %v4400 = vadd.f32 %v3741, %v4126
      %v4401 = vadd.f32 %v3742, %v4128
      %v4402 = vadd.f32 %v3743, %v4130
      %v4403 = vadd.f32 %v3744, %v4132
      %v4404 = vadd.f32 %v3745, %v4134
      %v4405 = vadd.f32 %v3746, %v4136
      %v4406 = vadd.f32 %v3747, %v4138
      %v4407 = vadd.f32 %v3748, %v4140
      %v4408 = vadd.f32 %v3749, %v4142
      %v4409 = vadd.f32 %v3750, %v4144
      %v4410 = vadd.f32 %v3751, %v4146
      %v4411 = vadd.f32 %v3752, %v4148
      %v4412 = vadd.f32 %v3753, %v4150
      %v4413 = vadd.f32 %v3754, %v4152
      %v4414 = vadd.f32 %v3755, %v4154
      %v4415 = vadd.f32 %v3756, %v4156
      %v4416 = vadd.f32 %v3757, %v4158
      %v4417 = vadd.f32 %v3758, %v4160
      %v4418 = vadd.f32 %v3759, %v4162
      %v4419 = vadd.f32 %v3760, %v4164
      %v4420 = vadd.f32 %v3761, %v4166
      %v4421 = vadd.f32 %v3762, %v4168
      %v4422 = vadd.f32 %v3763, %v4170
      %v4423 = vadd.f32 %v3764, %v4172
      %v4424 = vadd.f32 %v3765, %v4174
      %v4425 = vadd.f32 %v3766, %v4176
      %v4426 = vadd.f32 %v3767, %v4178
      %v4427 = vadd.f32 %v3768, %v4180
      %v4428 = vadd.f32 %v3769, %v4182
      %v4429 = vadd.f32 %v3770, %v4184
      %v4430 = vadd.f32 %v3771, %v4186
      %v4431 = vadd.f32 %v3772, %v4188
      %v4432 = vadd.f32 %v3773, %v4190
      %v4433 = vadd.f32 %v3774, %v4192
      %v4434 = vadd.f32 %v3775, %v4194
      %v4435 = vadd.f32 %v3776, %v4196
      %v4436 = vadd.f32 %v3777, %v4198
      %v4437 = vadd.f32 %v3778, %v4200
      %v4438 = vadd.f32 %v3779, %v4202
      %v4439 = vadd.f32 %v3780, %v4204
      %v4440 = vadd.f32 %v3781, %v4206
      %v4441 = vadd.f32 %v3782, %v4208
      %v4442 = vadd.f32 %v3783, %v4210
      %v4443 = vadd.f32 %v3784, %v4212
      %v4444 = vadd.f32 %v3785, %v4214
      %v4445 = vadd.f32 %v3786, %v4216
      %v4446 = vadd.f32 %v3787, %v4218
      %v4447 = vadd.f32 %v3788, %v4220
      %v4448 = vadd.f32 %v3789, %v4222
      %v4449 = vadd.f32 %v3790, %v4224
      %v4450 = vadd.f32 %v3791, %v4226
      %v4451 = vadd.f32 %v3792, %v4228
      %v4452 = vadd.f32 %v3793, %v4230
      %v4453 = vadd.f32 %v3794, %v4232
      %v4454 = vadd.f32 %v3795, %v4234
      %v4455 = vadd.f32 %v3796, %v4236
      %v4456 = vadd.f32 %v3797, %v4238
      %v4457 = vadd.f32 %v3798, %v4240
      %v4458 = vadd.f32 %v3799, %v4242
      %v4459 = vadd.f32 %v3800, %v4244
      %v4460 = vadd.f32 %v3801, %v4246
      %v4461 = vadd.f32 %v3802, %v4248
      %v4462 = vadd.f32 %v3803, %v4250
      %v4463 = vadd.f32 %v3804, %v4252
      %v4464 = vadd.f32 %v3805, %v4254
      %s4465 = scalar_lea.vmem %s1, 7
      %v4466 = vld [vmem:[%s4465] sm:$0x1]
      %v4468 = vperm.slane %v4466, 0
      %v4470 = vmul.f32 %v323, %v4468
      %v4471 = vmul.f32 %v328, %v4468
      %v4472 = vmul.f32 %v333, %v4468
      %v4473 = vmul.f32 %v338, %v4468
      %v4474 = vmul.f32 %v343, %v4468
      %v4475 = vmul.f32 %v348, %v4468
      %v4476 = vmul.f32 %v353, %v4468
      %v4477 = vmul.f32 %v358, %v4468
      %v4478 = vmul.f32 %v363, %v4468
      %v4479 = vmul.f32 %v368, %v4468
      %v4480 = vmul.f32 %v373, %v4468
      %v4481 = vmul.f32 %v378, %v4468
      %v4482 = vmul.f32 %v383, %v4468
      %v4483 = vmul.f32 %v388, %v4468
      %v4484 = vmul.f32 %v393, %v4468
      %v4485 = vmul.f32 %v398, %v4468
      %v4486 = vmul.f32 %v403, %v4468
      %v4487 = vmul.f32 %v408, %v4468
      %v4488 = vmul.f32 %v413, %v4468
      %v4489 = vmul.f32 %v418, %v4468
      %v4490 = vmul.f32 %v423, %v4468
      %v4491 = vmul.f32 %v428, %v4468
      %v4492 = vmul.f32 %v433, %v4468
      %v4493 = vmul.f32 %v438, %v4468
      %v4494 = vmul.f32 %v443, %v4468
      %v4495 = vmul.f32 %v448, %v4468
      %v4496 = vmul.f32 %v453, %v4468
      %v4497 = vmul.f32 %v458, %v4468
      %v4498 = vmul.f32 %v463, %v4468
      %v4499 = vmul.f32 %v468, %v4468
      %v4500 = vmul.f32 %v473, %v4468
      %v4501 = vmul.f32 %v478, %v4468
      %v4502 = vmul.f32 %v483, %v4468
      %v4503 = vmul.f32 %v488, %v4468
      %v4504 = vmul.f32 %v493, %v4468
      %v4505 = vmul.f32 %v498, %v4468
      %v4506 = vmul.f32 %v503, %v4468
      %v4507 = vmul.f32 %v508, %v4468
      %v4508 = vmul.f32 %v513, %v4468
      %v4509 = vmul.f32 %v518, %v4468
      %v4510 = vmul.f32 %v523, %v4468
      %v4511 = vmul.f32 %v528, %v4468
      %v4512 = vmul.f32 %v533, %v4468
      %v4513 = vmul.f32 %v538, %v4468
      %v4514 = vmul.f32 %v543, %v4468
      %v4515 = vmul.f32 %v548, %v4468
      %v4516 = vmul.f32 %v553, %v4468
      %v4517 = vmul.f32 %v558, %v4468
      %v4518 = vmul.f32 %v563, %v4468
      %v4519 = vmul.f32 %v568, %v4468
      %v4520 = vmul.f32 %v573, %v4468
      %v4521 = vmul.f32 %v578, %v4468
      %v4522 = vmul.f32 %v583, %v4468
      %v4523 = vmul.f32 %v588, %v4468
      %v4524 = vmul.f32 %v593, %v4468
      %v4525 = vmul.f32 %v598, %v4468
      %v4526 = vmul.f32 %v603, %v4468
      %v4527 = vmul.f32 %v608, %v4468
      %v4528 = vmul.f32 %v613, %v4468
      %v4529 = vmul.f32 %v618, %v4468
      %v4530 = vmul.f32 %v623, %v4468
      %v4531 = vmul.f32 %v628, %v4468
      %v4532 = vmul.f32 %v633, %v4468
      %v4533 = vmul.f32 %v638, %v4468
      %v4534 = vmul.f32 %v643, %v4468
      %v4535 = vmul.f32 %v648, %v4468
      %v4536 = vmul.f32 %v653, %v4468
      %v4537 = vmul.f32 %v658, %v4468
      %v4538 = vmul.f32 %v663, %v4468
      %v4539 = vmul.f32 %v668, %v4468
      %v4540 = vmul.f32 %v673, %v4468
      %v4541 = vmul.f32 %v678, %v4468
      %v4542 = vmul.f32 %v683, %v4468
      %v4543 = vmul.f32 %v688, %v4468
      %v4544 = vmul.f32 %v693, %v4468
      %v4545 = vmul.f32 %v698, %v4468
      %v4546 = vmul.f32 %v703, %v4468
      %v4547 = vmul.f32 %v708, %v4468
      %v4548 = vmul.f32 %v713, %v4468
      %v4549 = vmul.f32 %v718, %v4468
      %v4550 = vmul.f32 %v723, %v4468
      %v4551 = vmul.f32 %v728, %v4468
      %v4552 = vmul.f32 %v733, %v4468
      %v4553 = vmul.f32 %v738, %v4468
      %v4554 = vmul.f32 %v743, %v4468
      %v4555 = vmul.f32 %v748, %v4468
      %v4556 = vmul.f32 %v753, %v4468
      %v4557 = vmul.f32 %v758, %v4468
      %v4558 = vmul.f32 %v763, %v4468
      %v4559 = vmul.f32 %v768, %v4468
      %v4560 = vmul.f32 %v773, %v4468
      %v4561 = vmul.f32 %v778, %v4468
      %v4562 = vmul.f32 %v783, %v4468
      %v4563 = vmul.f32 %v788, %v4468
      %v4564 = vmul.f32 %v793, %v4468
      %v4565 = vmul.f32 %v798, %v4468
      %v4566 = vmul.f32 %v803, %v4468
      %v4567 = vmul.f32 %v808, %v4468
      %v4568 = vmul.f32 %v2298, %v4468
      %v4569 = vmul.f32 %v2303, %v4468
      %v4570 = vmul.f32 %v2308, %v4468
      %v4571 = vmul.f32 %v2313, %v4468
      %v4572 = vmul.f32 %v3811, %v4468
      %v4573 = vmul.f32 %v3816, %v4468
      %v4574 = vmul.f32 %v3821, %v4468
      %v4575 = vmul.f32 %v3826, %v4468
      %vm4682 = vcmask 1042432
      %v4683 = vrot.slane %v4470, 5
      %v4684 = vrot.slane %v4471, 5
      %v4685 = vsel %vm4682, %v4683, %v4684
      %v4686 = vrot.slane %v4472, 5
      %v4687 = vsel %vm4682, %v4684, %v4686
      %v4688 = vrot.slane %v4473, 5
      %v4689 = vsel %vm4682, %v4686, %v4688
      %v4690 = vrot.slane %v4474, 5
      %v4691 = vsel %vm4682, %v4688, %v4690
      %v4692 = vrot.slane %v4475, 5
      %v4693 = vsel %vm4682, %v4690, %v4692
      %v4694 = vrot.slane %v4476, 5
      %v4695 = vsel %vm4682, %v4692, %v4694
      %v4696 = vrot.slane %v4477, 5
      %v4697 = vsel %vm4682, %v4694, %v4696
      %v4698 = vrot.slane %v4478, 5
      %v4699 = vsel %vm4682, %v4696, %v4698
      %v4700 = vrot.slane %v4479, 5
      %v4701 = vsel %vm4682, %v4698, %v4700
      %v4702 = vrot.slane %v4480, 5
      %v4703 = vsel %vm4682, %v4700, %v4702
      %v4704 = vrot.slane %v4481, 5
      %v4705 = vsel %vm4682, %v4702, %v4704
      %v4706 = vrot.slane %v4482, 5
      %v4707 = vsel %vm4682, %v4704, %v4706
      %v4708 = vrot.slane %v4483, 5
      %v4709 = vsel %vm4682, %v4706, %v4708
      %v4710 = vrot.slane %v4484, 5
      %v4711 = vsel %vm4682, %v4708, %v4710
      %v4712 = vrot.slane %v4485, 5
      %v4713 = vsel %vm4682, %v4710, %v4712
      %v4714 = vrot.slane %v4486, 5
      %v4715 = vsel %vm4682, %v4712, %v4714
      %v4716 = vrot.slane %v4487, 5
      %v4717 = vsel %vm4682, %v4714, %v4716
      %v4718 = vrot.slane %v4488, 5
      %v4719 = vsel %vm4682, %v4716, %v4718
      %v4720 = vrot.slane %v4489, 5
      %v4721 = vsel %vm4682, %v4718, %v4720
      %v4722 = vrot.slane %v4490, 5
      %v4723 = vsel %vm4682, %v4720, %v4722
      %v4724 = vrot.slane %v4491, 5
      %v4725 = vsel %vm4682, %v4722, %v4724
      %v4726 = vrot.slane %v4492, 5
      %v4727 = vsel %vm4682, %v4724, %v4726
      %v4728 = vrot.slane %v4493, 5
      %v4729 = vsel %vm4682, %v4726, %v4728
      %v4730 = vrot.slane %v4494, 5
      %v4731 = vsel %vm4682, %v4728, %v4730
      %v4732 = vrot.slane %v4495, 5
      %v4733 = vsel %vm4682, %v4730, %v4732
      %v4734 = vrot.slane %v4496, 5
      %v4735 = vsel %vm4682, %v4732, %v4734
      %v4736 = vrot.slane %v4497, 5
      %v4737 = vsel %vm4682, %v4734, %v4736
      %v4738 = vrot.slane %v4498, 5
      %v4739 = vsel %vm4682, %v4736, %v4738
      %v4740 = vrot.slane %v4499, 5
      %v4741 = vsel %vm4682, %v4738, %v4740
      %v4742 = vrot.slane %v4500, 5
      %v4743 = vsel %vm4682, %v4740, %v4742
      %v4744 = vrot.slane %v4501, 5
      %v4745 = vsel %vm4682, %v4742, %v4744
      %v4746 = vrot.slane %v4502, 5
      %v4747 = vsel %vm4682, %v4744, %v4746
      %v4748 = vrot.slane %v4503, 5
      %v4749 = vsel %vm4682, %v4746, %v4748
      %v4750 = vrot.slane %v4504, 5
      %v4751 = vsel %vm4682, %v4748, %v4750
      %v4752 = vrot.slane %v4505, 5
      %v4753 = vsel %vm4682, %v4750, %v4752
      %v4754 = vrot.slane %v4506, 5
      %v4755 = vsel %vm4682, %v4752, %v4754
      %v4756 = vrot.slane %v4507, 5
      %v4757 = vsel %vm4682, %v4754, %v4756
      %v4758 = vrot.slane %v4508, 5
      %v4759 = vsel %vm4682, %v4756, %v4758
      %v4760 = vrot.slane %v4509, 5
      %v4761 = vsel %vm4682, %v4758, %v4760
      %v4762 = vrot.slane %v4510, 5
      %v4763 = vsel %vm4682, %v4760, %v4762
      %v4764 = vrot.slane %v4511, 5
      %v4765 = vsel %vm4682, %v4762, %v4764
      %v4766 = vrot.slane %v4512, 5
      %v4767 = vsel %vm4682, %v4764, %v4766
      %v4768 = vrot.slane %v4513, 5
      %v4769 = vsel %vm4682, %v4766, %v4768
      %v4770 = vrot.slane %v4514, 5
      %v4771 = vsel %vm4682, %v4768, %v4770
      %v4772 = vrot.slane %v4515, 5
      %v4773 = vsel %vm4682, %v4770, %v4772
      %v4774 = vrot.slane %v4516, 5
      %v4775 = vsel %vm4682, %v4772, %v4774
      %v4776 = vrot.slane %v4517, 5
      %v4777 = vsel %vm4682, %v4774, %v4776
      %v4778 = vrot.slane %v4518, 5
      %v4779 = vsel %vm4682, %v4776, %v4778
      %v4780 = vrot.slane %v4519, 5
      %v4781 = vsel %vm4682, %v4778, %v4780
      %v4782 = vrot.slane %v4520, 5
      %v4783 = vsel %vm4682, %v4780, %v4782
      %v4784 = vrot.slane %v4521, 5
      %v4785 = vsel %vm4682, %v4782, %v4784
      %v4786 = vrot.slane %v4522, 5
      %v4787 = vsel %vm4682, %v4784, %v4786
      %v4788 = vrot.slane %v4523, 5
      %v4789 = vsel %vm4682, %v4786, %v4788
      %v4790 = vrot.slane %v4524, 5
      %v4791 = vsel %vm4682, %v4788, %v4790
      %v4792 = vrot.slane %v4525, 5
      %v4793 = vsel %vm4682, %v4790, %v4792
      %v4794 = vrot.slane %v4526, 5
      %v4795 = vsel %vm4682, %v4792, %v4794
      %v4796 = vrot.slane %v4527, 5
      %v4797 = vsel %vm4682, %v4794, %v4796
      %v4798 = vrot.slane %v4528, 5
      %v4799 = vsel %vm4682, %v4796, %v4798
      %v4800 = vrot.slane %v4529, 5
      %v4801 = vsel %vm4682, %v4798, %v4800
      %v4802 = vrot.slane %v4530, 5
      %v4803 = vsel %vm4682, %v4800, %v4802
      %v4804 = vrot.slane %v4531, 5
      %v4805 = vsel %vm4682, %v4802, %v4804
      %v4806 = vrot.slane %v4532, 5
      %v4807 = vsel %vm4682, %v4804, %v4806
      %v4808 = vrot.slane %v4533, 5
      %v4809 = vsel %vm4682, %v4806, %v4808
      %v4810 = vrot.slane %v4534, 5
      %v4811 = vsel %vm4682, %v4808, %v4810
      %v4812 = vrot.slane %v4535, 5
      %v4813 = vsel %vm4682, %v4810, %v4812
      %v4814 = vrot.slane %v4536, 5
      %v4815 = vsel %vm4682, %v4812, %v4814
      %v4816 = vrot.slane %v4537, 5
      %v4817 = vsel %vm4682, %v4814, %v4816
      %v4818 = vrot.slane %v4538, 5
      %v4819 = vsel %vm4682, %v4816, %v4818
      %v4820 = vrot.slane %v4539, 5
      %v4821 = vsel %vm4682, %v4818, %v4820
      %v4822 = vrot.slane %v4540, 5
      %v4823 = vsel %vm4682, %v4820, %v4822
      %v4824 = vrot.slane %v4541, 5
      %v4825 = vsel %vm4682, %v4822, %v4824
      %v4826 = vrot.slane %v4542, 5
      %v4827 = vsel %vm4682, %v4824, %v4826
      %v4828 = vrot.slane %v4543, 5
      %v4829 = vsel %vm4682, %v4826, %v4828
      %v4830 = vrot.slane %v4544, 5
      %v4831 = vsel %vm4682, %v4828, %v4830
      %v4832 = vrot.slane %v4545, 5
      %v4833 = vsel %vm4682, %v4830, %v4832
      %v4834 = vrot.slane %v4546, 5
      %v4835 = vsel %vm4682, %v4832, %v4834
      %v4836 = vrot.slane %v4547, 5
      %v4837 = vsel %vm4682, %v4834, %v4836
      %v4838 = vrot.slane %v4548, 5
      %v4839 = vsel %vm4682, %v4836, %v4838
      %v4840 = vrot.slane %v4549, 5
      %v4841 = vsel %vm4682, %v4838, %v4840
      %v4842 = vrot.slane %v4550, 5
      %v4843 = vsel %vm4682, %v4840, %v4842
      %v4844 = vrot.slane %v4551, 5
      %v4845 = vsel %vm4682, %v4842, %v4844
      %v4846 = vrot.slane %v4552, 5
      %v4847 = vsel %vm4682, %v4844, %v4846
      %v4848 = vrot.slane %v4553, 5
      %v4849 = vsel %vm4682, %v4846, %v4848
      %v4850 = vrot.slane %v4554, 5
      %v4851 = vsel %vm4682, %v4848, %v4850
      %v4852 = vrot.slane %v4555, 5
      %v4853 = vsel %vm4682, %v4850, %v4852
      %v4854 = vrot.slane %v4556, 5
      %v4855 = vsel %vm4682, %v4852, %v4854
      %v4856 = vrot.slane %v4557, 5
      %v4857 = vsel %vm4682, %v4854, %v4856
      %v4858 = vrot.slane %v4558, 5
      %v4859 = vsel %vm4682, %v4856, %v4858
      %v4860 = vrot.slane %v4559, 5
      %v4861 = vsel %vm4682, %v4858, %v4860
      %v4862 = vrot.slane %v4560, 5
      %v4863 = vsel %vm4682, %v4860, %v4862
      %v4864 = vrot.slane %v4561, 5
      %v4865 = vsel %vm4682, %v4862, %v4864
      %v4866 = vrot.slane %v4562, 5
      %v4867 = vsel %vm4682, %v4864, %v4866
      %v4868 = vrot.slane %v4563, 5
      %v4869 = vsel %vm4682, %v4866, %v4868
      %v4870 = vrot.slane %v4564, 5
      %v4871 = vsel %vm4682, %v4868, %v4870
      %v4872 = vrot.slane %v4565, 5
      %v4873 = vsel %vm4682, %v4870, %v4872
      %v4874 = vrot.slane %v4566, 5
      %v4875 = vsel %vm4682, %v4872, %v4874
      %v4876 = vrot.slane %v4567, 5
      %v4877 = vsel %vm4682, %v4874, %v4876
      %v4878 = vrot.slane %v4568, 5
      %v4879 = vsel %vm4682, %v4876, %v4878
      %v4880 = vrot.slane %v4569, 5
      %v4881 = vsel %vm4682, %v4878, %v4880
      %v4882 = vrot.slane %v4570, 5
      %v4883 = vsel %vm4682, %v4880, %v4882
      %v4884 = vrot.slane %v4571, 5
      %v4885 = vsel %vm4682, %v4882, %v4884
      %v4886 = vrot.slane %v4572, 5
      %v4887 = vsel %vm4682, %v4884, %v4886
      %v4888 = vrot.slane %v4573, 5
      %v4889 = vsel %vm4682, %v4886, %v4888
      %v4890 = vrot.slane %v4574, 5
      %v4891 = vsel %vm4682, %v4888, %v4890
      %v4892 = vrot.slane %v4575, 5
      %v4893 = vsel %vm4682, %v4890, %v4892
      %v4999 = vadd.f32 %v4360, %v4685
      %v5000 = vadd.f32 %v4361, %v4687
      %v5001 = vadd.f32 %v4362, %v4689
      %v5002 = vadd.f32 %v4363, %v4691
      %v5003 = vadd.f32 %v4364, %v4693
      %v5004 = vadd.f32 %v4365, %v4695
      %v5005 = vadd.f32 %v4366, %v4697
      %v5006 = vadd.f32 %v4367, %v4699
      %v5007 = vadd.f32 %v4368, %v4701
      %v5008 = vadd.f32 %v4369, %v4703
      %v5009 = vadd.f32 %v4370, %v4705
      %v5010 = vadd.f32 %v4371, %v4707
      %v5011 = vadd.f32 %v4372, %v4709
      %v5012 = vadd.f32 %v4373, %v4711
      %v5013 = vadd.f32 %v4374, %v4713
      %v5014 = vadd.f32 %v4375, %v4715
      %v5015 = vadd.f32 %v4376, %v4717
      %v5016 = vadd.f32 %v4377, %v4719
      %v5017 = vadd.f32 %v4378, %v4721
      %v5018 = vadd.f32 %v4379, %v4723
      %v5019 = vadd.f32 %v4380, %v4725
      %v5020 = vadd.f32 %v4381, %v4727
      %v5021 = vadd.f32 %v4382, %v4729
      %v5022 = vadd.f32 %v4383, %v4731
      %v5023 = vadd.f32 %v4384, %v4733
      %v5024 = vadd.f32 %v4385, %v4735
      %v5025 = vadd.f32 %v4386, %v4737
      %v5026 = vadd.f32 %v4387, %v4739
      %v5027 = vadd.f32 %v4388, %v4741
      %v5028 = vadd.f32 %v4389, %v4743
      %v5029 = vadd.f32 %v4390, %v4745
      %v5030 = vadd.f32 %v4391, %v4747
      %v5031 = vadd.f32 %v4392, %v4749
      %v5032 = vadd.f32 %v4393, %v4751
      %v5033 = vadd.f32 %v4394, %v4753
      %v5034 = vadd.f32 %v4395, %v4755
      %v5035 = vadd.f32 %v4396, %v4757
      %v5036 = vadd.f32 %v4397, %v4759
      %v5037 = vadd.f32 %v4398, %v4761
      %v5038 = vadd.f32 %v4399, %v4763
      %v5039 = vadd.f32 %v4400, %v4765
      %v5040 = vadd.f32 %v4401, %v4767
      %v5041 = vadd.f32 %v4402, %v4769
      %v5042 = vadd.f32 %v4403, %v4771
      %v5043 = vadd.f32 %v4404, %v4773
      %v5044 = vadd.f32 %v4405, %v4775
      %v5045 = vadd.f32 %v4406, %v4777
      %v5046 = vadd.f32 %v4407, %v4779
      %v5047 = vadd.f32 %v4408, %v4781
      %v5048 = vadd.f32 %v4409, %v4783
      %v5049 = vadd.f32 %v4410, %v4785
      %v5050 = vadd.f32 %v4411, %v4787
      %v5051 = vadd.f32 %v4412, %v4789
      %v5052 = vadd.f32 %v4413, %v4791
      %v5053 = vadd.f32 %v4414, %v4793
      %v5054 = vadd.f32 %v4415, %v4795
      %v5055 = vadd.f32 %v4416, %v4797
      %v5056 = vadd.f32 %v4417, %v4799
      %v5057 = vadd.f32 %v4418, %v4801
      %v5058 = vadd.f32 %v4419, %v4803
      %v5059 = vadd.f32 %v4420, %v4805
      %v5060 = vadd.f32 %v4421, %v4807
      %v5061 = vadd.f32 %v4422, %v4809
      %v5062 = vadd.f32 %v4423, %v4811
      %v5063 = vadd.f32 %v4424, %v4813
      %v5064 = vadd.f32 %v4425, %v4815
      %v5065 = vadd.f32 %v4426, %v4817
      %v5066 = vadd.f32 %v4427, %v4819
      %v5067 = vadd.f32 %v4428, %v4821
      %v5068 = vadd.f32 %v4429, %v4823
      %v5069 = vadd.f32 %v4430, %v4825
      %v5070 = vadd.f32 %v4431, %v4827
      %v5071 = vadd.f32 %v4432, %v4829
      %v5072 = vadd.f32 %v4433, %v4831
      %v5073 = vadd.f32 %v4434, %v4833
      %v5074 = vadd.f32 %v4435, %v4835
      %v5075 = vadd.f32 %v4436, %v4837
      %v5076 = vadd.f32 %v4437, %v4839
      %v5077 = vadd.f32 %v4438, %v4841
      %v5078 = vadd.f32 %v4439, %v4843
      %v5079 = vadd.f32 %v4440, %v4845
      %v5080 = vadd.f32 %v4441, %v4847
      %v5081 = vadd.f32 %v4442, %v4849
      %v5082 = vadd.f32 %v4443, %v4851
      %v5083 = vadd.f32 %v4444, %v4853
      %v5084 = vadd.f32 %v4445, %v4855
      %v5085 = vadd.f32 %v4446, %v4857
      %v5086 = vadd.f32 %v4447, %v4859
      %v5087 = vadd.f32 %v4448, %v4861
      %v5088 = vadd.f32 %v4449, %v4863
      %v5089 = vadd.f32 %v4450, %v4865
      %v5090 = vadd.f32 %v4451, %v4867
      %v5091 = vadd.f32 %v4452, %v4869
      %v5092 = vadd.f32 %v4453, %v4871
      %v5093 = vadd.f32 %v4454, %v4873
      %v5094 = vadd.f32 %v4455, %v4875
      %v5095 = vadd.f32 %v4456, %v4877
      %v5096 = vadd.f32 %v4457, %v4879
      %v5097 = vadd.f32 %v4458, %v4881
      %v5098 = vadd.f32 %v4459, %v4883
      %v5099 = vadd.f32 %v4460, %v4885
      %v5100 = vadd.f32 %v4461, %v4887
      %v5101 = vadd.f32 %v4462, %v4889
      %v5102 = vadd.f32 %v4463, %v4891
      %v5103 = vadd.f32 %v4464, %v4893
      %s5104 = scalar_lea.vmem %s1, 8
      %v5105 = vld [vmem:[%s5104] sm:$0x1]
      %v5107 = vperm.slane %v5105, 0
      %v5109 = vmul.f32 %v323, %v5107
      %v5110 = vmul.f32 %v328, %v5107
      %v5111 = vmul.f32 %v333, %v5107
      %v5112 = vmul.f32 %v338, %v5107
      %v5113 = vmul.f32 %v343, %v5107
      %v5114 = vmul.f32 %v348, %v5107
      %v5115 = vmul.f32 %v353, %v5107
      %v5116 = vmul.f32 %v358, %v5107
      %v5117 = vmul.f32 %v363, %v5107
      %v5118 = vmul.f32 %v368, %v5107
      %v5119 = vmul.f32 %v373, %v5107
      %v5120 = vmul.f32 %v378, %v5107
      %v5121 = vmul.f32 %v383, %v5107
      %v5122 = vmul.f32 %v388, %v5107
      %v5123 = vmul.f32 %v393, %v5107
      %v5124 = vmul.f32 %v398, %v5107
      %v5125 = vmul.f32 %v403, %v5107
      %v5126 = vmul.f32 %v408, %v5107
      %v5127 = vmul.f32 %v413, %v5107
      %v5128 = vmul.f32 %v418, %v5107
      %v5129 = vmul.f32 %v423, %v5107
      %v5130 = vmul.f32 %v428, %v5107
      %v5131 = vmul.f32 %v433, %v5107
      %v5132 = vmul.f32 %v438, %v5107
      %v5133 = vmul.f32 %v443, %v5107
      %v5134 = vmul.f32 %v448, %v5107
      %v5135 = vmul.f32 %v453, %v5107
      %v5136 = vmul.f32 %v458, %v5107
      %v5137 = vmul.f32 %v463, %v5107
      %v5138 = vmul.f32 %v468, %v5107
      %v5139 = vmul.f32 %v473, %v5107
      %v5140 = vmul.f32 %v478, %v5107
      %v5141 = vmul.f32 %v483, %v5107
      %v5142 = vmul.f32 %v488, %v5107
      %v5143 = vmul.f32 %v493, %v5107
      %v5144 = vmul.f32 %v498, %v5107
      %v5145 = vmul.f32 %v503, %v5107
      %v5146 = vmul.f32 %v508, %v5107
      %v5147 = vmul.f32 %v513, %v5107
      %v5148 = vmul.f32 %v518, %v5107
      %v5149 = vmul.f32 %v523, %v5107
      %v5150 = vmul.f32 %v528, %v5107
      %v5151 = vmul.f32 %v533, %v5107
      %v5152 = vmul.f32 %v538, %v5107
      %v5153 = vmul.f32 %v543, %v5107
      %v5154 = vmul.f32 %v548, %v5107
      %v5155 = vmul.f32 %v553, %v5107
      %v5156 = vmul.f32 %v558, %v5107
      %v5157 = vmul.f32 %v563, %v5107
      %v5158 = vmul.f32 %v568, %v5107
      %v5159 = vmul.f32 %v573, %v5107
      %v5160 = vmul.f32 %v578, %v5107
      %v5161 = vmul.f32 %v583, %v5107
      %v5162 = vmul.f32 %v588, %v5107
      %v5163 = vmul.f32 %v593, %v5107
      %v5164 = vmul.f32 %v598, %v5107
      %v5165 = vmul.f32 %v603, %v5107
      %v5166 = vmul.f32 %v608, %v5107
      %v5167 = vmul.f32 %v613, %v5107
      %v5168 = vmul.f32 %v618, %v5107
      %v5169 = vmul.f32 %v623, %v5107
      %v5170 = vmul.f32 %v628, %v5107
      %v5171 = vmul.f32 %v633, %v5107
      %v5172 = vmul.f32 %v638, %v5107
      %v5173 = vmul.f32 %v643, %v5107
      %v5174 = vmul.f32 %v648, %v5107
      %v5175 = vmul.f32 %v653, %v5107
      %v5176 = vmul.f32 %v658, %v5107
      %v5177 = vmul.f32 %v663, %v5107
      %v5178 = vmul.f32 %v668, %v5107
      %v5179 = vmul.f32 %v673, %v5107
      %v5180 = vmul.f32 %v678, %v5107
      %v5181 = vmul.f32 %v683, %v5107
      %v5182 = vmul.f32 %v688, %v5107
      %v5183 = vmul.f32 %v693, %v5107
      %v5184 = vmul.f32 %v698, %v5107
      %v5185 = vmul.f32 %v703, %v5107
      %v5186 = vmul.f32 %v708, %v5107
      %v5187 = vmul.f32 %v713, %v5107
      %v5188 = vmul.f32 %v718, %v5107
      %v5189 = vmul.f32 %v723, %v5107
      %v5190 = vmul.f32 %v728, %v5107
      %v5191 = vmul.f32 %v733, %v5107
      %v5192 = vmul.f32 %v738, %v5107
      %v5193 = vmul.f32 %v743, %v5107
      %v5194 = vmul.f32 %v748, %v5107
      %v5195 = vmul.f32 %v753, %v5107
      %v5196 = vmul.f32 %v758, %v5107
      %v5197 = vmul.f32 %v763, %v5107
      %v5198 = vmul.f32 %v768, %v5107
      %v5199 = vmul.f32 %v773, %v5107
      %v5200 = vmul.f32 %v778, %v5107
      %v5201 = vmul.f32 %v783, %v5107
      %v5202 = vmul.f32 %v788, %v5107
      %v5203 = vmul.f32 %v793, %v5107
      %v5204 = vmul.f32 %v798, %v5107
      %v5205 = vmul.f32 %v803, %v5107
      %v5206 = vmul.f32 %v808, %v5107
      %v5207 = vmul.f32 %v2298, %v5107
      %v5208 = vmul.f32 %v2303, %v5107
      %v5209 = vmul.f32 %v2308, %v5107
      %v5210 = vmul.f32 %v2313, %v5107
      %v5211 = vmul.f32 %v3811, %v5107
      %v5212 = vmul.f32 %v3816, %v5107
      %v5213 = vmul.f32 %v3821, %v5107
      %v5214 = vmul.f32 %v3826, %v5107
      %v5321 = vrot.slane %v5109, 6
      %v5322 = vrot.slane %v5110, 6
      %v5323 = vsel %vm2530, %v5321, %v5322
      %v5324 = vrot.slane %v5111, 6
      %v5325 = vsel %vm2530, %v5322, %v5324
      %v5326 = vrot.slane %v5112, 6
      %v5327 = vsel %vm2530, %v5324, %v5326
      %v5328 = vrot.slane %v5113, 6
      %v5329 = vsel %vm2530, %v5326, %v5328
      %v5330 = vrot.slane %v5114, 6
      %v5331 = vsel %vm2530, %v5328, %v5330
      %v5332 = vrot.slane %v5115, 6
      %v5333 = vsel %vm2530, %v5330, %v5332
      %v5334 = vrot.slane %v5116, 6
      %v5335 = vsel %vm2530, %v5332, %v5334
      %v5336 = vrot.slane %v5117, 6
      %v5337 = vsel %vm2530, %v5334, %v5336
      %v5338 = vrot.slane %v5118, 6
      %v5339 = vsel %vm2530, %v5336, %v5338
      %v5340 = vrot.slane %v5119, 6
      %v5341 = vsel %vm2530, %v5338, %v5340
      %v5342 = vrot.slane %v5120, 6
      %v5343 = vsel %vm2530, %v5340, %v5342
      %v5344 = vrot.slane %v5121, 6
      %v5345 = vsel %vm2530, %v5342, %v5344
      %v5346 = vrot.slane %v5122, 6
      %v5347 = vsel %vm2530, %v5344, %v5346
      %v5348 = vrot.slane %v5123, 6
      %v5349 = vsel %vm2530, %v5346, %v5348
      %v5350 = vrot.slane %v5124, 6
      %v5351 = vsel %vm2530, %v5348, %v5350
      %v5352 = vrot.slane %v5125, 6
      %v5353 = vsel %vm2530, %v5350, %v5352
      %v5354 = vrot.slane %v5126, 6
      %v5355 = vsel %vm2530, %v5352, %v5354
      %v5356 = vrot.slane %v5127, 6
      %v5357 = vsel %vm2530, %v5354, %v5356
      %v5358 = vrot.slane %v5128, 6
      %v5359 = vsel %vm2530, %v5356, %v5358
      %v5360 = vrot.slane %v5129, 6
      %v5361 = vsel %vm2530, %v5358, %v5360
      %v5362 = vrot.slane %v5130, 6
      %v5363 = vsel %vm2530, %v5360, %v5362
      %v5364 = vrot.slane %v5131, 6
      %v5365 = vsel %vm2530, %v5362, %v5364
      %v5366 = vrot.slane %v5132, 6
      %v5367 = vsel %vm2530, %v5364, %v5366
      %v5368 = vrot.slane %v5133, 6
      %v5369 = vsel %vm2530, %v5366, %v5368
      %v5370 = vrot.slane %v5134, 6
      %v5371 = vsel %vm2530, %v5368, %v5370
      %v5372 = vrot.slane %v5135, 6
      %v5373 = vsel %vm2530, %v5370, %v5372
      %v5374 = vrot.slane %v5136, 6
      %v5375 = vsel %vm2530, %v5372, %v5374
      %v5376 = vrot.slane %v5137, 6
      %v5377 = vsel %vm2530, %v5374, %v5376
      %v5378 = vrot.slane %v5138, 6
      %v5379 = vsel %vm2530, %v5376, %v5378
      %v5380 = vrot.slane %v5139, 6
      %v5381 = vsel %vm2530, %v5378, %v5380
      %v5382 = vrot.slane %v5140, 6
      %v5383 = vsel %vm2530, %v5380, %v5382
      %v5384 = vrot.slane %v5141, 6
      %v5385 = vsel %vm2530, %v5382, %v5384
      %v5386 = vrot.slane %v5142, 6
      %v5387 = vsel %vm2530, %v5384, %v5386
      %v5388 = vrot.slane %v5143, 6
      %v5389 = vsel %vm2530, %v5386, %v5388
      %v5390 = vrot.slane %v5144, 6
      %v5391 = vsel %vm2530, %v5388, %v5390
      %v5392 = vrot.slane %v5145, 6
      %v5393 = vsel %vm2530, %v5390, %v5392
      %v5394 = vrot.slane %v5146, 6
      %v5395 = vsel %vm2530, %v5392, %v5394
      %v5396 = vrot.slane %v5147, 6
      %v5397 = vsel %vm2530, %v5394, %v5396
      %v5398 = vrot.slane %v5148, 6
      %v5399 = vsel %vm2530, %v5396, %v5398
      %v5400 = vrot.slane %v5149, 6
      %v5401 = vsel %vm2530, %v5398, %v5400
      %v5402 = vrot.slane %v5150, 6
      %v5403 = vsel %vm2530, %v5400, %v5402
      %v5404 = vrot.slane %v5151, 6
      %v5405 = vsel %vm2530, %v5402, %v5404
      %v5406 = vrot.slane %v5152, 6
      %v5407 = vsel %vm2530, %v5404, %v5406
      %v5408 = vrot.slane %v5153, 6
      %v5409 = vsel %vm2530, %v5406, %v5408
      %v5410 = vrot.slane %v5154, 6
      %v5411 = vsel %vm2530, %v5408, %v5410
      %v5412 = vrot.slane %v5155, 6
      %v5413 = vsel %vm2530, %v5410, %v5412
      %v5414 = vrot.slane %v5156, 6
      %v5415 = vsel %vm2530, %v5412, %v5414
      %v5416 = vrot.slane %v5157, 6
      %v5417 = vsel %vm2530, %v5414, %v5416
      %v5418 = vrot.slane %v5158, 6
      %v5419 = vsel %vm2530, %v5416, %v5418
      %v5420 = vrot.slane %v5159, 6
      %v5421 = vsel %vm2530, %v5418, %v5420
      %v5422 = vrot.slane %v5160, 6
      %v5423 = vsel %vm2530, %v5420, %v5422
      %v5424 = vrot.slane %v5161, 6
      %v5425 = vsel %vm2530, %v5422, %v5424
      %v5426 = vrot.slane %v5162, 6
      %v5427 = vsel %vm2530, %v5424, %v5426
      %v5428 = vrot.slane %v5163, 6
      %v5429 = vsel %vm2530, %v5426, %v5428
      %v5430 = vrot.slane %v5164, 6
      %v5431 = vsel %vm2530, %v5428, %v5430
      %v5432 = vrot.slane %v5165, 6
      %v5433 = vsel %vm2530, %v5430, %v5432
      %v5434 = vrot.slane %v5166, 6
      %v5435 = vsel %vm2530, %v5432, %v5434
      %v5436 = vrot.slane %v5167, 6
      %v5437 = vsel %vm2530, %v5434, %v5436
      %v5438 = vrot.slane %v5168, 6
      %v5439 = vsel %vm2530, %v5436, %v5438
      %v5440 = vrot.slane %v5169, 6
      %v5441 = vsel %vm2530, %v5438, %v5440
      %v5442 = vrot.slane %v5170, 6
      %v5443 = vsel %vm2530, %v5440, %v5442
      %v5444 = vrot.slane %v5171, 6
      %v5445 = vsel %vm2530, %v5442, %v5444
      %v5446 = vrot.slane %v5172, 6
      %v5447 = vsel %vm2530, %v5444, %v5446
      %v5448 = vrot.slane %v5173, 6
      %v5449 = vsel %vm2530, %v5446, %v5448
      %v5450 = vrot.slane %v5174, 6
      %v5451 = vsel %vm2530, %v5448, %v5450
      %v5452 = vrot.slane %v5175, 6
      %v5453 = vsel %vm2530, %v5450, %v5452
      %v5454 = vrot.slane %v5176, 6
      %v5455 = vsel %vm2530, %v5452, %v5454
      %v5456 = vrot.slane %v5177, 6
      %v5457 = vsel %vm2530, %v5454, %v5456
      %v5458 = vrot.slane %v5178, 6
      %v5459 = vsel %vm2530, %v5456, %v5458
      %v5460 = vrot.slane %v5179, 6
      %v5461 = vsel %vm2530, %v5458, %v5460
      %v5462 = vrot.slane %v5180, 6
      %v5463 = vsel %vm2530, %v5460, %v5462
      %v5464 = vrot.slane %v5181, 6
      %v5465 = vsel %vm2530, %v5462, %v5464
      %v5466 = vrot.slane %v5182, 6
      %v5467 = vsel %vm2530, %v5464, %v5466
      %v5468 = vrot.slane %v5183, 6
      %v5469 = vsel %vm2530, %v5466, %v5468
      %v5470 = vrot.slane %v5184, 6
      %v5471 = vsel %vm2530, %v5468, %v5470
      %v5472 = vrot.slane %v5185, 6
      %v5473 = vsel %vm2530, %v5470, %v5472
      %v5474 = vrot.slane %v5186, 6
      %v5475 = vsel %vm2530, %v5472, %v5474
      %v5476 = vrot.slane %v5187, 6
      %v5477 = vsel %vm2530, %v5474, %v5476
      %v5478 = vrot.slane %v5188, 6
      %v5479 = vsel %vm2530, %v5476, %v5478
      %v5480 = vrot.slane %v5189, 6
      %v5481 = vsel %vm2530, %v5478, %v5480
      %v5482 = vrot.slane %v5190, 6
      %v5483 = vsel %vm2530, %v5480, %v5482
      %v5484 = vrot.slane %v5191, 6
      %v5485 = vsel %vm2530, %v5482, %v5484
      %v5486 = vrot.slane %v5192, 6
      %v5487 = vsel %vm2530, %v5484, %v5486
      %v5488 = vrot.slane %v5193, 6
      %v5489 = vsel %vm2530, %v5486, %v5488
      %v5490 = vrot.slane %v5194, 6
      %v5491 = vsel %vm2530, %v5488, %v5490
      %v5492 = vrot.slane %v5195, 6
      %v5493 = vsel %vm2530, %v5490, %v5492
      %v5494 = vrot.slane %v5196, 6
      %v5495 = vsel %vm2530, %v5492, %v5494
      %v5496 = vrot.slane %v5197, 6
      %v5497 = vsel %vm2530, %v5494, %v5496
      %v5498 = vrot.slane %v5198, 6
      %v5499 = vsel %vm2530, %v5496, %v5498
      %v5500 = vrot.slane %v5199, 6
      %v5501 = vsel %vm2530, %v5498, %v5500
      %v5502 = vrot.slane %v5200, 6
      %v5503 = vsel %vm2530, %v5500, %v5502
      %v5504 = vrot.slane %v5201, 6
      %v5505 = vsel %vm2530, %v5502, %v5504
      %v5506 = vrot.slane %v5202, 6
      %v5507 = vsel %vm2530, %v5504, %v5506
      %v5508 = vrot.slane %v5203, 6
      %v5509 = vsel %vm2530, %v5506, %v5508
      %v5510 = vrot.slane %v5204, 6
      %v5511 = vsel %vm2530, %v5508, %v5510
      %v5512 = vrot.slane %v5205, 6
      %v5513 = vsel %vm2530, %v5510, %v5512
      %v5514 = vrot.slane %v5206, 6
      %v5515 = vsel %vm2530, %v5512, %v5514
      %v5516 = vrot.slane %v5207, 6
      %v5517 = vsel %vm2530, %v5514, %v5516
      %v5518 = vrot.slane %v5208, 6
      %v5519 = vsel %vm2530, %v5516, %v5518
      %v5520 = vrot.slane %v5209, 6
      %v5521 = vsel %vm2530, %v5518, %v5520
      %v5522 = vrot.slane %v5210, 6
      %v5523 = vsel %vm2530, %v5520, %v5522
      %v5524 = vrot.slane %v5211, 6
      %v5525 = vsel %vm2530, %v5522, %v5524
      %v5526 = vrot.slane %v5212, 6
      %v5527 = vsel %vm2530, %v5524, %v5526
      %v5528 = vrot.slane %v5213, 6
      %v5529 = vsel %vm2530, %v5526, %v5528
      %v5530 = vrot.slane %v5214, 6
      %v5531 = vsel %vm2530, %v5528, %v5530
      %v5637 = vadd.f32 %v4999, %v5323
      %v5638 = vadd.f32 %v5000, %v5325
      %v5639 = vadd.f32 %v5001, %v5327
      %v5640 = vadd.f32 %v5002, %v5329
      %v5641 = vadd.f32 %v5003, %v5331
      %v5642 = vadd.f32 %v5004, %v5333
      %v5643 = vadd.f32 %v5005, %v5335
      %v5644 = vadd.f32 %v5006, %v5337
      %v5645 = vadd.f32 %v5007, %v5339
      %v5646 = vadd.f32 %v5008, %v5341
      %v5647 = vadd.f32 %v5009, %v5343
      %v5648 = vadd.f32 %v5010, %v5345
      %v5649 = vadd.f32 %v5011, %v5347
      %v5650 = vadd.f32 %v5012, %v5349
      %v5651 = vadd.f32 %v5013, %v5351
      %v5652 = vadd.f32 %v5014, %v5353
      %v5653 = vadd.f32 %v5015, %v5355
      %v5654 = vadd.f32 %v5016, %v5357
      %v5655 = vadd.f32 %v5017, %v5359
      %v5656 = vadd.f32 %v5018, %v5361
      %v5657 = vadd.f32 %v5019, %v5363
      %v5658 = vadd.f32 %v5020, %v5365
      %v5659 = vadd.f32 %v5021, %v5367
      %v5660 = vadd.f32 %v5022, %v5369
      %v5661 = vadd.f32 %v5023, %v5371
      %v5662 = vadd.f32 %v5024, %v5373
      %v5663 = vadd.f32 %v5025, %v5375
      %v5664 = vadd.f32 %v5026, %v5377
      %v5665 = vadd.f32 %v5027, %v5379
      %v5666 = vadd.f32 %v5028, %v5381
      %v5667 = vadd.f32 %v5029, %v5383
      %v5668 = vadd.f32 %v5030, %v5385
      %v5669 = vadd.f32 %v5031, %v5387
      %v5670 = vadd.f32 %v5032, %v5389
      %v5671 = vadd.f32 %v5033, %v5391
      %v5672 = vadd.f32 %v5034, %v5393
      %v5673 = vadd.f32 %v5035, %v5395
      %v5674 = vadd.f32 %v5036, %v5397
      %v5675 = vadd.f32 %v5037, %v5399
      %v5676 = vadd.f32 %v5038, %v5401
      %v5677 = vadd.f32 %v5039, %v5403
      %v5678 = vadd.f32 %v5040, %v5405
      %v5679 = vadd.f32 %v5041, %v5407
      %v5680 = vadd.f32 %v5042, %v5409
      %v5681 = vadd.f32 %v5043, %v5411
      %v5682 = vadd.f32 %v5044, %v5413
      %v5683 = vadd.f32 %v5045, %v5415
      %v5684 = vadd.f32 %v5046, %v5417
      %v5685 = vadd.f32 %v5047, %v5419
      %v5686 = vadd.f32 %v5048, %v5421
      %v5687 = vadd.f32 %v5049, %v5423
      %v5688 = vadd.f32 %v5050, %v5425
      %v5689 = vadd.f32 %v5051, %v5427
      %v5690 = vadd.f32 %v5052, %v5429
      %v5691 = vadd.f32 %v5053, %v5431
      %v5692 = vadd.f32 %v5054, %v5433
      %v5693 = vadd.f32 %v5055, %v5435
      %v5694 = vadd.f32 %v5056, %v5437
      %v5695 = vadd.f32 %v5057, %v5439
      %v5696 = vadd.f32 %v5058, %v5441
      %v5697 = vadd.f32 %v5059, %v5443
      %v5698 = vadd.f32 %v5060, %v5445
      %v5699 = vadd.f32 %v5061, %v5447
      %v5700 = vadd.f32 %v5062, %v5449
      %v5701 = vadd.f32 %v5063, %v5451
      %v5702 = vadd.f32 %v5064, %v5453
      %v5703 = vadd.f32 %v5065, %v5455
      %v5704 = vadd.f32 %v5066, %v5457
      %v5705 = vadd.f32 %v5067, %v5459
      %v5706 = vadd.f32 %v5068, %v5461
      %v5707 = vadd.f32 %v5069, %v5463
      %v5708 = vadd.f32 %v5070, %v5465
      %v5709 = vadd.f32 %v5071, %v5467
      %v5710 = vadd.f32 %v5072, %v5469
      %v5711 = vadd.f32 %v5073, %v5471
      %v5712 = vadd.f32 %v5074, %v5473
      %v5713 = vadd.f32 %v5075, %v5475
      %v5714 = vadd.f32 %v5076, %v5477
      %v5715 = vadd.f32 %v5077, %v5479
      %v5716 = vadd.f32 %v5078, %v5481
      %v5717 = vadd.f32 %v5079, %v5483
      %v5718 = vadd.f32 %v5080, %v5485
      %v5719 = vadd.f32 %v5081, %v5487
      %v5720 = vadd.f32 %v5082, %v5489
      %v5721 = vadd.f32 %v5083, %v5491
      %v5722 = vadd.f32 %v5084, %v5493
      %v5723 = vadd.f32 %v5085, %v5495
      %v5724 = vadd.f32 %v5086, %v5497
      %v5725 = vadd.f32 %v5087, %v5499
      %v5726 = vadd.f32 %v5088, %v5501
      %v5727 = vadd.f32 %v5089, %v5503
      %v5728 = vadd.f32 %v5090, %v5505
      %v5729 = vadd.f32 %v5091, %v5507
      %v5730 = vadd.f32 %v5092, %v5509
      %v5731 = vadd.f32 %v5093, %v5511
      %v5732 = vadd.f32 %v5094, %v5513
      %v5733 = vadd.f32 %v5095, %v5515
      %v5734 = vadd.f32 %v5096, %v5517
      %v5735 = vadd.f32 %v5097, %v5519
      %v5736 = vadd.f32 %v5098, %v5521
      %v5737 = vadd.f32 %v5099, %v5523
      %v5738 = vadd.f32 %v5100, %v5525
      %v5739 = vadd.f32 %v5101, %v5527
      %v5740 = vadd.f32 %v5102, %v5529
      %v5741 = vadd.f32 %v5103, %v5531
      %v5742 = vld [vmem:[%s2] sm:$0x1]
      %v5744 = vperm.slane %v5742, 0
      %v5746 = vadd.f32 %v5637, %v5744
      %v5747 = vadd.f32 %v5638, %v5744
      %v5748 = vadd.f32 %v5639, %v5744
      %v5749 = vadd.f32 %v5640, %v5744
      %v5750 = vadd.f32 %v5641, %v5744
      %v5751 = vadd.f32 %v5642, %v5744
      %v5752 = vadd.f32 %v5643, %v5744
      %v5753 = vadd.f32 %v5644, %v5744
      %v5754 = vadd.f32 %v5645, %v5744
      %v5755 = vadd.f32 %v5646, %v5744
      %v5756 = vadd.f32 %v5647, %v5744
      %v5757 = vadd.f32 %v5648, %v5744
      %v5758 = vadd.f32 %v5649, %v5744
      %v5759 = vadd.f32 %v5650, %v5744
      %v5760 = vadd.f32 %v5651, %v5744
      %v5761 = vadd.f32 %v5652, %v5744
      %v5762 = vadd.f32 %v5653, %v5744
      %v5763 = vadd.f32 %v5654, %v5744
      %v5764 = vadd.f32 %v5655, %v5744
      %v5765 = vadd.f32 %v5656, %v5744
      %v5766 = vadd.f32 %v5657, %v5744
      %v5767 = vadd.f32 %v5658, %v5744
      %v5768 = vadd.f32 %v5659, %v5744
      %v5769 = vadd.f32 %v5660, %v5744
      %v5770 = vadd.f32 %v5661, %v5744
      %v5771 = vadd.f32 %v5662, %v5744
      %v5772 = vadd.f32 %v5663, %v5744
      %v5773 = vadd.f32 %v5664, %v5744
      %v5774 = vadd.f32 %v5665, %v5744
      %v5775 = vadd.f32 %v5666, %v5744
      %v5776 = vadd.f32 %v5667, %v5744
      %v5777 = vadd.f32 %v5668, %v5744
      %v5778 = vadd.f32 %v5669, %v5744
      %v5779 = vadd.f32 %v5670, %v5744
      %v5780 = vadd.f32 %v5671, %v5744
      %v5781 = vadd.f32 %v5672, %v5744
      %v5782 = vadd.f32 %v5673, %v5744
      %v5783 = vadd.f32 %v5674, %v5744
      %v5784 = vadd.f32 %v5675, %v5744
      %v5785 = vadd.f32 %v5676, %v5744
      %v5786 = vadd.f32 %v5677, %v5744
      %v5787 = vadd.f32 %v5678, %v5744
      %v5788 = vadd.f32 %v5679, %v5744
      %v5789 = vadd.f32 %v5680, %v5744
      %v5790 = vadd.f32 %v5681, %v5744
      %v5791 = vadd.f32 %v5682, %v5744
      %v5792 = vadd.f32 %v5683, %v5744
      %v5793 = vadd.f32 %v5684, %v5744
      %v5794 = vadd.f32 %v5685, %v5744
      %v5795 = vadd.f32 %v5686, %v5744
      %v5796 = vadd.f32 %v5687, %v5744
      %v5797 = vadd.f32 %v5688, %v5744
      %v5798 = vadd.f32 %v5689, %v5744
      %v5799 = vadd.f32 %v5690, %v5744
      %v5800 = vadd.f32 %v5691, %v5744
      %v5801 = vadd.f32 %v5692, %v5744
      %v5802 = vadd.f32 %v5693, %v5744
      %v5803 = vadd.f32 %v5694, %v5744
      %v5804 = vadd.f32 %v5695, %v5744
      %v5805 = vadd.f32 %v5696, %v5744
      %v5806 = vadd.f32 %v5697, %v5744
      %v5807 = vadd.f32 %v5698, %v5744
      %v5808 = vadd.f32 %v5699, %v5744
      %v5809 = vadd.f32 %v5700, %v5744
      %v5810 = vadd.f32 %v5701, %v5744
      %v5811 = vadd.f32 %v5702, %v5744
      %v5812 = vadd.f32 %v5703, %v5744
      %v5813 = vadd.f32 %v5704, %v5744
      %v5814 = vadd.f32 %v5705, %v5744
      %v5815 = vadd.f32 %v5706, %v5744
      %v5816 = vadd.f32 %v5707, %v5744
      %v5817 = vadd.f32 %v5708, %v5744
      %v5818 = vadd.f32 %v5709, %v5744
      %v5819 = vadd.f32 %v5710, %v5744
      %v5820 = vadd.f32 %v5711, %v5744
      %v5821 = vadd.f32 %v5712, %v5744
      %v5822 = vadd.f32 %v5713, %v5744
      %v5823 = vadd.f32 %v5714, %v5744
      %v5824 = vadd.f32 %v5715, %v5744
      %v5825 = vadd.f32 %v5716, %v5744
      %v5826 = vadd.f32 %v5717, %v5744
      %v5827 = vadd.f32 %v5718, %v5744
      %v5828 = vadd.f32 %v5719, %v5744
      %v5829 = vadd.f32 %v5720, %v5744
      %v5830 = vadd.f32 %v5721, %v5744
      %v5831 = vadd.f32 %v5722, %v5744
      %v5832 = vadd.f32 %v5723, %v5744
      %v5833 = vadd.f32 %v5724, %v5744
      %v5834 = vadd.f32 %v5725, %v5744
      %v5835 = vadd.f32 %v5726, %v5744
      %v5836 = vadd.f32 %v5727, %v5744
      %v5837 = vadd.f32 %v5728, %v5744
      %v5838 = vadd.f32 %v5729, %v5744
      %v5839 = vadd.f32 %v5730, %v5744
      %v5840 = vadd.f32 %v5731, %v5744
      %v5841 = vadd.f32 %v5732, %v5744
      %v5842 = vadd.f32 %v5733, %v5744
      %v5843 = vadd.f32 %v5734, %v5744
      %v5844 = vadd.f32 %v5735, %v5744
      %v5845 = vadd.f32 %v5736, %v5744
      %v5846 = vadd.f32 %v5737, %v5744
      %v5847 = vadd.f32 %v5738, %v5744
      %v5848 = vadd.f32 %v5739, %v5744
      %v5849 = vadd.f32 %v5740, %v5744
      %v5850 = vadd.f32 %v5741, %v5744
      %v5851 = vmax.f32 %v5746, 0.0
      %v5852 = vmax.f32 %v5747, 0.0
      %v5853 = vmax.f32 %v5748, 0.0
      %v5854 = vmax.f32 %v5749, 0.0
      %v5855 = vmax.f32 %v5750, 0.0
      %v5856 = vmax.f32 %v5751, 0.0
      %v5857 = vmax.f32 %v5752, 0.0
      %v5858 = vmax.f32 %v5753, 0.0
      %v5859 = vmax.f32 %v5754, 0.0
      %v5860 = vmax.f32 %v5755, 0.0
      %v5861 = vmax.f32 %v5756, 0.0
      %v5862 = vmax.f32 %v5757, 0.0
      %v5863 = vmax.f32 %v5758, 0.0
      %v5864 = vmax.f32 %v5759, 0.0
      %v5865 = vmax.f32 %v5760, 0.0
      %v5866 = vmax.f32 %v5761, 0.0
      %v5867 = vmax.f32 %v5762, 0.0
      %v5868 = vmax.f32 %v5763, 0.0
      %v5869 = vmax.f32 %v5764, 0.0
      %v5870 = vmax.f32 %v5765, 0.0
      %v5871 = vmax.f32 %v5766, 0.0
      %v5872 = vmax.f32 %v5767, 0.0
      %v5873 = vmax.f32 %v5768, 0.0
      %v5874 = vmax.f32 %v5769, 0.0
      %v5875 = vmax.f32 %v5770, 0.0
      %v5876 = vmax.f32 %v5771, 0.0
      %v5877 = vmax.f32 %v5772, 0.0
      %v5878 = vmax.f32 %v5773, 0.0
      %v5879 = vmax.f32 %v5774, 0.0
      %v5880 = vmax.f32 %v5775, 0.0
      %v5881 = vmax.f32 %v5776, 0.0
      %v5882 = vmax.f32 %v5777, 0.0
      %v5883 = vmax.f32 %v5778, 0.0
      %v5884 = vmax.f32 %v5779, 0.0
      %v5885 = vmax.f32 %v5780, 0.0
      %v5886 = vmax.f32 %v5781, 0.0
      %v5887 = vmax.f32 %v5782, 0.0
      %v5888 = vmax.f32 %v5783, 0.0
      %v5889 = vmax.f32 %v5784, 0.0
      %v5890 = vmax.f32 %v5785, 0.0
      %v5891 = vmax.f32 %v5786, 0.0
      %v5892 = vmax.f32 %v5787, 0.0
      %v5893 = vmax.f32 %v5788, 0.0
      %v5894 = vmax.f32 %v5789, 0.0
      %v5895 = vmax.f32 %v5790, 0.0
      %v5896 = vmax.f32 %v5791, 0.0
      %v5897 = vmax.f32 %v5792, 0.0
      %v5898 = vmax.f32 %v5793, 0.0
      %v5899 = vmax.f32 %v5794, 0.0
      %v5900 = vmax.f32 %v5795, 0.0
      %v5901 = vmax.f32 %v5796, 0.0
      %v5902 = vmax.f32 %v5797, 0.0
      %v5903 = vmax.f32 %v5798, 0.0
      %v5904 = vmax.f32 %v5799, 0.0
      %v5905 = vmax.f32 %v5800, 0.0
      %v5906 = vmax.f32 %v5801, 0.0
      %v5907 = vmax.f32 %v5802, 0.0
      %v5908 = vmax.f32 %v5803, 0.0
      %v5909 = vmax.f32 %v5804, 0.0
      %v5910 = vmax.f32 %v5805, 0.0
      %v5911 = vmax.f32 %v5806, 0.0
      %v5912 = vmax.f32 %v5807, 0.0
      %v5913 = vmax.f32 %v5808, 0.0
      %v5914 = vmax.f32 %v5809, 0.0
      %v5915 = vmax.f32 %v5810, 0.0
      %v5916 = vmax.f32 %v5811, 0.0
      %v5917 = vmax.f32 %v5812, 0.0
      %v5918 = vmax.f32 %v5813, 0.0
      %v5919 = vmax.f32 %v5814, 0.0
      %v5920 = vmax.f32 %v5815, 0.0
      %v5921 = vmax.f32 %v5816, 0.0
      %v5922 = vmax.f32 %v5817, 0.0
      %v5923 = vmax.f32 %v5818, 0.0
      %v5924 = vmax.f32 %v5819, 0.0
      %v5925 = vmax.f32 %v5820, 0.0
      %v5926 = vmax.f32 %v5821, 0.0
      %v5927 = vmax.f32 %v5822, 0.0
      %v5928 = vmax.f32 %v5823, 0.0
      %v5929 = vmax.f32 %v5824, 0.0
      %v5930 = vmax.f32 %v5825, 0.0
      %v5931 = vmax.f32 %v5826, 0.0
      %v5932 = vmax.f32 %v5827, 0.0
      %v5933 = vmax.f32 %v5828, 0.0
      %v5934 = vmax.f32 %v5829, 0.0
      %v5935 = vmax.f32 %v5830, 0.0
      %v5936 = vmax.f32 %v5831, 0.0
      %v5937 = vmax.f32 %v5832, 0.0
      %v5938 = vmax.f32 %v5833, 0.0
      %v5939 = vmax.f32 %v5834, 0.0
      %v5940 = vmax.f32 %v5835, 0.0
      %v5941 = vmax.f32 %v5836, 0.0
      %v5942 = vmax.f32 %v5837, 0.0
      %v5943 = vmax.f32 %v5838, 0.0
      %v5944 = vmax.f32 %v5839, 0.0
      %v5945 = vmax.f32 %v5840, 0.0
      %v5946 = vmax.f32 %v5841, 0.0
      %v5947 = vmax.f32 %v5842, 0.0
      %v5948 = vmax.f32 %v5843, 0.0
      %v5949 = vmax.f32 %v5844, 0.0
      %v5950 = vmax.f32 %v5845, 0.0
      %v5951 = vmax.f32 %v5846, 0.0
      %v5952 = vmax.f32 %v5847, 0.0
      %v5953 = vmax.f32 %v5848, 0.0
      %v5954 = vmax.f32 %v5849, 0.0
      %v5955 = vmax.f32 %v5850, 0.0
      %v6058 = vrot.slane %v5854, 6
      %v6059 = vrot.slane %v5855, 6
      %v6060 = vsel %vm2530, %v6058, %v6059
      %v6061 = vrot.slane %v5856, 6
      %v6062 = vsel %vm2530, %v6059, %v6061
      %v6063 = vrot.slane %v5857, 6
      %v6064 = vsel %vm2530, %v6061, %v6063
      %v6065 = vrot.slane %v5858, 6
      %v6066 = vsel %vm2530, %v6063, %v6065
      %v6067 = vrot.slane %v5859, 6
      %v6068 = vsel %vm2530, %v6065, %v6067
      %v6069 = vrot.slane %v5860, 6
      %v6070 = vsel %vm2530, %v6067, %v6069
      %v6071 = vrot.slane %v5861, 6
      %v6072 = vsel %vm2530, %v6069, %v6071
      %v6073 = vrot.slane %v5862, 6
      %v6074 = vsel %vm2530, %v6071, %v6073
      %v6075 = vrot.slane %v5863, 6
      %v6076 = vsel %vm2530, %v6073, %v6075
      %v6077 = vrot.slane %v5864, 6
      %v6078 = vsel %vm2530, %v6075, %v6077
      %v6079 = vrot.slane %v5865, 6
      %v6080 = vsel %vm2530, %v6077, %v6079
      %v6081 = vrot.slane %v5866, 6
      %v6082 = vsel %vm2530, %v6079, %v6081
      %v6083 = vrot.slane %v5867, 6
      %v6084 = vsel %vm2530, %v6081, %v6083
      %v6085 = vrot.slane %v5868, 6
      %v6086 = vsel %vm2530, %v6083, %v6085
      %v6087 = vrot.slane %v5869, 6
      %v6088 = vsel %vm2530, %v6085, %v6087
      %v6089 = vrot.slane %v5870, 6
      %v6090 = vsel %vm2530, %v6087, %v6089
      %v6091 = vrot.slane %v5871, 6
      %v6092 = vsel %vm2530, %v6089, %v6091
      %v6093 = vrot.slane %v5872, 6
      %v6094 = vsel %vm2530, %v6091, %v6093
      %v6095 = vrot.slane %v5873, 6
      %v6096 = vsel %vm2530, %v6093, %v6095
      %v6097 = vrot.slane %v5874, 6
      %v6098 = vsel %vm2530, %v6095, %v6097
      %v6099 = vrot.slane %v5875, 6
      %v6100 = vsel %vm2530, %v6097, %v6099
      %v6101 = vrot.slane %v5876, 6
      %v6102 = vsel %vm2530, %v6099, %v6101
      %v6103 = vrot.slane %v5877, 6
      %v6104 = vsel %vm2530, %v6101, %v6103
      %v6105 = vrot.slane %v5878, 6
      %v6106 = vsel %vm2530, %v6103, %v6105
      %v6107 = vrot.slane %v5879, 6
      %v6108 = vsel %vm2530, %v6105, %v6107
      %v6109 = vrot.slane %v5880, 6
      %v6110 = vsel %vm2530, %v6107, %v6109
      %v6111 = vrot.slane %v5881, 6
      %v6112 = vsel %vm2530, %v6109, %v6111
      %v6113 = vrot.slane %v5882, 6
      %v6114 = vsel %vm2530, %v6111, %v6113
      %v6115 = vrot.slane %v5883, 6
      %v6116 = vsel %vm2530, %v6113, %v6115
      %v6117 = vrot.slane %v5884, 6
      %v6118 = vsel %vm2530, %v6115, %v6117
      %v6119 = vrot.slane %v5885, 6
      %v6120 = vsel %vm2530, %v6117, %v6119
      %v6121 = vrot.slane %v5886, 6
      %v6122 = vsel %vm2530, %v6119, %v6121
      %v6123 = vrot.slane %v5887, 6
      %v6124 = vsel %vm2530, %v6121, %v6123
      %v6125 = vrot.slane %v5888, 6
      %v6126 = vsel %vm2530, %v6123, %v6125
      %v6127 = vrot.slane %v5889, 6
      %v6128 = vsel %vm2530, %v6125, %v6127
      %v6129 = vrot.slane %v5890, 6
      %v6130 = vsel %vm2530, %v6127, %v6129
      %v6131 = vrot.slane %v5891, 6
      %v6132 = vsel %vm2530, %v6129, %v6131
      %v6133 = vrot.slane %v5892, 6
      %v6134 = vsel %vm2530, %v6131, %v6133
      %v6135 = vrot.slane %v5893, 6
      %v6136 = vsel %vm2530, %v6133, %v6135
      %v6137 = vrot.slane %v5894, 6
      %v6138 = vsel %vm2530, %v6135, %v6137
      %v6139 = vrot.slane %v5895, 6
      %v6140 = vsel %vm2530, %v6137, %v6139
      %v6141 = vrot.slane %v5896, 6
      %v6142 = vsel %vm2530, %v6139, %v6141
      %v6143 = vrot.slane %v5897, 6
      %v6144 = vsel %vm2530, %v6141, %v6143
      %v6145 = vrot.slane %v5898, 6
      %v6146 = vsel %vm2530, %v6143, %v6145
      %v6147 = vrot.slane %v5899, 6
      %v6148 = vsel %vm2530, %v6145, %v6147
      %v6149 = vrot.slane %v5900, 6
      %v6150 = vsel %vm2530, %v6147, %v6149
      %v6151 = vrot.slane %v5901, 6
      %v6152 = vsel %vm2530, %v6149, %v6151
      %v6153 = vrot.slane %v5902, 6
      %v6154 = vsel %vm2530, %v6151, %v6153
      %v6155 = vrot.slane %v5903, 6
      %v6156 = vsel %vm2530, %v6153, %v6155
      %v6157 = vrot.slane %v5904, 6
      %v6158 = vsel %vm2530, %v6155, %v6157
      %v6159 = vrot.slane %v5905, 6
      %v6160 = vsel %vm2530, %v6157, %v6159
      %v6161 = vrot.slane %v5906, 6
      %v6162 = vsel %vm2530, %v6159, %v6161
      %v6163 = vrot.slane %v5907, 6
      %v6164 = vsel %vm2530, %v6161, %v6163
      %v6165 = vrot.slane %v5908, 6
      %v6166 = vsel %vm2530, %v6163, %v6165
      %v6167 = vrot.slane %v5909, 6
      %v6168 = vsel %vm2530, %v6165, %v6167
      %v6169 = vrot.slane %v5910, 6
      %v6170 = vsel %vm2530, %v6167, %v6169
      %v6171 = vrot.slane %v5911, 6
      %v6172 = vsel %vm2530, %v6169, %v6171
      %v6173 = vrot.slane %v5912, 6
      %v6174 = vsel %vm2530, %v6171, %v6173
      %v6175 = vrot.slane %v5913, 6
      %v6176 = vsel %vm2530, %v6173, %v6175
      %v6177 = vrot.slane %v5914, 6
      %v6178 = vsel %vm2530, %v6175, %v6177
      %v6179 = vrot.slane %v5915, 6
      %v6180 = vsel %vm2530, %v6177, %v6179
      %v6181 = vrot.slane %v5916, 6
      %v6182 = vsel %vm2530, %v6179, %v6181
      %v6183 = vrot.slane %v5917, 6
      %v6184 = vsel %vm2530, %v6181, %v6183
      %v6185 = vrot.slane %v5918, 6
      %v6186 = vsel %vm2530, %v6183, %v6185
      %v6187 = vrot.slane %v5919, 6
      %v6188 = vsel %vm2530, %v6185, %v6187
      %v6189 = vrot.slane %v5920, 6
      %v6190 = vsel %vm2530, %v6187, %v6189
      %v6191 = vrot.slane %v5921, 6
      %v6192 = vsel %vm2530, %v6189, %v6191
      %v6193 = vrot.slane %v5922, 6
      %v6194 = vsel %vm2530, %v6191, %v6193
      %v6195 = vrot.slane %v5923, 6
      %v6196 = vsel %vm2530, %v6193, %v6195
      %v6197 = vrot.slane %v5924, 6
      %v6198 = vsel %vm2530, %v6195, %v6197
      %v6199 = vrot.slane %v5925, 6
      %v6200 = vsel %vm2530, %v6197, %v6199
      %v6201 = vrot.slane %v5926, 6
      %v6202 = vsel %vm2530, %v6199, %v6201
      %v6203 = vrot.slane %v5927, 6
      %v6204 = vsel %vm2530, %v6201, %v6203
      %v6205 = vrot.slane %v5928, 6
      %v6206 = vsel %vm2530, %v6203, %v6205
      %v6207 = vrot.slane %v5929, 6
      %v6208 = vsel %vm2530, %v6205, %v6207
      %v6209 = vrot.slane %v5930, 6
      %v6210 = vsel %vm2530, %v6207, %v6209
      %v6211 = vrot.slane %v5931, 6
      %v6212 = vsel %vm2530, %v6209, %v6211
      %v6213 = vrot.slane %v5932, 6
      %v6214 = vsel %vm2530, %v6211, %v6213
      %v6215 = vrot.slane %v5933, 6
      %v6216 = vsel %vm2530, %v6213, %v6215
      %v6217 = vrot.slane %v5934, 6
      %v6218 = vsel %vm2530, %v6215, %v6217
      %v6219 = vrot.slane %v5935, 6
      %v6220 = vsel %vm2530, %v6217, %v6219
      %v6221 = vrot.slane %v5936, 6
      %v6222 = vsel %vm2530, %v6219, %v6221
      %v6223 = vrot.slane %v5937, 6
      %v6224 = vsel %vm2530, %v6221, %v6223
      %v6225 = vrot.slane %v5938, 6
      %v6226 = vsel %vm2530, %v6223, %v6225
      %v6227 = vrot.slane %v5939, 6
      %v6228 = vsel %vm2530, %v6225, %v6227
      %v6229 = vrot.slane %v5940, 6
      %v6230 = vsel %vm2530, %v6227, %v6229
      %v6231 = vrot.slane %v5941, 6
      %v6232 = vsel %vm2530, %v6229, %v6231
      %v6233 = vrot.slane %v5942, 6
      %v6234 = vsel %vm2530, %v6231, %v6233
      %v6235 = vrot.slane %v5943, 6
      %v6236 = vsel %vm2530, %v6233, %v6235
      %v6237 = vrot.slane %v5944, 6
      %v6238 = vsel %vm2530, %v6235, %v6237
      %v6239 = vrot.slane %v5945, 6
      %v6240 = vsel %vm2530, %v6237, %v6239
      %v6241 = vrot.slane %v5946, 6
      %v6242 = vsel %vm2530, %v6239, %v6241
      %v6243 = vrot.slane %v5947, 6
      %v6244 = vsel %vm2530, %v6241, %v6243
      %v6245 = vrot.slane %v5948, 6
      %v6246 = vsel %vm2530, %v6243, %v6245
      %v6247 = vrot.slane %v5949, 6
      %v6248 = vsel %vm2530, %v6245, %v6247
      %v6249 = vrot.slane %v5950, 6
      %v6250 = vsel %vm2530, %v6247, %v6249
      %v6251 = vrot.slane %v5951, 6
      %v6252 = vsel %vm2530, %v6249, %v6251
      %v6253 = vrot.slane %v5952, 6
      %v6254 = vsel %vm2530, %v6251, %v6253
      %v6255 = vrot.slane %v5953, 6
      %v6256 = vsel %vm2530, %v6253, %v6255
      %v6257 = vrot.slane %v5954, 6
      %v6258 = vsel %vm2530, %v6255, %v6257
      %v6259 = vrot.slane %v5955, 6
      %v6260 = vsel %vm2530, %v6257, %v6259
      %v6362 = vmax.f32 %v5851, %v6060
      %v6363 = vmax.f32 %v5852, %v6062
      %v6364 = vmax.f32 %v5853, %v6064
      %v6365 = vmax.f32 %v5854, %v6066
      %v6366 = vmax.f32 %v5855, %v6068
      %v6367 = vmax.f32 %v5856, %v6070
      %v6368 = vmax.f32 %v5857, %v6072
      %v6369 = vmax.f32 %v5858, %v6074
      %v6370 = vmax.f32 %v5859, %v6076
      %v6371 = vmax.f32 %v5860, %v6078
      %v6372 = vmax.f32 %v5861, %v6080
      %v6373 = vmax.f32 %v5862, %v6082
      %v6374 = vmax.f32 %v5863, %v6084
      %v6375 = vmax.f32 %v5864, %v6086
      %v6376 = vmax.f32 %v5865, %v6088
      %v6377 = vmax.f32 %v5866, %v6090
      %v6378 = vmax.f32 %v5867, %v6092
      %v6379 = vmax.f32 %v5868, %v6094
      %v6380 = vmax.f32 %v5869, %v6096
      %v6381 = vmax.f32 %v5870, %v6098
      %v6382 = vmax.f32 %v5871, %v6100
      %v6383 = vmax.f32 %v5872, %v6102
      %v6384 = vmax.f32 %v5873, %v6104
      %v6385 = vmax.f32 %v5874, %v6106
      %v6386 = vmax.f32 %v5875, %v6108
      %v6387 = vmax.f32 %v5876, %v6110
      %v6388 = vmax.f32 %v5877, %v6112
      %v6389 = vmax.f32 %v5878, %v6114
      %v6390 = vmax.f32 %v5879, %v6116
      %v6391 = vmax.f32 %v5880, %v6118
      %v6392 = vmax.f32 %v5881, %v6120
      %v6393 = vmax.f32 %v5882, %v6122
      %v6394 = vmax.f32 %v5883, %v6124
      %v6395 = vmax.f32 %v5884, %v6126
      %v6396 = vmax.f32 %v5885, %v6128
      %v6397 = vmax.f32 %v5886, %v6130
      %v6398 = vmax.f32 %v5887, %v6132
      %v6399 = vmax.f32 %v5888, %v6134
      %v6400 = vmax.f32 %v5889, %v6136
      %v6401 = vmax.f32 %v5890, %v6138
      %v6402 = vmax.f32 %v5891, %v6140
      %v6403 = vmax.f32 %v5892, %v6142
      %v6404 = vmax.f32 %v5893, %v6144
      %v6405 = vmax.f32 %v5894, %v6146
      %v6406 = vmax.f32 %v5895, %v6148
      %v6407 = vmax.f32 %v5896, %v6150
      %v6408 = vmax.f32 %v5897, %v6152
      %v6409 = vmax.f32 %v5898, %v6154
      %v6410 = vmax.f32 %v5899, %v6156
      %v6411 = vmax.f32 %v5900, %v6158
      %v6412 = vmax.f32 %v5901, %v6160
      %v6413 = vmax.f32 %v5902, %v6162
      %v6414 = vmax.f32 %v5903, %v6164
      %v6415 = vmax.f32 %v5904, %v6166
      %v6416 = vmax.f32 %v5905, %v6168
      %v6417 = vmax.f32 %v5906, %v6170
      %v6418 = vmax.f32 %v5907, %v6172
      %v6419 = vmax.f32 %v5908, %v6174
      %v6420 = vmax.f32 %v5909, %v6176
      %v6421 = vmax.f32 %v5910, %v6178
      %v6422 = vmax.f32 %v5911, %v6180
      %v6423 = vmax.f32 %v5912, %v6182
      %v6424 = vmax.f32 %v5913, %v6184
      %v6425 = vmax.f32 %v5914, %v6186
      %v6426 = vmax.f32 %v5915, %v6188
      %v6427 = vmax.f32 %v5916, %v6190
      %v6428 = vmax.f32 %v5917, %v6192
      %v6429 = vmax.f32 %v5918, %v6194
      %v6430 = vmax.f32 %v5919, %v6196
      %v6431 = vmax.f32 %v5920, %v6198
      %v6432 = vmax.f32 %v5921, %v6200
      %v6433 = vmax.f32 %v5922, %v6202
      %v6434 = vmax.f32 %v5923, %v6204
      %v6435 = vmax.f32 %v5924, %v6206
      %v6436 = vmax.f32 %v5925, %v6208
      %v6437 = vmax.f32 %v5926, %v6210
      %v6438 = vmax.f32 %v5927, %v6212
      %v6439 = vmax.f32 %v5928, %v6214
      %v6440 = vmax.f32 %v5929, %v6216
      %v6441 = vmax.f32 %v5930, %v6218
      %v6442 = vmax.f32 %v5931, %v6220
      %v6443 = vmax.f32 %v5932, %v6222
      %v6444 = vmax.f32 %v5933, %v6224
      %v6445 = vmax.f32 %v5934, %v6226
      %v6446 = vmax.f32 %v5935, %v6228
      %v6447 = vmax.f32 %v5936, %v6230
      %v6448 = vmax.f32 %v5937, %v6232
      %v6449 = vmax.f32 %v5938, %v6234
      %v6450 = vmax.f32 %v5939, %v6236
      %v6451 = vmax.f32 %v5940, %v6238
      %v6452 = vmax.f32 %v5941, %v6240
      %v6453 = vmax.f32 %v5942, %v6242
      %v6454 = vmax.f32 %v5943, %v6244
      %v6455 = vmax.f32 %v5944, %v6246
      %v6456 = vmax.f32 %v5945, %v6248
      %v6457 = vmax.f32 %v5946, %v6250
      %v6458 = vmax.f32 %v5947, %v6252
      %v6459 = vmax.f32 %v5948, %v6254
      %v6460 = vmax.f32 %v5949, %v6256
      %v6461 = vmax.f32 %v5950, %v6258
      %v6462 = vmax.f32 %v5951, %v6260
      %v6564 = vrot.slane %v6362, 1
      %v6565 = vrot.slane %v6363, 1
      %v6566 = vsel %vm1238, %v6564, %v6565
      %v6567 = vrot.slane %v6364, 1
      %v6568 = vsel %vm1238, %v6565, %v6567
      %v6569 = vrot.slane %v6365, 1
      %v6570 = vsel %vm1238, %v6567, %v6569
      %v6571 = vrot.slane %v6366, 1
      %v6572 = vsel %vm1238, %v6569, %v6571
      %v6573 = vrot.slane %v6367, 1
      %v6574 = vsel %vm1238, %v6571, %v6573
      %v6575 = vrot.slane %v6368, 1
      %v6576 = vsel %vm1238, %v6573, %v6575
      %v6577 = vrot.slane %v6369, 1
      %v6578 = vsel %vm1238, %v6575, %v6577
      %v6579 = vrot.slane %v6370, 1
      %v6580 = vsel %vm1238, %v6577, %v6579
      %v6581 = vrot.slane %v6371, 1
      %v6582 = vsel %vm1238, %v6579, %v6581
      %v6583 = vrot.slane %v6372, 1
      %v6584 = vsel %vm1238, %v6581, %v6583
      %v6585 = vrot.slane %v6373, 1
      %v6586 = vsel %vm1238, %v6583, %v6585
      %v6587 = vrot.slane %v6374, 1
      %v6588 = vsel %vm1238, %v6585, %v6587
      %v6589 = vrot.slane %v6375, 1
      %v6590 = vsel %vm1238, %v6587, %v6589
      %v6591 = vrot.slane %v6376, 1
      %v6592 = vsel %vm1238, %v6589, %v6591
      %v6593 = vrot.slane %v6377, 1
      %v6594 = vsel %vm1238, %v6591, %v6593
      %v6595 = vrot.slane %v6378, 1
      %v6596 = vsel %vm1238, %v6593, %v6595
      %v6597 = vrot.slane %v6379, 1
      %v6598 = vsel %vm1238, %v6595, %v6597
      %v6599 = vrot.slane %v6380, 1
      %v6600 = vsel %vm1238, %v6597, %v6599
      %v6601 = vrot.slane %v6381, 1
      %v6602 = vsel %vm1238, %v6599, %v6601
      %v6603 = vrot.slane %v6382, 1
      %v6604 = vsel %vm1238, %v6601, %v6603
      %v6605 = vrot.slane %v6383, 1
      %v6606 = vsel %vm1238, %v6603, %v6605
      %v6607 = vrot.slane %v6384, 1
      %v6608 = vsel %vm1238, %v6605, %v6607
      %v6609 = vrot.slane %v6385, 1
      %v6610 = vsel %vm1238, %v6607, %v6609
      %v6611 = vrot.slane %v6386, 1
      %v6612 = vsel %vm1238, %v6609, %v6611
      %v6613 = vrot.slane %v6387, 1
      %v6614 = vsel %vm1238, %v6611, %v6613
      %v6615 = vrot.slane %v6388, 1
      %v6616 = vsel %vm1238, %v6613, %v6615
      %v6617 = vrot.slane %v6389, 1
      %v6618 = vsel %vm1238, %v6615, %v6617
      %v6619 = vrot.slane %v6390, 1
      %v6620 = vsel %vm1238, %v6617, %v6619
      %v6621 = vrot.slane %v6391, 1
      %v6622 = vsel %vm1238, %v6619, %v6621
      %v6623 = vrot.slane %v6392, 1
      %v6624 = vsel %vm1238, %v6621, %v6623
      %v6625 = vrot.slane %v6393, 1
      %v6626 = vsel %vm1238, %v6623, %v6625
      %v6627 = vrot.slane %v6394, 1
      %v6628 = vsel %vm1238, %v6625, %v6627
      %v6629 = vrot.slane %v6395, 1
      %v6630 = vsel %vm1238, %v6627, %v6629
      %v6631 = vrot.slane %v6396, 1
      %v6632 = vsel %vm1238, %v6629, %v6631
      %v6633 = vrot.slane %v6397, 1
      %v6634 = vsel %vm1238, %v6631, %v6633
      %v6635 = vrot.slane %v6398, 1
      %v6636 = vsel %vm1238, %v6633, %v6635
      %v6637 = vrot.slane %v6399, 1
      %v6638 = vsel %vm1238, %v6635, %v6637
      %v6639 = vrot.slane %v6400, 1
      %v6640 = vsel %vm1238, %v6637, %v6639
      %v6641 = vrot.slane %v6401, 1
      %v6642 = vsel %vm1238, %v6639, %v6641
      %v6643 = vrot.slane %v6402, 1
      %v6644 = vsel %vm1238, %v6641, %v6643
      %v6645 = vrot.slane %v6403, 1
      %v6646 = vsel %vm1238, %v6643, %v6645
      %v6647 = vrot.slane %v6404, 1
      %v6648 = vsel %vm1238, %v6645, %v6647
      %v6649 = vrot.slane %v6405, 1
      %v6650 = vsel %vm1238, %v6647, %v6649
      %v6651 = vrot.slane %v6406, 1
      %v6652 = vsel %vm1238, %v6649, %v6651
      %v6653 = vrot.slane %v6407, 1
      %v6654 = vsel %vm1238, %v6651, %v6653
      %v6655 = vrot.slane %v6408, 1
      %v6656 = vsel %vm1238, %v6653, %v6655
      %v6657 = vrot.slane %v6409, 1
      %v6658 = vsel %vm1238, %v6655, %v6657
      %v6659 = vrot.slane %v6410, 1
      %v6660 = vsel %vm1238, %v6657, %v6659
      %v6661 = vrot.slane %v6411, 1
      %v6662 = vsel %vm1238, %v6659, %v6661
      %v6663 = vrot.slane %v6412, 1
      %v6664 = vsel %vm1238, %v6661, %v6663
      %v6665 = vrot.slane %v6413, 1
      %v6666 = vsel %vm1238, %v6663, %v6665
      %v6667 = vrot.slane %v6414, 1
      %v6668 = vsel %vm1238, %v6665, %v6667
      %v6669 = vrot.slane %v6415, 1
      %v6670 = vsel %vm1238, %v6667, %v6669
      %v6671 = vrot.slane %v6416, 1
      %v6672 = vsel %vm1238, %v6669, %v6671
      %v6673 = vrot.slane %v6417, 1
      %v6674 = vsel %vm1238, %v6671, %v6673
      %v6675 = vrot.slane %v6418, 1
      %v6676 = vsel %vm1238, %v6673, %v6675
      %v6677 = vrot.slane %v6419, 1
      %v6678 = vsel %vm1238, %v6675, %v6677
      %v6679 = vrot.slane %v6420, 1
      %v6680 = vsel %vm1238, %v6677, %v6679
      %v6681 = vrot.slane %v6421, 1
      %v6682 = vsel %vm1238, %v6679, %v6681
      %v6683 = vrot.slane %v6422, 1
      %v6684 = vsel %vm1238, %v6681, %v6683
      %v6685 = vrot.slane %v6423, 1
      %v6686 = vsel %vm1238, %v6683, %v6685
      %v6687 = vrot.slane %v6424, 1
      %v6688 = vsel %vm1238, %v6685, %v6687
      %v6689 = vrot.slane %v6425, 1
      %v6690 = vsel %vm1238, %v6687, %v6689
      %v6691 = vrot.slane %v6426, 1
      %v6692 = vsel %vm1238, %v6689, %v6691
      %v6693 = vrot.slane %v6427, 1
      %v6694 = vsel %vm1238, %v6691, %v6693
      %v6695 = vrot.slane %v6428, 1
      %v6696 = vsel %vm1238, %v6693, %v6695
      %v6697 = vrot.slane %v6429, 1
      %v6698 = vsel %vm1238, %v6695, %v6697
      %v6699 = vrot.slane %v6430, 1
      %v6700 = vsel %vm1238, %v6697, %v6699
      %v6701 = vrot.slane %v6431, 1
      %v6702 = vsel %vm1238, %v6699, %v6701
      %v6703 = vrot.slane %v6432, 1
      %v6704 = vsel %vm1238, %v6701, %v6703
      %v6705 = vrot.slane %v6433, 1
      %v6706 = vsel %vm1238, %v6703, %v6705
      %v6707 = vrot.slane %v6434, 1
      %v6708 = vsel %vm1238, %v6705, %v6707
      %v6709 = vrot.slane %v6435, 1
      %v6710 = vsel %vm1238, %v6707, %v6709
      %v6711 = vrot.slane %v6436, 1
      %v6712 = vsel %vm1238, %v6709, %v6711
      %v6713 = vrot.slane %v6437, 1
      %v6714 = vsel %vm1238, %v6711, %v6713
      %v6715 = vrot.slane %v6438, 1
      %v6716 = vsel %vm1238, %v6713, %v6715
      %v6717 = vrot.slane %v6439, 1
      %v6718 = vsel %vm1238, %v6715, %v6717
      %v6719 = vrot.slane %v6440, 1
      %v6720 = vsel %vm1238, %v6717, %v6719
      %v6721 = vrot.slane %v6441, 1
      %v6722 = vsel %vm1238, %v6719, %v6721
      %v6723 = vrot.slane %v6442, 1
      %v6724 = vsel %vm1238, %v6721, %v6723
      %v6725 = vrot.slane %v6443, 1
      %v6726 = vsel %vm1238, %v6723, %v6725
      %v6727 = vrot.slane %v6444, 1
      %v6728 = vsel %vm1238, %v6725, %v6727
      %v6729 = vrot.slane %v6445, 1
      %v6730 = vsel %vm1238, %v6727, %v6729
      %v6731 = vrot.slane %v6446, 1
      %v6732 = vsel %vm1238, %v6729, %v6731
      %v6733 = vrot.slane %v6447, 1
      %v6734 = vsel %vm1238, %v6731, %v6733
      %v6735 = vrot.slane %v6448, 1
      %v6736 = vsel %vm1238, %v6733, %v6735
      %v6737 = vrot.slane %v6449, 1
      %v6738 = vsel %vm1238, %v6735, %v6737
      %v6739 = vrot.slane %v6450, 1
      %v6740 = vsel %vm1238, %v6737, %v6739
      %v6741 = vrot.slane %v6451, 1
      %v6742 = vsel %vm1238, %v6739, %v6741
      %v6743 = vrot.slane %v6452, 1
      %v6744 = vsel %vm1238, %v6741, %v6743
      %v6745 = vrot.slane %v6453, 1
      %v6746 = vsel %vm1238, %v6743, %v6745
      %v6747 = vrot.slane %v6454, 1
      %v6748 = vsel %vm1238, %v6745, %v6747
      %v6749 = vrot.slane %v6455, 1
      %v6750 = vsel %vm1238, %v6747, %v6749
      %v6751 = vrot.slane %v6456, 1
      %v6752 = vsel %vm1238, %v6749, %v6751
      %v6753 = vrot.slane %v6457, 1
      %v6754 = vsel %vm1238, %v6751, %v6753
      %v6755 = vrot.slane %v6458, 1
      %v6756 = vsel %vm1238, %v6753, %v6755
      %v6757 = vrot.slane %v6459, 1
      %v6758 = vsel %vm1238, %v6755, %v6757
      %v6759 = vrot.slane %v6460, 1
      %v6760 = vsel %vm1238, %v6757, %v6759
      %v6761 = vrot.slane %v6461, 1
      %v6762 = vsel %vm1238, %v6759, %v6761
      %v6763 = vrot.slane %v6462, 1
      %v6764 = vsel %vm1238, %v6761, %v6763
      %v6866 = vmax.f32 %v6362, %v6566
      %v6867 = vmax.f32 %v6363, %v6568
      %v6868 = vmax.f32 %v6364, %v6570
      %v6869 = vmax.f32 %v6365, %v6572
      %v6870 = vmax.f32 %v6366, %v6574
      %v6871 = vmax.f32 %v6367, %v6576
      %v6872 = vmax.f32 %v6368, %v6578
      %v6873 = vmax.f32 %v6369, %v6580
      %v6874 = vmax.f32 %v6370, %v6582
      %v6875 = vmax.f32 %v6371, %v6584
      %v6876 = vmax.f32 %v6372, %v6586
      %v6877 = vmax.f32 %v6373, %v6588
      %v6878 = vmax.f32 %v6374, %v6590
      %v6879 = vmax.f32 %v6375, %v6592
      %v6880 = vmax.f32 %v6376, %v6594
      %v6881 = vmax.f32 %v6377, %v6596
      %v6882 = vmax.f32 %v6378, %v6598
      %v6883 = vmax.f32 %v6379, %v6600
      %v6884 = vmax.f32 %v6380, %v6602
      %v6885 = vmax.f32 %v6381, %v6604
      %v6886 = vmax.f32 %v6382, %v6606
      %v6887 = vmax.f32 %v6383, %v6608
      %v6888 = vmax.f32 %v6384, %v6610
      %v6889 = vmax.f32 %v6385, %v6612
      %v6890 = vmax.f32 %v6386, %v6614
      %v6891 = vmax.f32 %v6387, %v6616
      %v6892 = vmax.f32 %v6388, %v6618
      %v6893 = vmax.f32 %v6389, %v6620
      %v6894 = vmax.f32 %v6390, %v6622
      %v6895 = vmax.f32 %v6391, %v6624
      %v6896 = vmax.f32 %v6392, %v6626
      %v6897 = vmax.f32 %v6393, %v6628
      %v6898 = vmax.f32 %v6394, %v6630
      %v6899 = vmax.f32 %v6395, %v6632
      %v6900 = vmax.f32 %v6396, %v6634
      %v6901 = vmax.f32 %v6397, %v6636
      %v6902 = vmax.f32 %v6398, %v6638
      %v6903 = vmax.f32 %v6399, %v6640
      %v6904 = vmax.f32 %v6400, %v6642
      %v6905 = vmax.f32 %v6401, %v6644
      %v6906 = vmax.f32 %v6402, %v6646
      %v6907 = vmax.f32 %v6403, %v6648
      %v6908 = vmax.f32 %v6404, %v6650
      %v6909 = vmax.f32 %v6405, %v6652
      %v6910 = vmax.f32 %v6406, %v6654
      %v6911 = vmax.f32 %v6407, %v6656
      %v6912 = vmax.f32 %v6408, %v6658
      %v6913 = vmax.f32 %v6409, %v6660
      %v6914 = vmax.f32 %v6410, %v6662
      %v6915 = vmax.f32 %v6411, %v6664
      %v6916 = vmax.f32 %v6412, %v6666
      %v6917 = vmax.f32 %v6413, %v6668
      %v6918 = vmax.f32 %v6414, %v6670
      %v6919 = vmax.f32 %v6415, %v6672
      %v6920 = vmax.f32 %v6416, %v6674
      %v6921 = vmax.f32 %v6417, %v6676
      %v6922 = vmax.f32 %v6418, %v6678
      %v6923 = vmax.f32 %v6419, %v6680
      %v6924 = vmax.f32 %v6420, %v6682
      %v6925 = vmax.f32 %v6421, %v6684
      %v6926 = vmax.f32 %v6422, %v6686
      %v6927 = vmax.f32 %v6423, %v6688
      %v6928 = vmax.f32 %v6424, %v6690
      %v6929 = vmax.f32 %v6425, %v6692
      %v6930 = vmax.f32 %v6426, %v6694
      %v6931 = vmax.f32 %v6427, %v6696
      %v6932 = vmax.f32 %v6428, %v6698
      %v6933 = vmax.f32 %v6429, %v6700
      %v6934 = vmax.f32 %v6430, %v6702
      %v6935 = vmax.f32 %v6431, %v6704
      %v6936 = vmax.f32 %v6432, %v6706
      %v6937 = vmax.f32 %v6433, %v6708
      %v6938 = vmax.f32 %v6434, %v6710
      %v6939 = vmax.f32 %v6435, %v6712
      %v6940 = vmax.f32 %v6436, %v6714
      %v6941 = vmax.f32 %v6437, %v6716
      %v6942 = vmax.f32 %v6438, %v6718
      %v6943 = vmax.f32 %v6439, %v6720
      %v6944 = vmax.f32 %v6440, %v6722
      %v6945 = vmax.f32 %v6441, %v6724
      %v6946 = vmax.f32 %v6442, %v6726
      %v6947 = vmax.f32 %v6443, %v6728
      %v6948 = vmax.f32 %v6444, %v6730
      %v6949 = vmax.f32 %v6445, %v6732
      %v6950 = vmax.f32 %v6446, %v6734
      %v6951 = vmax.f32 %v6447, %v6736
      %v6952 = vmax.f32 %v6448, %v6738
      %v6953 = vmax.f32 %v6449, %v6740
      %v6954 = vmax.f32 %v6450, %v6742
      %v6955 = vmax.f32 %v6451, %v6744
      %v6956 = vmax.f32 %v6452, %v6746
      %v6957 = vmax.f32 %v6453, %v6748
      %v6958 = vmax.f32 %v6454, %v6750
      %v6959 = vmax.f32 %v6455, %v6752
      %v6960 = vmax.f32 %v6456, %v6754
      %v6961 = vmax.f32 %v6457, %v6756
      %v6962 = vmax.f32 %v6458, %v6758
      %v6963 = vmax.f32 %v6459, %v6760
      %v6964 = vmax.f32 %v6460, %v6762
      %v6965 = vmax.f32 %v6461, %v6764
      %v6966 = vmax.f32 %v6462, %v6763
      %vm6967 = vcmask 261120
      %6968 = vst.msk [vmem:[%s170] sm:$0xff] %vm6967, %v6866
      %6969 = vst.msk [vmem:[%s170 + $0x8] sm:$0xff] %vm6967, %v6867
      %6970 = vst.msk [vmem:[%s170 + $0x10] sm:$0xff] %vm6967, %v6868
      %6971 = vst.msk [vmem:[%s170 + $0x18] sm:$0xff] %vm6967, %v6869
      %6972 = vst.msk [vmem:[%s170 + $0x20] sm:$0xff] %vm6967, %v6870
      %6973 = vst.msk [vmem:[%s170 + $0x28] sm:$0xff] %vm6967, %v6871
      %6974 = vst.msk [vmem:[%s170 + $0x30] sm:$0xff] %vm6967, %v6872
      %6975 = vst.msk [vmem:[%s170 + $0x38] sm:$0xff] %vm6967, %v6873
      %6976 = vst.msk [vmem:[%s170 + $0x40] sm:$0xff] %vm6967, %v6874
      %6977 = vst.msk [vmem:[%s170 + $0x48] sm:$0xff] %vm6967, %v6875
      %6978 = vst.msk [vmem:[%s170 + $0x50] sm:$0xff] %vm6967, %v6876
      %6979 = vst.msk [vmem:[%s170 + $0x58] sm:$0xff] %vm6967, %v6877
      %6980 = vst.msk [vmem:[%s170 + $0x60] sm:$0xff] %vm6967, %v6878
      %6981 = vst.msk [vmem:[%s170 + $0x68] sm:$0xff] %vm6967, %v6879
      %6982 = vst.msk [vmem:[%s170 + $0x70] sm:$0xff] %vm6967, %v6880
      %6983 = vst.msk [vmem:[%s170 + $0x78] sm:$0xff] %vm6967, %v6881
      %6984 = vst.msk [vmem:[%s170 + $0x80] sm:$0xff] %vm6967, %v6882
      %6985 = vst.msk [vmem:[%s170 + $0x88] sm:$0xff] %vm6967, %v6883
      %6986 = vst.msk [vmem:[%s170 + $0x90] sm:$0xff] %vm6967, %v6884
      %6987 = vst.msk [vmem:[%s170 + $0x98] sm:$0xff] %vm6967, %v6885
      %6988 = vst.msk [vmem:[%s170 + $0xa0] sm:$0xff] %vm6967, %v6886
      %6989 = vst.msk [vmem:[%s170 + $0xa8] sm:$0xff] %vm6967, %v6887
      %6990 = vst.msk [vmem:[%s170 + $0xb0] sm:$0xff] %vm6967, %v6888
      %6991 = vst.msk [vmem:[%s170 + $0xb8] sm:$0xff] %vm6967, %v6889
      %6992 = vst.msk [vmem:[%s170 + $0xc0] sm:$0xff] %vm6967, %v6890
      %6993 = vst.msk [vmem:[%s170 + $0xc8] sm:$0xff] %vm6967, %v6891
      %6994 = vst.msk [vmem:[%s170 + $0xd0] sm:$0xff] %vm6967, %v6892
      %6995 = vst.msk [vmem:[%s170 + $0xd8] sm:$0xff] %vm6967, %v6893
      %6996 = vst.msk [vmem:[%s170 + $0xe0] sm:$0xff] %vm6967, %v6894
      %6997 = vst.msk [vmem:[%s170 + $0xe8] sm:$0xff] %vm6967, %v6895
      %6998 = vst.msk [vmem:[%s170 + $0xf0] sm:$0xff] %vm6967, %v6896
      %6999 = vst.msk [vmem:[%s170 + $0xf8] sm:$0xff] %vm6967, %v6897
      %7000 = vst.msk [vmem:[%s170 + $0x100] sm:$0xff] %vm6967, %v6898
      %7001 = vst.msk [vmem:[%s170 + $0x108] sm:$0xff] %vm6967, %v6899
      %7002 = vst.msk [vmem:[%s170 + $0x110] sm:$0xff] %vm6967, %v6900
      %7003 = vst.msk [vmem:[%s170 + $0x118] sm:$0xff] %vm6967, %v6901
      %7004 = vst.msk [vmem:[%s170 + $0x120] sm:$0xff] %vm6967, %v6902
      %7005 = vst.msk [vmem:[%s170 + $0x128] sm:$0xff] %vm6967, %v6903
      %7006 = vst.msk [vmem:[%s170 + $0x130] sm:$0xff] %vm6967, %v6904
      %7007 = vst.msk [vmem:[%s170 + $0x138] sm:$0xff] %vm6967, %v6905
      %7008 = vst.msk [vmem:[%s170 + $0x140] sm:$0xff] %vm6967, %v6906
      %7009 = vst.msk [vmem:[%s170 + $0x148] sm:$0xff] %vm6967, %v6907
      %7010 = vst.msk [vmem:[%s170 + $0x150] sm:$0xff] %vm6967, %v6908
      %7011 = vst.msk [vmem:[%s170 + $0x158] sm:$0xff] %vm6967, %v6909
      %7012 = vst.msk [vmem:[%s170 + $0x160] sm:$0xff] %vm6967, %v6910
      %7013 = vst.msk [vmem:[%s170 + $0x168] sm:$0xff] %vm6967, %v6911
      %7014 = vst.msk [vmem:[%s170 + $0x170] sm:$0xff] %vm6967, %v6912
      %7015 = vst.msk [vmem:[%s170 + $0x178] sm:$0xff] %vm6967, %v6913
      %7016 = vst.msk [vmem:[%s170 + $0x180] sm:$0xff] %vm6967, %v6914
      %7017 = vst.msk [vmem:[%s170 + $0x188] sm:$0xff] %vm6967, %v6915
      %7018 = vst.msk [vmem:[%s170 + $0x190] sm:$0xff] %vm6967, %v6916
      %7019 = vst.msk [vmem:[%s170 + $0x198] sm:$0xff] %vm6967, %v6917
      %7020 = vst.msk [vmem:[%s170 + $0x1a0] sm:$0xff] %vm6967, %v6918
      %7021 = vst.msk [vmem:[%s170 + $0x1a8] sm:$0xff] %vm6967, %v6919
      %7022 = vst.msk [vmem:[%s170 + $0x1b0] sm:$0xff] %vm6967, %v6920
      %7023 = vst.msk [vmem:[%s170 + $0x1b8] sm:$0xff] %vm6967, %v6921
      %7024 = vst.msk [vmem:[%s170 + $0x1c0] sm:$0xff] %vm6967, %v6922
      %7025 = vst.msk [vmem:[%s170 + $0x1c8] sm:$0xff] %vm6967, %v6923
      %7026 = vst.msk [vmem:[%s170 + $0x1d0] sm:$0xff] %vm6967, %v6924
      %7027 = vst.msk [vmem:[%s170 + $0x1d8] sm:$0xff] %vm6967, %v6925
      %7028 = vst.msk [vmem:[%s170 + $0x1e0] sm:$0xff] %vm6967, %v6926
      %7029 = vst.msk [vmem:[%s170 + $0x1e8] sm:$0xff] %vm6967, %v6927
      %7030 = vst.msk [vmem:[%s170 + $0x1f0] sm:$0xff] %vm6967, %v6928
      %7031 = vst.msk [vmem:[%s170 + $0x1f8] sm:$0xff] %vm6967, %v6929
      %7032 = vst.msk [vmem:[%s170 + $0x200] sm:$0xff] %vm6967, %v6930
      %7033 = vst.msk [vmem:[%s170 + $0x208] sm:$0xff] %vm6967, %v6931
      %7034 = vst.msk [vmem:[%s170 + $0x210] sm:$0xff] %vm6967, %v6932
      %7035 = vst.msk [vmem:[%s170 + $0x218] sm:$0xff] %vm6967, %v6933
      %7036 = vst.msk [vmem:[%s170 + $0x220] sm:$0xff] %vm6967, %v6934
      %7037 = vst.msk [vmem:[%s170 + $0x228] sm:$0xff] %vm6967, %v6935
      %7038 = vst.msk [vmem:[%s170 + $0x230] sm:$0xff] %vm6967, %v6936
      %7039 = vst.msk [vmem:[%s170 + $0x238] sm:$0xff] %vm6967, %v6937
      %7040 = vst.msk [vmem:[%s170 + $0x240] sm:$0xff] %vm6967, %v6938
      %7041 = vst.msk [vmem:[%s170 + $0x248] sm:$0xff] %vm6967, %v6939
      %7042 = vst.msk [vmem:[%s170 + $0x250] sm:$0xff] %vm6967, %v6940
      %7043 = vst.msk [vmem:[%s170 + $0x258] sm:$0xff] %vm6967, %v6941
      %7044 = vst.msk [vmem:[%s170 + $0x260] sm:$0xff] %vm6967, %v6942
      %7045 = vst.msk [vmem:[%s170 + $0x268] sm:$0xff] %vm6967, %v6943
      %7046 = vst.msk [vmem:[%s170 + $0x270] sm:$0xff] %vm6967, %v6944
      %7047 = vst.msk [vmem:[%s170 + $0x278] sm:$0xff] %vm6967, %v6945
      %7048 = vst.msk [vmem:[%s170 + $0x280] sm:$0xff] %vm6967, %v6946
      %7049 = vst.msk [vmem:[%s170 + $0x288] sm:$0xff] %vm6967, %v6947
      %7050 = vst.msk [vmem:[%s170 + $0x290] sm:$0xff] %vm6967, %v6948
      %7051 = vst.msk [vmem:[%s170 + $0x298] sm:$0xff] %vm6967, %v6949
      %7052 = vst.msk [vmem:[%s170 + $0x2a0] sm:$0xff] %vm6967, %v6950
      %7053 = vst.msk [vmem:[%s170 + $0x2a8] sm:$0xff] %vm6967, %v6951
      %7054 = vst.msk [vmem:[%s170 + $0x2b0] sm:$0xff] %vm6967, %v6952
      %7055 = vst.msk [vmem:[%s170 + $0x2b8] sm:$0xff] %vm6967, %v6953
      %7056 = vst.msk [vmem:[%s170 + $0x2c0] sm:$0xff] %vm6967, %v6954
      %7057 = vst.msk [vmem:[%s170 + $0x2c8] sm:$0xff] %vm6967, %v6955
      %7058 = vst.msk [vmem:[%s170 + $0x2d0] sm:$0xff] %vm6967, %v6956
      %7059 = vst.msk [vmem:[%s170 + $0x2d8] sm:$0xff] %vm6967, %v6957
      %7060 = vst.msk [vmem:[%s170 + $0x2e0] sm:$0xff] %vm6967, %v6958
      %7061 = vst.msk [vmem:[%s170 + $0x2e8] sm:$0xff] %vm6967, %v6959
      %7062 = vst.msk [vmem:[%s170 + $0x2f0] sm:$0xff] %vm6967, %v6960
      %7063 = vst.msk [vmem:[%s170 + $0x2f8] sm:$0xff] %vm6967, %v6961
      %7064 = vst.msk [vmem:[%s170 + $0x300] sm:$0xff] %vm6967, %v6962
      %7065 = vst.msk [vmem:[%s170 + $0x308] sm:$0xff] %vm6967, %v6963
      %7066 = vst.msk [vmem:[%s170 + $0x310] sm:$0xff] %vm6967, %v6964
      %7067 = vst.msk [vmem:[%s170 + $0x318] sm:$0xff] %vm6967, %v6965
      %vm7068 = vcmask 260096
      %7069 = vst.msk [vmem:[%s170 + $0x320] sm:$0x7f] %vm7068, %v6966
      %p7070 = scmp.lt.s32.totalorder %s14, 1
      %s7071 = scalar_select %p7070, %s14, 1
      %s7072 = smul.addr %s7071, 101
      %s7073 = smul.addr %s7072, 8
      %s7074 = scalar_lea.vmem %s3, %s7073
      // Predicated region
      $region33: #{simple_cnn_forward.3} parent=31 // pred_check
        %p7075 = pneg %p100
      $region34: #{simple_cnn_forward.3} parent=31 // pred_check_branch
        %7077 = sbr.rel (%p7075) target = $region36
      $region35: #{simple_cnn_forward.3} parent=31 // pred_region
        _
      $region36: #{simple_cnn_forward.3} parent=31 // pred_fallthru
        _
    $region32: #{simple_cnn_forward.3} parent=5 // pred_fallthru
      _
    %p7078 = scmp.le.s32.totalorder 2, %s9
    // Predicated region
    $region37: #{simple_cnn_forward.3} parent=5 // pred_check
      %p7079 = pneg %p7078
    $region38: #{simple_cnn_forward.3} parent=5 // pred_check_branch
      %7081 = sbr.rel (%p7079) target = $region40
    $region39: #{simple_cnn_forward.3} parent=5 // pred_region
      %s7082 = ssub.s32 %s9, 2
      // Predicated region
      $region41: #{simple_cnn_forward.3} parent=39 // pred_check
        %p7083 = pneg %p106
      $region42: #{simple_cnn_forward.3} parent=39 // pred_check_branch
        %7085 = sbr.rel (%p7083) target = $region44
      $region43: #{simple_cnn_forward.3} parent=39 // pred_region
        %p7086 = scmp.lt.s32.totalorder %s15, 1
        %s7087 = scalar_select %p7086, %s15, 1
        %s7088 = smul.addr %s7087, 101
        %s7089 = smul.addr %s7088, 8
        %s7090 = scalar_lea.vmem %s3, %s7089
      $region44: #{simple_cnn_forward.3} parent=39 // pred_fallthru
        _
    $region40: #{simple_cnn_forward.3} parent=5 // pred_fallthru
      _
  $region6: #{simple_cnn_forward.3} parent=0 // loop_footer
    %s13 = sadd.s32 1, %s9
  $region7: #{simple_cnn_forward.3} parent=0 // loop_footer_branch
    %8 = sbr.rel target = $region3
  $region8: #{simple_cnn_forward.3} parent=0 // loop_exit
    _

// kernel: simple_cnn_forward.5
$region0: #{simple_cnn_forward.5}
  #allocation0 [shape = 'u32[]', space=smem, size = 0x4, offset = 0x4, fixed_abs, tag = 'smem constant byte address 0x4 - core index']
  #allocation1 [shape = 'u32[72,128]{1,0:T(1,128)}', space=vmem, size = 0x9000, scoped, tag = 'internal scratch']
  %s0 = inlined_call_operand.vmem [shape: f32[2,3136], index: 0, kind: input, shape index: {}]
  %s1 = inlined_call_operand.vmem [shape: bf16[3136,128], index: 1, kind: input, shape index: {}]
  %s2 = inlined_call_operand.vmem [shape: f32[1,128], index: 2, kind: input, shape index: {}]
  %s3 = inlined_call_operand.vmem [shape: bf16[128,128], index: 3, kind: input, shape index: {}]
  %s4 = inlined_call_operand.vmem [shape: f32[1,128], index: 4, kind: input, shape index: {}]
  %s5 = inlined_call_operand.hbm [shape: f32[2,128], index: 5, kind: output, shape index: {}]
  %s6 = sld [smem:[#allocation0]]
  $region30: #{simple_cnn_forward.5} parent=0
    _
  %s8 = ssub.s32 1, %s6
  %s9 = scalar_select 0, %s8, %s6
  $region1: #{simple_cnn_forward.5} parent=0
    #allocation2 [shape = 'u8[1024]{0}', space=vmem, size = 0x400, scoped, tag = 'output window, operand 0, single buffered']
    #allocation3 [shape = 's32[1]{0}', space=sflag, size = 0x4, scoped, tag = 'scoped memory for simple_cnn_forward.5']
    %10 = vsyncpa [#allocation3], 0
    // Predicated region
    $region2: #{simple_cnn_forward.5} parent=1 // pred_check
      _
    $region3: #{simple_cnn_forward.5} parent=1 // pred_check_branch
      %12 = sbr.rel (0) target = $region5
    $region4: #{simple_cnn_forward.5} parent=1 // pred_region
      _
    $region5: #{simple_cnn_forward.5} parent=1 // pred_fallthru
      _
    // Predicated region
    $region6: #{simple_cnn_forward.5} parent=1 // pred_check
      _
    $region7: #{simple_cnn_forward.5} parent=1 // pred_check_branch
      %14 = sbr.rel (0) target = $region9
    $region8: #{simple_cnn_forward.5} parent=1 // pred_region
      _
    $region9: #{simple_cnn_forward.5} parent=1 // pred_fallthru
      _
    // Predicated region
    $region10: #{simple_cnn_forward.5} parent=1 // pred_check
      _
    $region11: #{simple_cnn_forward.5} parent=1 // pred_check_branch
      %16 = sbr.rel (0) target = $region13
    $region12: #{simple_cnn_forward.5} parent=1 // pred_region
      _
    $region13: #{simple_cnn_forward.5} parent=1 // pred_fallthru
      _
    // Predicated region
    $region14: #{simple_cnn_forward.5} parent=1 // pred_check
      _
    $region15: #{simple_cnn_forward.5} parent=1 // pred_check_branch
      %18 = sbr.rel (0) target = $region17
    $region16: #{simple_cnn_forward.5} parent=1 // pred_region
      _
    $region17: #{simple_cnn_forward.5} parent=1 // pred_fallthru
      _
    // Predicated region
    $region18: #{simple_cnn_forward.5} parent=1 // pred_check
      _
    $region19: #{simple_cnn_forward.5} parent=1 // pred_check_branch
      %20 = sbr.rel (0) target = $region21
    $region20: #{simple_cnn_forward.5} parent=1 // pred_region
      _
    $region21: #{simple_cnn_forward.5} parent=1 // pred_fallthru
      _
    %v22 = vld [vmem:[%s0] sm:$0xff]
    %v23 = vld [vmem:[%s0 + $0x8] sm:$0xff]
    %v24 = vld [vmem:[%s0 + $0x10] sm:$0xff]
    %v25 = vld [vmem:[%s0 + $0x18] sm:$0xff]
    %v26 = vld [vmem:[%s0 + $0x20] sm:$0xff]
    %v27 = vld [vmem:[%s0 + $0x28] sm:$0xff]
    %v28 = vld [vmem:[%s0 + $0x30] sm:$0x3]
    %36 = vst [vmem:[#allocation1] ss:$4 sm:$0xff] %v22
    %s37 = scalar_lea.vmem [#allocation1], 32
    %38 = vst [vmem:[%s37] ss:$4 sm:$0xff] %v23
    %v39 = vld.sshfl [vmem:[#allocation1] sm:$0xff pattern:$0x73625140]
    %v40 = vld.sshfl [vmem:[#allocation1 + $0x8] sm:$0xff pattern:$0x73625140]
    %v41 = vld.sshfl [vmem:[#allocation1 + $0x10] sm:$0xff pattern:$0x73625140]
    %v42 = vld.sshfl [vmem:[#allocation1 + $0x18] sm:$0xff pattern:$0x73625140]
    %v43 = vld.sshfl [vmem:[#allocation1 + $0x20] sm:$0xff pattern:$0x73625140]
    %v44 = vld.sshfl [vmem:[#allocation1 + $0x28] sm:$0xff pattern:$0x73625140]
    %v45 = vld.sshfl [vmem:[#allocation1 + $0x30] sm:$0xff pattern:$0x73625140]
    %v46 = vld.sshfl [vmem:[#allocation1 + $0x38] sm:$0xff pattern:$0x73625140]
    %47 = vst [vmem:[#allocation1] ss:$4 sm:$0xff] %v24
    %48 = vst [vmem:[%s37] ss:$4 sm:$0xff] %v25
    %v49 = vld.sshfl [vmem:[#allocation1] sm:$0xff pattern:$0x73625140]
    %v50 = vld.sshfl [vmem:[#allocation1 + $0x8] sm:$0xff pattern:$0x73625140]
    %v51 = vld.sshfl [vmem:[#allocation1 + $0x10] sm:$0xff pattern:$0x73625140]
    %v52 = vld.sshfl [vmem:[#allocation1 + $0x18] sm:$0xff pattern:$0x73625140]
    %v53 = vld.sshfl [vmem:[#allocation1 + $0x20] sm:$0xff pattern:$0x73625140]
    %v54 = vld.sshfl [vmem:[#allocation1 + $0x28] sm:$0xff pattern:$0x73625140]
    %v55 = vld.sshfl [vmem:[#allocation1 + $0x30] sm:$0xff pattern:$0x73625140]
    %v56 = vld.sshfl [vmem:[#allocation1 + $0x38] sm:$0xff pattern:$0x73625140]
    %57 = vst [vmem:[#allocation1] ss:$4 sm:$0xff] %v26
    %58 = vst [vmem:[%s37] ss:$4 sm:$0xff] %v27
    %v59 = vld.sshfl [vmem:[#allocation1] sm:$0xff pattern:$0x73625140]
    %v60 = vld.sshfl [vmem:[#allocation1 + $0x8] sm:$0xff pattern:$0x73625140]
    %v61 = vld.sshfl [vmem:[#allocation1 + $0x10] sm:$0xff pattern:$0x73625140]
    %v62 = vld.sshfl [vmem:[#allocation1 + $0x18] sm:$0xff pattern:$0x73625140]
    %v63 = vld.sshfl [vmem:[#allocation1 + $0x20] sm:$0xff pattern:$0x73625140]
    %v64 = vld.sshfl [vmem:[#allocation1 + $0x28] sm:$0xff pattern:$0x73625140]
    %v65 = vld.sshfl [vmem:[#allocation1 + $0x30] sm:$0xff pattern:$0x73625140]
    %v66 = vld.sshfl [vmem:[#allocation1 + $0x38] sm:$0xff pattern:$0x73625140]
    %67 = vst [vmem:[#allocation1] ss:$4 sm:$0xff] %v28
    %v68 = vld.sshfl [vmem:[#allocation1] sm:$0xff pattern:$0x73625140]
    %v94 = vpack.c.bf16 %v39, %v39
    %v95 = vpack.c.bf16 %v40, %v40
    %v96 = vpack.c.bf16 %v41, %v41
    %v97 = vpack.c.bf16 %v42, %v42
    %v98 = vpack.c.bf16 %v43, %v43
    %v99 = vpack.c.bf16 %v44, %v44
    %v100 = vpack.c.bf16 %v45, %v45
    %v101 = vpack.c.bf16 %v46, %v46
    %v102 = vpack.c.bf16 %v49, %v49
    %v103 = vpack.c.bf16 %v50, %v50
    %v104 = vpack.c.bf16 %v51, %v51
    %v105 = vpack.c.bf16 %v52, %v52
    %v106 = vpack.c.bf16 %v53, %v53
    %v107 = vpack.c.bf16 %v54, %v54
    %v108 = vpack.c.bf16 %v55, %v55
    %v109 = vpack.c.bf16 %v56, %v56
    %v110 = vpack.c.bf16 %v59, %v59
    %v111 = vpack.c.bf16 %v60, %v60
    %v112 = vpack.c.bf16 %v61, %v61
    %v113 = vpack.c.bf16 %v62, %v62
    %v114 = vpack.c.bf16 %v63, %v63
    %v115 = vpack.c.bf16 %v64, %v64
    %v116 = vpack.c.bf16 %v65, %v65
    %v117 = vpack.c.bf16 %v66, %v66
    %v118 = vpack.c.bf16 %v68, %v68
    %v119 = vld [vmem:[%s1] sm:$0xf]
    %v120 = vld [vmem:[%s1 + $0x4] sm:$0xf]
    %v121 = vld [vmem:[%s1 + $0x8] sm:$0xf]
    %v122 = vld [vmem:[%s1 + $0xc] sm:$0xf]
    %v123 = vld [vmem:[%s1 + $0x10] sm:$0xf]
    %v124 = vld [vmem:[%s1 + $0x14] sm:$0xf]
    %v125 = vld [vmem:[%s1 + $0x18] sm:$0xf]
    %v126 = vld [vmem:[%s1 + $0x1c] sm:$0xf]
    %v127 = vld [vmem:[%s1 + $0x20] sm:$0xf]
    %v128 = vld [vmem:[%s1 + $0x24] sm:$0xf]
    %v129 = vld [vmem:[%s1 + $0x28] sm:$0xf]
    %v130 = vld [vmem:[%s1 + $0x2c] sm:$0xf]
    %v131 = vld [vmem:[%s1 + $0x30] sm:$0xf]
    %v132 = vld [vmem:[%s1 + $0x34] sm:$0xf]
    %v133 = vld [vmem:[%s1 + $0x38] sm:$0xf]
    %v134 = vld [vmem:[%s1 + $0x3c] sm:$0xf]
    %v135 = vld [vmem:[%s1 + $0x40] sm:$0xf]
    %v136 = vld [vmem:[%s1 + $0x44] sm:$0xf]
    %v137 = vld [vmem:[%s1 + $0x48] sm:$0xf]
    %v138 = vld [vmem:[%s1 + $0x4c] sm:$0xf]
    %v139 = vld [vmem:[%s1 + $0x50] sm:$0xf]
    %v140 = vld [vmem:[%s1 + $0x54] sm:$0xf]
    %v141 = vld [vmem:[%s1 + $0x58] sm:$0xf]
    %v142 = vld [vmem:[%s1 + $0x5c] sm:$0xf]
    %v143 = vld [vmem:[%s1 + $0x60] sm:$0xf]
    %v144 = vld [vmem:[%s1 + $0x64] sm:$0xf]
    %v145 = vld [vmem:[%s1 + $0x68] sm:$0xf]
    %v146 = vld [vmem:[%s1 + $0x6c] sm:$0xf]
    %v147 = vld [vmem:[%s1 + $0x70] sm:$0xf]
    %v148 = vld [vmem:[%s1 + $0x74] sm:$0xf]
    %v149 = vld [vmem:[%s1 + $0x78] sm:$0xf]
    %v150 = vld [vmem:[%s1 + $0x7c] sm:$0xf]
    %v151 = vld [vmem:[%s1 + $0x80] sm:$0xf]
    %v152 = vld [vmem:[%s1 + $0x84] sm:$0xf]
    %v153 = vld [vmem:[%s1 + $0x88] sm:$0xf]
    %v154 = vld [vmem:[%s1 + $0x8c] sm:$0xf]
    %v155 = vld [vmem:[%s1 + $0x90] sm:$0xf]
    %v156 = vld [vmem:[%s1 + $0x94] sm:$0xf]
    %v157 = vld [vmem:[%s1 + $0x98] sm:$0xf]
    %v158 = vld [vmem:[%s1 + $0x9c] sm:$0xf]
    %v159 = vld [vmem:[%s1 + $0xa0] sm:$0xf]
    %v160 = vld [vmem:[%s1 + $0xa4] sm:$0xf]
    %v161 = vld [vmem:[%s1 + $0xa8] sm:$0xf]
    %v162 = vld [vmem:[%s1 + $0xac] sm:$0xf]
    %v163 = vld [vmem:[%s1 + $0xb0] sm:$0xf]
    %v164 = vld [vmem:[%s1 + $0xb4] sm:$0xf]
    %v165 = vld [vmem:[%s1 + $0xb8] sm:$0xf]
    %v166 = vld [vmem:[%s1 + $0xbc] sm:$0xf]
    %v167 = vld [vmem:[%s1 + $0xc0] sm:$0xf]
    %v168 = vld [vmem:[%s1 + $0xc4] sm:$0xf]
    %v169 = vld [vmem:[%s1 + $0xc8] sm:$0xf]
    %v170 = vld [vmem:[%s1 + $0xcc] sm:$0xf]
    %v171 = vld [vmem:[%s1 + $0xd0] sm:$0xf]
    %v172 = vld [vmem:[%s1 + $0xd4] sm:$0xf]
    %v173 = vld [vmem:[%s1 + $0xd8] sm:$0xf]
    %v174 = vld [vmem:[%s1 + $0xdc] sm:$0xf]
    %v175 = vld [vmem:[%s1 + $0xe0] sm:$0xf]
    %v176 = vld [vmem:[%s1 + $0xe4] sm:$0xf]
    %v177 = vld [vmem:[%s1 + $0xe8] sm:$0xf]
    %v178 = vld [vmem:[%s1 + $0xec] sm:$0xf]
    %v179 = vld [vmem:[%s1 + $0xf0] sm:$0xf]
    %v180 = vld [vmem:[%s1 + $0xf4] sm:$0xf]
    %v181 = vld [vmem:[%s1 + $0xf8] sm:$0xf]
    %v182 = vld [vmem:[%s1 + $0xfc] sm:$0xf]
    %v183 = vld [vmem:[%s1 + $0x100] sm:$0xf]
    %v184 = vld [vmem:[%s1 + $0x104] sm:$0xf]
    %v185 = vld [vmem:[%s1 + $0x108] sm:$0xf]
    %v186 = vld [vmem:[%s1 + $0x10c] sm:$0xf]
    %v187 = vld [vmem:[%s1 + $0x110] sm:$0xf]
    %v188 = vld [vmem:[%s1 + $0x114] sm:$0xf]
    %v189 = vld [vmem:[%s1 + $0x118] sm:$0xf]
    %v190 = vld [vmem:[%s1 + $0x11c] sm:$0xf]
    %v191 = vld [vmem:[%s1 + $0x120] sm:$0xf]
    %v192 = vld [vmem:[%s1 + $0x124] sm:$0xf]
    %v193 = vld [vmem:[%s1 + $0x128] sm:$0xf]
    %v194 = vld [vmem:[%s1 + $0x12c] sm:$0xf]
    %v195 = vld [vmem:[%s1 + $0x130] sm:$0xf]
    %v196 = vld [vmem:[%s1 + $0x134] sm:$0xf]
    %v197 = vld [vmem:[%s1 + $0x138] sm:$0xf]
    %v198 = vld [vmem:[%s1 + $0x13c] sm:$0xf]
    %v199 = vld [vmem:[%s1 + $0x140] sm:$0xf]
    %v200 = vld [vmem:[%s1 + $0x144] sm:$0xf]
    %v201 = vld [vmem:[%s1 + $0x148] sm:$0xf]
    %v202 = vld [vmem:[%s1 + $0x14c] sm:$0xf]
    %v203 = vld [vmem:[%s1 + $0x150] sm:$0xf]
    %v204 = vld [vmem:[%s1 + $0x154] sm:$0xf]
    %v205 = vld [vmem:[%s1 + $0x158] sm:$0xf]
    %v206 = vld [vmem:[%s1 + $0x15c] sm:$0xf]
    %v207 = vld [vmem:[%s1 + $0x160] sm:$0xf]
    %v208 = vld [vmem:[%s1 + $0x164] sm:$0xf]
    %v209 = vld [vmem:[%s1 + $0x168] sm:$0xf]
    %v210 = vld [vmem:[%s1 + $0x16c] sm:$0xf]
    %v211 = vld [vmem:[%s1 + $0x170] sm:$0xf]
    %v212 = vld [vmem:[%s1 + $0x174] sm:$0xf]
    %v213 = vld [vmem:[%s1 + $0x178] sm:$0xf]
    %v214 = vld [vmem:[%s1 + $0x17c] sm:$0xf]
    %v215 = vld [vmem:[%s1 + $0x180] sm:$0xf]
    %v216 = vld [vmem:[%s1 + $0x184] sm:$0xf]
    %v217 = vld [vmem:[%s1 + $0x188] sm:$0xf]
    %v218 = vld [vmem:[%s1 + $0x18c] sm:$0xf]
    %v219 = vld [vmem:[%s1 + $0x190] sm:$0xf]
    %v220 = vld [vmem:[%s1 + $0x194] sm:$0xf]
    %v221 = vld [vmem:[%s1 + $0x198] sm:$0xf]
    %v222 = vld [vmem:[%s1 + $0x19c] sm:$0xf]
    %v223 = vld [vmem:[%s1 + $0x1a0] sm:$0xf]
    %v224 = vld [vmem:[%s1 + $0x1a4] sm:$0xf]
    %v225 = vld [vmem:[%s1 + $0x1a8] sm:$0xf]
    %v226 = vld [vmem:[%s1 + $0x1ac] sm:$0xf]
    %v227 = vld [vmem:[%s1 + $0x1b0] sm:$0xf]
    %v228 = vld [vmem:[%s1 + $0x1b4] sm:$0xf]
    %v229 = vld [vmem:[%s1 + $0x1b8] sm:$0xf]
    %v230 = vld [vmem:[%s1 + $0x1bc] sm:$0xf]
    %v231 = vld [vmem:[%s1 + $0x1c0] sm:$0xf]
    %v232 = vld [vmem:[%s1 + $0x1c4] sm:$0xf]
    %v233 = vld [vmem:[%s1 + $0x1c8] sm:$0xf]
    %v234 = vld [vmem:[%s1 + $0x1cc] sm:$0xf]
    %v235 = vld [vmem:[%s1 + $0x1d0] sm:$0xf]
    %v236 = vld [vmem:[%s1 + $0x1d4] sm:$0xf]
    %v237 = vld [vmem:[%s1 + $0x1d8] sm:$0xf]
    %v238 = vld [vmem:[%s1 + $0x1dc] sm:$0xf]
    %v239 = vld [vmem:[%s1 + $0x1e0] sm:$0xf]
    %v240 = vld [vmem:[%s1 + $0x1e4] sm:$0xf]
    %v241 = vld [vmem:[%s1 + $0x1e8] sm:$0xf]
    %v242 = vld [vmem:[%s1 + $0x1ec] sm:$0xf]
    %v243 = vld [vmem:[%s1 + $0x1f0] sm:$0xf]
    %v244 = vld [vmem:[%s1 + $0x1f4] sm:$0xf]
    %v245 = vld [vmem:[%s1 + $0x1f8] sm:$0xf]
    %v246 = vld [vmem:[%s1 + $0x1fc] sm:$0xf]
    %v247 = vld [vmem:[%s1 + $0x200] sm:$0xf]
    %v248 = vld [vmem:[%s1 + $0x204] sm:$0xf]
    %v249 = vld [vmem:[%s1 + $0x208] sm:$0xf]
    %v250 = vld [vmem:[%s1 + $0x20c] sm:$0xf]
    %v251 = vld [vmem:[%s1 + $0x210] sm:$0xf]
    %v252 = vld [vmem:[%s1 + $0x214] sm:$0xf]
    %v253 = vld [vmem:[%s1 + $0x218] sm:$0xf]
    %v254 = vld [vmem:[%s1 + $0x21c] sm:$0xf]
    %v255 = vld [vmem:[%s1 + $0x220] sm:$0xf]
    %v256 = vld [vmem:[%s1 + $0x224] sm:$0xf]
    %v257 = vld [vmem:[%s1 + $0x228] sm:$0xf]
    %v258 = vld [vmem:[%s1 + $0x22c] sm:$0xf]
    %v259 = vld [vmem:[%s1 + $0x230] sm:$0xf]
    %v260 = vld [vmem:[%s1 + $0x234] sm:$0xf]
    %v261 = vld [vmem:[%s1 + $0x238] sm:$0xf]
    %v262 = vld [vmem:[%s1 + $0x23c] sm:$0xf]
    %v263 = vld [vmem:[%s1 + $0x240] sm:$0xf]
    %v264 = vld [vmem:[%s1 + $0x244] sm:$0xf]
    %v265 = vld [vmem:[%s1 + $0x248] sm:$0xf]
    %v266 = vld [vmem:[%s1 + $0x24c] sm:$0xf]
    %v267 = vld [vmem:[%s1 + $0x250] sm:$0xf]
    %v268 = vld [vmem:[%s1 + $0x254] sm:$0xf]
    %v269 = vld [vmem:[%s1 + $0x258] sm:$0xf]
    %v270 = vld [vmem:[%s1 + $0x25c] sm:$0xf]
    %v271 = vld [vmem:[%s1 + $0x260] sm:$0xf]
    %v272 = vld [vmem:[%s1 + $0x264] sm:$0xf]
    %v273 = vld [vmem:[%s1 + $0x268] sm:$0xf]
    %v274 = vld [vmem:[%s1 + $0x26c] sm:$0xf]
    %v275 = vld [vmem:[%s1 + $0x270] sm:$0xf]
    %v276 = vld [vmem:[%s1 + $0x274] sm:$0xf]
    %v277 = vld [vmem:[%s1 + $0x278] sm:$0xf]
    %v278 = vld [vmem:[%s1 + $0x27c] sm:$0xf]
    %v279 = vld [vmem:[%s1 + $0x280] sm:$0xf]
    %v280 = vld [vmem:[%s1 + $0x284] sm:$0xf]
    %v281 = vld [vmem:[%s1 + $0x288] sm:$0xf]
    %v282 = vld [vmem:[%s1 + $0x28c] sm:$0xf]
    %v283 = vld [vmem:[%s1 + $0x290] sm:$0xf]
    %v284 = vld [vmem:[%s1 + $0x294] sm:$0xf]
    %v285 = vld [vmem:[%s1 + $0x298] sm:$0xf]
    %v286 = vld [vmem:[%s1 + $0x29c] sm:$0xf]
    %v287 = vld [vmem:[%s1 + $0x2a0] sm:$0xf]
    %v288 = vld [vmem:[%s1 + $0x2a4] sm:$0xf]
    %v289 = vld [vmem:[%s1 + $0x2a8] sm:$0xf]
    %v290 = vld [vmem:[%s1 + $0x2ac] sm:$0xf]
    %v291 = vld [vmem:[%s1 + $0x2b0] sm:$0xf]
    %v292 = vld [vmem:[%s1 + $0x2b4] sm:$0xf]
    %v293 = vld [vmem:[%s1 + $0x2b8] sm:$0xf]
    %v294 = vld [vmem:[%s1 + $0x2bc] sm:$0xf]
    %v295 = vld [vmem:[%s1 + $0x2c0] sm:$0xf]
    %v296 = vld [vmem:[%s1 + $0x2c4] sm:$0xf]
    %v297 = vld [vmem:[%s1 + $0x2c8] sm:$0xf]
    %v298 = vld [vmem:[%s1 + $0x2cc] sm:$0xf]
    %v299 = vld [vmem:[%s1 + $0x2d0] sm:$0xf]
    %v300 = vld [vmem:[%s1 + $0x2d4] sm:$0xf]
    %v301 = vld [vmem:[%s1 + $0x2d8] sm:$0xf]
    %v302 = vld [vmem:[%s1 + $0x2dc] sm:$0xf]
    %v303 = vld [vmem:[%s1 + $0x2e0] sm:$0xf]
    %v304 = vld [vmem:[%s1 + $0x2e4] sm:$0xf]
    %v305 = vld [vmem:[%s1 + $0x2e8] sm:$0xf]
    %v306 = vld [vmem:[%s1 + $0x2ec] sm:$0xf]
    %v307 = vld [vmem:[%s1 + $0x2f0] sm:$0xf]
    %v308 = vld [vmem:[%s1 + $0x2f4] sm:$0xf]
    %v309 = vld [vmem:[%s1 + $0x2f8] sm:$0xf]
    %v310 = vld [vmem:[%s1 + $0x2fc] sm:$0xf]
    %v311 = vld [vmem:[%s1 + $0x300] sm:$0xf]
    %v312 = vld [vmem:[%s1 + $0x304] sm:$0xf]
    %v313 = vld [vmem:[%s1 + $0x308] sm:$0xf]
    %v314 = vld [vmem:[%s1 + $0x30c] sm:$0xf]
    %v315 = vld [vmem:[%s1 + $0x310] sm:$0xf]
    %v316 = vld [vmem:[%s1 + $0x314] sm:$0xf]
    %v317 = vld [vmem:[%s1 + $0x318] sm:$0xf]
    %v318 = vld [vmem:[%s1 + $0x31c] sm:$0xf]
    %v319 = vld [vmem:[%s1 + $0x320] sm:$0xf]
    %v320 = vld [vmem:[%s1 + $0x324] sm:$0xf]
    %v321 = vld [vmem:[%s1 + $0x328] sm:$0xf]
    %v322 = vld [vmem:[%s1 + $0x32c] sm:$0xf]
    %v323 = vld [vmem:[%s1 + $0x330] sm:$0xf]
    %v324 = vld [vmem:[%s1 + $0x334] sm:$0xf]
    %v325 = vld [vmem:[%s1 + $0x338] sm:$0xf]
    %v326 = vld [vmem:[%s1 + $0x33c] sm:$0xf]
    %v327 = vld [vmem:[%s1 + $0x340] sm:$0xf]
    %v328 = vld [vmem:[%s1 + $0x344] sm:$0xf]
    %v329 = vld [vmem:[%s1 + $0x348] sm:$0xf]
    %v330 = vld [vmem:[%s1 + $0x34c] sm:$0xf]
    %v331 = vld [vmem:[%s1 + $0x350] sm:$0xf]
    %v332 = vld [vmem:[%s1 + $0x354] sm:$0xf]
    %v333 = vld [vmem:[%s1 + $0x358] sm:$0xf]
    %v334 = vld [vmem:[%s1 + $0x35c] sm:$0xf]
    %v335 = vld [vmem:[%s1 + $0x360] sm:$0xf]
    %v336 = vld [vmem:[%s1 + $0x364] sm:$0xf]
    %v337 = vld [vmem:[%s1 + $0x368] sm:$0xf]
    %v338 = vld [vmem:[%s1 + $0x36c] sm:$0xf]
    %v339 = vld [vmem:[%s1 + $0x370] sm:$0xf]
    %v340 = vld [vmem:[%s1 + $0x374] sm:$0xf]
    %v341 = vld [vmem:[%s1 + $0x378] sm:$0xf]
    %v342 = vld [vmem:[%s1 + $0x37c] sm:$0xf]
    %v343 = vld [vmem:[%s1 + $0x380] sm:$0xf]
    %v344 = vld [vmem:[%s1 + $0x384] sm:$0xf]
    %v345 = vld [vmem:[%s1 + $0x388] sm:$0xf]
    %v346 = vld [vmem:[%s1 + $0x38c] sm:$0xf]
    %v347 = vld [vmem:[%s1 + $0x390] sm:$0xf]
    %v348 = vld [vmem:[%s1 + $0x394] sm:$0xf]
    %v349 = vld [vmem:[%s1 + $0x398] sm:$0xf]
    %v350 = vld [vmem:[%s1 + $0x39c] sm:$0xf]
    %v351 = vld [vmem:[%s1 + $0x3a0] sm:$0xf]
    %v352 = vld [vmem:[%s1 + $0x3a4] sm:$0xf]
    %v353 = vld [vmem:[%s1 + $0x3a8] sm:$0xf]
    %v354 = vld [vmem:[%s1 + $0x3ac] sm:$0xf]
    %v355 = vld [vmem:[%s1 + $0x3b0] sm:$0xf]
    %v356 = vld [vmem:[%s1 + $0x3b4] sm:$0xf]
    %v357 = vld [vmem:[%s1 + $0x3b8] sm:$0xf]
    %v358 = vld [vmem:[%s1 + $0x3bc] sm:$0xf]
    %v359 = vld [vmem:[%s1 + $0x3c0] sm:$0xf]
    %v360 = vld [vmem:[%s1 + $0x3c4] sm:$0xf]
    %v361 = vld [vmem:[%s1 + $0x3c8] sm:$0xf]
    %v362 = vld [vmem:[%s1 + $0x3cc] sm:$0xf]
    %v363 = vld [vmem:[%s1 + $0x3d0] sm:$0xf]
    %v364 = vld [vmem:[%s1 + $0x3d4] sm:$0xf]
    %v365 = vld [vmem:[%s1 + $0x3d8] sm:$0xf]
    %v366 = vld [vmem:[%s1 + $0x3dc] sm:$0xf]
    %v367 = vld [vmem:[%s1 + $0x3e0] sm:$0xf]
    %v368 = vld [vmem:[%s1 + $0x3e4] sm:$0xf]
    %v369 = vld [vmem:[%s1 + $0x3e8] sm:$0xf]
    %v370 = vld [vmem:[%s1 + $0x3ec] sm:$0xf]
    %v371 = vld [vmem:[%s1 + $0x3f0] sm:$0xf]
    %v372 = vld [vmem:[%s1 + $0x3f4] sm:$0xf]
    %v373 = vld [vmem:[%s1 + $0x3f8] sm:$0xf]
    %v374 = vld [vmem:[%s1 + $0x3fc] sm:$0xf]
    %v375 = vld [vmem:[%s1 + $0x400] sm:$0xf]
    %v376 = vld [vmem:[%s1 + $0x404] sm:$0xf]
    %v377 = vld [vmem:[%s1 + $0x408] sm:$0xf]
    %v378 = vld [vmem:[%s1 + $0x40c] sm:$0xf]
    %v379 = vld [vmem:[%s1 + $0x410] sm:$0xf]
    %v380 = vld [vmem:[%s1 + $0x414] sm:$0xf]
    %v381 = vld [vmem:[%s1 + $0x418] sm:$0xf]
    %v382 = vld [vmem:[%s1 + $0x41c] sm:$0xf]
    %v383 = vld [vmem:[%s1 + $0x420] sm:$0xf]
    %v384 = vld [vmem:[%s1 + $0x424] sm:$0xf]
    %v385 = vld [vmem:[%s1 + $0x428] sm:$0xf]
    %v386 = vld [vmem:[%s1 + $0x42c] sm:$0xf]
    %v387 = vld [vmem:[%s1 + $0x430] sm:$0xf]
    %v388 = vld [vmem:[%s1 + $0x434] sm:$0xf]
    %v389 = vld [vmem:[%s1 + $0x438] sm:$0xf]
    %v390 = vld [vmem:[%s1 + $0x43c] sm:$0xf]
    %v391 = vld [vmem:[%s1 + $0x440] sm:$0xf]
    %v392 = vld [vmem:[%s1 + $0x444] sm:$0xf]
    %v393 = vld [vmem:[%s1 + $0x448] sm:$0xf]
    %v394 = vld [vmem:[%s1 + $0x44c] sm:$0xf]
    %v395 = vld [vmem:[%s1 + $0x450] sm:$0xf]
    %v396 = vld [vmem:[%s1 + $0x454] sm:$0xf]
    %v397 = vld [vmem:[%s1 + $0x458] sm:$0xf]
    %v398 = vld [vmem:[%s1 + $0x45c] sm:$0xf]
    %v399 = vld [vmem:[%s1 + $0x460] sm:$0xf]
    %v400 = vld [vmem:[%s1 + $0x464] sm:$0xf]
    %v401 = vld [vmem:[%s1 + $0x468] sm:$0xf]
    %v402 = vld [vmem:[%s1 + $0x46c] sm:$0xf]
    %v403 = vld [vmem:[%s1 + $0x470] sm:$0xf]
    %v404 = vld [vmem:[%s1 + $0x474] sm:$0xf]
    %v405 = vld [vmem:[%s1 + $0x478] sm:$0xf]
    %v406 = vld [vmem:[%s1 + $0x47c] sm:$0xf]
    %v407 = vld [vmem:[%s1 + $0x480] sm:$0xf]
    %v408 = vld [vmem:[%s1 + $0x484] sm:$0xf]
    %v409 = vld [vmem:[%s1 + $0x488] sm:$0xf]
    %v410 = vld [vmem:[%s1 + $0x48c] sm:$0xf]
    %v411 = vld [vmem:[%s1 + $0x490] sm:$0xf]
    %v412 = vld [vmem:[%s1 + $0x494] sm:$0xf]
    %v413 = vld [vmem:[%s1 + $0x498] sm:$0xf]
    %v414 = vld [vmem:[%s1 + $0x49c] sm:$0xf]
    %v415 = vld [vmem:[%s1 + $0x4a0] sm:$0xf]
    %v416 = vld [vmem:[%s1 + $0x4a4] sm:$0xf]
    %v417 = vld [vmem:[%s1 + $0x4a8] sm:$0xf]
    %v418 = vld [vmem:[%s1 + $0x4ac] sm:$0xf]
    %v419 = vld [vmem:[%s1 + $0x4b0] sm:$0xf]
    %v420 = vld [vmem:[%s1 + $0x4b4] sm:$0xf]
    %v421 = vld [vmem:[%s1 + $0x4b8] sm:$0xf]
    %v422 = vld [vmem:[%s1 + $0x4bc] sm:$0xf]
    %v423 = vld [vmem:[%s1 + $0x4c0] sm:$0xf]
    %v424 = vld [vmem:[%s1 + $0x4c4] sm:$0xf]
    %v425 = vld [vmem:[%s1 + $0x4c8] sm:$0xf]
    %v426 = vld [vmem:[%s1 + $0x4cc] sm:$0xf]
    %v427 = vld [vmem:[%s1 + $0x4d0] sm:$0xf]
    %v428 = vld [vmem:[%s1 + $0x4d4] sm:$0xf]
    %v429 = vld [vmem:[%s1 + $0x4d8] sm:$0xf]
    %v430 = vld [vmem:[%s1 + $0x4dc] sm:$0xf]
    %v431 = vld [vmem:[%s1 + $0x4e0] sm:$0xf]
    %v432 = vld [vmem:[%s1 + $0x4e4] sm:$0xf]
    %v433 = vld [vmem:[%s1 + $0x4e8] sm:$0xf]
    %v434 = vld [vmem:[%s1 + $0x4ec] sm:$0xf]
    %v435 = vld [vmem:[%s1 + $0x4f0] sm:$0xf]
    %v436 = vld [vmem:[%s1 + $0x4f4] sm:$0xf]
    %v437 = vld [vmem:[%s1 + $0x4f8] sm:$0xf]
    %v438 = vld [vmem:[%s1 + $0x4fc] sm:$0xf]
    %v439 = vld [vmem:[%s1 + $0x500] sm:$0xf]
    %v440 = vld [vmem:[%s1 + $0x504] sm:$0xf]
    %v441 = vld [vmem:[%s1 + $0x508] sm:$0xf]
    %v442 = vld [vmem:[%s1 + $0x50c] sm:$0xf]
    %v443 = vld [vmem:[%s1 + $0x510] sm:$0xf]
    %v444 = vld [vmem:[%s1 + $0x514] sm:$0xf]
    %v445 = vld [vmem:[%s1 + $0x518] sm:$0xf]
    %v446 = vld [vmem:[%s1 + $0x51c] sm:$0xf]
    %v447 = vld [vmem:[%s1 + $0x520] sm:$0xf]
    %v448 = vld [vmem:[%s1 + $0x524] sm:$0xf]
    %v449 = vld [vmem:[%s1 + $0x528] sm:$0xf]
    %v450 = vld [vmem:[%s1 + $0x52c] sm:$0xf]
    %v451 = vld [vmem:[%s1 + $0x530] sm:$0xf]
    %v452 = vld [vmem:[%s1 + $0x534] sm:$0xf]
    %v453 = vld [vmem:[%s1 + $0x538] sm:$0xf]
    %v454 = vld [vmem:[%s1 + $0x53c] sm:$0xf]
    %v455 = vld [vmem:[%s1 + $0x540] sm:$0xf]
    %v456 = vld [vmem:[%s1 + $0x544] sm:$0xf]
    %v457 = vld [vmem:[%s1 + $0x548] sm:$0xf]
    %v458 = vld [vmem:[%s1 + $0x54c] sm:$0xf]
    %v459 = vld [vmem:[%s1 + $0x550] sm:$0xf]
    %v460 = vld [vmem:[%s1 + $0x554] sm:$0xf]
    %v461 = vld [vmem:[%s1 + $0x558] sm:$0xf]
    %v462 = vld [vmem:[%s1 + $0x55c] sm:$0xf]
    %v463 = vld [vmem:[%s1 + $0x560] sm:$0xf]
    %v464 = vld [vmem:[%s1 + $0x564] sm:$0xf]
    %v465 = vld [vmem:[%s1 + $0x568] sm:$0xf]
    %v466 = vld [vmem:[%s1 + $0x56c] sm:$0xf]
    %v467 = vld [vmem:[%s1 + $0x570] sm:$0xf]
    %v468 = vld [vmem:[%s1 + $0x574] sm:$0xf]
    %v469 = vld [vmem:[%s1 + $0x578] sm:$0xf]
    %v470 = vld [vmem:[%s1 + $0x57c] sm:$0xf]
    %v471 = vld [vmem:[%s1 + $0x580] sm:$0xf]
    %v472 = vld [vmem:[%s1 + $0x584] sm:$0xf]
    %v473 = vld [vmem:[%s1 + $0x588] sm:$0xf]
    %v474 = vld [vmem:[%s1 + $0x58c] sm:$0xf]
    %v475 = vld [vmem:[%s1 + $0x590] sm:$0xf]
    %v476 = vld [vmem:[%s1 + $0x594] sm:$0xf]
    %v477 = vld [vmem:[%s1 + $0x598] sm:$0xf]
    %v478 = vld [vmem:[%s1 + $0x59c] sm:$0xf]
    %v479 = vld [vmem:[%s1 + $0x5a0] sm:$0xf]
    %v480 = vld [vmem:[%s1 + $0x5a4] sm:$0xf]
    %v481 = vld [vmem:[%s1 + $0x5a8] sm:$0xf]
    %v482 = vld [vmem:[%s1 + $0x5ac] sm:$0xf]
    %v483 = vld [vmem:[%s1 + $0x5b0] sm:$0xf]
    %v484 = vld [vmem:[%s1 + $0x5b4] sm:$0xf]
    %v485 = vld [vmem:[%s1 + $0x5b8] sm:$0xf]
    %v486 = vld [vmem:[%s1 + $0x5bc] sm:$0xf]
    %v487 = vld [vmem:[%s1 + $0x5c0] sm:$0xf]
    %v488 = vld [vmem:[%s1 + $0x5c4] sm:$0xf]
    %v489 = vld [vmem:[%s1 + $0x5c8] sm:$0xf]
    %v490 = vld [vmem:[%s1 + $0x5cc] sm:$0xf]
    %v491 = vld [vmem:[%s1 + $0x5d0] sm:$0xf]
    %v492 = vld [vmem:[%s1 + $0x5d4] sm:$0xf]
    %v493 = vld [vmem:[%s1 + $0x5d8] sm:$0xf]
    %v494 = vld [vmem:[%s1 + $0x5dc] sm:$0xf]
    %v495 = vld [vmem:[%s1 + $0x5e0] sm:$0xf]
    %v496 = vld [vmem:[%s1 + $0x5e4] sm:$0xf]
    %v497 = vld [vmem:[%s1 + $0x5e8] sm:$0xf]
    %v498 = vld [vmem:[%s1 + $0x5ec] sm:$0xf]
    %v499 = vld [vmem:[%s1 + $0x5f0] sm:$0xf]
    %v500 = vld [vmem:[%s1 + $0x5f4] sm:$0xf]
    %v501 = vld [vmem:[%s1 + $0x5f8] sm:$0xf]
    %v502 = vld [vmem:[%s1 + $0x5fc] sm:$0xf]
    %v503 = vld [vmem:[%s1 + $0x600] sm:$0xf]
    %v504 = vld [vmem:[%s1 + $0x604] sm:$0xf]
    %v505 = vld [vmem:[%s1 + $0x608] sm:$0xf]
    %v506 = vld [vmem:[%s1 + $0x60c] sm:$0xf]
    %v507 = vld [vmem:[%s1 + $0x610] sm:$0xf]
    %v508 = vld [vmem:[%s1 + $0x614] sm:$0xf]
    %v509 = vld [vmem:[%s1 + $0x618] sm:$0xf]
    %v510 = vld [vmem:[%s1 + $0x61c] sm:$0xf]
    %v511 = vld [vmem:[%s2] sm:$0x1]
    %v513 = vperm.slane %v511, 0
    %v907 = vunpack.c.l.b16 %v119
    %v908 = vunpack.c.l.b16 %v120
    %v909 = vunpack.c.l.b16 %v121
    %v910 = vunpack.c.l.b16 %v122
    %v911 = vunpack.c.l.b16 %v123
    %v912 = vunpack.c.l.b16 %v124
    %v913 = vunpack.c.l.b16 %v125
    %v914 = vunpack.c.l.b16 %v126
    %v915 = vunpack.c.l.b16 %v127
    %v916 = vunpack.c.l.b16 %v128
    %v917 = vunpack.c.l.b16 %v129
    %v918 = vunpack.c.l.b16 %v130
    %v919 = vunpack.c.l.b16 %v131
    %v920 = vunpack.c.l.b16 %v132
    %v921 = vunpack.c.l.b16 %v133
    %v922 = vunpack.c.l.b16 %v134
    %v923 = vunpack.c.l.b16 %v135
    %v924 = vunpack.c.l.b16 %v136
    %v925 = vunpack.c.l.b16 %v137
    %v926 = vunpack.c.l.b16 %v138
    %v927 = vunpack.c.l.b16 %v139
    %v928 = vunpack.c.l.b16 %v140
    %v929 = vunpack.c.l.b16 %v141
    %v930 = vunpack.c.l.b16 %v142
    %v931 = vunpack.c.l.b16 %v143
    %v932 = vunpack.c.l.b16 %v144
    %v933 = vunpack.c.l.b16 %v145
    %v934 = vunpack.c.l.b16 %v146
    %v935 = vunpack.c.l.b16 %v147
    %v936 = vunpack.c.l.b16 %v148
    %v937 = vunpack.c.l.b16 %v149
    %v938 = vunpack.c.l.b16 %v150
    %v939 = vunpack.c.l.b16 %v151
    %v940 = vunpack.c.l.b16 %v152
    %v941 = vunpack.c.l.b16 %v153
    %v942 = vunpack.c.l.b16 %v154
    %v943 = vunpack.c.l.b16 %v155
    %v944 = vunpack.c.l.b16 %v156
    %v945 = vunpack.c.l.b16 %v157
    %v946 = vunpack.c.l.b16 %v158
    %v947 = vunpack.c.l.b16 %v159
    %v948 = vunpack.c.l.b16 %v160
    %v949 = vunpack.c.l.b16 %v161
    %v950 = vunpack.c.l.b16 %v162
    %v951 = vunpack.c.l.b16 %v163
    %v952 = vunpack.c.l.b16 %v164
    %v953 = vunpack.c.l.b16 %v165
    %v954 = vunpack.c.l.b16 %v166
    %v955 = vunpack.c.l.b16 %v167
    %v956 = vunpack.c.l.b16 %v168
    %v957 = vunpack.c.l.b16 %v169
    %v958 = vunpack.c.l.b16 %v170
    %v959 = vunpack.c.l.b16 %v171
    %v960 = vunpack.c.l.b16 %v172
    %v961 = vunpack.c.l.b16 %v173
    %v962 = vunpack.c.l.b16 %v174
    %v963 = vunpack.c.l.b16 %v175
    %v964 = vunpack.c.l.b16 %v176
    %v965 = vunpack.c.l.b16 %v177
    %v966 = vunpack.c.l.b16 %v178
    %v967 = vunpack.c.l.b16 %v179
    %v968 = vunpack.c.l.b16 %v180
    %v969 = vunpack.c.l.b16 %v181
    %v970 = vunpack.c.l.b16 %v182
    %v971 = vunpack.c.l.b16 %v183
    %v972 = vunpack.c.l.b16 %v184
    %v973 = vunpack.c.l.b16 %v185
    %v974 = vunpack.c.l.b16 %v186
    %v975 = vunpack.c.l.b16 %v187
    %v976 = vunpack.c.l.b16 %v188
    %v977 = vunpack.c.l.b16 %v189
    %v978 = vunpack.c.l.b16 %v190
    %v979 = vunpack.c.l.b16 %v191
    %v980 = vunpack.c.l.b16 %v192
    %v981 = vunpack.c.l.b16 %v193
    %v982 = vunpack.c.l.b16 %v194
    %v983 = vunpack.c.l.b16 %v195
    %v984 = vunpack.c.l.b16 %v196
    %v985 = vunpack.c.l.b16 %v197
    %v986 = vunpack.c.l.b16 %v198
    %v987 = vunpack.c.l.b16 %v199
    %v988 = vunpack.c.l.b16 %v200
    %v989 = vunpack.c.l.b16 %v201
    %v990 = vunpack.c.l.b16 %v202
    %v991 = vunpack.c.l.b16 %v203
    %v992 = vunpack.c.l.b16 %v204
    %v993 = vunpack.c.l.b16 %v205
    %v994 = vunpack.c.l.b16 %v206
    %v995 = vunpack.c.l.b16 %v207
    %v996 = vunpack.c.l.b16 %v208
    %v997 = vunpack.c.l.b16 %v209
    %v998 = vunpack.c.l.b16 %v210
    %v999 = vunpack.c.l.b16 %v211
    %v1000 = vunpack.c.l.b16 %v212
    %v1001 = vunpack.c.l.b16 %v213
    %v1002 = vunpack.c.l.b16 %v214
    %v1003 = vunpack.c.l.b16 %v215
    %v1004 = vunpack.c.l.b16 %v216
    %v1005 = vunpack.c.l.b16 %v217
    %v1006 = vunpack.c.l.b16 %v218
    %v1007 = vunpack.c.l.b16 %v219
    %v1008 = vunpack.c.l.b16 %v220
    %v1009 = vunpack.c.l.b16 %v221
    %v1010 = vunpack.c.l.b16 %v222
    %v1011 = vunpack.c.l.b16 %v223
    %v1012 = vunpack.c.l.b16 %v224
    %v1013 = vunpack.c.l.b16 %v225
    %v1014 = vunpack.c.l.b16 %v226
    %v1015 = vunpack.c.l.b16 %v227
    %v1016 = vunpack.c.l.b16 %v228
    %v1017 = vunpack.c.l.b16 %v229
    %v1018 = vunpack.c.l.b16 %v230
    %v1019 = vunpack.c.l.b16 %v231
    %v1020 = vunpack.c.l.b16 %v232
    %v1021 = vunpack.c.l.b16 %v233
    %v1022 = vunpack.c.l.b16 %v234
    %v1023 = vunpack.c.l.b16 %v235
    %v1024 = vunpack.c.l.b16 %v236
    %v1025 = vunpack.c.l.b16 %v237
    %v1026 = vunpack.c.l.b16 %v238
    %v1027 = vunpack.c.l.b16 %v239
    %v1028 = vunpack.c.l.b16 %v240
    %v1029 = vunpack.c.l.b16 %v241
    %v1030 = vunpack.c.l.b16 %v242
    %v1031 = vunpack.c.l.b16 %v243
    %v1032 = vunpack.c.l.b16 %v244
    %v1033 = vunpack.c.l.b16 %v245
    %v1034 = vunpack.c.l.b16 %v246
    %v1035 = vunpack.c.l.b16 %v247
    %v1036 = vunpack.c.l.b16 %v248
    %v1037 = vunpack.c.l.b16 %v249
    %v1038 = vunpack.c.l.b16 %v250
    %v1039 = vunpack.c.l.b16 %v251
    %v1040 = vunpack.c.l.b16 %v252
    %v1041 = vunpack.c.l.b16 %v253
    %v1042 = vunpack.c.l.b16 %v254
    %v1043 = vunpack.c.l.b16 %v255
    %v1044 = vunpack.c.l.b16 %v256
    %v1045 = vunpack.c.l.b16 %v257
    %v1046 = vunpack.c.l.b16 %v258
    %v1047 = vunpack.c.l.b16 %v259
    %v1048 = vunpack.c.l.b16 %v260
    %v1049 = vunpack.c.l.b16 %v261
    %v1050 = vunpack.c.l.b16 %v262
    %v1051 = vunpack.c.l.b16 %v263
    %v1052 = vunpack.c.l.b16 %v264
    %v1053 = vunpack.c.l.b16 %v265
    %v1054 = vunpack.c.l.b16 %v266
    %v1055 = vunpack.c.l.b16 %v267
    %v1056 = vunpack.c.l.b16 %v268
    %v1057 = vunpack.c.l.b16 %v269
    %v1058 = vunpack.c.l.b16 %v270
    %v1059 = vunpack.c.l.b16 %v271
    %v1060 = vunpack.c.l.b16 %v272
    %v1061 = vunpack.c.l.b16 %v273
    %v1062 = vunpack.c.l.b16 %v274
    %v1063 = vunpack.c.l.b16 %v275
    %v1064 = vunpack.c.l.b16 %v276
    %v1065 = vunpack.c.l.b16 %v277
    %v1066 = vunpack.c.l.b16 %v278
    %v1067 = vunpack.c.l.b16 %v279
    %v1068 = vunpack.c.l.b16 %v280
    %v1069 = vunpack.c.l.b16 %v281
    %v1070 = vunpack.c.l.b16 %v282
    %v1071 = vunpack.c.l.b16 %v283
    %v1072 = vunpack.c.l.b16 %v284
    %v1073 = vunpack.c.l.b16 %v285
    %v1074 = vunpack.c.l.b16 %v286
    %v1075 = vunpack.c.l.b16 %v287
    %v1076 = vunpack.c.l.b16 %v288
    %v1077 = vunpack.c.l.b16 %v289
    %v1078 = vunpack.c.l.b16 %v290
    %v1079 = vunpack.c.l.b16 %v291
    %v1080 = vunpack.c.l.b16 %v292
    %v1081 = vunpack.c.l.b16 %v293
    %v1082 = vunpack.c.l.b16 %v294
    %v1083 = vunpack.c.l.b16 %v295
    %v1084 = vunpack.c.l.b16 %v296
    %v1085 = vunpack.c.l.b16 %v297
    %v1086 = vunpack.c.l.b16 %v298
    %v1087 = vunpack.c.l.b16 %v299
    %v1088 = vunpack.c.l.b16 %v300
    %v1089 = vunpack.c.l.b16 %v301
    %v1090 = vunpack.c.l.b16 %v302
    %v1091 = vunpack.c.l.b16 %v303
    %v1092 = vunpack.c.l.b16 %v304
    %v1093 = vunpack.c.l.b16 %v305
    %v1094 = vunpack.c.l.b16 %v306
    %v1095 = vunpack.c.l.b16 %v307
    %v1096 = vunpack.c.l.b16 %v308
    %v1097 = vunpack.c.l.b16 %v309
    %v1098 = vunpack.c.l.b16 %v310
    %v1099 = vunpack.c.l.b16 %v311
    %v1100 = vunpack.c.l.b16 %v312
    %v1101 = vunpack.c.l.b16 %v313
    %v1102 = vunpack.c.l.b16 %v314
    %v1103 = vunpack.c.l.b16 %v315
    %v1104 = vunpack.c.l.b16 %v316
    %v1105 = vunpack.c.l.b16 %v317
    %v1106 = vunpack.c.l.b16 %v318
    %v1107 = vunpack.c.l.b16 %v319
    %v1108 = vunpack.c.l.b16 %v320
    %v1109 = vunpack.c.l.b16 %v321
    %v1110 = vunpack.c.l.b16 %v322
    %v1111 = vunpack.c.l.b16 %v323
    %v1112 = vunpack.c.l.b16 %v324
    %v1113 = vunpack.c.l.b16 %v325
    %v1114 = vunpack.c.l.b16 %v326
    %v1115 = vunpack.c.l.b16 %v327
    %v1116 = vunpack.c.l.b16 %v328
    %v1117 = vunpack.c.l.b16 %v329
    %v1118 = vunpack.c.l.b16 %v330
    %v1119 = vunpack.c.l.b16 %v331
    %v1120 = vunpack.c.l.b16 %v332
    %v1121 = vunpack.c.l.b16 %v333
    %v1122 = vunpack.c.l.b16 %v334
    %v1123 = vunpack.c.l.b16 %v335
    %v1124 = vunpack.c.l.b16 %v336
    %v1125 = vunpack.c.l.b16 %v337
    %v1126 = vunpack.c.l.b16 %v338
    %v1127 = vunpack.c.l.b16 %v339
    %v1128 = vunpack.c.l.b16 %v340
    %v1129 = vunpack.c.l.b16 %v341
    %v1130 = vunpack.c.l.b16 %v342
    %v1131 = vunpack.c.l.b16 %v343
    %v1132 = vunpack.c.l.b16 %v344
    %v1133 = vunpack.c.l.b16 %v345
    %v1134 = vunpack.c.l.b16 %v346
    %v1135 = vunpack.c.l.b16 %v347
    %v1136 = vunpack.c.l.b16 %v348
    %v1137 = vunpack.c.l.b16 %v349
    %v1138 = vunpack.c.l.b16 %v350
    %v1139 = vunpack.c.l.b16 %v351
    %v1140 = vunpack.c.l.b16 %v352
    %v1141 = vunpack.c.l.b16 %v353
    %v1142 = vunpack.c.l.b16 %v354
    %v1143 = vunpack.c.l.b16 %v355
    %v1144 = vunpack.c.l.b16 %v356
    %v1145 = vunpack.c.l.b16 %v357
    %v1146 = vunpack.c.l.b16 %v358
    %v1147 = vunpack.c.l.b16 %v359
    %v1148 = vunpack.c.l.b16 %v360
    %v1149 = vunpack.c.l.b16 %v361
    %v1150 = vunpack.c.l.b16 %v362
    %v1151 = vunpack.c.l.b16 %v363
    %v1152 = vunpack.c.l.b16 %v364
    %v1153 = vunpack.c.l.b16 %v365
    %v1154 = vunpack.c.l.b16 %v366
    %v1155 = vunpack.c.l.b16 %v367
    %v1156 = vunpack.c.l.b16 %v368
    %v1157 = vunpack.c.l.b16 %v369
    %v1158 = vunpack.c.l.b16 %v370
    %v1159 = vunpack.c.l.b16 %v371
    %v1160 = vunpack.c.l.b16 %v372
    %v1161 = vunpack.c.l.b16 %v373
    %v1162 = vunpack.c.l.b16 %v374
    %v1163 = vunpack.c.l.b16 %v375
    %v1164 = vunpack.c.l.b16 %v376
    %v1165 = vunpack.c.l.b16 %v377
    %v1166 = vunpack.c.l.b16 %v378
    %v1167 = vunpack.c.l.b16 %v379
    %v1168 = vunpack.c.l.b16 %v380
    %v1169 = vunpack.c.l.b16 %v381
    %v1170 = vunpack.c.l.b16 %v382
    %v1171 = vunpack.c.l.b16 %v383
    %v1172 = vunpack.c.l.b16 %v384
    %v1173 = vunpack.c.l.b16 %v385
    %v1174 = vunpack.c.l.b16 %v386
    %v1175 = vunpack.c.l.b16 %v387
    %v1176 = vunpack.c.l.b16 %v388
    %v1177 = vunpack.c.l.b16 %v389
    %v1178 = vunpack.c.l.b16 %v390
    %v1179 = vunpack.c.l.b16 %v391
    %v1180 = vunpack.c.l.b16 %v392
    %v1181 = vunpack.c.l.b16 %v393
    %v1182 = vunpack.c.l.b16 %v394
    %v1183 = vunpack.c.l.b16 %v395
    %v1184 = vunpack.c.l.b16 %v396
    %v1185 = vunpack.c.l.b16 %v397
    %v1186 = vunpack.c.l.b16 %v398
    %v1187 = vunpack.c.l.b16 %v399
    %v1188 = vunpack.c.l.b16 %v400
    %v1189 = vunpack.c.l.b16 %v401
    %v1190 = vunpack.c.l.b16 %v402
    %v1191 = vunpack.c.l.b16 %v403
    %v1192 = vunpack.c.l.b16 %v404
    %v1193 = vunpack.c.l.b16 %v405
    %v1194 = vunpack.c.l.b16 %v406
    %v1195 = vunpack.c.l.b16 %v407
    %v1196 = vunpack.c.l.b16 %v408
    %v1197 = vunpack.c.l.b16 %v409
    %v1198 = vunpack.c.l.b16 %v410
    %v1199 = vunpack.c.l.b16 %v411
    %v1200 = vunpack.c.l.b16 %v412
    %v1201 = vunpack.c.l.b16 %v413
    %v1202 = vunpack.c.l.b16 %v414
    %v1203 = vunpack.c.l.b16 %v415
    %v1204 = vunpack.c.l.b16 %v416
    %v1205 = vunpack.c.l.b16 %v417
    %v1206 = vunpack.c.l.b16 %v418
    %v1207 = vunpack.c.l.b16 %v419
    %v1208 = vunpack.c.l.b16 %v420
    %v1209 = vunpack.c.l.b16 %v421
    %v1210 = vunpack.c.l.b16 %v422
    %v1211 = vunpack.c.l.b16 %v423
    %v1212 = vunpack.c.l.b16 %v424
    %v1213 = vunpack.c.l.b16 %v425
    %v1214 = vunpack.c.l.b16 %v426
    %v1215 = vunpack.c.l.b16 %v427
    %v1216 = vunpack.c.l.b16 %v428
    %v1217 = vunpack.c.l.b16 %v429
    %v1218 = vunpack.c.l.b16 %v430
    %v1219 = vunpack.c.l.b16 %v431
    %v1220 = vunpack.c.l.b16 %v432
    %v1221 = vunpack.c.l.b16 %v433
    %v1222 = vunpack.c.l.b16 %v434
    %v1223 = vunpack.c.l.b16 %v435
    %v1224 = vunpack.c.l.b16 %v436
    %v1225 = vunpack.c.l.b16 %v437
    %v1226 = vunpack.c.l.b16 %v438
    %v1227 = vunpack.c.l.b16 %v439
    %v1228 = vunpack.c.l.b16 %v440
    %v1229 = vunpack.c.l.b16 %v441
    %v1230 = vunpack.c.l.b16 %v442
    %v1231 = vunpack.c.l.b16 %v443
    %v1232 = vunpack.c.l.b16 %v444
    %v1233 = vunpack.c.l.b16 %v445
    %v1234 = vunpack.c.l.b16 %v446
    %v1235 = vunpack.c.l.b16 %v447
    %v1236 = vunpack.c.l.b16 %v448
    %v1237 = vunpack.c.l.b16 %v449
    %v1238 = vunpack.c.l.b16 %v450
    %v1239 = vunpack.c.l.b16 %v451
    %v1240 = vunpack.c.l.b16 %v452
    %v1241 = vunpack.c.l.b16 %v453
    %v1242 = vunpack.c.l.b16 %v454
    %v1243 = vunpack.c.l.b16 %v455
    %v1244 = vunpack.c.l.b16 %v456
    %v1245 = vunpack.c.l.b16 %v457
    %v1246 = vunpack.c.l.b16 %v458
    %v1247 = vunpack.c.l.b16 %v459
    %v1248 = vunpack.c.l.b16 %v460
    %v1249 = vunpack.c.l.b16 %v461
    %v1250 = vunpack.c.l.b16 %v462
    %v1251 = vunpack.c.l.b16 %v463
    %v1252 = vunpack.c.l.b16 %v464
    %v1253 = vunpack.c.l.b16 %v465
    %v1254 = vunpack.c.l.b16 %v466
    %v1255 = vunpack.c.l.b16 %v467
    %v1256 = vunpack.c.l.b16 %v468
    %v1257 = vunpack.c.l.b16 %v469
    %v1258 = vunpack.c.l.b16 %v470
    %v1259 = vunpack.c.l.b16 %v471
    %v1260 = vunpack.c.l.b16 %v472
    %v1261 = vunpack.c.l.b16 %v473
    %v1262 = vunpack.c.l.b16 %v474
    %v1263 = vunpack.c.l.b16 %v475
    %v1264 = vunpack.c.l.b16 %v476
    %v1265 = vunpack.c.l.b16 %v477
    %v1266 = vunpack.c.l.b16 %v478
    %v1267 = vunpack.c.l.b16 %v479
    %v1268 = vunpack.c.l.b16 %v480
    %v1269 = vunpack.c.l.b16 %v481
    %v1270 = vunpack.c.l.b16 %v482
    %v1271 = vunpack.c.l.b16 %v483
    %v1272 = vunpack.c.l.b16 %v484
    %v1273 = vunpack.c.l.b16 %v485
    %v1274 = vunpack.c.l.b16 %v486
    %v1275 = vunpack.c.l.b16 %v487
    %v1276 = vunpack.c.l.b16 %v488
    %v1277 = vunpack.c.l.b16 %v489
    %v1278 = vunpack.c.l.b16 %v490
    %v1279 = vunpack.c.l.b16 %v491
    %v1280 = vunpack.c.l.b16 %v492
    %v1281 = vunpack.c.l.b16 %v493
    %v1282 = vunpack.c.l.b16 %v494
    %v1283 = vunpack.c.l.b16 %v495
    %v1284 = vunpack.c.l.b16 %v496
    %v1285 = vunpack.c.l.b16 %v497
    %v1286 = vunpack.c.l.b16 %v498
    %v1287 = vunpack.c.l.b16 %v499
    %v1288 = vunpack.c.l.b16 %v500
    %v1289 = vunpack.c.l.b16 %v501
    %v1290 = vunpack.c.l.b16 %v502
    %v1291 = vunpack.c.l.b16 %v503
    %v1292 = vunpack.c.l.b16 %v504
    %v1293 = vunpack.c.l.b16 %v505
    %v1294 = vunpack.c.l.b16 %v506
    %v1295 = vunpack.c.l.b16 %v507
    %v1296 = vunpack.c.l.b16 %v508
    %v1297 = vunpack.c.l.b16 %v509
    %v1298 = vunpack.c.l.b16 %v510
    %v1299 = vpack.c.b16 %v908, %v907
    %v1300 = vpack.c.b16 %v910, %v909
    %v1301 = vpack.c.b16 %v912, %v911
    %v1302 = vpack.c.b16 %v914, %v913
    %v1303 = vpack.c.b16 %v916, %v915
    %v1304 = vpack.c.b16 %v918, %v917
    %v1305 = vpack.c.b16 %v920, %v919
    %v1306 = vpack.c.b16 %v922, %v921
    %v1307 = vpack.c.b16 %v924, %v923
    %v1308 = vpack.c.b16 %v926, %v925
    %v1309 = vpack.c.b16 %v928, %v927
    %v1310 = vpack.c.b16 %v930, %v929
    %v1311 = vpack.c.b16 %v932, %v931
    %v1312 = vpack.c.b16 %v934, %v933
    %v1313 = vpack.c.b16 %v936, %v935
    %v1314 = vpack.c.b16 %v938, %v937
    %v1315 = vpack.c.b16 %v940, %v939
    %v1316 = vpack.c.b16 %v942, %v941
    %v1317 = vpack.c.b16 %v944, %v943
    %v1318 = vpack.c.b16 %v946, %v945
    %v1319 = vpack.c.b16 %v948, %v947
    %v1320 = vpack.c.b16 %v950, %v949
    %v1321 = vpack.c.b16 %v952, %v951
    %v1322 = vpack.c.b16 %v954, %v953
    %v1323 = vpack.c.b16 %v956, %v955
    %v1324 = vpack.c.b16 %v958, %v957
    %v1325 = vpack.c.b16 %v960, %v959
    %v1326 = vpack.c.b16 %v962, %v961
    %v1327 = vpack.c.b16 %v964, %v963
    %v1328 = vpack.c.b16 %v966, %v965
    %v1329 = vpack.c.b16 %v968, %v967
    %v1330 = vpack.c.b16 %v970, %v969
    %v1331 = vpack.c.b16 %v972, %v971
    %v1332 = vpack.c.b16 %v974, %v973
    %v1333 = vpack.c.b16 %v976, %v975
    %v1334 = vpack.c.b16 %v978, %v977
    %v1335 = vpack.c.b16 %v980, %v979
    %v1336 = vpack.c.b16 %v982, %v981
    %v1337 = vpack.c.b16 %v984, %v983
    %v1338 = vpack.c.b16 %v986, %v985
    %v1339 = vpack.c.b16 %v988, %v987
    %v1340 = vpack.c.b16 %v990, %v989
    %v1341 = vpack.c.b16 %v992, %v991
    %v1342 = vpack.c.b16 %v994, %v993
    %v1343 = vpack.c.b16 %v996, %v995
    %v1344 = vpack.c.b16 %v998, %v997
    %v1345 = vpack.c.b16 %v1000, %v999
    %v1346 = vpack.c.b16 %v1002, %v1001
    %v1347 = vpack.c.b16 %v1004, %v1003
    %v1348 = vpack.c.b16 %v1006, %v1005
    %v1349 = vpack.c.b16 %v1008, %v1007
    %v1350 = vpack.c.b16 %v1010, %v1009
    %v1351 = vpack.c.b16 %v1012, %v1011
    %v1352 = vpack.c.b16 %v1014, %v1013
    %v1353 = vpack.c.b16 %v1016, %v1015
    %v1354 = vpack.c.b16 %v1018, %v1017
    %v1355 = vpack.c.b16 %v1020, %v1019
    %v1356 = vpack.c.b16 %v1022, %v1021
    %v1357 = vpack.c.b16 %v1024, %v1023
    %v1358 = vpack.c.b16 %v1026, %v1025
    %v1359 = vpack.c.b16 %v1028, %v1027
    %v1360 = vpack.c.b16 %v1030, %v1029
    %v1361 = vpack.c.b16 %v1032, %v1031
    %v1362 = vpack.c.b16 %v1034, %v1033
    %v1363 = vpack.c.b16 %v1036, %v1035
    %v1364 = vpack.c.b16 %v1038, %v1037
    %v1365 = vpack.c.b16 %v1040, %v1039
    %v1366 = vpack.c.b16 %v1042, %v1041
    %v1367 = vpack.c.b16 %v1044, %v1043
    %v1368 = vpack.c.b16 %v1046, %v1045
    %v1369 = vpack.c.b16 %v1048, %v1047
    %v1370 = vpack.c.b16 %v1050, %v1049
    %v1371 = vpack.c.b16 %v1052, %v1051
    %v1372 = vpack.c.b16 %v1054, %v1053
    %v1373 = vpack.c.b16 %v1056, %v1055
    %v1374 = vpack.c.b16 %v1058, %v1057
    %v1375 = vpack.c.b16 %v1060, %v1059
    %v1376 = vpack.c.b16 %v1062, %v1061
    %v1377 = vpack.c.b16 %v1064, %v1063
    %v1378 = vpack.c.b16 %v1066, %v1065
    %v1379 = vpack.c.b16 %v1068, %v1067
    %v1380 = vpack.c.b16 %v1070, %v1069
    %v1381 = vpack.c.b16 %v1072, %v1071
    %v1382 = vpack.c.b16 %v1074, %v1073
    %v1383 = vpack.c.b16 %v1076, %v1075
    %v1384 = vpack.c.b16 %v1078, %v1077
    %v1385 = vpack.c.b16 %v1080, %v1079
    %v1386 = vpack.c.b16 %v1082, %v1081
    %v1387 = vpack.c.b16 %v1084, %v1083
    %v1388 = vpack.c.b16 %v1086, %v1085
    %v1389 = vpack.c.b16 %v1088, %v1087
    %v1390 = vpack.c.b16 %v1090, %v1089
    %v1391 = vpack.c.b16 %v1092, %v1091
    %v1392 = vpack.c.b16 %v1094, %v1093
    %v1393 = vpack.c.b16 %v1096, %v1095
    %v1394 = vpack.c.b16 %v1098, %v1097
    %v1395 = vpack.c.b16 %v1100, %v1099
    %v1396 = vpack.c.b16 %v1102, %v1101
    %v1397 = vpack.c.b16 %v1104, %v1103
    %v1398 = vpack.c.b16 %v1106, %v1105
    %v1399 = vpack.c.b16 %v1108, %v1107
    %v1400 = vpack.c.b16 %v1110, %v1109
    %v1401 = vpack.c.b16 %v1112, %v1111
    %v1402 = vpack.c.b16 %v1114, %v1113
    %v1403 = vpack.c.b16 %v1116, %v1115
    %v1404 = vpack.c.b16 %v1118, %v1117
    %v1405 = vpack.c.b16 %v1120, %v1119
    %v1406 = vpack.c.b16 %v1122, %v1121
    %v1407 = vpack.c.b16 %v1124, %v1123
    %v1408 = vpack.c.b16 %v1126, %v1125
    %v1409 = vpack.c.b16 %v1128, %v1127
    %v1410 = vpack.c.b16 %v1130, %v1129
    %v1411 = vpack.c.b16 %v1132, %v1131
    %v1412 = vpack.c.b16 %v1134, %v1133
    %v1413 = vpack.c.b16 %v1136, %v1135
    %v1414 = vpack.c.b16 %v1138, %v1137
    %v1415 = vpack.c.b16 %v1140, %v1139
    %v1416 = vpack.c.b16 %v1142, %v1141
    %v1417 = vpack.c.b16 %v1144, %v1143
    %v1418 = vpack.c.b16 %v1146, %v1145
    %v1419 = vpack.c.b16 %v1148, %v1147
    %v1420 = vpack.c.b16 %v1150, %v1149
    %v1421 = vpack.c.b16 %v1152, %v1151
    %v1422 = vpack.c.b16 %v1154, %v1153
    %v1423 = vpack.c.b16 %v1156, %v1155
    %v1424 = vpack.c.b16 %v1158, %v1157
    %v1425 = vpack.c.b16 %v1160, %v1159
    %v1426 = vpack.c.b16 %v1162, %v1161
    %v1427 = vpack.c.b16 %v1164, %v1163
    %v1428 = vpack.c.b16 %v1166, %v1165
    %v1429 = vpack.c.b16 %v1168, %v1167
    %v1430 = vpack.c.b16 %v1170, %v1169
    %v1431 = vpack.c.b16 %v1172, %v1171
    %v1432 = vpack.c.b16 %v1174, %v1173
    %v1433 = vpack.c.b16 %v1176, %v1175
    %v1434 = vpack.c.b16 %v1178, %v1177
    %v1435 = vpack.c.b16 %v1180, %v1179
    %v1436 = vpack.c.b16 %v1182, %v1181
    %v1437 = vpack.c.b16 %v1184, %v1183
    %v1438 = vpack.c.b16 %v1186, %v1185
    %v1439 = vpack.c.b16 %v1188, %v1187
    %v1440 = vpack.c.b16 %v1190, %v1189
    %v1441 = vpack.c.b16 %v1192, %v1191
    %v1442 = vpack.c.b16 %v1194, %v1193
    %v1443 = vpack.c.b16 %v1196, %v1195
    %v1444 = vpack.c.b16 %v1198, %v1197
    %v1445 = vpack.c.b16 %v1200, %v1199
    %v1446 = vpack.c.b16 %v1202, %v1201
    %v1447 = vpack.c.b16 %v1204, %v1203
    %v1448 = vpack.c.b16 %v1206, %v1205
    %v1449 = vpack.c.b16 %v1208, %v1207
    %v1450 = vpack.c.b16 %v1210, %v1209
    %v1451 = vpack.c.b16 %v1212, %v1211
    %v1452 = vpack.c.b16 %v1214, %v1213
    %v1453 = vpack.c.b16 %v1216, %v1215
    %v1454 = vpack.c.b16 %v1218, %v1217
    %v1455 = vpack.c.b16 %v1220, %v1219
    %v1456 = vpack.c.b16 %v1222, %v1221
    %v1457 = vpack.c.b16 %v1224, %v1223
    %v1458 = vpack.c.b16 %v1226, %v1225
    %v1459 = vpack.c.b16 %v1228, %v1227
    %v1460 = vpack.c.b16 %v1230, %v1229
    %v1461 = vpack.c.b16 %v1232, %v1231
    %v1462 = vpack.c.b16 %v1234, %v1233
    %v1463 = vpack.c.b16 %v1236, %v1235
    %v1464 = vpack.c.b16 %v1238, %v1237
    %v1465 = vpack.c.b16 %v1240, %v1239
    %v1466 = vpack.c.b16 %v1242, %v1241
    %v1467 = vpack.c.b16 %v1244, %v1243
    %v1468 = vpack.c.b16 %v1246, %v1245
    %v1469 = vpack.c.b16 %v1248, %v1247
    %v1470 = vpack.c.b16 %v1250, %v1249
    %v1471 = vpack.c.b16 %v1252, %v1251
    %v1472 = vpack.c.b16 %v1254, %v1253
    %v1473 = vpack.c.b16 %v1256, %v1255
    %v1474 = vpack.c.b16 %v1258, %v1257
    %v1475 = vpack.c.b16 %v1260, %v1259
    %v1476 = vpack.c.b16 %v1262, %v1261
    %v1477 = vpack.c.b16 %v1264, %v1263
    %v1478 = vpack.c.b16 %v1266, %v1265
    %v1479 = vpack.c.b16 %v1268, %v1267
    %v1480 = vpack.c.b16 %v1270, %v1269
    %v1481 = vpack.c.b16 %v1272, %v1271
    %v1482 = vpack.c.b16 %v1274, %v1273
    %v1483 = vpack.c.b16 %v1276, %v1275
    %v1484 = vpack.c.b16 %v1278, %v1277
    %v1485 = vpack.c.b16 %v1280, %v1279
    %v1486 = vpack.c.b16 %v1282, %v1281
    %v1487 = vpack.c.b16 %v1284, %v1283
    %v1488 = vpack.c.b16 %v1286, %v1285
    %v1489 = vpack.c.b16 %v1288, %v1287
    %v1490 = vpack.c.b16 %v1290, %v1289
    %v1491 = vpack.c.b16 %v1292, %v1291
    %v1492 = vpack.c.b16 %v1294, %v1293
    %v1493 = vpack.c.b16 %v1296, %v1295
    %v1494 = vpack.c.b16 %v1298, %v1297
    %vm1691 = vcmask 523264
    %v1693 = vsel %vm1691, %v118, 0
    %1695 = vmatpush.bf16.msra.mxu0 %v1306
    %1696 = vmatpush.bf16.msra.mxu0 %v1305
    %1697 = vmatpush.bf16.msra.mxu0 %v1304
    %1698 = vmatpush.bf16.msra.mxu0 %v1303
    %1699 = vmatpush.bf16.msra.mxu0 %v1302
    %1700 = vmatpush.bf16.msra.mxu0 %v1301
    %1701 = vmatpush.bf16.msra.mxu0 %v1300
    %1702 = vmatpush.bf16.msra.mxu0 %v1299
    %1703 = vmatmul.bf16.gmra.mxu0 %v94
    %v1704 = vpop.f32.mrf.mxu0
    %v1705 = vadd.f32 %v513, %v1704
    %v1706 = vpop.f32.mrf.mxu0
    %1707 = vdwg.mxu0
    %1708 = vmatpush.bf16.msra.mxu0 %v1314
    %1709 = vmatpush.bf16.msra.mxu0 %v1313
    %1710 = vmatpush.bf16.msra.mxu0 %v1312
    %1711 = vmatpush.bf16.msra.mxu0 %v1311
    %1712 = vmatpush.bf16.msra.mxu0 %v1310
    %1713 = vmatpush.bf16.msra.mxu0 %v1309
    %1714 = vmatpush.bf16.msra.mxu0 %v1308
    %1715 = vmatpush.bf16.msra.mxu0 %v1307
    %1716 = vmatmul.bf16.gmra.mxu0 %v95
    %v1717 = vpop.f32.mrf.mxu0
    %v1718 = vadd.f32 %v1705, %v1717
    %v1719 = vpop.f32.mrf.mxu0
    %1720 = vdwg.mxu0
    %1721 = vmatpush.bf16.msra.mxu0 %v1322
    %1722 = vmatpush.bf16.msra.mxu0 %v1321
    %1723 = vmatpush.bf16.msra.mxu0 %v1320
    %1724 = vmatpush.bf16.msra.mxu0 %v1319
    %1725 = vmatpush.bf16.msra.mxu0 %v1318
    %1726 = vmatpush.bf16.msra.mxu0 %v1317
    %1727 = vmatpush.bf16.msra.mxu0 %v1316
    %1728 = vmatpush.bf16.msra.mxu0 %v1315
    %1729 = vmatmul.bf16.gmra.mxu0 %v96
    %v1730 = vpop.f32.mrf.mxu0
    %v1731 = vadd.f32 %v1718, %v1730
    %v1732 = vpop.f32.mrf.mxu0
    %1733 = vdwg.mxu0
    %1734 = vmatpush.bf16.msra.mxu0 %v1330
    %1735 = vmatpush.bf16.msra.mxu0 %v1329
    %1736 = vmatpush.bf16.msra.mxu0 %v1328
    %1737 = vmatpush.bf16.msra.mxu0 %v1327
    %1738 = vmatpush.bf16.msra.mxu0 %v1326
    %1739 = vmatpush.bf16.msra.mxu0 %v1325
    %1740 = vmatpush.bf16.msra.mxu0 %v1324
    %1741 = vmatpush.bf16.msra.mxu0 %v1323
    %1742 = vmatmul.bf16.gmra.mxu0 %v97
    %v1743 = vpop.f32.mrf.mxu0
    %v1744 = vadd.f32 %v1731, %v1743
    %v1745 = vpop.f32.mrf.mxu0
    %1746 = vdwg.mxu0
    %1747 = vmatpush.bf16.msra.mxu0 %v1338
    %1748 = vmatpush.bf16.msra.mxu0 %v1337
    %1749 = vmatpush.bf16.msra.mxu0 %v1336
    %1750 = vmatpush.bf16.msra.mxu0 %v1335
    %1751 = vmatpush.bf16.msra.mxu0 %v1334
    %1752 = vmatpush.bf16.msra.mxu0 %v1333
    %1753 = vmatpush.bf16.msra.mxu0 %v1332
    %1754 = vmatpush.bf16.msra.mxu0 %v1331
    %1755 = vmatmul.bf16.gmra.mxu0 %v98
    %v1756 = vpop.f32.mrf.mxu0
    %v1757 = vadd.f32 %v1744, %v1756
    %v1758 = vpop.f32.mrf.mxu0
    %1759 = vdwg.mxu0
    %1760 = vmatpush.bf16.msra.mxu0 %v1346
    %1761 = vmatpush.bf16.msra.mxu0 %v1345
    %1762 = vmatpush.bf16.msra.mxu0 %v1344
    %1763 = vmatpush.bf16.msra.mxu0 %v1343
    %1764 = vmatpush.bf16.msra.mxu0 %v1342
    %1765 = vmatpush.bf16.msra.mxu0 %v1341
    %1766 = vmatpush.bf16.msra.mxu0 %v1340
    %1767 = vmatpush.bf16.msra.mxu0 %v1339
    %1768 = vmatmul.bf16.gmra.mxu0 %v99
    %v1769 = vpop.f32.mrf.mxu0
    %v1770 = vadd.f32 %v1757, %v1769
    %v1771 = vpop.f32.mrf.mxu0
    %1772 = vdwg.mxu0
    %1773 = vmatpush.bf16.msra.mxu0 %v1354
    %1774 = vmatpush.bf16.msra.mxu0 %v1353
    %1775 = vmatpush.bf16.msra.mxu0 %v1352
    %1776 = vmatpush.bf16.msra.mxu0 %v1351
    %1777 = vmatpush.bf16.msra.mxu0 %v1350
    %1778 = vmatpush.bf16.msra.mxu0 %v1349
    %1779 = vmatpush.bf16.msra.mxu0 %v1348
    %1780 = vmatpush.bf16.msra.mxu0 %v1347
    %1781 = vmatmul.bf16.gmra.mxu0 %v100
    %v1782 = vpop.f32.mrf.mxu0
    %v1783 = vadd.f32 %v1770, %v1782
    %v1784 = vpop.f32.mrf.mxu0
    %1785 = vdwg.mxu0
    %1786 = vmatpush.bf16.msra.mxu0 %v1362
    %1787 = vmatpush.bf16.msra.mxu0 %v1361
    %1788 = vmatpush.bf16.msra.mxu0 %v1360
    %1789 = vmatpush.bf16.msra.mxu0 %v1359
    %1790 = vmatpush.bf16.msra.mxu0 %v1358
    %1791 = vmatpush.bf16.msra.mxu0 %v1357
    %1792 = vmatpush.bf16.msra.mxu0 %v1356
    %1793 = vmatpush.bf16.msra.mxu0 %v1355
    %1794 = vmatmul.bf16.gmra.mxu0 %v101
    %v1795 = vpop.f32.mrf.mxu0
    %v1796 = vadd.f32 %v1783, %v1795
    %v1797 = vpop.f32.mrf.mxu0
    %1798 = vdwg.mxu0
    %1799 = vmatpush.bf16.msra.mxu0 %v1370
    %1800 = vmatpush.bf16.msra.mxu0 %v1369
    %1801 = vmatpush.bf16.msra.mxu0 %v1368
    %1802 = vmatpush.bf16.msra.mxu0 %v1367
    %1803 = vmatpush.bf16.msra.mxu0 %v1366
    %1804 = vmatpush.bf16.msra.mxu0 %v1365
    %1805 = vmatpush.bf16.msra.mxu0 %v1364
    %1806 = vmatpush.bf16.msra.mxu0 %v1363
    %1807 = vmatmul.bf16.gmra.mxu0 %v102
    %v1808 = vpop.f32.mrf.mxu0
    %v1809 = vadd.f32 %v1796, %v1808
    %v1810 = vpop.f32.mrf.mxu0
    %1811 = vdwg.mxu0
    %1812 = vmatpush.bf16.msra.mxu0 %v1378
    %1813 = vmatpush.bf16.msra.mxu0 %v1377
    %1814 = vmatpush.bf16.msra.mxu0 %v1376
    %1815 = vmatpush.bf16.msra.mxu0 %v1375
    %1816 = vmatpush.bf16.msra.mxu0 %v1374
    %1817 = vmatpush.bf16.msra.mxu0 %v1373
    %1818 = vmatpush.bf16.msra.mxu0 %v1372
    %1819 = vmatpush.bf16.msra.mxu0 %v1371
    %1820 = vmatmul.bf16.gmra.mxu0 %v103
    %v1821 = vpop.f32.mrf.mxu0
    %v1822 = vadd.f32 %v1809, %v1821
    %v1823 = vpop.f32.mrf.mxu0
    %1824 = vdwg.mxu0
    %1825 = vmatpush.bf16.msra.mxu0 %v1386
    %1826 = vmatpush.bf16.msra.mxu0 %v1385
    %1827 = vmatpush.bf16.msra.mxu0 %v1384
    %1828 = vmatpush.bf16.msra.mxu0 %v1383
    %1829 = vmatpush.bf16.msra.mxu0 %v1382
    %1830 = vmatpush.bf16.msra.mxu0 %v1381
    %1831 = vmatpush.bf16.msra.mxu0 %v1380
    %1832 = vmatpush.bf16.msra.mxu0 %v1379
    %1833 = vmatmul.bf16.gmra.mxu0 %v104
    %v1834 = vpop.f32.mrf.mxu0
    %v1835 = vadd.f32 %v1822, %v1834
    %v1836 = vpop.f32.mrf.mxu0
    %1837 = vdwg.mxu0
    %1838 = vmatpush.bf16.msra.mxu0 %v1394
    %1839 = vmatpush.bf16.msra.mxu0 %v1393
    %1840 = vmatpush.bf16.msra.mxu0 %v1392
    %1841 = vmatpush.bf16.msra.mxu0 %v1391
    %1842 = vmatpush.bf16.msra.mxu0 %v1390
    %1843 = vmatpush.bf16.msra.mxu0 %v1389
    %1844 = vmatpush.bf16.msra.mxu0 %v1388
    %1845 = vmatpush.bf16.msra.mxu0 %v1387
    %1846 = vmatmul.bf16.gmra.mxu0 %v105
    %v1847 = vpop.f32.mrf.mxu0
    %v1848 = vadd.f32 %v1835, %v1847
    %v1849 = vpop.f32.mrf.mxu0
    %1850 = vdwg.mxu0
    %1851 = vmatpush.bf16.msra.mxu0 %v1402
    %1852 = vmatpush.bf16.msra.mxu0 %v1401
    %1853 = vmatpush.bf16.msra.mxu0 %v1400
    %1854 = vmatpush.bf16.msra.mxu0 %v1399
    %1855 = vmatpush.bf16.msra.mxu0 %v1398
    %1856 = vmatpush.bf16.msra.mxu0 %v1397
    %1857 = vmatpush.bf16.msra.mxu0 %v1396
    %1858 = vmatpush.bf16.msra.mxu0 %v1395
    %1859 = vmatmul.bf16.gmra.mxu0 %v106
    %v1860 = vpop.f32.mrf.mxu0
    %v1861 = vadd.f32 %v1848, %v1860
    %v1862 = vpop.f32.mrf.mxu0
    %1863 = vdwg.mxu0
    %1864 = vmatpush.bf16.msra.mxu0 %v1410
    %1865 = vmatpush.bf16.msra.mxu0 %v1409
    %1866 = vmatpush.bf16.msra.mxu0 %v1408
    %1867 = vmatpush.bf16.msra.mxu0 %v1407
    %1868 = vmatpush.bf16.msra.mxu0 %v1406
    %1869 = vmatpush.bf16.msra.mxu0 %v1405
    %1870 = vmatpush.bf16.msra.mxu0 %v1404
    %1871 = vmatpush.bf16.msra.mxu0 %v1403
    %1872 = vmatmul.bf16.gmra.mxu0 %v107
    %v1873 = vpop.f32.mrf.mxu0
    %v1874 = vadd.f32 %v1861, %v1873
    %v1875 = vpop.f32.mrf.mxu0
    %1876 = vdwg.mxu0
    %1877 = vmatpush.bf16.msra.mxu0 %v1418
    %1878 = vmatpush.bf16.msra.mxu0 %v1417
    %1879 = vmatpush.bf16.msra.mxu0 %v1416
    %1880 = vmatpush.bf16.msra.mxu0 %v1415
    %1881 = vmatpush.bf16.msra.mxu0 %v1414
    %1882 = vmatpush.bf16.msra.mxu0 %v1413
    %1883 = vmatpush.bf16.msra.mxu0 %v1412
    %1884 = vmatpush.bf16.msra.mxu0 %v1411
    %1885 = vmatmul.bf16.gmra.mxu0 %v108
    %v1886 = vpop.f32.mrf.mxu0
    %v1887 = vadd.f32 %v1874, %v1886
    %v1888 = vpop.f32.mrf.mxu0
    %1889 = vdwg.mxu0
    %1890 = vmatpush.bf16.msra.mxu0 %v1426
    %1891 = vmatpush.bf16.msra.mxu0 %v1425
    %1892 = vmatpush.bf16.msra.mxu0 %v1424
    %1893 = vmatpush.bf16.msra.mxu0 %v1423
    %1894 = vmatpush.bf16.msra.mxu0 %v1422
    %1895 = vmatpush.bf16.msra.mxu0 %v1421
    %1896 = vmatpush.bf16.msra.mxu0 %v1420
    %1897 = vmatpush.bf16.msra.mxu0 %v1419
    %1898 = vmatmul.bf16.gmra.mxu0 %v109
    %v1899 = vpop.f32.mrf.mxu0
    %v1900 = vadd.f32 %v1887, %v1899
    %v1901 = vpop.f32.mrf.mxu0
    %1902 = vdwg.mxu0
    %1903 = vmatpush.bf16.msra.mxu0 %v1434
    %1904 = vmatpush.bf16.msra.mxu0 %v1433
    %1905 = vmatpush.bf16.msra.mxu0 %v1432
    %1906 = vmatpush.bf16.msra.mxu0 %v1431
    %1907 = vmatpush.bf16.msra.mxu0 %v1430
    %1908 = vmatpush.bf16.msra.mxu0 %v1429
    %1909 = vmatpush.bf16.msra.mxu0 %v1428
    %1910 = vmatpush.bf16.msra.mxu0 %v1427
    %1911 = vmatmul.bf16.gmra.mxu0 %v110
    %v1912 = vpop.f32.mrf.mxu0
    %v1913 = vadd.f32 %v1900, %v1912
    %v1914 = vpop.f32.mrf.mxu0
    %1915 = vdwg.mxu0
    %1916 = vmatpush.bf16.msra.mxu0 %v1442
    %1917 = vmatpush.bf16.msra.mxu0 %v1441
    %1918 = vmatpush.bf16.msra.mxu0 %v1440
    %1919 = vmatpush.bf16.msra.mxu0 %v1439
    %1920 = vmatpush.bf16.msra.mxu0 %v1438
    %1921 = vmatpush.bf16.msra.mxu0 %v1437
    %1922 = vmatpush.bf16.msra.mxu0 %v1436
    %1923 = vmatpush.bf16.msra.mxu0 %v1435
    %1924 = vmatmul.bf16.gmra.mxu0 %v111
    %v1925 = vpop.f32.mrf.mxu0
    %v1926 = vadd.f32 %v1913, %v1925
    %v1927 = vpop.f32.mrf.mxu0
    %1928 = vdwg.mxu0
    %1929 = vmatpush.bf16.msra.mxu0 %v1450
    %1930 = vmatpush.bf16.msra.mxu0 %v1449
    %1931 = vmatpush.bf16.msra.mxu0 %v1448
    %1932 = vmatpush.bf16.msra.mxu0 %v1447
    %1933 = vmatpush.bf16.msra.mxu0 %v1446
    %1934 = vmatpush.bf16.msra.mxu0 %v1445
    %1935 = vmatpush.bf16.msra.mxu0 %v1444
    %1936 = vmatpush.bf16.msra.mxu0 %v1443
    %1937 = vmatmul.bf16.gmra.mxu0 %v112
    %v1938 = vpop.f32.mrf.mxu0
    %v1939 = vadd.f32 %v1926, %v1938
    %v1940 = vpop.f32.mrf.mxu0
    %1941 = vdwg.mxu0
    %1942 = vmatpush.bf16.msra.mxu0 %v1458
    %1943 = vmatpush.bf16.msra.mxu0 %v1457
    %1944 = vmatpush.bf16.msra.mxu0 %v1456
    %1945 = vmatpush.bf16.msra.mxu0 %v1455
    %1946 = vmatpush.bf16.msra.mxu0 %v1454
    %1947 = vmatpush.bf16.msra.mxu0 %v1453
    %1948 = vmatpush.bf16.msra.mxu0 %v1452
    %1949 = vmatpush.bf16.msra.mxu0 %v1451
    %1950 = vmatmul.bf16.gmra.mxu0 %v113
    %v1951 = vpop.f32.mrf.mxu0
    %v1952 = vadd.f32 %v1939, %v1951
    %v1953 = vpop.f32.mrf.mxu0
    %1954 = vdwg.mxu0
    %1955 = vmatpush.bf16.msra.mxu0 %v1466
    %1956 = vmatpush.bf16.msra.mxu0 %v1465
    %1957 = vmatpush.bf16.msra.mxu0 %v1464
    %1958 = vmatpush.bf16.msra.mxu0 %v1463
    %1959 = vmatpush.bf16.msra.mxu0 %v1462
    %1960 = vmatpush.bf16.msra.mxu0 %v1461
    %1961 = vmatpush.bf16.msra.mxu0 %v1460
    %1962 = vmatpush.bf16.msra.mxu0 %v1459
    %1963 = vmatmul.bf16.gmra.mxu0 %v114
    %v1964 = vpop.f32.mrf.mxu0
    %v1965 = vadd.f32 %v1952, %v1964
    %v1966 = vpop.f32.mrf.mxu0
    %1967 = vdwg.mxu0
    %1968 = vmatpush.bf16.msra.mxu0 %v1474
    %1969 = vmatpush.bf16.msra.mxu0 %v1473
    %1970 = vmatpush.bf16.msra.mxu0 %v1472
    %1971 = vmatpush.bf16.msra.mxu0 %v1471
    %1972 = vmatpush.bf16.msra.mxu0 %v1470
    %1973 = vmatpush.bf16.msra.mxu0 %v1469
    %1974 = vmatpush.bf16.msra.mxu0 %v1468
    %1975 = vmatpush.bf16.msra.mxu0 %v1467
    %1976 = vmatmul.bf16.gmra.mxu0 %v115
    %v1977 = vpop.f32.mrf.mxu0
    %v1978 = vadd.f32 %v1965, %v1977
    %v1979 = vpop.f32.mrf.mxu0
    %1980 = vdwg.mxu0
    %1981 = vmatpush.bf16.msra.mxu0 %v1482
    %1982 = vmatpush.bf16.msra.mxu0 %v1481
    %1983 = vmatpush.bf16.msra.mxu0 %v1480
    %1984 = vmatpush.bf16.msra.mxu0 %v1479
    %1985 = vmatpush.bf16.msra.mxu0 %v1478
    %1986 = vmatpush.bf16.msra.mxu0 %v1477
    %1987 = vmatpush.bf16.msra.mxu0 %v1476
    %1988 = vmatpush.bf16.msra.mxu0 %v1475
    %1989 = vmatmul.bf16.gmra.mxu0 %v116
    %v1990 = vpop.f32.mrf.mxu0
    %v1991 = vadd.f32 %v1978, %v1990
    %v1992 = vpop.f32.mrf.mxu0
    %1993 = vdwg.mxu0
    %1994 = vmatpush.bf16.msra.mxu0 %v1490
    %1995 = vmatpush.bf16.msra.mxu0 %v1489
    %1996 = vmatpush.bf16.msra.mxu0 %v1488
    %1997 = vmatpush.bf16.msra.mxu0 %v1487
    %1998 = vmatpush.bf16.msra.mxu0 %v1486
    %1999 = vmatpush.bf16.msra.mxu0 %v1485
    %2000 = vmatpush.bf16.msra.mxu0 %v1484
    %2001 = vmatpush.bf16.msra.mxu0 %v1483
    %2002 = vmatmul.bf16.gmra.mxu0 %v117
    %v2003 = vpop.f32.mrf.mxu0
    %v2004 = vadd.f32 %v1991, %v2003
    %v2005 = vpop.f32.mrf.mxu0
    %2006 = vdwg.mxu0
    %2007 = vmatpush.bf16.msra.mxu0 0
    %2008 = vmatpush.bf16.msra.mxu0 0
    %2009 = vmatpush.bf16.msra.mxu0 0
    %2010 = vmatpush.bf16.msra.mxu0 0
    %2011 = vmatpush.bf16.msra.mxu0 %v1494
    %2012 = vmatpush.bf16.msra.mxu0 %v1493
    %2013 = vmatpush.bf16.msra.mxu0 %v1492
    %2014 = vmatpush.bf16.msra.mxu0 %v1491
    %2015 = vmatmul.bf16.gmra.mxu0 %v1693
    %v2016 = vpop.f32.mrf.mxu0
    %v2017 = vadd.f32 %v2004, %v2016
    %v2018 = vpop.f32.mrf.mxu0
    %2019 = vdwg.mxu0
    %v2020 = vmax.f32 %v2017, 0.0
    %v2021 = vpack.c.bf16 %v2020, %v2020
    %v2022 = vld [vmem:[%s3] sm:$0xf]
    %v2023 = vld [vmem:[%s3 + $0x4] sm:$0xf]
    %v2024 = vld [vmem:[%s3 + $0x8] sm:$0xf]
    %v2025 = vld [vmem:[%s3 + $0xc] sm:$0xf]
    %v2026 = vld [vmem:[%s3 + $0x10] sm:$0xf]
    %v2027 = vld [vmem:[%s3 + $0x14] sm:$0xf]
    %v2028 = vld [vmem:[%s3 + $0x18] sm:$0xf]
    %v2029 = vld [vmem:[%s3 + $0x1c] sm:$0xf]
    %v2030 = vld [vmem:[%s3 + $0x20] sm:$0xf]
    %v2031 = vld [vmem:[%s3 + $0x24] sm:$0xf]
    %v2032 = vld [vmem:[%s3 + $0x28] sm:$0xf]
    %v2033 = vld [vmem:[%s3 + $0x2c] sm:$0xf]
    %v2034 = vld [vmem:[%s3 + $0x30] sm:$0xf]
    %v2035 = vld [vmem:[%s3 + $0x34] sm:$0xf]
    %v2036 = vld [vmem:[%s3 + $0x38] sm:$0xf]
    %v2037 = vld [vmem:[%s3 + $0x3c] sm:$0xf]
    %v2038 = vld [vmem:[%s4] sm:$0x1]
    %v2040 = vperm.slane %v2038, 0
    %v2058 = vunpack.c.l.b16 %v2022
    %v2059 = vunpack.c.l.b16 %v2023
    %v2060 = vunpack.c.l.b16 %v2024
    %v2061 = vunpack.c.l.b16 %v2025
    %v2062 = vunpack.c.l.b16 %v2026
    %v2063 = vunpack.c.l.b16 %v2027
    %v2064 = vunpack.c.l.b16 %v2028
    %v2065 = vunpack.c.l.b16 %v2029
    %v2066 = vunpack.c.l.b16 %v2030
    %v2067 = vunpack.c.l.b16 %v2031
    %v2068 = vunpack.c.l.b16 %v2032
    %v2069 = vunpack.c.l.b16 %v2033
    %v2070 = vunpack.c.l.b16 %v2034
    %v2071 = vunpack.c.l.b16 %v2035
    %v2072 = vunpack.c.l.b16 %v2036
    %v2073 = vunpack.c.l.b16 %v2037
    %v2074 = vpack.c.b16 %v2059, %v2058
    %v2075 = vpack.c.b16 %v2061, %v2060
    %v2076 = vpack.c.b16 %v2063, %v2062
    %v2077 = vpack.c.b16 %v2065, %v2064
    %v2078 = vpack.c.b16 %v2067, %v2066
    %v2079 = vpack.c.b16 %v2069, %v2068
    %v2080 = vpack.c.b16 %v2071, %v2070
    %v2081 = vpack.c.b16 %v2073, %v2072
    %2090 = vmatpush.bf16.msra.mxu0 %v2081
    %2091 = vmatpush.bf16.msra.mxu0 %v2080
    %2092 = vmatpush.bf16.msra.mxu0 %v2079
    %2093 = vmatpush.bf16.msra.mxu0 %v2078
    %2094 = vmatpush.bf16.msra.mxu0 %v2077
    %2095 = vmatpush.bf16.msra.mxu0 %v2076
    %2096 = vmatpush.bf16.msra.mxu0 %v2075
    %2097 = vmatpush.bf16.msra.mxu0 %v2074
    %2098 = vmatmul.bf16.gmra.mxu0 %v2021
    %v2099 = vpop.f32.mrf.mxu0
    %v2100 = vadd.f32 %v2040, %v2099
    %v2101 = vpop.f32.mrf.mxu0
    %2102 = vdwg.mxu0
    %2103 = vst [vmem:[#allocation2] sm:$0x3] %v2100
    // Predicated region
    $region22: #{simple_cnn_forward.5} parent=1 // pred_check
      _
    $region23: #{simple_cnn_forward.5} parent=1 // pred_check_branch
      %2105 = sbr.rel (0) target = $region25
    $region24: #{simple_cnn_forward.5} parent=1 // pred_region
      %2107 = vsyncadd [#allocation3], 0
      %s2109 = sshll.u32 [#allocation2], 4
      %s2110 = int_to_ptr.vmem [resolvable:$true] %s2109
      %s2111 = sshll.u32 %s5, 4
      %s2112 = int_to_ptr.hbm [resolvable:$true] %s2111
      %2114 = dma.vmem_to_hbm [thread:$0]  %s2110, 32, %s2112, [#allocation3]
    $region25: #{simple_cnn_forward.5} parent=1 // pred_fallthru
      _
    // Predicated region
    $region26: #{simple_cnn_forward.5} parent=1 // pred_check
      _
    $region27: #{simple_cnn_forward.5} parent=1 // pred_check_branch
      %2116 = sbr.rel (0) target = $region29
    $region28: #{simple_cnn_forward.5} parent=1 // pred_region
      %2118 = dma.done [#allocation3], 32
    $region29: #{simple_cnn_forward.5} parent=1 // pred_fallthru
      _
    %2119 = vsyncpa [#allocation3], 1

</llo_original>
